<compile_context>
chip_gen: v7x
topology: tpu7x:2x2x1
jax: 0.10.0
libtpu: 0.0.40
codegen_flags: <defaults>
</compile_context>

<pallas_src>
import math
from types import SimpleNamespace

import numpy as np
import jax
import jax.numpy as jnp
from jax import lax
from jax.experimental import pallas as pl
from jax.experimental.pallas import tpu as pltpu


# ---------------------------------------------------------------------------
# geometry helpers (padded-flat layout)
# ---------------------------------------------------------------------------
def _round_up(n, m):
    return ((n + m - 1) // m) * m


def _geom(d):
    """d x d image -> zero-padded (d+2)x(d+2) grid flattened on lanes.

    Returns (Wp, L, M): Wp padded width, L = Wp*Wp flattened length,
    M = Wp + 1 lane margin so every 3x3 tap is a static in-bounds lane slice
    of a (C, M + L + M) rep buffer.
    """
    wp = d + 2
    return wp, wp * wp, wp + 1


_SS_NAMES = ["s0a", "b0a", "s1a", "b1a", "ssca", "bsca", "b2a",
             "su1", "bu1", "su2", "bu2",
             "s0b", "b0b", "s1b", "b1b", "sscb", "bscb", "b2b"]


def _build_layout(input_nc, internal_nc, output_nc, d0, nb):
    """Static layout shared by the kernel builder and the host-side packer.

    nb = number of batch elements folded onto the sublane (channel) axis
    (block-diagonal weights).  nb=1 keeps one batch element per grid step.
    """
    def round_ch(c):
        cr = _round_up(c, 8)
        if (nb * cr) % 16:            # keep bf16 sublane groups 16-aligned
            cr = _round_up(c, 16)
        return cr

    cri, crm, cro = round_ch(input_nc), round_ch(internal_nc), round_ch(output_nc)
    CI, CM, CO = nb * cri, nb * crm, nb * cro
    d1, d2 = 2 * d0, 4 * d0
    Wp0, L0, M0 = _geom(d0)
    Wp1, L1, M1 = _geom(d1)
    Wp2, L2, M2 = _geom(d2)

    # packed-weight slots (columns padded to 128 -> aligned VMEM loads)
    slots = [("w1a", CM, 9 * CI), ("wsca", CM, CI), ("w2a", CM, 9 * CM),
             ("wu1", CM, 9 * CM), ("wu2", CM, 9 * CM),
             ("w1b", CO, 9 * CM), ("wscb", CO, CM), ("w2b", CO, 9 * CO),
             ("S1", Wp0, Wp1), ("S2", Wp1, Wp2)]
    woff, off, rows_w = {}, 0, 8
    for name, r, c in slots:
        woff[name] = off
        off += _round_up(c, 128)
        rows_w = max(rows_w, _round_up(r, 8))
    rows_w = _round_up(rows_w, 16)

    return SimpleNamespace(
        nb=nb, input_nc=input_nc, internal_nc=internal_nc, output_nc=output_nc,
        cri=cri, crm=crm, cro=cro, CI=CI, CM=CM, CO=CO,
        d0=d0, d1=d1, d2=d2,
        Wp0=Wp0, L0=L0, M0=M0, Wp1=Wp1, L1=L1, M1=M1, Wp2=Wp2, L2=L2, M2=M2,
        LT0=L0 + 2 * M0, LT1=L1 + 2 * M1, LT2=L2 + 2 * M2,
        woff=woff, cols_w=off, rows_w=rows_w,
        ss_col={n: i for i, n in enumerate(_SS_NAMES)}, n_ss=len(_SS_NAMES),
        rows_s=max(CI, CM, CO),
    )


# ---------------------------------------------------------------------------
# kernel
# ---------------------------------------------------------------------------
def _make_kernel(ly):
    f32, bf16 = jnp.float32, jnp.bfloat16
    CI, CM, CO = ly.CI, ly.CM, ly.CO

    def kernel(x_ref, w_ref, ss_ref, m_ref, o_ref,
               t0_ref, u0_ref, da_ref, db_ref, t2_ref, u2_ref, sc2_ref,
               xcol_ref):

        def ssc(name, rows):
            j = ly.ss_col[name]
            return ss_ref[0:rows, j:j + 1]

        def wsl(name, rows, cols):
            off = ly.woff[name]
            return w_ref[0:rows, off:off + cols]

        def zero_margins(ref, M, L):
            z = jnp.zeros((ref.shape[0], M), bf16)
            ref[:, 0:M] = z
            ref[:, M + L:M + L + M] = z

        # Per-step scratch init (cheap; keeps correctness independent of the
        # grid-step -> core assignment under "parallel" semantics).
        zero_margins(t0_ref, ly.M0, ly.L0)
        zero_margins(u0_ref, ly.M0, ly.L0)
        zero_margins(t2_ref, ly.M2, ly.L2)
        zero_margins(u2_ref, ly.M2, ly.L2)
        da_ref[...] = jnp.zeros(da_ref.shape, bf16)   # dilated reps: structural
        db_ref[...] = jnp.zeros(db_ref.shape, bf16)   # zeros everywhere else

        mask0 = m_ref[0:1, 0:ly.L0]
        mask1 = m_ref[1:2, 0:ly.L1]
        mask2 = m_ref[2:3, 0:ly.L2]

        def store_grid(dst_ref, y, M, L):
            dst_ref[:, M:M + L] = y.astype(bf16)

        def conv3x3(src_ref, cin, w, scale, shift, mask, Wp, L, M, act,
                    residual=None):
            """Fused 3x3 stride-1 'same' conv + scale/shift + residual + act.

            src_ref: (cin, M+L+M) bf16 margined rep (zero margins / border);
            one deep (Cout, 9*cin) @ (9*cin, L) bf16 MXU contraction via 9
            static lane-offset bf16 copies into the shared im2col scratch.
            """
            for k in range(9):
                ky, kx = divmod(k, 3)
                s = (ky - 1) * Wp + (kx - 1)
                xcol_ref[k * cin:(k + 1) * cin, 0:L] = src_ref[:, M + s:M + s + L]
            acc = jnp.dot(w, xcol_ref[0:9 * cin, 0:L],
                          preferred_element_type=f32)
            y = acc + shift if scale is None else acc * scale + shift
            if residual is not None:
                y = y + residual
            if act == "relu":
                y = jnp.maximum(y, 0.0)
            elif act == "sigmoid":
                y = jax.nn.sigmoid(y)
            return y * mask

        def upsample(h, Wps, Hs, dst_ref, Wpd, Md, S):
            """ConvTranspose stride-2 zero-dilation without the big spread
            matmul: each dilated destination row is a tiny 0/1 column-spread
            matmul of the corresponding source row, stored at a static lane
            offset into the pre-zeroed dilated rep."""
            for y in range(Hs):
                row = h[:, (1 + y) * Wps:(1 + y) * Wps + Wps]           # (C,Wps)
                drow = jnp.dot(row, S, preferred_element_type=f32)      # (C,Wpd)
                off = Md + (1 + 2 * y) * Wpd
                dst_ref[:, off:off + Wpd] = drow.astype(bf16)

        # ---------------- ResBlock(input_nc -> internal_nc) + ReLU @ d0 ------
        x = x_ref[0]                                                  # (CI, L0)
        t = jnp.maximum(x * ssc("s0a", CI) + ssc("b0a", CI), 0.0) * mask0
        store_grid(t0_ref, t, ly.M0, ly.L0)
        u = conv3x3(t0_ref, CI, wsl("w1a", CM, 9 * CI),
                    ssc("s1a", CM), ssc("b1a", CM), mask0,
                    ly.Wp0, ly.L0, ly.M0, "relu")
        store_grid(u0_ref, u, ly.M0, ly.L0)
        sc = (jnp.dot(wsl("wsca", CM, CI).astype(f32), x,
                      preferred_element_type=f32)
              * ssc("ssca", CM) + ssc("bsca", CM)) * mask0
        h0 = conv3x3(u0_ref, CM, wsl("w2a", CM, 9 * CM),
                     None, ssc("b2a", CM), mask0,
                     ly.Wp0, ly.L0, ly.M0, "relu", residual=sc)

        # ---------------- ConvTranspose + BN + ReLU (d0 -> d1) ---------------
        upsample(h0, ly.Wp0, ly.d0, da_ref, ly.Wp1, ly.M1,
                 wsl("S1", ly.Wp0, ly.Wp1).astype(f32))
        h1 = conv3x3(da_ref, CM, wsl("wu1", CM, 9 * CM),
                     ssc("su1", CM), ssc("bu1", CM), mask1,
                     ly.Wp1, ly.L1, ly.M1, "relu")

        # ---------------- ConvTranspose + BN + ReLU (d1 -> d2) ---------------
        upsample(h1, ly.Wp1, ly.d1, db_ref, ly.Wp2, ly.M2,
                 wsl("S2", ly.Wp1, ly.Wp2).astype(f32))
        h2 = conv3x3(db_ref, CM, wsl("wu2", CM, 9 * CM),
                     ssc("su2", CM), ssc("bu2", CM), mask2,
                     ly.Wp2, ly.L2, ly.M2, "relu")

        # ---------------- ResBlock(internal_nc -> output_nc) + Sigmoid @ d2 --
        sc2_ref[...] = (jnp.dot(wsl("wscb", CO, CM).astype(f32), h2,
                                preferred_element_type=f32)
                        * ssc("sscb", CO) + ssc("bscb", CO)) * mask2
        t2 = jnp.maximum(h2 * ssc("s0b", CM) + ssc("b0b", CM), 0.0) * mask2
        store_grid(t2_ref, t2, ly.M2, ly.L2)
        u2 = conv3x3(t2_ref, CM, wsl("w1b", CO, 9 * CM),
                     ssc("s1b", CO), ssc("b1b", CO), mask2,
                     ly.Wp2, ly.L2, ly.M2, "relu")
        store_grid(u2_ref, u2, ly.M2, ly.L2)
        out = conv3x3(u2_ref, CO, wsl("w2b", CO, 9 * CO),
                      None, ssc("b2b", CO), mask2,
                      ly.Wp2, ly.L2, ly.M2, "sigmoid", residual=sc2_ref[...])
        o_ref[0] = out

    return kernel


def build_forward(ly):
    kernel = _make_kernel(ly)

    def forward(x_nchw, wref, ssref, mref):
        B = x_nchw.shape[0]
        G = B // ly.nb
        # NCHW -> zero-padded, channel-padded, (optionally batch-folded) grid.
        xp = jnp.pad(x_nchw, ((0, 0), (0, ly.cri - x_nchw.shape[1]),
                              (1, 1), (1, 1)))
        xg = xp.reshape(B, ly.cri, ly.L0).reshape(G, ly.nb * ly.cri, ly.L0)
        xg = xg.astype(jnp.float32)

        out = pl.pallas_call(
            kernel,
            grid=(G,),
            in_specs=[
                pl.BlockSpec((1, ly.CI, ly.L0), lambda g: (g, 0, 0)),
                pl.BlockSpec((ly.rows_w, ly.cols_w), lambda g: (0, 0)),
                pl.BlockSpec((ly.rows_s, ly.n_ss), lambda g: (0, 0)),
                pl.BlockSpec((3, ly.L2), lambda g: (0, 0)),
            ],
            out_specs=pl.BlockSpec((1, ly.CO, ly.L2), lambda g: (g, 0, 0)),
            out_shape=jax.ShapeDtypeStruct((G, ly.CO, ly.L2), jnp.float32),
            scratch_shapes=[
                pltpu.VMEM((ly.CI, ly.LT0), jnp.bfloat16),   # t0: relu(bn0(x))
                pltpu.VMEM((ly.CM, ly.LT0), jnp.bfloat16),   # u0: relu(bn1(conv1))
                pltpu.VMEM((ly.CM, ly.LT1), jnp.bfloat16),   # da: dilated grid, up1
                pltpu.VMEM((ly.CM, ly.LT2), jnp.bfloat16),   # db: dilated grid, up2
                pltpu.VMEM((ly.CM, ly.LT2), jnp.bfloat16),   # t2: relu(bn0(h2))
                pltpu.VMEM((ly.CO, ly.LT2), jnp.bfloat16),   # u2: relu(bn1(conv1))
                pltpu.VMEM((ly.CO, ly.L2), jnp.float32),     # shortcut 2 (f32)
                pltpu.VMEM((9 * max(ly.CI, ly.CM, ly.CO),
                            max(ly.L0, ly.L1, ly.L2)), jnp.bfloat16),  # im2col
            ],
            compiler_params=pltpu.CompilerParams(
                dimension_semantics=("parallel",)),
        )(xg, wref, ssref, mref)

        # Module-boundary layout glue: padded-flat lanes -> NCHW interior.
        B_out = G * ly.nb
        r = out.reshape(G, ly.nb, ly.cro, ly.L2).reshape(B_out, ly.cro, ly.L2)
        r = r.reshape(B_out, ly.cro, ly.d2 + 2, ly.d2 + 2)
        return r[:, :ly.output_nc, 1:1 + ly.d2, 1:1 + ly.d2]

    return forward


# ---------------------------------------------------------------------------
# host-side packing: BN folding, block-diagonal (batch-folded) weights, masks
# ---------------------------------------------------------------------------
def _fold_bn(bn, conv_bias=None, eps=1e-5):
    gamma, beta, mean, var = (np.asarray(a, np.float32) for a in bn)
    s = gamma / np.sqrt(var + eps)
    b = beta - mean * s
    if conv_bias is not None:
        b = b + np.asarray(conv_bias, np.float32) * s
    return s, b


def _convT_as_conv(w_iohw):
    """ConvTranspose2d weight (Cin,Cout,kh,kw) -> equivalent stride-1 Conv2d
    weight (Cout,Cin,kh,kw): swap in/out channels + spatial flip."""
    w = np.asarray(w_iohw, np.float32)
    return np.flip(np.transpose(w, (1, 0, 2, 3)), axis=(2, 3))


def _w3x3_bd(w_oihw, cin_r, cout_r, nb):
    """(Cout,Cin,3,3) -> block-diagonal im2col weight (nb*cout_r, 9*nb*cin_r)."""
    w = np.asarray(w_oihw, np.float32)
    cout, cin = w.shape[:2]
    out = np.zeros((nb * cout_r, 9 * nb * cin_r), np.float32)
    for k in range(9):
        ky, kx = divmod(k, 3)
        for b in range(nb):
            r0, c0 = b * cout_r, k * nb * cin_r + b * cin_r
            out[r0:r0 + cout, c0:c0 + cin] = w[:, :, ky, kx]
    return out


def _w1x1_bd(w_oihw, cin_r, cout_r, nb):
    w = np.asarray(w_oihw, np.float32)
    cout, cin = w.shape[:2]
    out = np.zeros((nb * cout_r, nb * cin_r), np.float32)
    for b in range(nb):
        out[b * cout_r:b * cout_r + cout,
            b * cin_r:b * cin_r + cin] = w[:, :, 0, 0]
    return out


def _col_spread(d):
    """(d+2, 2d+2) 0/1 matrix: padded source row -> zero-dilated padded
    destination row (ConvTranspose stride-2 column dilation)."""
    wps, wpd = d + 2, 2 * d + 2
    S = np.zeros((wps, wpd), np.float32)
    for x in range(d):
        S[1 + x, 1 + 2 * x] = 1.0
    return S


def _interior_mask(d):
    wp, L, _ = _geom(d)
    m = np.zeros((L,), np.float32)
    for y in range(1, d + 1):
        m[y * wp + 1:y * wp + 1 + d] = 1.0
    return m


def pack_params(p, ly):
    nb = ly.nb
    rb1, up1, up2, rb2 = p["rb1"], p["up1"], p["up2"], p["rb2"]

    # --- matmul weights (bf16), one packed array, 128-aligned column slots ---
    W = np.zeros((ly.rows_w, ly.cols_w), np.float32)

    def put_w(name, arr):
        r, c = arr.shape
        W[:r, ly.woff[name]:ly.woff[name] + c] = arr

    put_w("w1a", _w3x3_bd(rb1["w1"], ly.cri, ly.crm, nb))
    put_w("wsca", _w1x1_bd(rb1["wsc"], ly.cri, ly.crm, nb))
    put_w("w2a", _w3x3_bd(rb1["w2"], ly.crm, ly.crm, nb))
    put_w("wu1", _w3x3_bd(_convT_as_conv(up1["w"]), ly.crm, ly.crm, nb))
    put_w("wu2", _w3x3_bd(_convT_as_conv(up2["w"]), ly.crm, ly.crm, nb))
    put_w("w1b", _w3x3_bd(rb2["w1"], ly.crm, ly.cro, nb))
    put_w("wscb", _w1x1_bd(rb2["wsc"], ly.crm, ly.cro, nb))
    put_w("w2b", _w3x3_bd(rb2["w2"], ly.cro, ly.cro, nb))
    put_w("S1", _col_spread(ly.d0))
    put_w("S2", _col_spread(ly.d1))
    wref = jnp.asarray(W).astype(jnp.bfloat16)

    # --- per-channel scale/shift columns (folded BN + conv bias), one array --
    SS = np.zeros((ly.rows_s, ly.n_ss), np.float32)

    def put_ss(name, vec, cr):
        v = np.asarray(vec, np.float32)
        for b in range(nb):
            SS[b * cr:b * cr + v.shape[0], ly.ss_col[name]] = v

    s0a, b0a = _fold_bn(rb1["bn0"])
    s1a, b1a = _fold_bn(rb1["bn1"], rb1["b1"])
    ssca, bsca = _fold_bn(rb1["bnsc"])
    su1, bu1 = _fold_bn(up1["bn"], up1["b"])
    su2, bu2 = _fold_bn(up2["bn"], up2["b"])
    s0b, b0b = _fold_bn(rb2["bn0"])
    s1b, b1b = _fold_bn(rb2["bn1"], rb2["b1"])
    sscb, bscb = _fold_bn(rb2["bnsc"])
    put_ss("s0a", s0a, ly.cri); put_ss("b0a", b0a, ly.cri)
    put_ss("s1a", s1a, ly.crm); put_ss("b1a", b1a, ly.crm)
    put_ss("ssca", ssca, ly.crm); put_ss("bsca", bsca, ly.crm)
    put_ss("b2a", rb1["b2"], ly.crm)
    put_ss("su1", su1, ly.crm); put_ss("bu1", bu1, ly.crm)
    put_ss("su2", su2, ly.crm); put_ss("bu2", bu2, ly.crm)
    put_ss("s0b", s0b, ly.crm); put_ss("b0b", b0b, ly.crm)
    put_ss("s1b", s1b, ly.cro); put_ss("b1b", b1b, ly.cro)
    put_ss("sscb", sscb, ly.cro); put_ss("bscb", bscb, ly.cro)
    put_ss("b2b", rb2["b2"], ly.cro)
    ssref = jnp.asarray(SS)

    # --- interior masks for the three resolutions, one array -----------------
    Msk = np.zeros((3, ly.L2), np.float32)
    Msk[0, :ly.L0] = _interior_mask(ly.d0)
    Msk[1, :ly.L1] = _interior_mask(ly.d1)
    Msk[2, :ly.L2] = _interior_mask(ly.d2)
    mref = jnp.asarray(Msk)

    return wref, ssref, mref


# ---------------------------------------------------------------------------
# deterministic parameter construction (PyTorch-native layouts)
# ---------------------------------------------------------------------------
def _conv2d_init(key, cin, cout, k, bias=True):
    kw, kb = jax.random.split(key)
    w = jax.random.normal(kw, (cout, cin, k, k), jnp.float32) / math.sqrt(cin * k * k)
    b = 0.1 * jax.random.normal(kb, (cout,), jnp.float32) if bias else None
    return w, b


def _convT2d_init(key, cin, cout, k):
    kw, kb = jax.random.split(key)
    w = jax.random.normal(kw, (cin, cout, k, k), jnp.float32) / math.sqrt(cout * k * k)
    b = 0.1 * jax.random.normal(kb, (cout,), jnp.float32)
    return w, b


def _bn_init(key, c):
    k1, k2, k3, k4 = jax.random.split(key, 4)
    gamma = 1.0 + 0.1 * jax.random.normal(k1, (c,), jnp.float32)
    beta = 0.1 * jax.random.normal(k2, (c,), jnp.float32)
    mean = 0.1 * jax.random.normal(k3, (c,), jnp.float32)
    var = 0.9 + 0.1 * jnp.abs(jax.random.normal(k4, (c,), jnp.float32))
    return (gamma, beta, mean, var)


def _resblock_init(key, cin, cout):
    ks = jax.random.split(key, 6)
    p = {"bn0": _bn_init(ks[0], cin)}
    p["w1"], p["b1"] = _conv2d_init(ks[1], cin, cout, 3)
    p["bn1"] = _bn_init(ks[2], cout)
    p["w2"], p["b2"] = _conv2d_init(ks[3], cout, cout, 3)
    p["wsc"], _ = _conv2d_init(ks[4], cin, cout, 1, bias=False)
    p["bnsc"] = _bn_init(ks[5], cout)
    return p


def _up_init(key, c):
    kw, kb = jax.random.split(key)
    w, b = _convT2d_init(kw, c, c, 3)
    return {"w": w, "b": b, "bn": _bn_init(kb, c)}


def init_params(key, input_nc, internal_nc, output_nc):
    k1, k2, k3, k4 = jax.random.split(key, 4)
    return {"rb1": _resblock_init(k1, input_nc, internal_nc),
            "up1": _up_init(k2, internal_nc),
            "up2": _up_init(k3, internal_nc),
            "rb2": _resblock_init(k4, internal_nc, output_nc)}


# ---------------------------------------------------------------------------
# pure-JAX (XLA) reference of the PyTorch module, for a tolerance check
# ---------------------------------------------------------------------------
def reference_forward(x, p, eps=1e-5):
    def q(w):   # match the kernel's bf16 weight storage
        return jnp.asarray(w, jnp.float32).astype(jnp.bfloat16).astype(jnp.float32)

    def bn(h, bnp):
        g, b, m, v = bnp
        inv = 1.0 / jnp.sqrt(v + eps)
        return (h - m[None, :, None, None]) * (g * inv)[None, :, None, None] \
            + b[None, :, None, None]

    def conv(h, w, b=None, pad=1):
        y = lax.conv_general_dilated(h, q(w), (1, 1), ((pad, pad), (pad, pad)),
                                     dimension_numbers=("NCHW", "OIHW", "NCHW"))
        if b is not None:
            y = y + b[None, :, None, None]
        return y

    def convT(h, w_T, b):   # ConvTranspose2d(k=3, s=2, p=1, output_padding=1)
        wc = q(_convT_as_conv(w_T))
        y = lax.conv_general_dilated(h, wc, (1, 1), ((1, 2), (1, 2)),
                                     lhs_dilation=(2, 2),
                                     dimension_numbers=("NCHW", "OIHW", "NCHW"))
        return y + b[None, :, None, None]

    def resblock(h, rp):
        o = jax.nn.relu(bn(h, rp["bn0"]))
        o = jax.nn.relu(bn(conv(o, rp["w1"], rp["b1"]), rp["bn1"]))
        o = conv(o, rp["w2"], rp["b2"])
        return o + bn(conv(h, rp["wsc"], None, pad=0), rp["bnsc"])

    h = jax.nn.relu(resblock(x, p["rb1"]))
    h = jax.nn.relu(bn(convT(h, p["up1"]["w"], p["up1"]["b"]), p["up1"]["bn"]))
    h = jax.nn.relu(bn(convT(h, p["up2"]["w"], p["up2"]["b"]), p["up2"]["bn"]))
    return jax.nn.sigmoid(resblock(h, p["rb2"]))


# ---------------------------------------------------------------------------
def _pick_batch_fold(batch):
    try:
        kind = jax.devices()[0].device_kind.lower()
    except Exception:
        kind = ""
    # v7x has two TensorCores per chip: keep the batch on a "parallel" grid.
    if "v7" in kind or "7x" in kind:
        return 1
    # Single-TensorCore chips (v5e / v6e): fold the batch onto sublanes so all
    # fixed per-layer costs are paid once.
    return max(batch, 1)


if __name__ == "__main__":
    # res_normN_AE(N=0, internal_nc=16, input_nc=32, output_nc=3,
    #              input_dim=8, output_dim=32, activation='sigmoid')
    B, input_nc, internal_nc, output_nc = 2, 32, 16, 3
    input_dim, output_dim = 8, 32            # upsampling_num = log2(32 // 8) = 2

    key = jax.random.PRNGKey(0)
    kx, kp = jax.random.split(key)
    x = jax.random.normal(kx, (B, input_nc, input_dim, input_dim), jnp.float32)

    params = init_params(kp, input_nc, internal_nc, output_nc)

    nb = _pick_batch_fold(B)
    ly = _build_layout(input_nc, internal_nc, output_nc, input_dim, nb)
    wref, ssref, mref = pack_params(params, ly)
    forward = jax.jit(build_forward(ly))

    out = forward(x, wref, ssref, mref)
    jax.block_until_ready(out)

    assert out.shape == (B, output_nc, output_dim, output_dim), out.shape
    assert bool(jnp.all(jnp.isfinite(out)))
    assert bool(jnp.all((out >= 0.0) & (out <= 1.0)))   # sigmoid output range

    # Tolerance check vs a pure-XLA reference of the PyTorch module (loose
    # bound: the kernel stores weights and intermediate activations in bf16).
    ref = reference_forward(x, params)
    max_err = float(jnp.max(jnp.abs(out - ref)))
    assert max_err < 0.1, max_err

    print("KERNEL_OK")
</pallas_src>

<mosaic_0001>
module attributes {stable_mosaic.version = 11 : i64} {
  func.func @kernel(%arg0: i32, %arg1: memref<1x64x100xf32, #tpu.memory_space<vmem>>, %arg2: memref<32x2944xbf16, #tpu.memory_space<vmem>>, %arg3: memref<64x18xf32, #tpu.memory_space<vmem>>, %arg4: memref<3x1156xf32, #tpu.memory_space<vmem>>, %arg5: memref<1x16x1156xf32, #tpu.memory_space<vmem>>, %arg6: memref<64x122xbf16, #tpu.memory_space<vmem>>, %arg7: memref<32x122xbf16, #tpu.memory_space<vmem>>, %arg8: memref<32x362xbf16, #tpu.memory_space<vmem>>, %arg9: memref<32x1226xbf16, #tpu.memory_space<vmem>>, %arg10: memref<32x1226xbf16, #tpu.memory_space<vmem>>, %arg11: memref<16x1226xbf16, #tpu.memory_space<vmem>>, %arg12: memref<16x1156xf32, #tpu.memory_space<vmem>>, %arg13: memref<576x1156xbf16, #tpu.memory_space<vmem>>) attributes {dimension_semantics = [#tpu.dimension_semantics<parallel>], iteration_bounds = array<i64: 1>, scalar_prefetch = 0 : i64, scratch_operands = 8 : i64, tpu.core_type = #tpu.core_type<tc>, window_params = [{transform_indices = @transform_0, window_bounds = array<i64: 1, 64, 100>}, {pipeline_mode = #tpu.pipeline_mode<synchronous>, transform_indices = @transform_1, window_bounds = array<i64: 32, 2944>}, {pipeline_mode = #tpu.pipeline_mode<synchronous>, transform_indices = @transform_2, window_bounds = array<i64: 64, 18>}, {pipeline_mode = #tpu.pipeline_mode<synchronous>, transform_indices = @transform_3, window_bounds = array<i64: 3, 1156>}, {transform_indices = @transform_4, window_bounds = array<i64: 1, 16, 1156>}]} {
    %cst = arith.constant 0.000000e+00 : bf16
    %0 = vector.broadcast %cst : bf16 to vector<64x11xbf16>
    %c0 = arith.constant 0 : index
    %c0_0 = arith.constant 0 : index
    %1 = vector.load %arg6[%c0, %c0_0] : memref<64x122xbf16, #tpu.memory_space<vmem>>, vector<64x11xbf16>
    tpu.vector_store %arg6[%c0, %c0_0], %0 {strides = array<i32>} : memref<64x122xbf16, #tpu.memory_space<vmem>>, vector<64x11xbf16>,
    %c0_1 = arith.constant 0 : index
    %c111 = arith.constant 111 : index
    %2 = vector.load %arg6[%c0_1, %c111] : memref<64x122xbf16, #tpu.memory_space<vmem>>, vector<64x11xbf16>
    tpu.vector_store %arg6[%c0_1, %c111], %0 {strides = array<i32>} : memref<64x122xbf16, #tpu.memory_space<vmem>>, vector<64x11xbf16>,
    %cst_2 = arith.constant 0.000000e+00 : bf16
    %3 = vector.broadcast %cst_2 : bf16 to vector<32x11xbf16>
    %c0_3 = arith.constant 0 : index
    %c0_4 = arith.constant 0 : index
    %4 = vector.load %arg7[%c0_3, %c0_4] : memref<32x122xbf16, #tpu.memory_space<vmem>>, vector<32x11xbf16>
    tpu.vector_store %arg7[%c0_3, %c0_4], %3 {strides = array<i32>} : memref<32x122xbf16, #tpu.memory_space<vmem>>, vector<32x11xbf16>,
    %c0_5 = arith.constant 0 : index
    %c111_6 = arith.constant 111 : index
    %5 = vector.load %arg7[%c0_5, %c111_6] : memref<32x122xbf16, #tpu.memory_space<vmem>>, vector<32x11xbf16>
    tpu.vector_store %arg7[%c0_5, %c111_6], %3 {strides = array<i32>} : memref<32x122xbf16, #tpu.memory_space<vmem>>, vector<32x11xbf16>,
    %cst_7 = arith.constant 0.000000e+00 : bf16
    %6 = vector.broadcast %cst_7 : bf16 to vector<32x35xbf16>
    %c0_8 = arith.constant 0 : index
    %c0_9 = arith.constant 0 : index
    %7 = vector.load %arg10[%c0_8, %c0_9] : memref<32x1226xbf16, #tpu.memory_space<vmem>>, vector<32x35xbf16>
    tpu.vector_store %arg10[%c0_8, %c0_9], %6 {strides = array<i32>} : memref<32x1226xbf16, #tpu.memory_space<vmem>>, vector<32x35xbf16>,
    %c0_10 = arith.constant 0 : index
    %c1191 = arith.constant 1191 : index
    %8 = vector.load %arg10[%c0_10, %c1191] : memref<32x1226xbf16, #tpu.memory_space<vmem>>, vector<32x35xbf16>
    tpu.vector_store %arg10[%c0_10, %c1191], %6 {strides = array<i32>} : memref<32x1226xbf16, #tpu.memory_space<vmem>>, vector<32x35xbf16>,
    %cst_11 = arith.constant 0.000000e+00 : bf16
    %9 = vector.broadcast %cst_11 : bf16 to vector<16x35xbf16>
    %c0_12 = arith.constant 0 : index
    %c0_13 = arith.constant 0 : index
    %10 = vector.load %arg11[%c0_12, %c0_13] : memref<16x1226xbf16, #tpu.memory_space<vmem>>, vector<16x35xbf16>
    tpu.vector_store %arg11[%c0_12, %c0_13], %9 {strides = array<i32>} : memref<16x1226xbf16, #tpu.memory_space<vmem>>, vector<16x35xbf16>,
    %c0_14 = arith.constant 0 : index
    %c1191_15 = arith.constant 1191 : index
    %11 = vector.load %arg11[%c0_14, %c1191_15] : memref<16x1226xbf16, #tpu.memory_space<vmem>>, vector<16x35xbf16>
    tpu.vector_store %arg11[%c0_14, %c1191_15], %9 {strides = array<i32>} : memref<16x1226xbf16, #tpu.memory_space<vmem>>, vector<16x35xbf16>,
    %cst_16 = arith.constant 0.000000e+00 : bf16
    %12 = vector.broadcast %cst_16 : bf16 to vector<32x362xbf16>
    %c0_17 = arith.constant 0 : index
    %c0_18 = arith.constant 0 : index
    %13 = vector.load %arg8[%c0_17, %c0_18] : memref<32x362xbf16, #tpu.memory_space<vmem>>, vector<32x362xbf16>
    tpu.vector_store %arg8[%c0_17, %c0_18], %12 {strides = array<i32>} : memref<32x362xbf16, #tpu.memory_space<vmem>>, vector<32x362xbf16>,
    %cst_19 = arith.constant 0.000000e+00 : bf16
    %14 = vector.broadcast %cst_19 : bf16 to vector<32x1226xbf16>
    %c0_20 = arith.constant 0 : index
    %c0_21 = arith.constant 0 : index
    %15 = vector.load %arg9[%c0_20, %c0_21] : memref<32x1226xbf16, #tpu.memory_space<vmem>>, vector<32x1226xbf16>
    tpu.vector_store %arg9[%c0_20, %c0_21], %14 {strides = array<i32>} : memref<32x1226xbf16, #tpu.memory_space<vmem>>, vector<32x1226xbf16>,
    %c0_22 = arith.constant 0 : index
    %c0_23 = arith.constant 0 : index
    %16 = vector.load %arg4[%c0_22, %c0_23] : memref<3x1156xf32, #tpu.memory_space<vmem>>, vector<1x100xf32>
    %c1 = arith.constant 1 : index
    %c0_24 = arith.constant 0 : index
    %17 = vector.load %arg4[%c1, %c0_24] : memref<3x1156xf32, #tpu.memory_space<vmem>>, vector<1x324xf32>
    %c2 = arith.constant 2 : index
    %c0_25 = arith.constant 0 : index
    %18 = vector.load %arg4[%c2, %c0_25] : memref<3x1156xf32, #tpu.memory_space<vmem>>, vector<1x1156xf32>
    %c0_26 = arith.constant 0 : index
    %c0_27 = arith.constant 0 : index
    %c0_28 = arith.constant 0 : index
    %19 = vector.load %arg1[%c0_26, %c0_27, %c0_28] : memref<1x64x100xf32, #tpu.memory_space<vmem>>, vector<1x64x100xf32>
    %20 = vector.shape_cast %19 : vector<1x64x100xf32> to vector<64x100xf32>
    %c0_29 = arith.constant 0 : index
    %c0_30 = arith.constant 0 : index
    %21 = vector.load %arg3[%c0_29, %c0_30] : memref<64x18xf32, #tpu.memory_space<vmem>>, vector<64x1xf32>
    %22 = vector.broadcast %21 : vector<64x1xf32> to vector<64x100xf32>
    %23 = arith.mulf %20, %22 : vector<64x100xf32>
    %c0_31 = arith.constant 0 : index
    %c1_32 = arith.constant 1 : index
    %24 = vector.load %arg3[%c0_31, %c1_32] : memref<64x18xf32, #tpu.memory_space<vmem>>, vector<64x1xf32>
    %25 = vector.broadcast %24 : vector<64x1xf32> to vector<64x100xf32>
    %26 = arith.addf %23, %25 : vector<64x100xf32>
    %cst_33 = arith.constant 0.000000e+00 : f32
    %27 = vector.broadcast %cst_33 : f32 to vector<64x100xf32>
    %28 = arith.maximumf %26, %27 : vector<64x100xf32>
    %29 = vector.broadcast %16 : vector<1x100xf32> to vector<64x100xf32>
    %30 = arith.mulf %28, %29 : vector<64x100xf32>
    %31 = arith.truncf %30 : vector<64x100xf32> to vector<64x100xbf16>
    %c0_34 = arith.constant 0 : index
    %c11 = arith.constant 11 : index
    %32 = vector.load %arg6[%c0_34, %c11] : memref<64x122xbf16, #tpu.memory_space<vmem>>, vector<64x100xbf16>
    tpu.vector_store %arg6[%c0_34, %c11], %31 {strides = array<i32>} : memref<64x122xbf16, #tpu.memory_space<vmem>>, vector<64x100xbf16>,
    %c0_35 = arith.constant 0 : index
    %c0_36 = arith.constant 0 : index
    %33 = vector.load %arg2[%c0_35, %c0_36] : memref<32x2944xbf16, #tpu.memory_space<vmem>>, vector<32x576xbf16>
    %c0_37 = arith.constant 0 : index
    %c2_38 = arith.constant 2 : index
    %34 = vector.load %arg3[%c0_37, %c2_38] : memref<64x18xf32, #tpu.memory_space<vmem>>, vector<32x1xf32>
    %c0_39 = arith.constant 0 : index
    %c3 = arith.constant 3 : index
    %35 = vector.load %arg3[%c0_39, %c3] : memref<64x18xf32, #tpu.memory_space<vmem>>, vector<32x1xf32>
    %c0_40 = arith.constant 0 : index
    %c0_41 = arith.constant 0 : index
    %36 = vector.load %arg6[%c0_40, %c0_41] : memref<64x122xbf16, #tpu.memory_space<vmem>>, vector<64x100xbf16>
    %c0_42 = arith.constant 0 : index
    %c0_43 = arith.constant 0 : index
    %37 = vector.load %arg13[%c0_42, %c0_43] : memref<576x1156xbf16, #tpu.memory_space<vmem>>, vector<64x100xbf16>
    tpu.vector_store %arg13[%c0_42, %c0_43], %36 {strides = array<i32>} : memref<576x1156xbf16, #tpu.memory_space<vmem>>, vector<64x100xbf16>,
    %c0_44 = arith.constant 0 : index
    %c1_45 = arith.constant 1 : index
    %38 = vector.load %arg6[%c0_44, %c1_45] : memref<64x122xbf16, #tpu.memory_space<vmem>>, vector<64x100xbf16>
    %c64 = arith.constant 64 : index
    %c0_46 = arith.constant 0 : index
    %39 = vector.load %arg13[%c64, %c0_46] : memref<576x1156xbf16, #tpu.memory_space<vmem>>, vector<64x100xbf16>
    tpu.vector_store %arg13[%c64, %c0_46], %38 {strides = array<i32>} : memref<576x1156xbf16, #tpu.memory_space<vmem>>, vector<64x100xbf16>,
    %c0_47 = arith.constant 0 : index
    %c2_48 = arith.constant 2 : index
    %40 = vector.load %arg6[%c0_47, %c2_48] : memref<64x122xbf16, #tpu.memory_space<vmem>>, vector<64x100xbf16>
    %c128 = arith.constant 128 : index
    %c0_49 = arith.constant 0 : index
    %41 = vector.load %arg13[%c128, %c0_49] : memref<576x1156xbf16, #tpu.memory_space<vmem>>, vector<64x100xbf16>
    tpu.vector_store %arg13[%c128, %c0_49], %40 {strides = array<i32>} : memref<576x1156xbf16, #tpu.memory_space<vmem>>, vector<64x100xbf16>,
    %c0_50 = arith.constant 0 : index
    %c10 = arith.constant 10 : index
    %42 = vector.load %arg6[%c0_50, %c10] : memref<64x122xbf16, #tpu.memory_space<vmem>>, vector<64x100xbf16>
    %c192 = arith.constant 192 : index
    %c0_51 = arith.constant 0 : index
    %43 = vector.load %arg13[%c192, %c0_51] : memref<576x1156xbf16, #tpu.memory_space<vmem>>, vector<64x100xbf16>
    tpu.vector_store %arg13[%c192, %c0_51], %42 {strides = array<i32>} : memref<576x1156xbf16, #tpu.memory_space<vmem>>, vector<64x100xbf16>,
    %c0_52 = arith.constant 0 : index
    %c11_53 = arith.constant 11 : index
    %44 = vector.load %arg6[%c0_52, %c11_53] : memref<64x122xbf16, #tpu.memory_space<vmem>>, vector<64x100xbf16>
    %c256 = arith.constant 256 : index
    %c0_54 = arith.constant 0 : index
    %45 = vector.load %arg13[%c256, %c0_54] : memref<576x1156xbf16, #tpu.memory_space<vmem>>, vector<64x100xbf16>
    tpu.vector_store %arg13[%c256, %c0_54], %44 {strides = array<i32>} : memref<576x1156xbf16, #tpu.memory_space<vmem>>, vector<64x100xbf16>,
    %c0_55 = arith.constant 0 : index
    %c12 = arith.constant 12 : index
    %46 = vector.load %arg6[%c0_55, %c12] : memref<64x122xbf16, #tpu.memory_space<vmem>>, vector<64x100xbf16>
    %c320 = arith.constant 320 : index
    %c0_56 = arith.constant 0 : index
    %47 = vector.load %arg13[%c320, %c0_56] : memref<576x1156xbf16, #tpu.memory_space<vmem>>, vector<64x100xbf16>
    tpu.vector_store %arg13[%c320, %c0_56], %46 {strides = array<i32>} : memref<576x1156xbf16, #tpu.memory_space<vmem>>, vector<64x100xbf16>,
    %c0_57 = arith.constant 0 : index
    %c20 = arith.constant 20 : index
    %48 = vector.load %arg6[%c0_57, %c20] : memref<64x122xbf16, #tpu.memory_space<vmem>>, vector<64x100xbf16>
    %c384 = arith.constant 384 : index
    %c0_58 = arith.constant 0 : index
    %49 = vector.load %arg13[%c384, %c0_58] : memref<576x1156xbf16, #tpu.memory_space<vmem>>, vector<64x100xbf16>
    tpu.vector_store %arg13[%c384, %c0_58], %48 {strides = array<i32>} : memref<576x1156xbf16, #tpu.memory_space<vmem>>, vector<64x100xbf16>,
    %c0_59 = arith.constant 0 : index
    %c21 = arith.constant 21 : index
    %50 = vector.load %arg6[%c0_59, %c21] : memref<64x122xbf16, #tpu.memory_space<vmem>>, vector<64x100xbf16>
    %c448 = arith.constant 448 : index
    %c0_60 = arith.constant 0 : index
    %51 = vector.load %arg13[%c448, %c0_60] : memref<576x1156xbf16, #tpu.memory_space<vmem>>, vector<64x100xbf16>
    tpu.vector_store %arg13[%c448, %c0_60], %50 {strides = array<i32>} : memref<576x1156xbf16, #tpu.memory_space<vmem>>, vector<64x100xbf16>,
    %c0_61 = arith.constant 0 : index
    %c22 = arith.constant 22 : index
    %52 = vector.load %arg6[%c0_61, %c22] : memref<64x122xbf16, #tpu.memory_space<vmem>>, vector<64x100xbf16>
    %c512 = arith.constant 512 : index
    %c0_62 = arith.constant 0 : index
    %53 = vector.load %arg13[%c512, %c0_62] : memref<576x1156xbf16, #tpu.memory_space<vmem>>, vector<64x100xbf16>
    tpu.vector_store %arg13[%c512, %c0_62], %52 {strides = array<i32>} : memref<576x1156xbf16, #tpu.memory_space<vmem>>, vector<64x100xbf16>,
    %c0_63 = arith.constant 0 : index
    %c0_64 = arith.constant 0 : index
    %54 = vector.load %arg13[%c0_63, %c0_64] : memref<576x1156xbf16, #tpu.memory_space<vmem>>, vector<576x100xbf16>
    %cst_65 = arith.constant dense<0.000000e+00> : vector<32x100xf32>
    %55 = tpu.matmul %33, %54, %cst_65 {dimension_numbers = #tpu.dot_dimension_numbers<[1], [0], [0], [1], [0, 0, 1, 1], [], []>} : vector<32x576xbf16>, vector<576x100xbf16>, vector<32x100xf32> -> vector<32x100xf32>
    %56 = vector.broadcast %34 : vector<32x1xf32> to vector<32x100xf32>
    %57 = arith.mulf %55, %56 : vector<32x100xf32>
    %58 = vector.broadcast %35 : vector<32x1xf32> to vector<32x100xf32>
    %59 = arith.addf %57, %58 : vector<32x100xf32>
    %cst_66 = arith.constant 0.000000e+00 : f32
    %60 = vector.broadcast %cst_66 : f32 to vector<32x100xf32>
    %61 = arith.maximumf %59, %60 : vector<32x100xf32>
    %62 = vector.broadcast %16 : vector<1x100xf32> to vector<32x100xf32>
    %63 = arith.mulf %61, %62 : vector<32x100xf32>
    %64 = arith.truncf %63 : vector<32x100xf32> to vector<32x100xbf16>
    %c0_67 = arith.constant 0 : index
    %c11_68 = arith.constant 11 : index
    %65 = vector.load %arg7[%c0_67, %c11_68] : memref<32x122xbf16, #tpu.memory_space<vmem>>, vector<32x100xbf16>
    tpu.vector_store %arg7[%c0_67, %c11_68], %64 {strides = array<i32>} : memref<32x122xbf16, #tpu.memory_space<vmem>>, vector<32x100xbf16>,
    %c0_69 = arith.constant 0 : index
    %c640 = arith.constant 640 : index
    %66 = vector.load %arg2[%c0_69, %c640] : memref<32x2944xbf16, #tpu.memory_space<vmem>>, vector<32x64xbf16>
    %67 = arith.extf %66 : vector<32x64xbf16> to vector<32x64xf32>
    %cst_70 = arith.constant dense<0.000000e+00> : vector<32x100xf32>
    %68 = tpu.matmul %67, %20, %cst_70 {dimension_numbers = #tpu.dot_dimension_numbers<[1], [0], [0], [1], [0, 0, 1, 1], [], []>} : vector<32x64xf32>, vector<64x100xf32>, vector<32x100xf32> -> vector<32x100xf32>
    %c0_71 = arith.constant 0 : index
    %c4 = arith.constant 4 : index
    %69 = vector.load %arg3[%c0_71, %c4] : memref<64x18xf32, #tpu.memory_space<vmem>>, vector<32x1xf32>
    %70 = vector.broadcast %69 : vector<32x1xf32> to vector<32x100xf32>
    %71 = arith.mulf %68, %70 : vector<32x100xf32>
    %c0_72 = arith.constant 0 : index
    %c5 = arith.constant 5 : index
    %72 = vector.load %arg3[%c0_72, %c5] : memref<64x18xf32, #tpu.memory_space<vmem>>, vector<32x1xf32>
    %73 = vector.broadcast %72 : vector<32x1xf32> to vector<32x100xf32>
    %74 = arith.addf %71, %73 : vector<32x100xf32>
    %75 = vector.broadcast %16 : vector<1x100xf32> to vector<32x100xf32>
    %76 = arith.mulf %74, %75 : vector<32x100xf32>
    %c0_73 = arith.constant 0 : index
    %c768 = arith.constant 768 : index
    %77 = vector.load %arg2[%c0_73, %c768] : memref<32x2944xbf16, #tpu.memory_space<vmem>>, vector<32x288xbf16>
    %c0_74 = arith.constant 0 : index
    %c6 = arith.constant 6 : index
    %78 = vector.load %arg3[%c0_74, %c6] : memref<64x18xf32, #tpu.memory_space<vmem>>, vector<32x1xf32>
    %c0_75 = arith.constant 0 : index
    %c0_76 = arith.constant 0 : index
    %79 = vector.load %arg7[%c0_75, %c0_76] : memref<32x122xbf16, #tpu.memory_space<vmem>>, vector<32x100xbf16>
    %c0_77 = arith.constant 0 : index
    %c0_78 = arith.constant 0 : index
    %80 = vector.load %arg13[%c0_77, %c0_78] : memref<576x1156xbf16, #tpu.memory_space<vmem>>, vector<32x100xbf16>
    tpu.vector_store %arg13[%c0_77, %c0_78], %79 {strides = array<i32>} : memref<576x1156xbf16, #tpu.memory_space<vmem>>, vector<32x100xbf16>,
    %c0_79 = arith.constant 0 : index
    %c1_80 = arith.constant 1 : index
    %81 = vector.load %arg7[%c0_79, %c1_80] : memref<32x122xbf16, #tpu.memory_space<vmem>>, vector<32x100xbf16>
    %c32 = arith.constant 32 : index
    %c0_81 = arith.constant 0 : index
    %82 = vector.load %arg13[%c32, %c0_81] : memref<576x1156xbf16, #tpu.memory_space<vmem>>, vector<32x100xbf16>
    tpu.vector_store %arg13[%c32, %c0_81], %81 {strides = array<i32>} : memref<576x1156xbf16, #tpu.memory_space<vmem>>, vector<32x100xbf16>,
    %c0_82 = arith.constant 0 : index
    %c2_83 = arith.constant 2 : index
    %83 = vector.load %arg7[%c0_82, %c2_83] : memref<32x122xbf16, #tpu.memory_space<vmem>>, vector<32x100xbf16>
    %c64_84 = arith.constant 64 : index
    %c0_85 = arith.constant 0 : index
    %84 = vector.load %arg13[%c64_84, %c0_85] : memref<576x1156xbf16, #tpu.memory_space<vmem>>, vector<32x100xbf16>
    tpu.vector_store %arg13[%c64_84, %c0_85], %83 {strides = array<i32>} : memref<576x1156xbf16, #tpu.memory_space<vmem>>, vector<32x100xbf16>,
    %c0_86 = arith.constant 0 : index
    %c10_87 = arith.constant 10 : index
    %85 = vector.load %arg7[%c0_86, %c10_87] : memref<32x122xbf16, #tpu.memory_space<vmem>>, vector<32x100xbf16>
    %c96 = arith.constant 96 : index
    %c0_88 = arith.constant 0 : index
    %86 = vector.load %arg13[%c96, %c0_88] : memref<576x1156xbf16, #tpu.memory_space<vmem>>, vector<32x100xbf16>
    tpu.vector_store %arg13[%c96, %c0_88], %85 {strides = array<i32>} : memref<576x1156xbf16, #tpu.memory_space<vmem>>, vector<32x100xbf16>,
    %c0_89 = arith.constant 0 : index
    %c11_90 = arith.constant 11 : index
    %87 = vector.load %arg7[%c0_89, %c11_90] : memref<32x122xbf16, #tpu.memory_space<vmem>>, vector<32x100xbf16>
    %c128_91 = arith.constant 128 : index
    %c0_92 = arith.constant 0 : index
    %88 = vector.load %arg13[%c128_91, %c0_92] : memref<576x1156xbf16, #tpu.memory_space<vmem>>, vector<32x100xbf16>
    tpu.vector_store %arg13[%c128_91, %c0_92], %87 {strides = array<i32>} : memref<576x1156xbf16, #tpu.memory_space<vmem>>, vector<32x100xbf16>,
    %c0_93 = arith.constant 0 : index
    %c12_94 = arith.constant 12 : index
    %89 = vector.load %arg7[%c0_93, %c12_94] : memref<32x122xbf16, #tpu.memory_space<vmem>>, vector<32x100xbf16>
    %c160 = arith.constant 160 : index
    %c0_95 = arith.constant 0 : index
    %90 = vector.load %arg13[%c160, %c0_95] : memref<576x1156xbf16, #tpu.memory_space<vmem>>, vector<32x100xbf16>
    tpu.vector_store %arg13[%c160, %c0_95], %89 {strides = array<i32>} : memref<576x1156xbf16, #tpu.memory_space<vmem>>, vector<32x100xbf16>,
    %c0_96 = arith.constant 0 : index
    %c20_97 = arith.constant 20 : index
    %91 = vector.load %arg7[%c0_96, %c20_97] : memref<32x122xbf16, #tpu.memory_space<vmem>>, vector<32x100xbf16>
    %c192_98 = arith.constant 192 : index
    %c0_99 = arith.constant 0 : index
    %92 = vector.load %arg13[%c192_98, %c0_99] : memref<576x1156xbf16, #tpu.memory_space<vmem>>, vector<32x100xbf16>
    tpu.vector_store %arg13[%c192_98, %c0_99], %91 {strides = array<i32>} : memref<576x1156xbf16, #tpu.memory_space<vmem>>, vector<32x100xbf16>,
    %c0_100 = arith.constant 0 : index
    %c21_101 = arith.constant 21 : index
    %93 = vector.load %arg7[%c0_100, %c21_101] : memref<32x122xbf16, #tpu.memory_space<vmem>>, vector<32x100xbf16>
    %c224 = arith.constant 224 : index
    %c0_102 = arith.constant 0 : index
    %94 = vector.load %arg13[%c224, %c0_102] : memref<576x1156xbf16, #tpu.memory_space<vmem>>, vector<32x100xbf16>
    tpu.vector_store %arg13[%c224, %c0_102], %93 {strides = array<i32>} : memref<576x1156xbf16, #tpu.memory_space<vmem>>, vector<32x100xbf16>,
    %c0_103 = arith.constant 0 : index
    %c22_104 = arith.constant 22 : index
    %95 = vector.load %arg7[%c0_103, %c22_104] : memref<32x122xbf16, #tpu.memory_space<vmem>>, vector<32x100xbf16>
    %c256_105 = arith.constant 256 : index
    %c0_106 = arith.constant 0 : index
    %96 = vector.load %arg13[%c256_105, %c0_106] : memref<576x1156xbf16, #tpu.memory_space<vmem>>, vector<32x100xbf16>
    tpu.vector_store %arg13[%c256_105, %c0_106], %95 {strides = array<i32>} : memref<576x1156xbf16, #tpu.memory_space<vmem>>, vector<32x100xbf16>,
    %c0_107 = arith.constant 0 : index
    %c0_108 = arith.constant 0 : index
    %97 = vector.load %arg13[%c0_107, %c0_108] : memref<576x1156xbf16, #tpu.memory_space<vmem>>, vector<288x100xbf16>
    %cst_109 = arith.constant dense<0.000000e+00> : vector<32x100xf32>
    %98 = tpu.matmul %77, %97, %cst_109 {dimension_numbers = #tpu.dot_dimension_numbers<[1], [0], [0], [1], [0, 0, 1, 1], [], []>} : vector<32x288xbf16>, vector<288x100xbf16>, vector<32x100xf32> -> vector<32x100xf32>
    %99 = vector.broadcast %78 : vector<32x1xf32> to vector<32x100xf32>
    %100 = arith.addf %98, %99 : vector<32x100xf32>
    %101 = arith.addf %100, %76 : vector<32x100xf32>
    %cst_110 = arith.constant 0.000000e+00 : f32
    %102 = vector.broadcast %cst_110 : f32 to vector<32x100xf32>
    %103 = arith.maximumf %101, %102 : vector<32x100xf32>
    %104 = vector.broadcast %16 : vector<1x100xf32> to vector<32x100xf32>
    %105 = arith.mulf %103, %104 : vector<32x100xf32>
    %c0_111 = arith.constant 0 : index
    %c2688 = arith.constant 2688 : index
    %106 = vector.load %arg2[%c0_111, %c2688] : memref<32x2944xbf16, #tpu.memory_space<vmem>>, vector<10x18xbf16>
    %107 = arith.extf %106 : vector<10x18xbf16> to vector<10x18xf32>
    %108 = vector.extract_strided_slice %105 {offsets = [0, 10], sizes = [32, 10], strides = [1, 1]} : vector<32x100xf32> to vector<32x10xf32>
    %cst_112 = arith.constant dense<0.000000e+00> : vector<32x18xf32>
    %109 = tpu.matmul %108, %107, %cst_112 {dimension_numbers = #tpu.dot_dimension_numbers<[1], [0], [0], [1], [0, 0, 1, 1], [], []>} : vector<32x10xf32>, vector<10x18xf32>, vector<32x18xf32> -> vector<32x18xf32>
    %110 = arith.truncf %109 : vector<32x18xf32> to vector<32x18xbf16>
    %c0_113 = arith.constant 0 : index
    %c37 = arith.constant 37 : index
    %111 = vector.load %arg8[%c0_113, %c37] : memref<32x362xbf16, #tpu.memory_space<vmem>>, vector<32x18xbf16>
    tpu.vector_store %arg8[%c0_113, %c37], %110 {strides = array<i32>} : memref<32x362xbf16, #tpu.memory_space<vmem>>, vector<32x18xbf16>,
    %112 = vector.extract_strided_slice %105 {offsets = [0, 20], sizes = [32, 10], strides = [1, 1]} : vector<32x100xf32> to vector<32x10xf32>
    %cst_114 = arith.constant dense<0.000000e+00> : vector<32x18xf32>
    %113 = tpu.matmul %112, %107, %cst_114 {dimension_numbers = #tpu.dot_dimension_numbers<[1], [0], [0], [1], [0, 0, 1, 1], [], []>} : vector<32x10xf32>, vector<10x18xf32>, vector<32x18xf32> -> vector<32x18xf32>
    %114 = arith.truncf %113 : vector<32x18xf32> to vector<32x18xbf16>
    %c0_115 = arith.constant 0 : index
    %c73 = arith.constant 73 : index
    %115 = vector.load %arg8[%c0_115, %c73] : memref<32x362xbf16, #tpu.memory_space<vmem>>, vector<32x18xbf16>
    tpu.vector_store %arg8[%c0_115, %c73], %114 {strides = array<i32>} : memref<32x362xbf16, #tpu.memory_space<vmem>>, vector<32x18xbf16>,
    %116 = vector.extract_strided_slice %105 {offsets = [0, 30], sizes = [32, 10], strides = [1, 1]} : vector<32x100xf32> to vector<32x10xf32>
    %cst_116 = arith.constant dense<0.000000e+00> : vector<32x18xf32>
    %117 = tpu.matmul %116, %107, %cst_116 {dimension_numbers = #tpu.dot_dimension_numbers<[1], [0], [0], [1], [0, 0, 1, 1], [], []>} : vector<32x10xf32>, vector<10x18xf32>, vector<32x18xf32> -> vector<32x18xf32>
    %118 = arith.truncf %117 : vector<32x18xf32> to vector<32x18xbf16>
    %c0_117 = arith.constant 0 : index
    %c109 = arith.constant 109 : index
    %119 = vector.load %arg8[%c0_117, %c109] : memref<32x362xbf16, #tpu.memory_space<vmem>>, vector<32x18xbf16>
    tpu.vector_store %arg8[%c0_117, %c109], %118 {strides = array<i32>} : memref<32x362xbf16, #tpu.memory_space<vmem>>, vector<32x18xbf16>,
    %120 = vector.extract_strided_slice %105 {offsets = [0, 40], sizes = [32, 10], strides = [1, 1]} : vector<32x100xf32> to vector<32x10xf32>
    %cst_118 = arith.constant dense<0.000000e+00> : vector<32x18xf32>
    %121 = tpu.matmul %120, %107, %cst_118 {dimension_numbers = #tpu.dot_dimension_numbers<[1], [0], [0], [1], [0, 0, 1, 1], [], []>} : vector<32x10xf32>, vector<10x18xf32>, vector<32x18xf32> -> vector<32x18xf32>
    %122 = arith.truncf %121 : vector<32x18xf32> to vector<32x18xbf16>
    %c0_119 = arith.constant 0 : index
    %c145 = arith.constant 145 : index
    %123 = vector.load %arg8[%c0_119, %c145] : memref<32x362xbf16, #tpu.memory_space<vmem>>, vector<32x18xbf16>
    tpu.vector_store %arg8[%c0_119, %c145], %122 {strides = array<i32>} : memref<32x362xbf16, #tpu.memory_space<vmem>>, vector<32x18xbf16>,
    %124 = vector.extract_strided_slice %105 {offsets = [0, 50], sizes = [32, 10], strides = [1, 1]} : vector<32x100xf32> to vector<32x10xf32>
    %cst_120 = arith.constant dense<0.000000e+00> : vector<32x18xf32>
    %125 = tpu.matmul %124, %107, %cst_120 {dimension_numbers = #tpu.dot_dimension_numbers<[1], [0], [0], [1], [0, 0, 1, 1], [], []>} : vector<32x10xf32>, vector<10x18xf32>, vector<32x18xf32> -> vector<32x18xf32>
    %126 = arith.truncf %125 : vector<32x18xf32> to vector<32x18xbf16>
    %c0_121 = arith.constant 0 : index
    %c181 = arith.constant 181 : index
    %127 = vector.load %arg8[%c0_121, %c181] : memref<32x362xbf16, #tpu.memory_space<vmem>>, vector<32x18xbf16>
    tpu.vector_store %arg8[%c0_121, %c181], %126 {strides = array<i32>} : memref<32x362xbf16, #tpu.memory_space<vmem>>, vector<32x18xbf16>,
    %128 = vector.extract_strided_slice %105 {offsets = [0, 60], sizes = [32, 10], strides = [1, 1]} : vector<32x100xf32> to vector<32x10xf32>
    %cst_122 = arith.constant dense<0.000000e+00> : vector<32x18xf32>
    %129 = tpu.matmul %128, %107, %cst_122 {dimension_numbers = #tpu.dot_dimension_numbers<[1], [0], [0], [1], [0, 0, 1, 1], [], []>} : vector<32x10xf32>, vector<10x18xf32>, vector<32x18xf32> -> vector<32x18xf32>
    %130 = arith.truncf %129 : vector<32x18xf32> to vector<32x18xbf16>
    %c0_123 = arith.constant 0 : index
    %c217 = arith.constant 217 : index
    %131 = vector.load %arg8[%c0_123, %c217] : memref<32x362xbf16, #tpu.memory_space<vmem>>, vector<32x18xbf16>
    tpu.vector_store %arg8[%c0_123, %c217], %130 {strides = array<i32>} : memref<32x362xbf16, #tpu.memory_space<vmem>>, vector<32x18xbf16>,
    %132 = vector.extract_strided_slice %105 {offsets = [0, 70], sizes = [32, 10], strides = [1, 1]} : vector<32x100xf32> to vector<32x10xf32>
    %cst_124 = arith.constant dense<0.000000e+00> : vector<32x18xf32>
    %133 = tpu.matmul %132, %107, %cst_124 {dimension_numbers = #tpu.dot_dimension_numbers<[1], [0], [0], [1], [0, 0, 1, 1], [], []>} : vector<32x10xf32>, vector<10x18xf32>, vector<32x18xf32> -> vector<32x18xf32>
    %134 = arith.truncf %133 : vector<32x18xf32> to vector<32x18xbf16>
    %c0_125 = arith.constant 0 : index
    %c253 = arith.constant 253 : index
    %135 = vector.load %arg8[%c0_125, %c253] : memref<32x362xbf16, #tpu.memory_space<vmem>>, vector<32x18xbf16>
    tpu.vector_store %arg8[%c0_125, %c253], %134 {strides = array<i32>} : memref<32x362xbf16, #tpu.memory_space<vmem>>, vector<32x18xbf16>,
    %136 = vector.extract_strided_slice %105 {offsets = [0, 80], sizes = [32, 10], strides = [1, 1]} : vector<32x100xf32> to vector<32x10xf32>
    %cst_126 = arith.constant dense<0.000000e+00> : vector<32x18xf32>
    %137 = tpu.matmul %136, %107, %cst_126 {dimension_numbers = #tpu.dot_dimension_numbers<[1], [0], [0], [1], [0, 0, 1, 1], [], []>} : vector<32x10xf32>, vector<10x18xf32>, vector<32x18xf32> -> vector<32x18xf32>
    %138 = arith.truncf %137 : vector<32x18xf32> to vector<32x18xbf16>
    %c0_127 = arith.constant 0 : index
    %c289 = arith.constant 289 : index
    %139 = vector.load %arg8[%c0_127, %c289] : memref<32x362xbf16, #tpu.memory_space<vmem>>, vector<32x18xbf16>
    tpu.vector_store %arg8[%c0_127, %c289], %138 {strides = array<i32>} : memref<32x362xbf16, #tpu.memory_space<vmem>>, vector<32x18xbf16>,
    %c0_128 = arith.constant 0 : index
    %c1152 = arith.constant 1152 : index
    %140 = vector.load %arg2[%c0_128, %c1152] : memref<32x2944xbf16, #tpu.memory_space<vmem>>, vector<32x288xbf16>
    %c0_129 = arith.constant 0 : index
    %c7 = arith.constant 7 : index
    %141 = vector.load %arg3[%c0_129, %c7] : memref<64x18xf32, #tpu.memory_space<vmem>>, vector<32x1xf32>
    %c0_130 = arith.constant 0 : index
    %c8 = arith.constant 8 : index
    %142 = vector.load %arg3[%c0_130, %c8] : memref<64x18xf32, #tpu.memory_space<vmem>>, vector<32x1xf32>
    %c0_131 = arith.constant 0 : index
    %c0_132 = arith.constant 0 : index
    %143 = vector.load %arg8[%c0_131, %c0_132] : memref<32x362xbf16, #tpu.memory_space<vmem>>, vector<32x324xbf16>
    %c0_133 = arith.constant 0 : index
    %c0_134 = arith.constant 0 : index
    %144 = vector.load %arg13[%c0_133, %c0_134] : memref<576x1156xbf16, #tpu.memory_space<vmem>>, vector<32x324xbf16>
    tpu.vector_store %arg13[%c0_133, %c0_134], %143 {strides = array<i32>} : memref<576x1156xbf16, #tpu.memory_space<vmem>>, vector<32x324xbf16>,
    %c0_135 = arith.constant 0 : index
    %c1_136 = arith.constant 1 : index
    %145 = vector.load %arg8[%c0_135, %c1_136] : memref<32x362xbf16, #tpu.memory_space<vmem>>, vector<32x324xbf16>
    %c32_137 = arith.constant 32 : index
    %c0_138 = arith.constant 0 : index
    %146 = vector.load %arg13[%c32_137, %c0_138] : memref<576x1156xbf16, #tpu.memory_space<vmem>>, vector<32x324xbf16>
    tpu.vector_store %arg13[%c32_137, %c0_138], %145 {strides = array<i32>} : memref<576x1156xbf16, #tpu.memory_space<vmem>>, vector<32x324xbf16>,
    %c0_139 = arith.constant 0 : index
    %c2_140 = arith.constant 2 : index
    %147 = vector.load %arg8[%c0_139, %c2_140] : memref<32x362xbf16, #tpu.memory_space<vmem>>, vector<32x324xbf16>
    %c64_141 = arith.constant 64 : index
    %c0_142 = arith.constant 0 : index
    %148 = vector.load %arg13[%c64_141, %c0_142] : memref<576x1156xbf16, #tpu.memory_space<vmem>>, vector<32x324xbf16>
    tpu.vector_store %arg13[%c64_141, %c0_142], %147 {strides = array<i32>} : memref<576x1156xbf16, #tpu.memory_space<vmem>>, vector<32x324xbf16>,
    %c0_143 = arith.constant 0 : index
    %c18 = arith.constant 18 : index
    %149 = vector.load %arg8[%c0_143, %c18] : memref<32x362xbf16, #tpu.memory_space<vmem>>, vector<32x324xbf16>
    %c96_144 = arith.constant 96 : index
    %c0_145 = arith.constant 0 : index
    %150 = vector.load %arg13[%c96_144, %c0_145] : memref<576x1156xbf16, #tpu.memory_space<vmem>>, vector<32x324xbf16>
    tpu.vector_store %arg13[%c96_144, %c0_145], %149 {strides = array<i32>} : memref<576x1156xbf16, #tpu.memory_space<vmem>>, vector<32x324xbf16>,
    %c0_146 = arith.constant 0 : index
    %c19 = arith.constant 19 : index
    %151 = vector.load %arg8[%c0_146, %c19] : memref<32x362xbf16, #tpu.memory_space<vmem>>, vector<32x324xbf16>
    %c128_147 = arith.constant 128 : index
    %c0_148 = arith.constant 0 : index
    %152 = vector.load %arg13[%c128_147, %c0_148] : memref<576x1156xbf16, #tpu.memory_space<vmem>>, vector<32x324xbf16>
    tpu.vector_store %arg13[%c128_147, %c0_148], %151 {strides = array<i32>} : memref<576x1156xbf16, #tpu.memory_space<vmem>>, vector<32x324xbf16>,
    %c0_149 = arith.constant 0 : index
    %c20_150 = arith.constant 20 : index
    %153 = vector.load %arg8[%c0_149, %c20_150] : memref<32x362xbf16, #tpu.memory_space<vmem>>, vector<32x324xbf16>
    %c160_151 = arith.constant 160 : index
    %c0_152 = arith.constant 0 : index
    %154 = vector.load %arg13[%c160_151, %c0_152] : memref<576x1156xbf16, #tpu.memory_space<vmem>>, vector<32x324xbf16>
    tpu.vector_store %arg13[%c160_151, %c0_152], %153 {strides = array<i32>} : memref<576x1156xbf16, #tpu.memory_space<vmem>>, vector<32x324xbf16>,
    %c0_153 = arith.constant 0 : index
    %c36 = arith.constant 36 : index
    %155 = vector.load %arg8[%c0_153, %c36] : memref<32x362xbf16, #tpu.memory_space<vmem>>, vector<32x324xbf16>
    %c192_154 = arith.constant 192 : index
    %c0_155 = arith.constant 0 : index
    %156 = vector.load %arg13[%c192_154, %c0_155] : memref<576x1156xbf16, #tpu.memory_space<vmem>>, vector<32x324xbf16>
    tpu.vector_store %arg13[%c192_154, %c0_155], %155 {strides = array<i32>} : memref<576x1156xbf16, #tpu.memory_space<vmem>>, vector<32x324xbf16>,
    %c0_156 = arith.constant 0 : index
    %c37_157 = arith.constant 37 : index
    %157 = vector.load %arg8[%c0_156, %c37_157] : memref<32x362xbf16, #tpu.memory_space<vmem>>, vector<32x324xbf16>
    %c224_158 = arith.constant 224 : index
    %c0_159 = arith.constant 0 : index
    %158 = vector.load %arg13[%c224_158, %c0_159] : memref<576x1156xbf16, #tpu.memory_space<vmem>>, vector<32x324xbf16>
    tpu.vector_store %arg13[%c224_158, %c0_159], %157 {strides = array<i32>} : memref<576x1156xbf16, #tpu.memory_space<vmem>>, vector<32x324xbf16>,
    %c0_160 = arith.constant 0 : index
    %c38 = arith.constant 38 : index
    %159 = vector.load %arg8[%c0_160, %c38] : memref<32x362xbf16, #tpu.memory_space<vmem>>, vector<32x324xbf16>
    %c256_161 = arith.constant 256 : index
    %c0_162 = arith.constant 0 : index
    %160 = vector.load %arg13[%c256_161, %c0_162] : memref<576x1156xbf16, #tpu.memory_space<vmem>>, vector<32x324xbf16>
    tpu.vector_store %arg13[%c256_161, %c0_162], %159 {strides = array<i32>} : memref<576x1156xbf16, #tpu.memory_space<vmem>>, vector<32x324xbf16>,
    %c0_163 = arith.constant 0 : index
    %c0_164 = arith.constant 0 : index
    %161 = vector.load %arg13[%c0_163, %c0_164] : memref<576x1156xbf16, #tpu.memory_space<vmem>>, vector<288x324xbf16>
    %cst_165 = arith.constant dense<0.000000e+00> : vector<32x324xf32>
    %162 = tpu.matmul %140, %161, %cst_165 {dimension_numbers = #tpu.dot_dimension_numbers<[1], [0], [0], [1], [0, 0, 1, 1], [], []>} : vector<32x288xbf16>, vector<288x324xbf16>, vector<32x324xf32> -> vector<32x324xf32>
    %163 = vector.broadcast %141 : vector<32x1xf32> to vector<32x324xf32>
    %164 = arith.mulf %162, %163 : vector<32x324xf32>
    %165 = vector.broadcast %142 : vector<32x1xf32> to vector<32x324xf32>
    %166 = arith.addf %164, %165 : vector<32x324xf32>
    %cst_166 = arith.constant 0.000000e+00 : f32
    %167 = vector.broadcast %cst_166 : f32 to vector<32x324xf32>
    %168 = arith.maximumf %166, %167 : vector<32x324xf32>
    %169 = vector.broadcast %17 : vector<1x324xf32> to vector<32x324xf32>
    %170 = arith.mulf %168, %169 : vector<32x324xf32>
    %c0_167 = arith.constant 0 : index
    %c2816 = arith.constant 2816 : index
    %171 = vector.load %arg2[%c0_167, %c2816] : memref<32x2944xbf16, #tpu.memory_space<vmem>>, vector<18x34xbf16>
    %172 = arith.extf %171 : vector<18x34xbf16> to vector<18x34xf32>
    %173 = vector.extract_strided_slice %170 {offsets = [0, 18], sizes = [32, 18], strides = [1, 1]} : vector<32x324xf32> to vector<32x18xf32>
    %cst_168 = arith.constant dense<0.000000e+00> : vector<32x34xf32>
    %174 = tpu.matmul %173, %172, %cst_168 {dimension_numbers = #tpu.dot_dimension_numbers<[1], [0], [0], [1], [0, 0, 1, 1], [], []>} : vector<32x18xf32>, vector<18x34xf32>, vector<32x34xf32> -> vector<32x34xf32>
    %175 = arith.truncf %174 : vector<32x34xf32> to vector<32x34xbf16>
    %c0_169 = arith.constant 0 : index
    %c69 = arith.constant 69 : index
    %176 = vector.load %arg9[%c0_169, %c69] : memref<32x1226xbf16, #tpu.memory_space<vmem>>, vector<32x34xbf16>
    tpu.vector_store %arg9[%c0_169, %c69], %175 {strides = array<i32>} : memref<32x1226xbf16, #tpu.memory_space<vmem>>, vector<32x34xbf16>,
    %177 = vector.extract_strided_slice %170 {offsets = [0, 36], sizes = [32, 18], strides = [1, 1]} : vector<32x324xf32> to vector<32x18xf32>
    %cst_170 = arith.constant dense<0.000000e+00> : vector<32x34xf32>
    %178 = tpu.matmul %177, %172, %cst_170 {dimension_numbers = #tpu.dot_dimension_numbers<[1], [0], [0], [1], [0, 0, 1, 1], [], []>} : vector<32x18xf32>, vector<18x34xf32>, vector<32x34xf32> -> vector<32x34xf32>
    %179 = arith.truncf %178 : vector<32x34xf32> to vector<32x34xbf16>
    %c0_171 = arith.constant 0 : index
    %c137 = arith.constant 137 : index
    %180 = vector.load %arg9[%c0_171, %c137] : memref<32x1226xbf16, #tpu.memory_space<vmem>>, vector<32x34xbf16>
    tpu.vector_store %arg9[%c0_171, %c137], %179 {strides = array<i32>} : memref<32x1226xbf16, #tpu.memory_space<vmem>>, vector<32x34xbf16>,
    %181 = vector.extract_strided_slice %170 {offsets = [0, 54], sizes = [32, 18], strides = [1, 1]} : vector<32x324xf32> to vector<32x18xf32>
    %cst_172 = arith.constant dense<0.000000e+00> : vector<32x34xf32>
    %182 = tpu.matmul %181, %172, %cst_172 {dimension_numbers = #tpu.dot_dimension_numbers<[1], [0], [0], [1], [0, 0, 1, 1], [], []>} : vector<32x18xf32>, vector<18x34xf32>, vector<32x34xf32> -> vector<32x34xf32>
    %183 = arith.truncf %182 : vector<32x34xf32> to vector<32x34xbf16>
    %c0_173 = arith.constant 0 : index
    %c205 = arith.constant 205 : index
    %184 = vector.load %arg9[%c0_173, %c205] : memref<32x1226xbf16, #tpu.memory_space<vmem>>, vector<32x34xbf16>
    tpu.vector_store %arg9[%c0_173, %c205], %183 {strides = array<i32>} : memref<32x1226xbf16, #tpu.memory_space<vmem>>, vector<32x34xbf16>,
    %185 = vector.extract_strided_slice %170 {offsets = [0, 72], sizes = [32, 18], strides = [1, 1]} : vector<32x324xf32> to vector<32x18xf32>
    %cst_174 = arith.constant dense<0.000000e+00> : vector<32x34xf32>
    %186 = tpu.matmul %185, %172, %cst_174 {dimension_numbers = #tpu.dot_dimension_numbers<[1], [0], [0], [1], [0, 0, 1, 1], [], []>} : vector<32x18xf32>, vector<18x34xf32>, vector<32x34xf32> -> vector<32x34xf32>
    %187 = arith.truncf %186 : vector<32x34xf32> to vector<32x34xbf16>
    %c0_175 = arith.constant 0 : index
    %c273 = arith.constant 273 : index
    %188 = vector.load %arg9[%c0_175, %c273] : memref<32x1226xbf16, #tpu.memory_space<vmem>>, vector<32x34xbf16>
    tpu.vector_store %arg9[%c0_175, %c273], %187 {strides = array<i32>} : memref<32x1226xbf16, #tpu.memory_space<vmem>>, vector<32x34xbf16>,
    %189 = vector.extract_strided_slice %170 {offsets = [0, 90], sizes = [32, 18], strides = [1, 1]} : vector<32x324xf32> to vector<32x18xf32>
    %cst_176 = arith.constant dense<0.000000e+00> : vector<32x34xf32>
    %190 = tpu.matmul %189, %172, %cst_176 {dimension_numbers = #tpu.dot_dimension_numbers<[1], [0], [0], [1], [0, 0, 1, 1], [], []>} : vector<32x18xf32>, vector<18x34xf32>, vector<32x34xf32> -> vector<32x34xf32>
    %191 = arith.truncf %190 : vector<32x34xf32> to vector<32x34xbf16>
    %c0_177 = arith.constant 0 : index
    %c341 = arith.constant 341 : index
    %192 = vector.load %arg9[%c0_177, %c341] : memref<32x1226xbf16, #tpu.memory_space<vmem>>, vector<32x34xbf16>
    tpu.vector_store %arg9[%c0_177, %c341], %191 {strides = array<i32>} : memref<32x1226xbf16, #tpu.memory_space<vmem>>, vector<32x34xbf16>,
    %193 = vector.extract_strided_slice %170 {offsets = [0, 108], sizes = [32, 18], strides = [1, 1]} : vector<32x324xf32> to vector<32x18xf32>
    %cst_178 = arith.constant dense<0.000000e+00> : vector<32x34xf32>
    %194 = tpu.matmul %193, %172, %cst_178 {dimension_numbers = #tpu.dot_dimension_numbers<[1], [0], [0], [1], [0, 0, 1, 1], [], []>} : vector<32x18xf32>, vector<18x34xf32>, vector<32x34xf32> -> vector<32x34xf32>
    %195 = arith.truncf %194 : vector<32x34xf32> to vector<32x34xbf16>
    %c0_179 = arith.constant 0 : index
    %c409 = arith.constant 409 : index
    %196 = vector.load %arg9[%c0_179, %c409] : memref<32x1226xbf16, #tpu.memory_space<vmem>>, vector<32x34xbf16>
    tpu.vector_store %arg9[%c0_179, %c409], %195 {strides = array<i32>} : memref<32x1226xbf16, #tpu.memory_space<vmem>>, vector<32x34xbf16>,
    %197 = vector.extract_strided_slice %170 {offsets = [0, 126], sizes = [32, 18], strides = [1, 1]} : vector<32x324xf32> to vector<32x18xf32>
    %cst_180 = arith.constant dense<0.000000e+00> : vector<32x34xf32>
    %198 = tpu.matmul %197, %172, %cst_180 {dimension_numbers = #tpu.dot_dimension_numbers<[1], [0], [0], [1], [0, 0, 1, 1], [], []>} : vector<32x18xf32>, vector<18x34xf32>, vector<32x34xf32> -> vector<32x34xf32>
    %199 = arith.truncf %198 : vector<32x34xf32> to vector<32x34xbf16>
    %c0_181 = arith.constant 0 : index
    %c477 = arith.constant 477 : index
    %200 = vector.load %arg9[%c0_181, %c477] : memref<32x1226xbf16, #tpu.memory_space<vmem>>, vector<32x34xbf16>
    tpu.vector_store %arg9[%c0_181, %c477], %199 {strides = array<i32>} : memref<32x1226xbf16, #tpu.memory_space<vmem>>, vector<32x34xbf16>,
    %201 = vector.extract_strided_slice %170 {offsets = [0, 144], sizes = [32, 18], strides = [1, 1]} : vector<32x324xf32> to vector<32x18xf32>
    %cst_182 = arith.constant dense<0.000000e+00> : vector<32x34xf32>
    %202 = tpu.matmul %201, %172, %cst_182 {dimension_numbers = #tpu.dot_dimension_numbers<[1], [0], [0], [1], [0, 0, 1, 1], [], []>} : vector<32x18xf32>, vector<18x34xf32>, vector<32x34xf32> -> vector<32x34xf32>
    %203 = arith.truncf %202 : vector<32x34xf32> to vector<32x34xbf16>
    %c0_183 = arith.constant 0 : index
    %c545 = arith.constant 545 : index
    %204 = vector.load %arg9[%c0_183, %c545] : memref<32x1226xbf16, #tpu.memory_space<vmem>>, vector<32x34xbf16>
    tpu.vector_store %arg9[%c0_183, %c545], %203 {strides = array<i32>} : memref<32x1226xbf16, #tpu.memory_space<vmem>>, vector<32x34xbf16>,
    %205 = vector.extract_strided_slice %170 {offsets = [0, 162], sizes = [32, 18], strides = [1, 1]} : vector<32x324xf32> to vector<32x18xf32>
    %cst_184 = arith.constant dense<0.000000e+00> : vector<32x34xf32>
    %206 = tpu.matmul %205, %172, %cst_184 {dimension_numbers = #tpu.dot_dimension_numbers<[1], [0], [0], [1], [0, 0, 1, 1], [], []>} : vector<32x18xf32>, vector<18x34xf32>, vector<32x34xf32> -> vector<32x34xf32>
    %207 = arith.truncf %206 : vector<32x34xf32> to vector<32x34xbf16>
    %c0_185 = arith.constant 0 : index
    %c613 = arith.constant 613 : index
    %208 = vector.load %arg9[%c0_185, %c613] : memref<32x1226xbf16, #tpu.memory_space<vmem>>, vector<32x34xbf16>
    tpu.vector_store %arg9[%c0_185, %c613], %207 {strides = array<i32>} : memref<32x1226xbf16, #tpu.memory_space<vmem>>, vector<32x34xbf16>,
    %209 = vector.extract_strided_slice %170 {offsets = [0, 180], sizes = [32, 18], strides = [1, 1]} : vector<32x324xf32> to vector<32x18xf32>
    %cst_186 = arith.constant dense<0.000000e+00> : vector<32x34xf32>
    %210 = tpu.matmul %209, %172, %cst_186 {dimension_numbers = #tpu.dot_dimension_numbers<[1], [0], [0], [1], [0, 0, 1, 1], [], []>} : vector<32x18xf32>, vector<18x34xf32>, vector<32x34xf32> -> vector<32x34xf32>
    %211 = arith.truncf %210 : vector<32x34xf32> to vector<32x34xbf16>
    %c0_187 = arith.constant 0 : index
    %c681 = arith.constant 681 : index
    %212 = vector.load %arg9[%c0_187, %c681] : memref<32x1226xbf16, #tpu.memory_space<vmem>>, vector<32x34xbf16>
    tpu.vector_store %arg9[%c0_187, %c681], %211 {strides = array<i32>} : memref<32x1226xbf16, #tpu.memory_space<vmem>>, vector<32x34xbf16>,
    %213 = vector.extract_strided_slice %170 {offsets = [0, 198], sizes = [32, 18], strides = [1, 1]} : vector<32x324xf32> to vector<32x18xf32>
    %cst_188 = arith.constant dense<0.000000e+00> : vector<32x34xf32>
    %214 = tpu.matmul %213, %172, %cst_188 {dimension_numbers = #tpu.dot_dimension_numbers<[1], [0], [0], [1], [0, 0, 1, 1], [], []>} : vector<32x18xf32>, vector<18x34xf32>, vector<32x34xf32> -> vector<32x34xf32>
    %215 = arith.truncf %214 : vector<32x34xf32> to vector<32x34xbf16>
    %c0_189 = arith.constant 0 : index
    %c749 = arith.constant 749 : index
    %216 = vector.load %arg9[%c0_189, %c749] : memref<32x1226xbf16, #tpu.memory_space<vmem>>, vector<32x34xbf16>
    tpu.vector_store %arg9[%c0_189, %c749], %215 {strides = array<i32>} : memref<32x1226xbf16, #tpu.memory_space<vmem>>, vector<32x34xbf16>,
    %217 = vector.extract_strided_slice %170 {offsets = [0, 216], sizes = [32, 18], strides = [1, 1]} : vector<32x324xf32> to vector<32x18xf32>
    %cst_190 = arith.constant dense<0.000000e+00> : vector<32x34xf32>
    %218 = tpu.matmul %217, %172, %cst_190 {dimension_numbers = #tpu.dot_dimension_numbers<[1], [0], [0], [1], [0, 0, 1, 1], [], []>} : vector<32x18xf32>, vector<18x34xf32>, vector<32x34xf32> -> vector<32x34xf32>
    %219 = arith.truncf %218 : vector<32x34xf32> to vector<32x34xbf16>
    %c0_191 = arith.constant 0 : index
    %c817 = arith.constant 817 : index
    %220 = vector.load %arg9[%c0_191, %c817] : memref<32x1226xbf16, #tpu.memory_space<vmem>>, vector<32x34xbf16>
    tpu.vector_store %arg9[%c0_191, %c817], %219 {strides = array<i32>} : memref<32x1226xbf16, #tpu.memory_space<vmem>>, vector<32x34xbf16>,
    %221 = vector.extract_strided_slice %170 {offsets = [0, 234], sizes = [32, 18], strides = [1, 1]} : vector<32x324xf32> to vector<32x18xf32>
    %cst_192 = arith.constant dense<0.000000e+00> : vector<32x34xf32>
    %222 = tpu.matmul %221, %172, %cst_192 {dimension_numbers = #tpu.dot_dimension_numbers<[1], [0], [0], [1], [0, 0, 1, 1], [], []>} : vector<32x18xf32>, vector<18x34xf32>, vector<32x34xf32> -> vector<32x34xf32>
    %223 = arith.truncf %222 : vector<32x34xf32> to vector<32x34xbf16>
    %c0_193 = arith.constant 0 : index
    %c885 = arith.constant 885 : index
    %224 = vector.load %arg9[%c0_193, %c885] : memref<32x1226xbf16, #tpu.memory_space<vmem>>, vector<32x34xbf16>
    tpu.vector_store %arg9[%c0_193, %c885], %223 {strides = array<i32>} : memref<32x1226xbf16, #tpu.memory_space<vmem>>, vector<32x34xbf16>,
    %225 = vector.extract_strided_slice %170 {offsets = [0, 252], sizes = [32, 18], strides = [1, 1]} : vector<32x324xf32> to vector<32x18xf32>
    %cst_194 = arith.constant dense<0.000000e+00> : vector<32x34xf32>
    %226 = tpu.matmul %225, %172, %cst_194 {dimension_numbers = #tpu.dot_dimension_numbers<[1], [0], [0], [1], [0, 0, 1, 1], [], []>} : vector<32x18xf32>, vector<18x34xf32>, vector<32x34xf32> -> vector<32x34xf32>
    %227 = arith.truncf %226 : vector<32x34xf32> to vector<32x34xbf16>
    %c0_195 = arith.constant 0 : index
    %c953 = arith.constant 953 : index
    %228 = vector.load %arg9[%c0_195, %c953] : memref<32x1226xbf16, #tpu.memory_space<vmem>>, vector<32x34xbf16>
    tpu.vector_store %arg9[%c0_195, %c953], %227 {strides = array<i32>} : memref<32x1226xbf16, #tpu.memory_space<vmem>>, vector<32x34xbf16>,
    %229 = vector.extract_strided_slice %170 {offsets = [0, 270], sizes = [32, 18], strides = [1, 1]} : vector<32x324xf32> to vector<32x18xf32>
    %cst_196 = arith.constant dense<0.000000e+00> : vector<32x34xf32>
    %230 = tpu.matmul %229, %172, %cst_196 {dimension_numbers = #tpu.dot_dimension_numbers<[1], [0], [0], [1], [0, 0, 1, 1], [], []>} : vector<32x18xf32>, vector<18x34xf32>, vector<32x34xf32> -> vector<32x34xf32>
    %231 = arith.truncf %230 : vector<32x34xf32> to vector<32x34xbf16>
    %c0_197 = arith.constant 0 : index
    %c1021 = arith.constant 1021 : index
    %232 = vector.load %arg9[%c0_197, %c1021] : memref<32x1226xbf16, #tpu.memory_space<vmem>>, vector<32x34xbf16>
    tpu.vector_store %arg9[%c0_197, %c1021], %231 {strides = array<i32>} : memref<32x1226xbf16, #tpu.memory_space<vmem>>, vector<32x34xbf16>,
    %233 = vector.extract_strided_slice %170 {offsets = [0, 288], sizes = [32, 18], strides = [1, 1]} : vector<32x324xf32> to vector<32x18xf32>
    %cst_198 = arith.constant dense<0.000000e+00> : vector<32x34xf32>
    %234 = tpu.matmul %233, %172, %cst_198 {dimension_numbers = #tpu.dot_dimension_numbers<[1], [0], [0], [1], [0, 0, 1, 1], [], []>} : vector<32x18xf32>, vector<18x34xf32>, vector<32x34xf32> -> vector<32x34xf32>
    %235 = arith.truncf %234 : vector<32x34xf32> to vector<32x34xbf16>
    %c0_199 = arith.constant 0 : index
    %c1089 = arith.constant 1089 : index
    %236 = vector.load %arg9[%c0_199, %c1089] : memref<32x1226xbf16, #tpu.memory_space<vmem>>, vector<32x34xbf16>
    tpu.vector_store %arg9[%c0_199, %c1089], %235 {strides = array<i32>} : memref<32x1226xbf16, #tpu.memory_space<vmem>>, vector<32x34xbf16>,
    %c0_200 = arith.constant 0 : index
    %c1536 = arith.constant 1536 : index
    %237 = vector.load %arg2[%c0_200, %c1536] : memref<32x2944xbf16, #tpu.memory_space<vmem>>, vector<32x288xbf16>
    %c0_201 = arith.constant 0 : index
    %c9 = arith.constant 9 : index
    %238 = vector.load %arg3[%c0_201, %c9] : memref<64x18xf32, #tpu.memory_space<vmem>>, vector<32x1xf32>
    %c0_202 = arith.constant 0 : index
    %c10_203 = arith.constant 10 : index
    %239 = vector.load %arg3[%c0_202, %c10_203] : memref<64x18xf32, #tpu.memory_space<vmem>>, vector<32x1xf32>
    %c0_204 = arith.constant 0 : index
    %c0_205 = arith.constant 0 : index
    %240 = vector.load %arg9[%c0_204, %c0_205] : memref<32x1226xbf16, #tpu.memory_space<vmem>>, vector<32x1156xbf16>
    %c0_206 = arith.constant 0 : index
    %c0_207 = arith.constant 0 : index
    %241 = vector.load %arg13[%c0_206, %c0_207] : memref<576x1156xbf16, #tpu.memory_space<vmem>>, vector<32x1156xbf16>
    tpu.vector_store %arg13[%c0_206, %c0_207], %240 {strides = array<i32>} : memref<576x1156xbf16, #tpu.memory_space<vmem>>, vector<32x1156xbf16>,
    %c0_208 = arith.constant 0 : index
    %c1_209 = arith.constant 1 : index
    %242 = vector.load %arg9[%c0_208, %c1_209] : memref<32x1226xbf16, #tpu.memory_space<vmem>>, vector<32x1156xbf16>
    %c32_210 = arith.constant 32 : index
    %c0_211 = arith.constant 0 : index
    %243 = vector.load %arg13[%c32_210, %c0_211] : memref<576x1156xbf16, #tpu.memory_space<vmem>>, vector<32x1156xbf16>
    tpu.vector_store %arg13[%c32_210, %c0_211], %242 {strides = array<i32>} : memref<576x1156xbf16, #tpu.memory_space<vmem>>, vector<32x1156xbf16>,
    %c0_212 = arith.constant 0 : index
    %c2_213 = arith.constant 2 : index
    %244 = vector.load %arg9[%c0_212, %c2_213] : memref<32x1226xbf16, #tpu.memory_space<vmem>>, vector<32x1156xbf16>
    %c64_214 = arith.constant 64 : index
    %c0_215 = arith.constant 0 : index
    %245 = vector.load %arg13[%c64_214, %c0_215] : memref<576x1156xbf16, #tpu.memory_space<vmem>>, vector<32x1156xbf16>
    tpu.vector_store %arg13[%c64_214, %c0_215], %244 {strides = array<i32>} : memref<576x1156xbf16, #tpu.memory_space<vmem>>, vector<32x1156xbf16>,
    %c0_216 = arith.constant 0 : index
    %c34 = arith.constant 34 : index
    %246 = vector.load %arg9[%c0_216, %c34] : memref<32x1226xbf16, #tpu.memory_space<vmem>>, vector<32x1156xbf16>
    %c96_217 = arith.constant 96 : index
    %c0_218 = arith.constant 0 : index
    %247 = vector.load %arg13[%c96_217, %c0_218] : memref<576x1156xbf16, #tpu.memory_space<vmem>>, vector<32x1156xbf16>
    tpu.vector_store %arg13[%c96_217, %c0_218], %246 {strides = array<i32>} : memref<576x1156xbf16, #tpu.memory_space<vmem>>, vector<32x1156xbf16>,
    %c0_219 = arith.constant 0 : index
    %c35 = arith.constant 35 : index
    %248 = vector.load %arg9[%c0_219, %c35] : memref<32x1226xbf16, #tpu.memory_space<vmem>>, vector<32x1156xbf16>
    %c128_220 = arith.constant 128 : index
    %c0_221 = arith.constant 0 : index
    %249 = vector.load %arg13[%c128_220, %c0_221] : memref<576x1156xbf16, #tpu.memory_space<vmem>>, vector<32x1156xbf16>
    tpu.vector_store %arg13[%c128_220, %c0_221], %248 {strides = array<i32>} : memref<576x1156xbf16, #tpu.memory_space<vmem>>, vector<32x1156xbf16>,
    %c0_222 = arith.constant 0 : index
    %c36_223 = arith.constant 36 : index
    %250 = vector.load %arg9[%c0_222, %c36_223] : memref<32x1226xbf16, #tpu.memory_space<vmem>>, vector<32x1156xbf16>
    %c160_224 = arith.constant 160 : index
    %c0_225 = arith.constant 0 : index
    %251 = vector.load %arg13[%c160_224, %c0_225] : memref<576x1156xbf16, #tpu.memory_space<vmem>>, vector<32x1156xbf16>
    tpu.vector_store %arg13[%c160_224, %c0_225], %250 {strides = array<i32>} : memref<576x1156xbf16, #tpu.memory_space<vmem>>, vector<32x1156xbf16>,
    %c0_226 = arith.constant 0 : index
    %c68 = arith.constant 68 : index
    %252 = vector.load %arg9[%c0_226, %c68] : memref<32x1226xbf16, #tpu.memory_space<vmem>>, vector<32x1156xbf16>
    %c192_227 = arith.constant 192 : index
    %c0_228 = arith.constant 0 : index
    %253 = vector.load %arg13[%c192_227, %c0_228] : memref<576x1156xbf16, #tpu.memory_space<vmem>>, vector<32x1156xbf16>
    tpu.vector_store %arg13[%c192_227, %c0_228], %252 {strides = array<i32>} : memref<576x1156xbf16, #tpu.memory_space<vmem>>, vector<32x1156xbf16>,
    %c0_229 = arith.constant 0 : index
    %c69_230 = arith.constant 69 : index
    %254 = vector.load %arg9[%c0_229, %c69_230] : memref<32x1226xbf16, #tpu.memory_space<vmem>>, vector<32x1156xbf16>
    %c224_231 = arith.constant 224 : index
    %c0_232 = arith.constant 0 : index
    %255 = vector.load %arg13[%c224_231, %c0_232] : memref<576x1156xbf16, #tpu.memory_space<vmem>>, vector<32x1156xbf16>
    tpu.vector_store %arg13[%c224_231, %c0_232], %254 {strides = array<i32>} : memref<576x1156xbf16, #tpu.memory_space<vmem>>, vector<32x1156xbf16>,
    %c0_233 = arith.constant 0 : index
    %c70 = arith.constant 70 : index
    %256 = vector.load %arg9[%c0_233, %c70] : memref<32x1226xbf16, #tpu.memory_space<vmem>>, vector<32x1156xbf16>
    %c256_234 = arith.constant 256 : index
    %c0_235 = arith.constant 0 : index
    %257 = vector.load %arg13[%c256_234, %c0_235] : memref<576x1156xbf16, #tpu.memory_space<vmem>>, vector<32x1156xbf16>
    tpu.vector_store %arg13[%c256_234, %c0_235], %256 {strides = array<i32>} : memref<576x1156xbf16, #tpu.memory_space<vmem>>, vector<32x1156xbf16>,
    %c0_236 = arith.constant 0 : index
    %c0_237 = arith.constant 0 : index
    %258 = vector.load %arg13[%c0_236, %c0_237] : memref<576x1156xbf16, #tpu.memory_space<vmem>>, vector<288x1156xbf16>
    %cst_238 = arith.constant dense<0.000000e+00> : vector<32x1156xf32>
    %259 = tpu.matmul %237, %258, %cst_238 {dimension_numbers = #tpu.dot_dimension_numbers<[1], [0], [0], [1], [0, 0, 1, 1], [], []>} : vector<32x288xbf16>, vector<288x1156xbf16>, vector<32x1156xf32> -> vector<32x1156xf32>
    %260 = vector.broadcast %238 : vector<32x1xf32> to vector<32x1156xf32>
    %261 = arith.mulf %259, %260 : vector<32x1156xf32>
    %262 = vector.broadcast %239 : vector<32x1xf32> to vector<32x1156xf32>
    %263 = arith.addf %261, %262 : vector<32x1156xf32>
    %cst_239 = arith.constant 0.000000e+00 : f32
    %264 = vector.broadcast %cst_239 : f32 to vector<32x1156xf32>
    %265 = arith.maximumf %263, %264 : vector<32x1156xf32>
    %266 = vector.broadcast %18 : vector<1x1156xf32> to vector<32x1156xf32>
    %267 = arith.mulf %265, %266 : vector<32x1156xf32>
    %c0_240 = arith.constant 0 : index
    %c2304 = arith.constant 2304 : index
    %268 = vector.load %arg2[%c0_240, %c2304] : memref<32x2944xbf16, #tpu.memory_space<vmem>>, vector<16x32xbf16>
    %269 = arith.extf %268 : vector<16x32xbf16> to vector<16x32xf32>
    %cst_241 = arith.constant dense<0.000000e+00> : vector<16x1156xf32>
    %270 = tpu.matmul %269, %267, %cst_241 {dimension_numbers = #tpu.dot_dimension_numbers<[1], [0], [0], [1], [0, 0, 1, 1], [], []>} : vector<16x32xf32>, vector<32x1156xf32>, vector<16x1156xf32> -> vector<16x1156xf32>
    %c0_242 = arith.constant 0 : index
    %c15 = arith.constant 15 : index
    %271 = vector.load %arg3[%c0_242, %c15] : memref<64x18xf32, #tpu.memory_space<vmem>>, vector<16x1xf32>
    %272 = vector.broadcast %271 : vector<16x1xf32> to vector<16x1156xf32>
    %273 = arith.mulf %270, %272 : vector<16x1156xf32>
    %c0_243 = arith.constant 0 : index
    %c16 = arith.constant 16 : index
    %274 = vector.load %arg3[%c0_243, %c16] : memref<64x18xf32, #tpu.memory_space<vmem>>, vector<16x1xf32>
    %275 = vector.broadcast %274 : vector<16x1xf32> to vector<16x1156xf32>
    %276 = arith.addf %273, %275 : vector<16x1156xf32>
    %277 = vector.broadcast %18 : vector<1x1156xf32> to vector<16x1156xf32>
    %278 = arith.mulf %276, %277 : vector<16x1156xf32>
    %c0_244 = arith.constant 0 : index
    %c0_245 = arith.constant 0 : index
    %279 = vector.load %arg12[%c0_244, %c0_245] : memref<16x1156xf32, #tpu.memory_space<vmem>>, vector<16x1156xf32>
    tpu.vector_store %arg12[%c0_244, %c0_245], %278 {strides = array<i32>} : memref<16x1156xf32, #tpu.memory_space<vmem>>, vector<16x1156xf32>,
    %c0_246 = arith.constant 0 : index
    %c11_247 = arith.constant 11 : index
    %280 = vector.load %arg3[%c0_246, %c11_247] : memref<64x18xf32, #tpu.memory_space<vmem>>, vector<32x1xf32>
    %281 = vector.broadcast %280 : vector<32x1xf32> to vector<32x1156xf32>
    %282 = arith.mulf %267, %281 : vector<32x1156xf32>
    %c0_248 = arith.constant 0 : index
    %c12_249 = arith.constant 12 : index
    %283 = vector.load %arg3[%c0_248, %c12_249] : memref<64x18xf32, #tpu.memory_space<vmem>>, vector<32x1xf32>
    %284 = vector.broadcast %283 : vector<32x1xf32> to vector<32x1156xf32>
    %285 = arith.addf %282, %284 : vector<32x1156xf32>
    %cst_250 = arith.constant 0.000000e+00 : f32
    %286 = vector.broadcast %cst_250 : f32 to vector<32x1156xf32>
    %287 = arith.maximumf %285, %286 : vector<32x1156xf32>
    %288 = vector.broadcast %18 : vector<1x1156xf32> to vector<32x1156xf32>
    %289 = arith.mulf %287, %288 : vector<32x1156xf32>
    %290 = arith.truncf %289 : vector<32x1156xf32> to vector<32x1156xbf16>
    %c0_251 = arith.constant 0 : index
    %c35_252 = arith.constant 35 : index
    %291 = vector.load %arg10[%c0_251, %c35_252] : memref<32x1226xbf16, #tpu.memory_space<vmem>>, vector<32x1156xbf16>
    tpu.vector_store %arg10[%c0_251, %c35_252], %290 {strides = array<i32>} : memref<32x1226xbf16, #tpu.memory_space<vmem>>, vector<32x1156xbf16>,
    %c0_253 = arith.constant 0 : index
    %c1920 = arith.constant 1920 : index
    %292 = vector.load %arg2[%c0_253, %c1920] : memref<32x2944xbf16, #tpu.memory_space<vmem>>, vector<16x288xbf16>
    %c0_254 = arith.constant 0 : index
    %c13 = arith.constant 13 : index
    %293 = vector.load %arg3[%c0_254, %c13] : memref<64x18xf32, #tpu.memory_space<vmem>>, vector<16x1xf32>
    %c0_255 = arith.constant 0 : index
    %c14 = arith.constant 14 : index
    %294 = vector.load %arg3[%c0_255, %c14] : memref<64x18xf32, #tpu.memory_space<vmem>>, vector<16x1xf32>
    %c0_256 = arith.constant 0 : index
    %c0_257 = arith.constant 0 : index
    %295 = vector.load %arg10[%c0_256, %c0_257] : memref<32x1226xbf16, #tpu.memory_space<vmem>>, vector<32x1156xbf16>
    %c0_258 = arith.constant 0 : index
    %c0_259 = arith.constant 0 : index
    %296 = vector.load %arg13[%c0_258, %c0_259] : memref<576x1156xbf16, #tpu.memory_space<vmem>>, vector<32x1156xbf16>
    tpu.vector_store %arg13[%c0_258, %c0_259], %295 {strides = array<i32>} : memref<576x1156xbf16, #tpu.memory_space<vmem>>, vector<32x1156xbf16>,
    %c0_260 = arith.constant 0 : index
    %c1_261 = arith.constant 1 : index
    %297 = vector.load %arg10[%c0_260, %c1_261] : memref<32x1226xbf16, #tpu.memory_space<vmem>>, vector<32x1156xbf16>
    %c32_262 = arith.constant 32 : index
    %c0_263 = arith.constant 0 : index
    %298 = vector.load %arg13[%c32_262, %c0_263] : memref<576x1156xbf16, #tpu.memory_space<vmem>>, vector<32x1156xbf16>
    tpu.vector_store %arg13[%c32_262, %c0_263], %297 {strides = array<i32>} : memref<576x1156xbf16, #tpu.memory_space<vmem>>, vector<32x1156xbf16>,
    %c0_264 = arith.constant 0 : index
    %c2_265 = arith.constant 2 : index
    %299 = vector.load %arg10[%c0_264, %c2_265] : memref<32x1226xbf16, #tpu.memory_space<vmem>>, vector<32x1156xbf16>
    %c64_266 = arith.constant 64 : index
    %c0_267 = arith.constant 0 : index
    %300 = vector.load %arg13[%c64_266, %c0_267] : memref<576x1156xbf16, #tpu.memory_space<vmem>>, vector<32x1156xbf16>
    tpu.vector_store %arg13[%c64_266, %c0_267], %299 {strides = array<i32>} : memref<576x1156xbf16, #tpu.memory_space<vmem>>, vector<32x1156xbf16>,
    %c0_268 = arith.constant 0 : index
    %c34_269 = arith.constant 34 : index
    %301 = vector.load %arg10[%c0_268, %c34_269] : memref<32x1226xbf16, #tpu.memory_space<vmem>>, vector<32x1156xbf16>
    %c96_270 = arith.constant 96 : index
    %c0_271 = arith.constant 0 : index
    %302 = vector.load %arg13[%c96_270, %c0_271] : memref<576x1156xbf16, #tpu.memory_space<vmem>>, vector<32x1156xbf16>
    tpu.vector_store %arg13[%c96_270, %c0_271], %301 {strides = array<i32>} : memref<576x1156xbf16, #tpu.memory_space<vmem>>, vector<32x1156xbf16>,
    %c0_272 = arith.constant 0 : index
    %c35_273 = arith.constant 35 : index
    %303 = vector.load %arg10[%c0_272, %c35_273] : memref<32x1226xbf16, #tpu.memory_space<vmem>>, vector<32x1156xbf16>
    %c128_274 = arith.constant 128 : index
    %c0_275 = arith.constant 0 : index
    %304 = vector.load %arg13[%c128_274, %c0_275] : memref<576x1156xbf16, #tpu.memory_space<vmem>>, vector<32x1156xbf16>
    tpu.vector_store %arg13[%c128_274, %c0_275], %303 {strides = array<i32>} : memref<576x1156xbf16, #tpu.memory_space<vmem>>, vector<32x1156xbf16>,
    %c0_276 = arith.constant 0 : index
    %c36_277 = arith.constant 36 : index
    %305 = vector.load %arg10[%c0_276, %c36_277] : memref<32x1226xbf16, #tpu.memory_space<vmem>>, vector<32x1156xbf16>
    %c160_278 = arith.constant 160 : index
    %c0_279 = arith.constant 0 : index
    %306 = vector.load %arg13[%c160_278, %c0_279] : memref<576x1156xbf16, #tpu.memory_space<vmem>>, vector<32x1156xbf16>
    tpu.vector_store %arg13[%c160_278, %c0_279], %305 {strides = array<i32>} : memref<576x1156xbf16, #tpu.memory_space<vmem>>, vector<32x1156xbf16>,
    %c0_280 = arith.constant 0 : index
    %c68_281 = arith.constant 68 : index
    %307 = vector.load %arg10[%c0_280, %c68_281] : memref<32x1226xbf16, #tpu.memory_space<vmem>>, vector<32x1156xbf16>
    %c192_282 = arith.constant 192 : index
    %c0_283 = arith.constant 0 : index
    %308 = vector.load %arg13[%c192_282, %c0_283] : memref<576x1156xbf16, #tpu.memory_space<vmem>>, vector<32x1156xbf16>
    tpu.vector_store %arg13[%c192_282, %c0_283], %307 {strides = array<i32>} : memref<576x1156xbf16, #tpu.memory_space<vmem>>, vector<32x1156xbf16>,
    %c0_284 = arith.constant 0 : index
    %c69_285 = arith.constant 69 : index
    %309 = vector.load %arg10[%c0_284, %c69_285] : memref<32x1226xbf16, #tpu.memory_space<vmem>>, vector<32x1156xbf16>
    %c224_286 = arith.constant 224 : index
    %c0_287 = arith.constant 0 : index
    %310 = vector.load %arg13[%c224_286, %c0_287] : memref<576x1156xbf16, #tpu.memory_space<vmem>>, vector<32x1156xbf16>
    tpu.vector_store %arg13[%c224_286, %c0_287], %309 {strides = array<i32>} : memref<576x1156xbf16, #tpu.memory_space<vmem>>, vector<32x1156xbf16>,
    %c0_288 = arith.constant 0 : index
    %c70_289 = arith.constant 70 : index
    %311 = vector.load %arg10[%c0_288, %c70_289] : memref<32x1226xbf16, #tpu.memory_space<vmem>>, vector<32x1156xbf16>
    %c256_290 = arith.constant 256 : index
    %c0_291 = arith.constant 0 : index
    %312 = vector.load %arg13[%c256_290, %c0_291] : memref<576x1156xbf16, #tpu.memory_space<vmem>>, vector<32x1156xbf16>
    tpu.vector_store %arg13[%c256_290, %c0_291], %311 {strides = array<i32>} : memref<576x1156xbf16, #tpu.memory_space<vmem>>, vector<32x1156xbf16>,
    %c0_292 = arith.constant 0 : index
    %c0_293 = arith.constant 0 : index
    %313 = vector.load %arg13[%c0_292, %c0_293] : memref<576x1156xbf16, #tpu.memory_space<vmem>>, vector<288x1156xbf16>
    %cst_294 = arith.constant dense<0.000000e+00> : vector<16x1156xf32>
    %314 = tpu.matmul %292, %313, %cst_294 {dimension_numbers = #tpu.dot_dimension_numbers<[1], [0], [0], [1], [0, 0, 1, 1], [], []>} : vector<16x288xbf16>, vector<288x1156xbf16>, vector<16x1156xf32> -> vector<16x1156xf32>
    %315 = vector.broadcast %293 : vector<16x1xf32> to vector<16x1156xf32>
    %316 = arith.mulf %314, %315 : vector<16x1156xf32>
    %317 = vector.broadcast %294 : vector<16x1xf32> to vector<16x1156xf32>
    %318 = arith.addf %316, %317 : vector<16x1156xf32>
    %cst_295 = arith.constant 0.000000e+00 : f32
    %319 = vector.broadcast %cst_295 : f32 to vector<16x1156xf32>
    %320 = arith.maximumf %318, %319 : vector<16x1156xf32>
    %321 = vector.broadcast %18 : vector<1x1156xf32> to vector<16x1156xf32>
    %322 = arith.mulf %320, %321 : vector<16x1156xf32>
    %323 = arith.truncf %322 : vector<16x1156xf32> to vector<16x1156xbf16>
    %c0_296 = arith.constant 0 : index
    %c35_297 = arith.constant 35 : index
    %324 = vector.load %arg11[%c0_296, %c35_297] : memref<16x1226xbf16, #tpu.memory_space<vmem>>, vector<16x1156xbf16>
    tpu.vector_store %arg11[%c0_296, %c35_297], %323 {strides = array<i32>} : memref<16x1226xbf16, #tpu.memory_space<vmem>>, vector<16x1156xbf16>,
    %c0_298 = arith.constant 0 : index
    %c2432 = arith.constant 2432 : index
    %325 = vector.load %arg2[%c0_298, %c2432] : memref<32x2944xbf16, #tpu.memory_space<vmem>>, vector<16x144xbf16>
    %c0_299 = arith.constant 0 : index
    %c17 = arith.constant 17 : index
    %326 = vector.load %arg3[%c0_299, %c17] : memref<64x18xf32, #tpu.memory_space<vmem>>, vector<16x1xf32>
    %c0_300 = arith.constant 0 : index
    %c0_301 = arith.constant 0 : index
    %327 = vector.load %arg12[%c0_300, %c0_301] : memref<16x1156xf32, #tpu.memory_space<vmem>>, vector<16x1156xf32>
    %c0_302 = arith.constant 0 : index
    %c0_303 = arith.constant 0 : index
    %328 = vector.load %arg11[%c0_302, %c0_303] : memref<16x1226xbf16, #tpu.memory_space<vmem>>, vector<16x1156xbf16>
    %c0_304 = arith.constant 0 : index
    %c0_305 = arith.constant 0 : index
    %329 = vector.load %arg13[%c0_304, %c0_305] : memref<576x1156xbf16, #tpu.memory_space<vmem>>, vector<16x1156xbf16>
    tpu.vector_store %arg13[%c0_304, %c0_305], %328 {strides = array<i32>} : memref<576x1156xbf16, #tpu.memory_space<vmem>>, vector<16x1156xbf16>,
    %c0_306 = arith.constant 0 : index
    %c1_307 = arith.constant 1 : index
    %330 = vector.load %arg11[%c0_306, %c1_307] : memref<16x1226xbf16, #tpu.memory_space<vmem>>, vector<16x1156xbf16>
    %c16_308 = arith.constant 16 : index
    %c0_309 = arith.constant 0 : index
    %331 = vector.load %arg13[%c16_308, %c0_309] : memref<576x1156xbf16, #tpu.memory_space<vmem>>, vector<16x1156xbf16>
    tpu.vector_store %arg13[%c16_308, %c0_309], %330 {strides = array<i32>} : memref<576x1156xbf16, #tpu.memory_space<vmem>>, vector<16x1156xbf16>,
    %c0_310 = arith.constant 0 : index
    %c2_311 = arith.constant 2 : index
    %332 = vector.load %arg11[%c0_310, %c2_311] : memref<16x1226xbf16, #tpu.memory_space<vmem>>, vector<16x1156xbf16>
    %c32_312 = arith.constant 32 : index
    %c0_313 = arith.constant 0 : index
    %333 = vector.load %arg13[%c32_312, %c0_313] : memref<576x1156xbf16, #tpu.memory_space<vmem>>, vector<16x1156xbf16>
    tpu.vector_store %arg13[%c32_312, %c0_313], %332 {strides = array<i32>} : memref<576x1156xbf16, #tpu.memory_space<vmem>>, vector<16x1156xbf16>,
    %c0_314 = arith.constant 0 : index
    %c34_315 = arith.constant 34 : index
    %334 = vector.load %arg11[%c0_314, %c34_315] : memref<16x1226xbf16, #tpu.memory_space<vmem>>, vector<16x1156xbf16>
    %c48 = arith.constant 48 : index
    %c0_316 = arith.constant 0 : index
    %335 = vector.load %arg13[%c48, %c0_316] : memref<576x1156xbf16, #tpu.memory_space<vmem>>, vector<16x1156xbf16>
    tpu.vector_store %arg13[%c48, %c0_316], %334 {strides = array<i32>} : memref<576x1156xbf16, #tpu.memory_space<vmem>>, vector<16x1156xbf16>,
    %c0_317 = arith.constant 0 : index
    %c35_318 = arith.constant 35 : index
    %336 = vector.load %arg11[%c0_317, %c35_318] : memref<16x1226xbf16, #tpu.memory_space<vmem>>, vector<16x1156xbf16>
    %c64_319 = arith.constant 64 : index
    %c0_320 = arith.constant 0 : index
    %337 = vector.load %arg13[%c64_319, %c0_320] : memref<576x1156xbf16, #tpu.memory_space<vmem>>, vector<16x1156xbf16>
    tpu.vector_store %arg13[%c64_319, %c0_320], %336 {strides = array<i32>} : memref<576x1156xbf16, #tpu.memory_space<vmem>>, vector<16x1156xbf16>,
    %c0_321 = arith.constant 0 : index
    %c36_322 = arith.constant 36 : index
    %338 = vector.load %arg11[%c0_321, %c36_322] : memref<16x1226xbf16, #tpu.memory_space<vmem>>, vector<16x1156xbf16>
    %c80 = arith.constant 80 : index
    %c0_323 = arith.constant 0 : index
    %339 = vector.load %arg13[%c80, %c0_323] : memref<576x1156xbf16, #tpu.memory_space<vmem>>, vector<16x1156xbf16>
    tpu.vector_store %arg13[%c80, %c0_323], %338 {strides = array<i32>} : memref<576x1156xbf16, #tpu.memory_space<vmem>>, vector<16x1156xbf16>,
    %c0_324 = arith.constant 0 : index
    %c68_325 = arith.constant 68 : index
    %340 = vector.load %arg11[%c0_324, %c68_325] : memref<16x1226xbf16, #tpu.memory_space<vmem>>, vector<16x1156xbf16>
    %c96_326 = arith.constant 96 : index
    %c0_327 = arith.constant 0 : index
    %341 = vector.load %arg13[%c96_326, %c0_327] : memref<576x1156xbf16, #tpu.memory_space<vmem>>, vector<16x1156xbf16>
    tpu.vector_store %arg13[%c96_326, %c0_327], %340 {strides = array<i32>} : memref<576x1156xbf16, #tpu.memory_space<vmem>>, vector<16x1156xbf16>,
    %c0_328 = arith.constant 0 : index
    %c69_329 = arith.constant 69 : index
    %342 = vector.load %arg11[%c0_328, %c69_329] : memref<16x1226xbf16, #tpu.memory_space<vmem>>, vector<16x1156xbf16>
    %c112 = arith.constant 112 : index
    %c0_330 = arith.constant 0 : index
    %343 = vector.load %arg13[%c112, %c0_330] : memref<576x1156xbf16, #tpu.memory_space<vmem>>, vector<16x1156xbf16>
    tpu.vector_store %arg13[%c112, %c0_330], %342 {strides = array<i32>} : memref<576x1156xbf16, #tpu.memory_space<vmem>>, vector<16x1156xbf16>,
    %c0_331 = arith.constant 0 : index
    %c70_332 = arith.constant 70 : index
    %344 = vector.load %arg11[%c0_331, %c70_332] : memref<16x1226xbf16, #tpu.memory_space<vmem>>, vector<16x1156xbf16>
    %c128_333 = arith.constant 128 : index
    %c0_334 = arith.constant 0 : index
    %345 = vector.load %arg13[%c128_333, %c0_334] : memref<576x1156xbf16, #tpu.memory_space<vmem>>, vector<16x1156xbf16>
    tpu.vector_store %arg13[%c128_333, %c0_334], %344 {strides = array<i32>} : memref<576x1156xbf16, #tpu.memory_space<vmem>>, vector<16x1156xbf16>,
    %c0_335 = arith.constant 0 : index
    %c0_336 = arith.constant 0 : index
    %346 = vector.load %arg13[%c0_335, %c0_336] : memref<576x1156xbf16, #tpu.memory_space<vmem>>, vector<144x1156xbf16>
    %cst_337 = arith.constant dense<0.000000e+00> : vector<16x1156xf32>
    %347 = tpu.matmul %325, %346, %cst_337 {dimension_numbers = #tpu.dot_dimension_numbers<[1], [0], [0], [1], [0, 0, 1, 1], [], []>} : vector<16x144xbf16>, vector<144x1156xbf16>, vector<16x1156xf32> -> vector<16x1156xf32>
    %348 = vector.broadcast %326 : vector<16x1xf32> to vector<16x1156xf32>
    %349 = arith.addf %347, %348 : vector<16x1156xf32>
    %350 = arith.addf %349, %327 : vector<16x1156xf32>
    %351 = arith.negf %350 : vector<16x1156xf32>
    %352 = math.exp %351 : vector<16x1156xf32>
    %cst_338 = arith.constant 1.000000e+00 : f32
    %353 = vector.broadcast %cst_338 : f32 to vector<16x1156xf32>
    %354 = arith.addf %353, %352 : vector<16x1156xf32>
    %355 = arith.divf %353, %354 : vector<16x1156xf32>
    %356 = vector.broadcast %18 : vector<1x1156xf32> to vector<16x1156xf32>
    %357 = arith.mulf %355, %356 : vector<16x1156xf32>
    %c0_339 = arith.constant 0 : index
    %c0_340 = arith.constant 0 : index
    %c0_341 = arith.constant 0 : index
    %358 = vector.load %arg5[%c0_339, %c0_340, %c0_341] : memref<1x16x1156xf32, #tpu.memory_space<vmem>>, vector<1x16x1156xf32>
    %359 = vector.shape_cast %358 : vector<1x16x1156xf32> to vector<16x1156xf32>
    %360 = vector.shape_cast %357 : vector<16x1156xf32> to vector<1x16x1156xf32>
    tpu.vector_store %arg5[%c0_339, %c0_340, %c0_341], %360 {strides = array<i32>} : memref<1x16x1156xf32, #tpu.memory_space<vmem>>, vector<1x16x1156xf32>,
    return
  }
  func.func @transform_0(%arg0: i32) -> (i32, i32, i32) {
    %c0_i32 = arith.constant 0 : i32
    %c0_i32_0 = arith.constant 0 : i32
    %c0_i32_1 = arith.constant 0 : i32
    return %arg0, %c0_i32, %c0_i32_0 : i32, i32, i32
  }
  func.func @transform_1(%arg0: i32) -> (i32, i32) {
    %c0_i32 = arith.constant 0 : i32
    %c0_i32_0 = arith.constant 0 : i32
    %c0_i32_1 = arith.constant 0 : i32
    return %c0_i32, %c0_i32_0 : i32, i32
  }
  func.func @transform_2(%arg0: i32) -> (i32, i32) {
    %c0_i32 = arith.constant 0 : i32
    %c0_i32_0 = arith.constant 0 : i32
    %c0_i32_1 = arith.constant 0 : i32
    return %c0_i32, %c0_i32_0 : i32, i32
  }
  func.func @transform_3(%arg0: i32) -> (i32, i32) {
    %c0_i32 = arith.constant 0 : i32
    %c0_i32_0 = arith.constant 0 : i32
    %c0_i32_1 = arith.constant 0 : i32
    return %c0_i32, %c0_i32_0 : i32, i32
  }
  func.func @transform_4(%arg0: i32) -> (i32, i32, i32) {
    %c0_i32 = arith.constant 0 : i32
    %c0_i32_0 = arith.constant 0 : i32
    %c0_i32_1 = arith.constant 0 : i32
    return %arg0, %c0_i32, %c0_i32_0 : i32, i32, i32
  }
}

</mosaic_0001>

<llo_original>
// kernel: forward.1
$region0: #{forward.1}
  #allocation0 [shape = 'u32[]', space=smem, size = 0x4, offset = 0x4, fixed_abs, tag = 'smem constant byte address 0x4 - core index']
  #allocation1 [shape = 'u32[144,128]{1,0:T(1,128)}', space=vmem, size = 0x12000, scoped, tag = 'internal scratch']
  #allocation2 [shape = 'bf16[64,122]{1,0:T(16,128)(2,1)}', space=vmem, size = 0x4000, scoped, tag = 'scratch operand']
  #allocation3 [shape = 'bf16[32,122]{1,0:T(16,128)(2,1)}', space=vmem, size = 0x2000, scoped, tag = 'scratch operand']
  #allocation4 [shape = 'bf16[32,362]{1,0:T(16,128)(2,1)}', space=vmem, size = 0x6000, scoped, tag = 'scratch operand']
  #allocation5 [shape = 'bf16[32,1226]{1,0:T(16,128)(2,1)}', space=vmem, size = 0x14000, scoped, tag = 'scratch operand']
  #allocation6 [shape = 'bf16[32,1226]{1,0:T(16,128)(2,1)}', space=vmem, size = 0x14000, scoped, tag = 'scratch operand']
  #allocation7 [shape = 'bf16[16,1226]{1,0:T(16,128)(2,1)}', space=vmem, size = 0xa000, scoped, tag = 'scratch operand']
  #allocation8 [shape = 'f32[16,1156]{1,0:T(8,128)}', space=vmem, size = 0x14000, scoped, tag = 'scratch operand']
  #allocation9 [shape = 'bf16[576,1156]{1,0:T(16,128)(2,1)}', space=vmem, size = 0x168000, scoped, tag = 'scratch operand']
  %s0 = inlined_call_operand.vmem [shape: f32[1,64,100], index: 0, kind: input, shape index: {}]
  %s1 = inlined_call_operand.vmem [shape: bf16[32,2944], index: 1, kind: input, shape index: {}]
  %s2 = inlined_call_operand.vmem [shape: f32[64,18], index: 2, kind: input, shape index: {}]
  %s3 = inlined_call_operand.vmem [shape: f32[3,1156], index: 3, kind: input, shape index: {}]
  %s4 = inlined_call_operand.vmem [shape: f32[1,16,1156], index: 4, kind: output, shape index: {}]
  %s5 = sld [smem:[#allocation0]]
  $region26: #{forward.1} parent=0
    _
  %s7 = ssub.s32 1, %s5
  %s8 = scalar_select 0, %s7, %s5
  // Predicated region
  $region2: #{forward.1} parent=0 // pred_check
    _
  $region3: #{forward.1} parent=0 // pred_check_branch
    %10 = sbr.rel (0) target = $region5
  $region4: #{forward.1} parent=0 // pred_region
    _
  $region5: #{forward.1} parent=0 // pred_fallthru
    _
  // Predicated region
  $region6: #{forward.1} parent=0 // pred_check
    _
  $region7: #{forward.1} parent=0 // pred_check_branch
    %12 = sbr.rel (0) target = $region9
  $region8: #{forward.1} parent=0 // pred_region
    _
  $region9: #{forward.1} parent=0 // pred_fallthru
    _
  // Predicated region
  $region10: #{forward.1} parent=0 // pred_check
    _
  $region11: #{forward.1} parent=0 // pred_check_branch
    %14 = sbr.rel (0) target = $region13
  $region12: #{forward.1} parent=0 // pred_region
    _
  $region13: #{forward.1} parent=0 // pred_fallthru
    _
  // Predicated region
  $region14: #{forward.1} parent=0 // pred_check
    _
  $region15: #{forward.1} parent=0 // pred_check_branch
    %16 = sbr.rel (0) target = $region17
  $region16: #{forward.1} parent=0 // pred_region
    _
  $region17: #{forward.1} parent=0 // pred_fallthru
    _
  %vm18 = vcmask 89088
  %19 = vst.msk [vmem:[#allocation2] sm:$0xff] %vm18, 0
  %20 = vst.msk [vmem:[#allocation2 + $0x8] sm:$0xff] %vm18, 0
  %21 = vst.msk [vmem:[#allocation2 + $0x10] sm:$0xff] %vm18, 0
  %22 = vst.msk [vmem:[#allocation2 + $0x18] sm:$0xff] %vm18, 0
  %vm23 = vcmask 999288
  %24 = vst.msk [vmem:[#allocation2] sm:$0xff] %vm23, 0
  %25 = vst.msk [vmem:[#allocation2 + $0x8] sm:$0xff] %vm23, 0
  %26 = vst.msk [vmem:[#allocation2 + $0x10] sm:$0xff] %vm23, 0
  %27 = vst.msk [vmem:[#allocation2 + $0x18] sm:$0xff] %vm23, 0
  %28 = vst.msk [vmem:[#allocation3] sm:$0xff] %vm18, 0
  %29 = vst.msk [vmem:[#allocation3 + $0x8] sm:$0xff] %vm18, 0
  %30 = vst.msk [vmem:[#allocation3] sm:$0xff] %vm23, 0
  %31 = vst.msk [vmem:[#allocation3 + $0x8] sm:$0xff] %vm23, 0
  %vm32 = vcmask 285696
  %33 = vst.msk [vmem:[#allocation6] sm:$0xff] %vm32, 0
  %34 = vst.msk [vmem:[#allocation6 + $0x50] sm:$0xff] %vm32, 0
  %vm35 = vcmask 605496
  %36 = vst.msk [vmem:[#allocation6 + $0x48] sm:$0xff] %vm35, 0
  %37 = vst.msk [vmem:[#allocation6 + $0x98] sm:$0xff] %vm35, 0
  %38 = vst.msk [vmem:[#allocation7] sm:$0xff] %vm32, 0
  %39 = vst.msk [vmem:[#allocation7 + $0x48] sm:$0xff] %vm35, 0
  %40 = vst [vmem:[#allocation4] sm:$0xff] 0
  %41 = vst [vmem:[#allocation4 + $0x8] sm:$0xff] 0
  %vm42 = vcmask 867328
  %43 = vst.msk [vmem:[#allocation4 + $0x10] sm:$0xff] %vm42, 0
  %44 = vst [vmem:[#allocation4 + $0x18] sm:$0xff] 0
  %45 = vst [vmem:[#allocation4 + $0x20] sm:$0xff] 0
  %46 = vst.msk [vmem:[#allocation4 + $0x28] sm:$0xff] %vm42, 0
  %47 = vst [vmem:[#allocation5] sm:$0xff] 0
  %48 = vst [vmem:[#allocation5 + $0x8] sm:$0xff] 0
  %49 = vst [vmem:[#allocation5 + $0x10] sm:$0xff] 0
  %50 = vst [vmem:[#allocation5 + $0x18] sm:$0xff] 0
  %51 = vst [vmem:[#allocation5 + $0x20] sm:$0xff] 0
  %52 = vst [vmem:[#allocation5 + $0x28] sm:$0xff] 0
  %53 = vst [vmem:[#allocation5 + $0x30] sm:$0xff] 0
  %54 = vst [vmem:[#allocation5 + $0x38] sm:$0xff] 0
  %55 = vst [vmem:[#allocation5 + $0x40] sm:$0xff] 0
  %vm56 = vcmask 605184
  %57 = vst.msk [vmem:[#allocation5 + $0x48] sm:$0xff] %vm56, 0
  %58 = vst [vmem:[#allocation5 + $0x50] sm:$0xff] 0
  %59 = vst [vmem:[#allocation5 + $0x58] sm:$0xff] 0
  %60 = vst [vmem:[#allocation5 + $0x60] sm:$0xff] 0
  %61 = vst [vmem:[#allocation5 + $0x68] sm:$0xff] 0
  %62 = vst [vmem:[#allocation5 + $0x70] sm:$0xff] 0
  %63 = vst [vmem:[#allocation5 + $0x78] sm:$0xff] 0
  %64 = vst [vmem:[#allocation5 + $0x80] sm:$0xff] 0
  %65 = vst [vmem:[#allocation5 + $0x88] sm:$0xff] 0
  %66 = vst [vmem:[#allocation5 + $0x90] sm:$0xff] 0
  %67 = vst.msk [vmem:[#allocation5 + $0x98] sm:$0xff] %vm56, 0
  %v68 = vld [vmem:[%s3] sm:$0x1]
  %s69 = scalar_lea.vmem %s3, 1
  %v70 = vld [vmem:[%s69] ss:$4 sm:$0x7]
  %s71 = scalar_lea.vmem %s3, 2
  %v72 = vld [vmem:[%s71] ss:$4 sm:$0xff]
  %s73 = scalar_lea.vmem %s3, 34
  %v74 = vld [vmem:[%s73] ss:$4 sm:$0x3]
  %v75 = vld [vmem:[%s0] sm:$0xff]
  %v76 = vld [vmem:[%s0 + $0x8] sm:$0xff]
  %v77 = vld [vmem:[%s0 + $0x10] sm:$0xff]
  %v78 = vld [vmem:[%s0 + $0x18] sm:$0xff]
  %v79 = vld [vmem:[%s0 + $0x20] sm:$0xff]
  %v80 = vld [vmem:[%s0 + $0x28] sm:$0xff]
  %v81 = vld [vmem:[%s0 + $0x30] sm:$0xff]
  %v82 = vld [vmem:[%s0 + $0x38] sm:$0xff]
  %v83 = vld [vmem:[%s2] sm:$0xff]
  %v84 = vld [vmem:[%s2 + $0x8] sm:$0xff]
  %v85 = vld [vmem:[%s2 + $0x10] sm:$0xff]
  %v86 = vld [vmem:[%s2 + $0x18] sm:$0xff]
  %v87 = vld [vmem:[%s2 + $0x20] sm:$0xff]
  %v88 = vld [vmem:[%s2 + $0x28] sm:$0xff]
  %v89 = vld [vmem:[%s2 + $0x30] sm:$0xff]
  %v90 = vld [vmem:[%s2 + $0x38] sm:$0xff]
  %92 = vset.pattern.permute.xlu0 0
  %93 = vperm.xlu0 %92, %v83
  %v94 = vpop.permute.xlu0 %93
  %97 = vset.pattern.permute.xlu0 0
  %98 = vperm.xlu0 %97, %v84
  %v99 = vpop.permute.xlu0 %98
  %102 = vset.pattern.permute.xlu0 0
  %103 = vperm.xlu0 %102, %v85
  %v104 = vpop.permute.xlu0 %103
  %107 = vset.pattern.permute.xlu0 0
  %108 = vperm.xlu0 %107, %v86
  %v109 = vpop.permute.xlu0 %108
  %112 = vset.pattern.permute.xlu0 0
  %113 = vperm.xlu0 %112, %v87
  %v114 = vpop.permute.xlu0 %113
  %117 = vset.pattern.permute.xlu0 0
  %118 = vperm.xlu0 %117, %v88
  %v119 = vpop.permute.xlu0 %118
  %122 = vset.pattern.permute.xlu0 0
  %123 = vperm.xlu0 %122, %v89
  %v124 = vpop.permute.xlu0 %123
  %127 = vset.pattern.permute.xlu0 0
  %128 = vperm.xlu0 %127, %v90
  %v129 = vpop.permute.xlu0 %128
  %v131 = vmul.f32 %v75, %v94
  %v132 = vmul.f32 %v76, %v99
  %v133 = vmul.f32 %v77, %v104
  %v134 = vmul.f32 %v78, %v109
  %v135 = vmul.f32 %v79, %v114
  %v136 = vmul.f32 %v80, %v119
  %v137 = vmul.f32 %v81, %v124
  %v138 = vmul.f32 %v82, %v129
  %139 = vset.pattern.permute.xlu0 1
  %140 = vperm.xlu0 %139, %v83
  %v141 = vpop.permute.xlu0 %140
  %143 = vset.pattern.permute.xlu0 1
  %144 = vperm.xlu0 %143, %v84
  %v145 = vpop.permute.xlu0 %144
  %147 = vset.pattern.permute.xlu0 1
  %148 = vperm.xlu0 %147, %v85
  %v149 = vpop.permute.xlu0 %148
  %151 = vset.pattern.permute.xlu0 1
  %152 = vperm.xlu0 %151, %v86
  %v153 = vpop.permute.xlu0 %152
  %155 = vset.pattern.permute.xlu0 1
  %156 = vperm.xlu0 %155, %v87
  %v157 = vpop.permute.xlu0 %156
  %159 = vset.pattern.permute.xlu0 1
  %160 = vperm.xlu0 %159, %v88
  %v161 = vpop.permute.xlu0 %160
  %163 = vset.pattern.permute.xlu0 1
  %164 = vperm.xlu0 %163, %v89
  %v165 = vpop.permute.xlu0 %164
  %167 = vset.pattern.permute.xlu0 1
  %168 = vperm.xlu0 %167, %v90
  %v169 = vpop.permute.xlu0 %168
  %v171 = vadd.f32 %v131, %v141
  %v172 = vadd.f32 %v132, %v145
  %v173 = vadd.f32 %v133, %v149
  %v174 = vadd.f32 %v134, %v153
  %v175 = vadd.f32 %v135, %v157
  %v176 = vadd.f32 %v136, %v161
  %v177 = vadd.f32 %v137, %v165
  %v178 = vadd.f32 %v138, %v169
  %v179 = vmax.f32 %v171, 0.0
  %v180 = vmax.f32 %v172, 0.0
  %v181 = vmax.f32 %v173, 0.0
  %v182 = vmax.f32 %v174, 0.0
  %v183 = vmax.f32 %v175, 0.0
  %v184 = vmax.f32 %v176, 0.0
  %v185 = vmax.f32 %v177, 0.0
  %v186 = vmax.f32 %v178, 0.0
  %v187 = vlaneseq
  %v188 = vshrl.u32 %v187, 7
  %v189 = vsub.s32 0, %v188
  %v190 = vrot.slane %v68, %v189
  %v191 = vmul.f32 %v179, %v190
  %v192 = vmul.f32 %v180, %v190
  %v193 = vmul.f32 %v181, %v190
  %v194 = vmul.f32 %v182, %v190
  %v195 = vmul.f32 %v183, %v190
  %v196 = vmul.f32 %v184, %v190
  %v197 = vmul.f32 %v185, %v190
  %v198 = vmul.f32 %v186, %v190
  %v199 = vpack.c.bf16 %v192, %v191
  %v200 = vpack.c.bf16 %v194, %v193
  %v201 = vpack.c.bf16 %v196, %v195
  %v202 = vpack.c.bf16 %v198, %v197
  %207 = vrot.lane.b32.xlu0 %v199, 11
  %v208 = vpop.permute.xlu0 %207
  %209 = vrot.lane.b32.xlu0 %v200, 11
  %v210 = vpop.permute.xlu0 %209
  %211 = vrot.lane.b32.xlu0 %v201, 11
  %v212 = vpop.permute.xlu0 %211
  %213 = vrot.lane.b32.xlu0 %v202, 11
  %v214 = vpop.permute.xlu0 %213
  %vm219 = vcmask 908376
  %220 = vst.msk [vmem:[#allocation2] sm:$0xff] %vm219, %v208
  %221 = vst.msk [vmem:[#allocation2 + $0x8] sm:$0xff] %vm219, %v210
  %222 = vst.msk [vmem:[#allocation2 + $0x10] sm:$0xff] %vm219, %v212
  %223 = vst.msk [vmem:[#allocation2 + $0x18] sm:$0xff] %vm219, %v214
  %v224 = vld [vmem:[%s1] sm:$0xff]
  %v225 = vld [vmem:[%s1 + $0x8] sm:$0xff]
  %v226 = vld [vmem:[%s1 + $0x10] sm:$0xf]
  %v227 = vld [vmem:[%s1 + $0x5c] sm:$0xff]
  %v228 = vld [vmem:[%s1 + $0x64] sm:$0xff]
  %v229 = vld [vmem:[%s1 + $0x6c] sm:$0xf]
  %v230 = vld [vmem:[%s1 + $0xb8] sm:$0xff]
  %v231 = vld [vmem:[%s1 + $0xc0] sm:$0xff]
  %v232 = vld [vmem:[%s1 + $0xc8] sm:$0xf]
  %v233 = vld [vmem:[%s1 + $0x114] sm:$0xff]
  %v234 = vld [vmem:[%s1 + $0x11c] sm:$0xff]
  %v235 = vld [vmem:[%s1 + $0x124] sm:$0xf]
  %v236 = vld [vmem:[%s2] sm:$0xff]
  %v237 = vld [vmem:[%s2 + $0x8] sm:$0xff]
  %v238 = vld [vmem:[%s2 + $0x10] sm:$0xff]
  %v239 = vld [vmem:[%s2 + $0x18] sm:$0xff]
  %v240 = vld [vmem:[#allocation2] sm:$0xff]
  %v241 = vld [vmem:[#allocation2 + $0x8] sm:$0xff]
  %v242 = vld [vmem:[#allocation2 + $0x10] sm:$0xff]
  %v243 = vld [vmem:[#allocation2 + $0x18] sm:$0xff]
  %vm244 = vcmask 818176
  %245 = vst.msk [vmem:[#allocation9] sm:$0xff] %vm244, %v240
  %246 = vst.msk [vmem:[#allocation9 + $0x50] sm:$0xff] %vm244, %v241
  %247 = vst.msk [vmem:[#allocation9 + $0xa0] sm:$0xff] %vm244, %v242
  %248 = vst.msk [vmem:[#allocation9 + $0xf0] sm:$0xff] %vm244, %v243
  %v249 = vld [vmem:[#allocation2] sm:$0xff]
  %v250 = vld [vmem:[#allocation2 + $0x8] sm:$0xff]
  %v251 = vld [vmem:[#allocation2 + $0x10] sm:$0xff]
  %v252 = vld [vmem:[#allocation2 + $0x18] sm:$0xff]
  %257 = vrot.lane.b32.xlu0 %v249, 127
  %v258 = vpop.permute.xlu0 %257
  %259 = vrot.lane.b32.xlu0 %v250, 127
  %v260 = vpop.permute.xlu0 %259
  %261 = vrot.lane.b32.xlu0 %v251, 127
  %v262 = vpop.permute.xlu0 %261
  %263 = vrot.lane.b32.xlu0 %v252, 127
  %v264 = vpop.permute.xlu0 %263
  %269 = vst.msk [vmem:[#allocation9 + $0x140] sm:$0xff] %vm244, %v258
  %270 = vst.msk [vmem:[#allocation9 + $0x190] sm:$0xff] %vm244, %v260
  %271 = vst.msk [vmem:[#allocation9 + $0x1e0] sm:$0xff] %vm244, %v262
  %272 = vst.msk [vmem:[#allocation9 + $0x230] sm:$0xff] %vm244, %v264
  %v273 = vld [vmem:[#allocation2] sm:$0xff]
  %v274 = vld [vmem:[#allocation2 + $0x8] sm:$0xff]
  %v275 = vld [vmem:[#allocation2 + $0x10] sm:$0xff]
  %v276 = vld [vmem:[#allocation2 + $0x18] sm:$0xff]
  %281 = vrot.lane.b32.xlu0 %v273, 126
  %v282 = vpop.permute.xlu0 %281
  %283 = vrot.lane.b32.xlu0 %v274, 126
  %v284 = vpop.permute.xlu0 %283
  %285 = vrot.lane.b32.xlu0 %v275, 126
  %v286 = vpop.permute.xlu0 %285
  %287 = vrot.lane.b32.xlu0 %v276, 126
  %v288 = vpop.permute.xlu0 %287
  %293 = vst.msk [vmem:[#allocation9 + $0x280] sm:$0xff] %vm244, %v282
  %294 = vst.msk [vmem:[#allocation9 + $0x2d0] sm:$0xff] %vm244, %v284
  %295 = vst.msk [vmem:[#allocation9 + $0x320] sm:$0xff] %vm244, %v286
  %296 = vst.msk [vmem:[#allocation9 + $0x370] sm:$0xff] %vm244, %v288
  %v297 = vld [vmem:[#allocation2] sm:$0xff]
  %v298 = vld [vmem:[#allocation2 + $0x8] sm:$0xff]
  %v299 = vld [vmem:[#allocation2 + $0x10] sm:$0xff]
  %v300 = vld [vmem:[#allocation2 + $0x18] sm:$0xff]
  %305 = vrot.lane.b32.xlu0 %v297, 118
  %v306 = vpop.permute.xlu0 %305
  %307 = vrot.lane.b32.xlu0 %v298, 118
  %v308 = vpop.permute.xlu0 %307
  %309 = vrot.lane.b32.xlu0 %v299, 118
  %v310 = vpop.permute.xlu0 %309
  %311 = vrot.lane.b32.xlu0 %v300, 118
  %v312 = vpop.permute.xlu0 %311
  %317 = vst.msk [vmem:[#allocation9 + $0x3c0] sm:$0xff] %vm244, %v306
  %318 = vst.msk [vmem:[#allocation9 + $0x410] sm:$0xff] %vm244, %v308
  %319 = vst.msk [vmem:[#allocation9 + $0x460] sm:$0xff] %vm244, %v310
  %320 = vst.msk [vmem:[#allocation9 + $0x4b0] sm:$0xff] %vm244, %v312
  %v321 = vld [vmem:[#allocation2] sm:$0xff]
  %v322 = vld [vmem:[#allocation2 + $0x8] sm:$0xff]
  %v323 = vld [vmem:[#allocation2 + $0x10] sm:$0xff]
  %v324 = vld [vmem:[#allocation2 + $0x18] sm:$0xff]
  %329 = vrot.lane.b32.xlu0 %v321, 117
  %v330 = vpop.permute.xlu0 %329
  %331 = vrot.lane.b32.xlu0 %v322, 117
  %v332 = vpop.permute.xlu0 %331
  %333 = vrot.lane.b32.xlu0 %v323, 117
  %v334 = vpop.permute.xlu0 %333
  %335 = vrot.lane.b32.xlu0 %v324, 117
  %v336 = vpop.permute.xlu0 %335
  %341 = vst.msk [vmem:[#allocation9 + $0x500] sm:$0xff] %vm244, %v330
  %342 = vst.msk [vmem:[#allocation9 + $0x550] sm:$0xff] %vm244, %v332
  %343 = vst.msk [vmem:[#allocation9 + $0x5a0] sm:$0xff] %vm244, %v334
  %344 = vst.msk [vmem:[#allocation9 + $0x5f0] sm:$0xff] %vm244, %v336
  %v345 = vld [vmem:[#allocation2] sm:$0xff]
  %v346 = vld [vmem:[#allocation2 + $0x8] sm:$0xff]
  %v347 = vld [vmem:[#allocation2 + $0x10] sm:$0xff]
  %v348 = vld [vmem:[#allocation2 + $0x18] sm:$0xff]
  %353 = vrot.lane.b32.xlu0 %v345, 116
  %v354 = vpop.permute.xlu0 %353
  %355 = vrot.lane.b32.xlu0 %v346, 116
  %v356 = vpop.permute.xlu0 %355
  %357 = vrot.lane.b32.xlu0 %v347, 116
  %v358 = vpop.permute.xlu0 %357
  %359 = vrot.lane.b32.xlu0 %v348, 116
  %v360 = vpop.permute.xlu0 %359
  %365 = vst.msk [vmem:[#allocation9 + $0x640] sm:$0xff] %vm244, %v354
  %366 = vst.msk [vmem:[#allocation9 + $0x690] sm:$0xff] %vm244, %v356
  %367 = vst.msk [vmem:[#allocation9 + $0x6e0] sm:$0xff] %vm244, %v358
  %368 = vst.msk [vmem:[#allocation9 + $0x730] sm:$0xff] %vm244, %v360
  %v369 = vld [vmem:[#allocation2] sm:$0xff]
  %v370 = vld [vmem:[#allocation2 + $0x8] sm:$0xff]
  %v371 = vld [vmem:[#allocation2 + $0x10] sm:$0xff]
  %v372 = vld [vmem:[#allocation2 + $0x18] sm:$0xff]
  %377 = vrot.lane.b32.xlu0 %v369, 108
  %v378 = vpop.permute.xlu0 %377
  %379 = vrot.lane.b32.xlu0 %v370, 108
  %v380 = vpop.permute.xlu0 %379
  %381 = vrot.lane.b32.xlu0 %v371, 108
  %v382 = vpop.permute.xlu0 %381
  %383 = vrot.lane.b32.xlu0 %v372, 108
  %v384 = vpop.permute.xlu0 %383
  %389 = vst.msk [vmem:[#allocation9 + $0x780] sm:$0xff] %vm244, %v378
  %390 = vst.msk [vmem:[#allocation9 + $0x7d0] sm:$0xff] %vm244, %v380
  %391 = vst.msk [vmem:[#allocation9 + $0x820] sm:$0xff] %vm244, %v382
  %392 = vst.msk [vmem:[#allocation9 + $0x870] sm:$0xff] %vm244, %v384
  %v393 = vld [vmem:[#allocation2] sm:$0xff]
  %v394 = vld [vmem:[#allocation2 + $0x8] sm:$0xff]
  %v395 = vld [vmem:[#allocation2 + $0x10] sm:$0xff]
  %v396 = vld [vmem:[#allocation2 + $0x18] sm:$0xff]
  %401 = vrot.lane.b32.xlu0 %v393, 107
  %v402 = vpop.permute.xlu0 %401
  %403 = vrot.lane.b32.xlu0 %v394, 107
  %v404 = vpop.permute.xlu0 %403
  %405 = vrot.lane.b32.xlu0 %v395, 107
  %v406 = vpop.permute.xlu0 %405
  %407 = vrot.lane.b32.xlu0 %v396, 107
  %v408 = vpop.permute.xlu0 %407
  %413 = vst.msk [vmem:[#allocation9 + $0x8c0] sm:$0xff] %vm244, %v402
  %414 = vst.msk [vmem:[#allocation9 + $0x910] sm:$0xff] %vm244, %v404
  %415 = vst.msk [vmem:[#allocation9 + $0x960] sm:$0xff] %vm244, %v406
  %416 = vst.msk [vmem:[#allocation9 + $0x9b0] sm:$0xff] %vm244, %v408
  %v417 = vld [vmem:[#allocation2] sm:$0xff]
  %v418 = vld [vmem:[#allocation2 + $0x8] sm:$0xff]
  %v419 = vld [vmem:[#allocation2 + $0x10] sm:$0xff]
  %v420 = vld [vmem:[#allocation2 + $0x18] sm:$0xff]
  %425 = vrot.lane.b32.xlu0 %v417, 106
  %v426 = vpop.permute.xlu0 %425
  %427 = vrot.lane.b32.xlu0 %v418, 106
  %v428 = vpop.permute.xlu0 %427
  %429 = vrot.lane.b32.xlu0 %v419, 106
  %v430 = vpop.permute.xlu0 %429
  %431 = vrot.lane.b32.xlu0 %v420, 106
  %v432 = vpop.permute.xlu0 %431
  %437 = vst.msk [vmem:[#allocation9 + $0xa00] sm:$0xff] %vm244, %v426
  %438 = vst.msk [vmem:[#allocation9 + $0xa50] sm:$0xff] %vm244, %v428
  %439 = vst.msk [vmem:[#allocation9 + $0xaa0] sm:$0xff] %vm244, %v430
  %440 = vst.msk [vmem:[#allocation9 + $0xaf0] sm:$0xff] %vm244, %v432
  %v441 = vld [vmem:[#allocation9] sm:$0xff]
  %v442 = vld [vmem:[#allocation9 + $0x50] sm:$0xff]
  %v443 = vld [vmem:[#allocation9 + $0xa0] sm:$0xff]
  %v444 = vld [vmem:[#allocation9 + $0xf0] sm:$0xff]
  %v445 = vld [vmem:[#allocation9 + $0x140] sm:$0xff]
  %v446 = vld [vmem:[#allocation9 + $0x190] sm:$0xff]
  %v447 = vld [vmem:[#allocation9 + $0x1e0] sm:$0xff]
  %v448 = vld [vmem:[#allocation9 + $0x230] sm:$0xff]
  %v449 = vld [vmem:[#allocation9 + $0x280] sm:$0xff]
  %v450 = vld [vmem:[#allocation9 + $0x2d0] sm:$0xff]
  %v451 = vld [vmem:[#allocation9 + $0x320] sm:$0xff]
  %v452 = vld [vmem:[#allocation9 + $0x370] sm:$0xff]
  %v453 = vld [vmem:[#allocation9 + $0x3c0] sm:$0xff]
  %v454 = vld [vmem:[#allocation9 + $0x410] sm:$0xff]
  %v455 = vld [vmem:[#allocation9 + $0x460] sm:$0xff]
  %v456 = vld [vmem:[#allocation9 + $0x4b0] sm:$0xff]
  %v457 = vld [vmem:[#allocation9 + $0x500] sm:$0xff]
  %v458 = vld [vmem:[#allocation9 + $0x550] sm:$0xff]
  %v459 = vld [vmem:[#allocation9 + $0x5a0] sm:$0xff]
  %v460 = vld [vmem:[#allocation9 + $0x5f0] sm:$0xff]
  %v461 = vld [vmem:[#allocation9 + $0x640] sm:$0xff]
  %v462 = vld [vmem:[#allocation9 + $0x690] sm:$0xff]
  %v463 = vld [vmem:[#allocation9 + $0x6e0] sm:$0xff]
  %v464 = vld [vmem:[#allocation9 + $0x730] sm:$0xff]
  %v465 = vld [vmem:[#allocation9 + $0x780] sm:$0xff]
  %v466 = vld [vmem:[#allocation9 + $0x7d0] sm:$0xff]
  %v467 = vld [vmem:[#allocation9 + $0x820] sm:$0xff]
  %v468 = vld [vmem:[#allocation9 + $0x870] sm:$0xff]
  %v469 = vld [vmem:[#allocation9 + $0x8c0] sm:$0xff]
  %v470 = vld [vmem:[#allocation9 + $0x910] sm:$0xff]
  %v471 = vld [vmem:[#allocation9 + $0x960] sm:$0xff]
  %v472 = vld [vmem:[#allocation9 + $0x9b0] sm:$0xff]
  %v473 = vld [vmem:[#allocation9 + $0xa00] sm:$0xff]
  %v474 = vld [vmem:[#allocation9 + $0xa50] sm:$0xff]
  %v475 = vld [vmem:[#allocation9 + $0xaa0] sm:$0xff]
  %v476 = vld [vmem:[#allocation9 + $0xaf0] sm:$0xff]
  %v489 = vunpack.c.l.b16 %v224
  %v490 = vunpack.c.h.b16 %v224
  %v491 = vunpack.c.l.b16 %v225
  %v492 = vunpack.c.h.b16 %v225
  %v493 = vunpack.c.l.b16 %v226
  %v494 = vunpack.c.l.b16 %v227
  %v495 = vunpack.c.h.b16 %v227
  %v496 = vunpack.c.l.b16 %v228
  %v497 = vunpack.c.h.b16 %v228
  %v498 = vunpack.c.l.b16 %v229
  %v499 = vunpack.c.l.b16 %v230
  %v500 = vunpack.c.h.b16 %v230
  %v501 = vunpack.c.l.b16 %v231
  %v502 = vunpack.c.h.b16 %v231
  %v503 = vunpack.c.l.b16 %v232
  %v504 = vunpack.c.l.b16 %v233
  %v505 = vunpack.c.h.b16 %v233
  %v506 = vunpack.c.l.b16 %v234
  %v507 = vunpack.c.h.b16 %v234
  %v508 = vunpack.c.l.b16 %v235
  %v509 = vpack.c.b16 %v494, %v489
  %v510 = vpack.c.b16 %v495, %v490
  %v511 = vpack.c.b16 %v496, %v491
  %v512 = vpack.c.b16 %v497, %v492
  %v513 = vpack.c.b16 %v498, %v493
  %v514 = vpack.c.b16 %v504, %v499
  %v515 = vpack.c.b16 %v505, %v500
  %v516 = vpack.c.b16 %v506, %v501
  %v517 = vpack.c.b16 %v507, %v502
  %v518 = vpack.c.b16 %v508, %v503
  %vm527 = vcmask 523264
  %v529 = vsel %vm527, %v513, 0
  %v532 = vsel %vm527, %v518, 0
  %534 = vmatprep.subr.bf16.mxu0 0
  %535 = vmatpush1.bf16.msra.mxu0 %v441
  %536 = vmatprep.subr.bf16.mxu0 0
  %537 = vmatpush1.bf16.msra.mxu0 %v442
  %538 = vmatprep.subr.bf16.mxu0 0
  %539 = vmatpush1.bf16.msra.mxu0 %v443
  %540 = vmatprep.subr.bf16.mxu0 0
  %541 = vmatpush1.bf16.msra.mxu0 %v444
  %542 = vmatprep.subr.bf16.mxu0 0
  %543 = vmatpush1.bf16.msra.mxu0 %v445
  %544 = vmatprep.subr.bf16.mxu0 0
  %545 = vmatpush1.bf16.msra.mxu0 %v446
  %546 = vmatprep.subr.bf16.mxu0 0
  %547 = vmatpush1.bf16.msra.mxu0 %v447
  %548 = vmatprep.subr.bf16.mxu0 0
  %549 = vmatpush1.bf16.msra.mxu0 %v448
  %550 = vmatprep.subr.bf16.mxu0 0
  %551 = vmatpush1.bf16.msra.mxu0 %v449
  %552 = vmatprep.subr.bf16.mxu0 0
  %553 = vmatpush1.bf16.msra.mxu0 %v450
  %554 = vmatprep.subr.bf16.mxu0 0
  %555 = vmatpush1.bf16.msra.mxu0 %v451
  %556 = vmatprep.subr.bf16.mxu0 0
  %557 = vmatpush1.bf16.msra.mxu0 %v452
  %558 = vmatprep.subr.bf16.mxu0 0
  %559 = vmatpush1.bf16.msra.mxu0 %v453
  %560 = vmatprep.subr.bf16.mxu0 0
  %561 = vmatpush1.bf16.msra.mxu0 %v454
  %562 = vmatprep.subr.bf16.mxu0 0
  %563 = vmatpush1.bf16.msra.mxu0 %v455
  %564 = vmatprep.subr.bf16.mxu0 0
  %565 = vmatpush1.bf16.msra.mxu0 %v456
  %566 = vmatprep.mubr.bf16.mxu0 %v510
  %567 = vmatmul.mubr.bf16.gmra.mrb[0].mxu0 %v509
  %v568 = vpop.f32.mrb[0].mxu0
  %v569 = vadd.f32 0.0, %v568
  %v570 = vpop.f32.mrb[0].mxu0
  %v571 = vpop.f32.mrb[0].mxu0
  %v572 = vadd.f32 0.0, %v571
  %v573 = vpop.f32.mrb[0].mxu0
  %574 = vmatprep.mubr.bf16.mxu0 %v515
  %575 = vmatmul.mubr.bf16.gmra.mrb[0].mxu0 %v514
  %v576 = vpop.f32.mrb[0].mxu0
  %v577 = vadd.f32 0.0, %v576
  %v578 = vpop.f32.mrb[0].mxu0
  %v579 = vpop.f32.mrb[0].mxu0
  %v580 = vadd.f32 0.0, %v579
  %v581 = vpop.f32.mrb[0].mxu0
  %582 = vdwg.mxu0
  %583 = vmatprep.subr.bf16.mxu0 0
  %584 = vmatpush1.bf16.msra.mxu0 %v457
  %585 = vmatprep.subr.bf16.mxu0 0
  %586 = vmatpush1.bf16.msra.mxu0 %v458
  %587 = vmatprep.subr.bf16.mxu0 0
  %588 = vmatpush1.bf16.msra.mxu0 %v459
  %589 = vmatprep.subr.bf16.mxu0 0
  %590 = vmatpush1.bf16.msra.mxu0 %v460
  %591 = vmatprep.subr.bf16.mxu0 0
  %592 = vmatpush1.bf16.msra.mxu0 %v461
  %593 = vmatprep.subr.bf16.mxu0 0
  %594 = vmatpush1.bf16.msra.mxu0 %v462
  %595 = vmatprep.subr.bf16.mxu0 0
  %596 = vmatpush1.bf16.msra.mxu0 %v463
  %597 = vmatprep.subr.bf16.mxu0 0
  %598 = vmatpush1.bf16.msra.mxu0 %v464
  %599 = vmatprep.subr.bf16.mxu0 0
  %600 = vmatpush1.bf16.msra.mxu0 %v465
  %601 = vmatprep.subr.bf16.mxu0 0
  %602 = vmatpush1.bf16.msra.mxu0 %v466
  %603 = vmatprep.subr.bf16.mxu0 0
  %604 = vmatpush1.bf16.msra.mxu0 %v467
  %605 = vmatprep.subr.bf16.mxu0 0
  %606 = vmatpush1.bf16.msra.mxu0 %v468
  %607 = vmatprep.subr.bf16.mxu0 0
  %608 = vmatpush1.bf16.msra.mxu0 %v469
  %609 = vmatprep.subr.bf16.mxu0 0
  %610 = vmatpush1.bf16.msra.mxu0 %v470
  %611 = vmatprep.subr.bf16.mxu0 0
  %612 = vmatpush1.bf16.msra.mxu0 %v471
  %613 = vmatprep.subr.bf16.mxu0 0
  %614 = vmatpush1.bf16.msra.mxu0 %v472
  %615 = vmatprep.mubr.bf16.mxu0 %v512
  %616 = vmatmul.mubr.bf16.gmra.mrb[0].mxu0 %v511
  %v617 = vpop.f32.mrb[0].mxu0
  %v618 = vadd.f32 %v569, %v617
  %v619 = vpop.f32.mrb[0].mxu0
  %v620 = vpop.f32.mrb[0].mxu0
  %v621 = vadd.f32 %v572, %v620
  %v622 = vpop.f32.mrb[0].mxu0
  %623 = vmatprep.mubr.bf16.mxu0 %v517
  %624 = vmatmul.mubr.bf16.gmra.mrb[0].mxu0 %v516
  %v625 = vpop.f32.mrb[0].mxu0
  %v626 = vadd.f32 %v577, %v625
  %v627 = vpop.f32.mrb[0].mxu0
  %v628 = vpop.f32.mrb[0].mxu0
  %v629 = vadd.f32 %v580, %v628
  %v630 = vpop.f32.mrb[0].mxu0
  %631 = vdwg.mxu0
  %632 = vmatprep.subr.bf16.mxu0 0
  %633 = vmatpush1.bf16.msra.mxu0 %v473
  %634 = vmatprep.subr.bf16.mxu0 0
  %635 = vmatpush1.bf16.msra.mxu0 %v474
  %636 = vmatprep.subr.bf16.mxu0 0
  %637 = vmatpush1.bf16.msra.mxu0 %v475
  %638 = vmatprep.subr.bf16.mxu0 0
  %639 = vmatpush1.bf16.msra.mxu0 %v476
  %640 = vmatprep.subr.bf16.mxu0 0
  %641 = vmatpush1.bf16.msra.mxu0 0
  %642 = vmatprep.subr.bf16.mxu0 0
  %643 = vmatpush1.bf16.msra.mxu0 0
  %644 = vmatprep.subr.bf16.mxu0 0
  %645 = vmatpush1.bf16.msra.mxu0 0
  %646 = vmatprep.subr.bf16.mxu0 0
  %647 = vmatpush1.bf16.msra.mxu0 0
  %648 = vmatprep.subr.bf16.mxu0 0
  %649 = vmatpush1.bf16.msra.mxu0 0
  %650 = vmatprep.subr.bf16.mxu0 0
  %651 = vmatpush1.bf16.msra.mxu0 0
  %652 = vmatprep.subr.bf16.mxu0 0
  %653 = vmatpush1.bf16.msra.mxu0 0
  %654 = vmatprep.subr.bf16.mxu0 0
  %655 = vmatpush1.bf16.msra.mxu0 0
  %656 = vmatprep.subr.bf16.mxu0 0
  %657 = vmatpush1.bf16.msra.mxu0 0
  %658 = vmatprep.subr.bf16.mxu0 0
  %659 = vmatpush1.bf16.msra.mxu0 0
  %660 = vmatprep.subr.bf16.mxu0 0
  %661 = vmatpush1.bf16.msra.mxu0 0
  %662 = vmatprep.subr.bf16.mxu0 0
  %663 = vmatpush1.bf16.msra.mxu0 0
  %664 = vmatprep.mubr.bf16.mxu0 0
  %665 = vmatmul.mubr.bf16.gmra.mrb[0].mxu0 %v529
  %v666 = vpop.f32.mrb[0].mxu0
  %v667 = vadd.f32 %v618, %v666
  %v668 = vpop.f32.mrb[0].mxu0
  %v669 = vpop.f32.mrb[0].mxu0
  %v670 = vadd.f32 %v621, %v669
  %v671 = vpop.f32.mrb[0].mxu0
  %672 = vmatprep.mubr.bf16.mxu0 0
  %673 = vmatmul.mubr.bf16.gmra.mrb[0].mxu0 %v532
  %v674 = vpop.f32.mrb[0].mxu0
  %v675 = vadd.f32 %v626, %v674
  %v676 = vpop.f32.mrb[0].mxu0
  %v677 = vpop.f32.mrb[0].mxu0
  %v678 = vadd.f32 %v629, %v677
  %v679 = vpop.f32.mrb[0].mxu0
  %680 = vdwg.mxu0
  %682 = vset.pattern.permute.xlu0 2
  %683 = vperm.xlu0 %682, %v236
  %v684 = vpop.permute.xlu0 %683
  %687 = vset.pattern.permute.xlu0 2
  %688 = vperm.xlu0 %687, %v237
  %v689 = vpop.permute.xlu0 %688
  %692 = vset.pattern.permute.xlu0 2
  %693 = vperm.xlu0 %692, %v238
  %v694 = vpop.permute.xlu0 %693
  %697 = vset.pattern.permute.xlu0 2
  %698 = vperm.xlu0 %697, %v239
  %v699 = vpop.permute.xlu0 %698
  %v701 = vmul.f32 %v667, %v684
  %v702 = vmul.f32 %v670, %v689
  %v703 = vmul.f32 %v675, %v694
  %v704 = vmul.f32 %v678, %v699
  %705 = vset.pattern.permute.xlu0 3
  %706 = vperm.xlu0 %705, %v236
  %v707 = vpop.permute.xlu0 %706
  %709 = vset.pattern.permute.xlu0 3
  %710 = vperm.xlu0 %709, %v237
  %v711 = vpop.permute.xlu0 %710
  %713 = vset.pattern.permute.xlu0 3
  %714 = vperm.xlu0 %713, %v238
  %v715 = vpop.permute.xlu0 %714
  %717 = vset.pattern.permute.xlu0 3
  %718 = vperm.xlu0 %717, %v239
  %v719 = vpop.permute.xlu0 %718
  %v721 = vadd.f32 %v701, %v707
  %v722 = vadd.f32 %v702, %v711
  %v723 = vadd.f32 %v703, %v715
  %v724 = vadd.f32 %v704, %v719
  %v725 = vmax.f32 %v721, 0.0
  %v726 = vmax.f32 %v722, 0.0
  %v727 = vmax.f32 %v723, 0.0
  %v728 = vmax.f32 %v724, 0.0
  %v729 = vmul.f32 %v725, %v190
  %v730 = vmul.f32 %v726, %v190
  %v731 = vmul.f32 %v727, %v190
  %v732 = vmul.f32 %v728, %v190
  %v733 = vpack.c.bf16 %v730, %v729
  %v734 = vpack.c.bf16 %v732, %v731
  %737 = vrot.lane.b32.xlu0 %v733, 11
  %v738 = vpop.permute.xlu0 %737
  %739 = vrot.lane.b32.xlu0 %v734, 11
  %v740 = vpop.permute.xlu0 %739
  %743 = vst.msk [vmem:[#allocation3] sm:$0xff] %vm219, %v738
  %744 = vst.msk [vmem:[#allocation3 + $0x8] sm:$0xff] %vm219, %v740
  %v745 = vld [vmem:[%s1 + $0x14] sm:$0xf]
  %v746 = vld [vmem:[%s1 + $0x70] sm:$0xf]
  %v747 = vld [vmem:[%s1 + $0xcc] sm:$0xf]
  %v748 = vld [vmem:[%s1 + $0x128] sm:$0xf]
  %v749 = vunpack.c.l.bf16 %v745
  %v750 = vunpack.c.l.bf16 %v746
  %v751 = vunpack.c.l.bf16 %v747
  %v752 = vunpack.c.l.bf16 %v748
  %v754 = vsel %vm527, %v749, 0
  %v757 = vsel %vm527, %v750, 0
  %v760 = vsel %vm527, %v751, 0
  %v763 = vsel %vm527, %v752, 0
  %765 = vmatprep.subr.mxu0 0.0
  %766 = vmatpush1.msra.mxu0 %v75
  %767 = vmatprep.subr.mxu0 0.0
  %768 = vmatpush1.msra.mxu0 %v76
  %769 = vmatprep.subr.mxu0 0.0
  %770 = vmatpush1.msra.mxu0 %v77
  %771 = vmatprep.subr.mxu0 0.0
  %772 = vmatpush1.msra.mxu0 %v78
  %773 = vmatprep.subr.mxu0 0.0
  %774 = vmatpush1.msra.mxu0 %v79
  %775 = vmatprep.subr.mxu0 0.0
  %776 = vmatpush1.msra.mxu0 %v80
  %777 = vmatprep.subr.mxu0 0.0
  %778 = vmatpush1.msra.mxu0 %v81
  %779 = vmatprep.subr.mxu0 0.0
  %780 = vmatpush1.msra.mxu0 %v82
  %781 = vmatprep.subr.mxu0 0.0
  %782 = vmatpush1.msra.mxu0 0.0
  %783 = vmatprep.subr.mxu0 0.0
  %784 = vmatpush1.msra.mxu0 0.0
  %785 = vmatprep.subr.mxu0 0.0
  %786 = vmatpush1.msra.mxu0 0.0
  %787 = vmatprep.subr.mxu0 0.0
  %788 = vmatpush1.msra.mxu0 0.0
  %789 = vmatprep.subr.mxu0 0.0
  %790 = vmatpush1.msra.mxu0 0.0
  %791 = vmatprep.subr.mxu0 0.0
  %792 = vmatpush1.msra.mxu0 0.0
  %793 = vmatprep.subr.mxu0 0.0
  %794 = vmatpush1.msra.mxu0 0.0
  %795 = vmatprep.subr.mxu0 0.0
  %796 = vmatpush1.msra.mxu0 0.0
  %797 = vmatprep.subr.mxu0 0.0
  %798 = vmatpush1.msra.mxu0 0.0
  %799 = vmatprep.subr.mxu0 0.0
  %800 = vmatpush1.msra.mxu0 0.0
  %801 = vmatprep.subr.mxu0 0.0
  %802 = vmatpush1.msra.mxu0 0.0
  %803 = vmatprep.subr.mxu0 0.0
  %804 = vmatpush1.msra.mxu0 0.0
  %805 = vmatprep.subr.mxu0 0.0
  %806 = vmatpush1.msra.mxu0 0.0
  %807 = vmatprep.subr.mxu0 0.0
  %808 = vmatpush1.msra.mxu0 0.0
  %809 = vmatprep.subr.mxu0 0.0
  %810 = vmatpush1.msra.mxu0 0.0
  %811 = vmatprep.subr.mxu0 0.0
  %812 = vmatpush1.msra.mxu0 0.0
  %813 = vmatprep.subr.mxu0 0.0
  %814 = vmatpush1.msra.mxu0 0.0
  %815 = vmatprep.subr.mxu0 0.0
  %816 = vmatpush1.msra.mxu0 0.0
  %817 = vmatprep.subr.mxu0 0.0
  %818 = vmatpush1.msra.mxu0 0.0
  %819 = vmatprep.subr.mxu0 0.0
  %820 = vmatpush1.msra.mxu0 0.0
  %821 = vmatprep.subr.mxu0 0.0
  %822 = vmatpush1.msra.mxu0 0.0
  %823 = vmatprep.subr.mxu0 0.0
  %824 = vmatpush1.msra.mxu0 0.0
  %825 = vmatprep.subr.mxu0 0.0
  %826 = vmatpush1.msra.mxu0 0.0
  %827 = vmatprep.subr.mxu0 0.0
  %828 = vmatpush1.msra.mxu0 0.0
  %829 = vmatprep.mubr.f32.mxu0 0.0
  %830 = vmatmul.mubr.f32.gmra.mrb[0].mxu0 %v754
  %v831 = vpop.f32.mrb[0].mxu0
  %v832 = vadd.f32 0.0, %v831
  %v833 = vpop.f32.mrb[0].mxu0
  %834 = vmatprep.mubr.f32.mxu0 0.0
  %835 = vmatmul.mubr.f32.gmra.mrb[0].mxu0 %v757
  %v836 = vpop.f32.mrb[0].mxu0
  %v837 = vadd.f32 0.0, %v836
  %v838 = vpop.f32.mrb[0].mxu0
  %839 = vmatprep.mubr.f32.mxu0 0.0
  %840 = vmatmul.mubr.f32.gmra.mrb[0].mxu0 %v760
  %v841 = vpop.f32.mrb[0].mxu0
  %v842 = vadd.f32 0.0, %v841
  %v843 = vpop.f32.mrb[0].mxu0
  %844 = vmatprep.mubr.f32.mxu0 0.0
  %845 = vmatmul.mubr.f32.gmra.mrb[0].mxu0 %v763
  %v846 = vpop.f32.mrb[0].mxu0
  %v847 = vadd.f32 0.0, %v846
  %v848 = vpop.f32.mrb[0].mxu0
  %849 = vdwg.mxu0
  %v850 = vld [vmem:[%s2] sm:$0xff]
  %v851 = vld [vmem:[%s2 + $0x8] sm:$0xff]
  %v852 = vld [vmem:[%s2 + $0x10] sm:$0xff]
  %v853 = vld [vmem:[%s2 + $0x18] sm:$0xff]
  %855 = vset.pattern.permute.xlu0 4
  %856 = vperm.xlu0 %855, %v850
  %v857 = vpop.permute.xlu0 %856
  %860 = vset.pattern.permute.xlu0 4
  %861 = vperm.xlu0 %860, %v851
  %v862 = vpop.permute.xlu0 %861
  %865 = vset.pattern.permute.xlu0 4
  %866 = vperm.xlu0 %865, %v852
  %v867 = vpop.permute.xlu0 %866
  %870 = vset.pattern.permute.xlu0 4
  %871 = vperm.xlu0 %870, %v853
  %v872 = vpop.permute.xlu0 %871
  %v874 = vmul.f32 %v832, %v857
  %v875 = vmul.f32 %v837, %v862
  %v876 = vmul.f32 %v842, %v867
  %v877 = vmul.f32 %v847, %v872
  %878 = vset.pattern.permute.xlu0 5
  %879 = vperm.xlu0 %878, %v850
  %v880 = vpop.permute.xlu0 %879
  %882 = vset.pattern.permute.xlu0 5
  %883 = vperm.xlu0 %882, %v851
  %v884 = vpop.permute.xlu0 %883
  %886 = vset.pattern.permute.xlu0 5
  %887 = vperm.xlu0 %886, %v852
  %v888 = vpop.permute.xlu0 %887
  %890 = vset.pattern.permute.xlu0 5
  %891 = vperm.xlu0 %890, %v853
  %v892 = vpop.permute.xlu0 %891
  %v894 = vadd.f32 %v874, %v880
  %v895 = vadd.f32 %v875, %v884
  %v896 = vadd.f32 %v876, %v888
  %v897 = vadd.f32 %v877, %v892
  %v898 = vmul.f32 %v894, %v190
  %v899 = vmul.f32 %v895, %v190
  %v900 = vmul.f32 %v896, %v190
  %v901 = vmul.f32 %v897, %v190
  %v902 = vld [vmem:[%s1 + $0x18] sm:$0xff]
  %v903 = vld [vmem:[%s1 + $0x20] sm:$0xf]
  %v904 = vld [vmem:[%s1 + $0x74] sm:$0xff]
  %v905 = vld [vmem:[%s1 + $0x7c] sm:$0xf]
  %v906 = vld [vmem:[%s1 + $0xd0] sm:$0xff]
  %v907 = vld [vmem:[%s1 + $0xd8] sm:$0xf]
  %v908 = vld [vmem:[%s1 + $0x12c] sm:$0xff]
  %v909 = vld [vmem:[%s1 + $0x134] sm:$0xf]
  %v910 = vld [vmem:[#allocation3] sm:$0xff]
  %v911 = vld [vmem:[#allocation3 + $0x8] sm:$0xff]
  %912 = vst.msk [vmem:[#allocation9] sm:$0xff] %vm244, %v910
  %913 = vst.msk [vmem:[#allocation9 + $0x50] sm:$0xff] %vm244, %v911
  %v914 = vld [vmem:[#allocation3] sm:$0xff]
  %v915 = vld [vmem:[#allocation3 + $0x8] sm:$0xff]
  %918 = vrot.lane.b32.xlu0 %v914, 127
  %v919 = vpop.permute.xlu0 %918
  %920 = vrot.lane.b32.xlu0 %v915, 127
  %v921 = vpop.permute.xlu0 %920
  %924 = vst.msk [vmem:[#allocation9 + $0xa0] sm:$0xff] %vm244, %v919
  %925 = vst.msk [vmem:[#allocation9 + $0xf0] sm:$0xff] %vm244, %v921
  %v926 = vld [vmem:[#allocation3] sm:$0xff]
  %v927 = vld [vmem:[#allocation3 + $0x8] sm:$0xff]
  %930 = vrot.lane.b32.xlu0 %v926, 126
  %v931 = vpop.permute.xlu0 %930
  %932 = vrot.lane.b32.xlu0 %v927, 126
  %v933 = vpop.permute.xlu0 %932
  %936 = vst.msk [vmem:[#allocation9 + $0x140] sm:$0xff] %vm244, %v931
  %937 = vst.msk [vmem:[#allocation9 + $0x190] sm:$0xff] %vm244, %v933
  %v938 = vld [vmem:[#allocation3] sm:$0xff]
  %v939 = vld [vmem:[#allocation3 + $0x8] sm:$0xff]
  %942 = vrot.lane.b32.xlu0 %v938, 118
  %v943 = vpop.permute.xlu0 %942
  %944 = vrot.lane.b32.xlu0 %v939, 118
  %v945 = vpop.permute.xlu0 %944
  %948 = vst.msk [vmem:[#allocation9 + $0x1e0] sm:$0xff] %vm244, %v943
  %949 = vst.msk [vmem:[#allocation9 + $0x230] sm:$0xff] %vm244, %v945
  %v950 = vld [vmem:[#allocation3] sm:$0xff]
  %v951 = vld [vmem:[#allocation3 + $0x8] sm:$0xff]
  %954 = vrot.lane.b32.xlu0 %v950, 117
  %v955 = vpop.permute.xlu0 %954
  %956 = vrot.lane.b32.xlu0 %v951, 117
  %v957 = vpop.permute.xlu0 %956
  %960 = vst.msk [vmem:[#allocation9 + $0x280] sm:$0xff] %vm244, %v955
  %961 = vst.msk [vmem:[#allocation9 + $0x2d0] sm:$0xff] %vm244, %v957
  %v962 = vld [vmem:[#allocation3] sm:$0xff]
  %v963 = vld [vmem:[#allocation3 + $0x8] sm:$0xff]
  %966 = vrot.lane.b32.xlu0 %v962, 116
  %v967 = vpop.permute.xlu0 %966
  %968 = vrot.lane.b32.xlu0 %v963, 116
  %v969 = vpop.permute.xlu0 %968
  %972 = vst.msk [vmem:[#allocation9 + $0x320] sm:$0xff] %vm244, %v967
  %973 = vst.msk [vmem:[#allocation9 + $0x370] sm:$0xff] %vm244, %v969
  %v974 = vld [vmem:[#allocation3] sm:$0xff]
  %v975 = vld [vmem:[#allocation3 + $0x8] sm:$0xff]
  %978 = vrot.lane.b32.xlu0 %v974, 108
  %v979 = vpop.permute.xlu0 %978
  %980 = vrot.lane.b32.xlu0 %v975, 108
  %v981 = vpop.permute.xlu0 %980
  %984 = vst.msk [vmem:[#allocation9 + $0x3c0] sm:$0xff] %vm244, %v979
  %985 = vst.msk [vmem:[#allocation9 + $0x410] sm:$0xff] %vm244, %v981
  %v986 = vld [vmem:[#allocation3] sm:$0xff]
  %v987 = vld [vmem:[#allocation3 + $0x8] sm:$0xff]
  %990 = vrot.lane.b32.xlu0 %v986, 107
  %v991 = vpop.permute.xlu0 %990
  %992 = vrot.lane.b32.xlu0 %v987, 107
  %v993 = vpop.permute.xlu0 %992
  %996 = vst.msk [vmem:[#allocation9 + $0x460] sm:$0xff] %vm244, %v991
  %997 = vst.msk [vmem:[#allocation9 + $0x4b0] sm:$0xff] %vm244, %v993
  %v998 = vld [vmem:[#allocation3] sm:$0xff]
  %v999 = vld [vmem:[#allocation3 + $0x8] sm:$0xff]
  %1002 = vrot.lane.b32.xlu0 %v998, 106
  %v1003 = vpop.permute.xlu0 %1002
  %1004 = vrot.lane.b32.xlu0 %v999, 106
  %v1005 = vpop.permute.xlu0 %1004
  %1008 = vst.msk [vmem:[#allocation9 + $0x500] sm:$0xff] %vm244, %v1003
  %1009 = vst.msk [vmem:[#allocation9 + $0x550] sm:$0xff] %vm244, %v1005
  %v1010 = vld [vmem:[#allocation9] sm:$0xff]
  %v1011 = vld [vmem:[#allocation9 + $0x50] sm:$0xff]
  %v1012 = vld [vmem:[#allocation9 + $0xa0] sm:$0xff]
  %v1013 = vld [vmem:[#allocation9 + $0xf0] sm:$0xff]
  %v1014 = vld [vmem:[#allocation9 + $0x140] sm:$0xff]
  %v1015 = vld [vmem:[#allocation9 + $0x190] sm:$0xff]
  %v1016 = vld [vmem:[#allocation9 + $0x1e0] sm:$0xff]
  %v1017 = vld [vmem:[#allocation9 + $0x230] sm:$0xff]
  %v1018 = vld [vmem:[#allocation9 + $0x280] sm:$0xff]
  %v1019 = vld [vmem:[#allocation9 + $0x2d0] sm:$0xff]
  %v1020 = vld [vmem:[#allocation9 + $0x320] sm:$0xff]
  %v1021 = vld [vmem:[#allocation9 + $0x370] sm:$0xff]
  %v1022 = vld [vmem:[#allocation9 + $0x3c0] sm:$0xff]
  %v1023 = vld [vmem:[#allocation9 + $0x410] sm:$0xff]
  %v1024 = vld [vmem:[#allocation9 + $0x460] sm:$0xff]
  %v1025 = vld [vmem:[#allocation9 + $0x4b0] sm:$0xff]
  %v1026 = vld [vmem:[#allocation9 + $0x500] sm:$0xff]
  %v1027 = vld [vmem:[#allocation9 + $0x550] sm:$0xff]
  %1028 = vset.pattern.permute.xlu0 6
  %1029 = vperm.xlu0 %1028, %v850
  %v1030 = vpop.permute.xlu0 %1029
  %1032 = vset.pattern.permute.xlu0 6
  %1033 = vperm.xlu0 %1032, %v851
  %v1034 = vpop.permute.xlu0 %1033
  %1036 = vset.pattern.permute.xlu0 6
  %1037 = vperm.xlu0 %1036, %v852
  %v1038 = vpop.permute.xlu0 %1037
  %1040 = vset.pattern.permute.xlu0 6
  %1041 = vperm.xlu0 %1040, %v853
  %v1042 = vpop.permute.xlu0 %1041
  %v1052 = vunpack.c.l.b16 %v902
  %v1053 = vunpack.c.h.b16 %v902
  %v1054 = vunpack.c.l.b16 %v903
  %v1055 = vunpack.c.l.b16 %v904
  %v1056 = vunpack.c.h.b16 %v904
  %v1057 = vunpack.c.l.b16 %v905
  %v1058 = vunpack.c.l.b16 %v906
  %v1059 = vunpack.c.h.b16 %v906
  %v1060 = vunpack.c.l.b16 %v907
  %v1061 = vunpack.c.l.b16 %v908
  %v1062 = vunpack.c.h.b16 %v908
  %v1063 = vunpack.c.l.b16 %v909
  %v1064 = vpack.c.b16 %v1055, %v1052
  %v1065 = vpack.c.b16 %v1056, %v1053
  %v1066 = vpack.c.b16 %v1057, %v1054
  %v1067 = vpack.c.b16 %v1061, %v1058
  %v1068 = vpack.c.b16 %v1062, %v1059
  %v1069 = vpack.c.b16 %v1063, %v1060
  %vm1074 = vcmask 261120
  %v1076 = vsel %vm1074, %v1066, 0
  %v1079 = vsel %vm1074, %v1069, 0
  %1081 = vmatprep.subr.bf16.mxu0 0
  %1082 = vmatpush1.bf16.msra.mxu0 %v1010
  %1083 = vmatprep.subr.bf16.mxu0 0
  %1084 = vmatpush1.bf16.msra.mxu0 %v1011
  %1085 = vmatprep.subr.bf16.mxu0 0
  %1086 = vmatpush1.bf16.msra.mxu0 %v1012
  %1087 = vmatprep.subr.bf16.mxu0 0
  %1088 = vmatpush1.bf16.msra.mxu0 %v1013
  %1089 = vmatprep.subr.bf16.mxu0 0
  %1090 = vmatpush1.bf16.msra.mxu0 %v1014
  %1091 = vmatprep.subr.bf16.mxu0 0
  %1092 = vmatpush1.bf16.msra.mxu0 %v1015
  %1093 = vmatprep.subr.bf16.mxu0 0
  %1094 = vmatpush1.bf16.msra.mxu0 %v1016
  %1095 = vmatprep.subr.bf16.mxu0 0
  %1096 = vmatpush1.bf16.msra.mxu0 %v1017
  %1097 = vmatprep.subr.bf16.mxu0 0
  %1098 = vmatpush1.bf16.msra.mxu0 %v1018
  %1099 = vmatprep.subr.bf16.mxu0 0
  %1100 = vmatpush1.bf16.msra.mxu0 %v1019
  %1101 = vmatprep.subr.bf16.mxu0 0
  %1102 = vmatpush1.bf16.msra.mxu0 %v1020
  %1103 = vmatprep.subr.bf16.mxu0 0
  %1104 = vmatpush1.bf16.msra.mxu0 %v1021
  %1105 = vmatprep.subr.bf16.mxu0 0
  %1106 = vmatpush1.bf16.msra.mxu0 %v1022
  %1107 = vmatprep.subr.bf16.mxu0 0
  %1108 = vmatpush1.bf16.msra.mxu0 %v1023
  %1109 = vmatprep.subr.bf16.mxu0 0
  %1110 = vmatpush1.bf16.msra.mxu0 %v1024
  %1111 = vmatprep.subr.bf16.mxu0 0
  %1112 = vmatpush1.bf16.msra.mxu0 %v1025
  %1113 = vmatprep.mubr.bf16.mxu0 %v1065
  %1114 = vmatmul.mubr.bf16.gmra.mrb[0].mxu0 %v1064
  %v1115 = vpop.f32.mrb[0].mxu0
  %v1116 = vadd.f32 %v1030, %v1115
  %v1117 = vpop.f32.mrb[0].mxu0
  %v1118 = vpop.f32.mrb[0].mxu0
  %v1119 = vadd.f32 %v1034, %v1118
  %v1120 = vpop.f32.mrb[0].mxu0
  %1121 = vmatprep.mubr.bf16.mxu0 %v1068
  %1122 = vmatmul.mubr.bf16.gmra.mrb[0].mxu0 %v1067
  %v1123 = vpop.f32.mrb[0].mxu0
  %v1124 = vadd.f32 %v1038, %v1123
  %v1125 = vpop.f32.mrb[0].mxu0
  %v1126 = vpop.f32.mrb[0].mxu0
  %v1127 = vadd.f32 %v1042, %v1126
  %v1128 = vpop.f32.mrb[0].mxu0
  %1129 = vdwg.mxu0
  %1130 = vmatprep.subr.bf16.mxu0 0
  %1131 = vmatpush1.bf16.msra.mxu0 %v1026
  %1132 = vmatprep.subr.bf16.mxu0 0
  %1133 = vmatpush1.bf16.msra.mxu0 %v1027
  %1134 = vmatprep.subr.bf16.mxu0 0
  %1135 = vmatpush1.bf16.msra.mxu0 0
  %1136 = vmatprep.subr.bf16.mxu0 0
  %1137 = vmatpush1.bf16.msra.mxu0 0
  %1138 = vmatprep.subr.bf16.mxu0 0
  %1139 = vmatpush1.bf16.msra.mxu0 0
  %1140 = vmatprep.subr.bf16.mxu0 0
  %1141 = vmatpush1.bf16.msra.mxu0 0
  %1142 = vmatprep.subr.bf16.mxu0 0
  %1143 = vmatpush1.bf16.msra.mxu0 0
  %1144 = vmatprep.subr.bf16.mxu0 0
  %1145 = vmatpush1.bf16.msra.mxu0 0
  %1146 = vmatprep.subr.bf16.mxu0 0
  %1147 = vmatpush1.bf16.msra.mxu0 0
  %1148 = vmatprep.subr.bf16.mxu0 0
  %1149 = vmatpush1.bf16.msra.mxu0 0
  %1150 = vmatprep.subr.bf16.mxu0 0
  %1151 = vmatpush1.bf16.msra.mxu0 0
  %1152 = vmatprep.subr.bf16.mxu0 0
  %1153 = vmatpush1.bf16.msra.mxu0 0
  %1154 = vmatprep.subr.bf16.mxu0 0
  %1155 = vmatpush1.bf16.msra.mxu0 0
  %1156 = vmatprep.subr.bf16.mxu0 0
  %1157 = vmatpush1.bf16.msra.mxu0 0
  %1158 = vmatprep.subr.bf16.mxu0 0
  %1159 = vmatpush1.bf16.msra.mxu0 0
  %1160 = vmatprep.subr.bf16.mxu0 0
  %1161 = vmatpush1.bf16.msra.mxu0 0
  %1162 = vmatprep.mubr.bf16.mxu0 0
  %1163 = vmatmul.mubr.bf16.gmra.mrb[0].mxu0 %v1076
  %v1164 = vpop.f32.mrb[0].mxu0
  %v1165 = vadd.f32 %v1116, %v1164
  %v1166 = vpop.f32.mrb[0].mxu0
  %v1167 = vpop.f32.mrb[0].mxu0
  %v1168 = vadd.f32 %v1119, %v1167
  %v1169 = vpop.f32.mrb[0].mxu0
  %1170 = vmatprep.mubr.bf16.mxu0 0
  %1171 = vmatmul.mubr.bf16.gmra.mrb[0].mxu0 %v1079
  %v1172 = vpop.f32.mrb[0].mxu0
  %v1173 = vadd.f32 %v1124, %v1172
  %v1174 = vpop.f32.mrb[0].mxu0
  %v1175 = vpop.f32.mrb[0].mxu0
  %v1176 = vadd.f32 %v1127, %v1175
  %v1177 = vpop.f32.mrb[0].mxu0
  %1178 = vdwg.mxu0
  %v1179 = vadd.f32 %v1165, %v898
  %v1180 = vadd.f32 %v1168, %v899
  %v1181 = vadd.f32 %v1173, %v900
  %v1182 = vadd.f32 %v1176, %v901
  %v1183 = vmax.f32 %v1179, 0.0
  %v1184 = vmax.f32 %v1180, 0.0
  %v1185 = vmax.f32 %v1181, 0.0
  %v1186 = vmax.f32 %v1182, 0.0
  %v1187 = vmul.f32 %v1183, %v190
  %v1188 = vmul.f32 %v1184, %v190
  %v1189 = vmul.f32 %v1185, %v190
  %v1190 = vmul.f32 %v1186, %v190
  %v1191 = vld [vmem:[%s1 + $0x54] sm:$0xf]
  %v1192 = vld [vmem:[%s1 + $0xb0] sm:$0x1]
  %v1193 = vunpack.c.l.bf16 %v1191
  %v1194 = vunpack.c.l.bf16 %v1192
  %1199 = vrot.lane.b32.xlu0 %v1187, 118
  %v1200 = vpop.permute.xlu0 %1199
  %1201 = vrot.lane.b32.xlu0 %v1188, 118
  %v1202 = vpop.permute.xlu0 %1201
  %1203 = vrot.lane.b32.xlu0 %v1189, 118
  %v1204 = vpop.permute.xlu0 %1203
  %1205 = vrot.lane.b32.xlu0 %v1190, 118
  %v1206 = vpop.permute.xlu0 %1205
  %vm1207 = vcmask 80896
  %v1208 = vsel %vm1207, %v1200, 0
  %v1210 = vsel %vm1207, %v1202, 0
  %v1212 = vsel %vm1207, %v1204, 0
  %v1214 = vsel %vm1207, %v1206, 0
  %vm1216 = vcmask 1041408
  %v1218 = vsel %vm1216, %v1194, 0
  %1220 = vmatprep.subr.mxu0 0.0
  %1221 = vmatpush1.msra.mxu0 %v1193
  %1222 = vmatprep.subr.mxu0 0.0
  %1223 = vmatpush1.msra.mxu0 %v1218
  %1224 = vmatprep.subr.mxu0 0.0
  %1225 = vmatpush1.msra.mxu0 0.0
  %1226 = vmatprep.subr.mxu0 0.0
  %1227 = vmatpush1.msra.mxu0 0.0
  %1228 = vmatprep.subr.mxu0 0.0
  %1229 = vmatpush1.msra.mxu0 0.0
  %1230 = vmatprep.subr.mxu0 0.0
  %1231 = vmatpush1.msra.mxu0 0.0
  %1232 = vmatprep.subr.mxu0 0.0
  %1233 = vmatpush1.msra.mxu0 0.0
  %1234 = vmatprep.subr.mxu0 0.0
  %1235 = vmatpush1.msra.mxu0 0.0
  %1236 = vmatprep.subr.mxu0 0.0
  %1237 = vmatpush1.msra.mxu0 0.0
  %1238 = vmatprep.subr.mxu0 0.0
  %1239 = vmatpush1.msra.mxu0 0.0
  %1240 = vmatprep.subr.mxu0 0.0
  %1241 = vmatpush1.msra.mxu0 0.0
  %1242 = vmatprep.subr.mxu0 0.0
  %1243 = vmatpush1.msra.mxu0 0.0
  %1244 = vmatprep.subr.mxu0 0.0
  %1245 = vmatpush1.msra.mxu0 0.0
  %1246 = vmatprep.subr.mxu0 0.0
  %1247 = vmatpush1.msra.mxu0 0.0
  %1248 = vmatprep.subr.mxu0 0.0
  %1249 = vmatpush1.msra.mxu0 0.0
  %1250 = vmatprep.subr.mxu0 0.0
  %1251 = vmatpush1.msra.mxu0 0.0
  %1252 = vmatprep.subr.mxu0 0.0
  %1253 = vmatpush1.msra.mxu0 0.0
  %1254 = vmatprep.subr.mxu0 0.0
  %1255 = vmatpush1.msra.mxu0 0.0
  %1256 = vmatprep.subr.mxu0 0.0
  %1257 = vmatpush1.msra.mxu0 0.0
  %1258 = vmatprep.subr.mxu0 0.0
  %1259 = vmatpush1.msra.mxu0 0.0
  %1260 = vmatprep.subr.mxu0 0.0
  %1261 = vmatpush1.msra.mxu0 0.0
  %1262 = vmatprep.subr.mxu0 0.0
  %1263 = vmatpush1.msra.mxu0 0.0
  %1264 = vmatprep.subr.mxu0 0.0
  %1265 = vmatpush1.msra.mxu0 0.0
  %1266 = vmatprep.subr.mxu0 0.0
  %1267 = vmatpush1.msra.mxu0 0.0
  %1268 = vmatprep.subr.mxu0 0.0
  %1269 = vmatpush1.msra.mxu0 0.0
  %1270 = vmatprep.subr.mxu0 0.0
  %1271 = vmatpush1.msra.mxu0 0.0
  %1272 = vmatprep.subr.mxu0 0.0
  %1273 = vmatpush1.msra.mxu0 0.0
  %1274 = vmatprep.subr.mxu0 0.0
  %1275 = vmatpush1.msra.mxu0 0.0
  %1276 = vmatprep.subr.mxu0 0.0
  %1277 = vmatpush1.msra.mxu0 0.0
  %1278 = vmatprep.subr.mxu0 0.0
  %1279 = vmatpush1.msra.mxu0 0.0
  %1280 = vmatprep.subr.mxu0 0.0
  %1281 = vmatpush1.msra.mxu0 0.0
  %1282 = vmatprep.subr.mxu0 0.0
  %1283 = vmatpush1.msra.mxu0 0.0
  %1284 = vmatprep.mubr.f32.mxu0 0.0
  %1285 = vmatmul.mubr.f32.gmra.mrb[0].mxu0 %v1208
  %v1286 = vpop.f32.mrb[0].mxu0
  %v1287 = vadd.f32 0.0, %v1286
  %v1288 = vpop.f32.mrb[0].mxu0
  %1289 = vmatprep.mubr.f32.mxu0 0.0
  %1290 = vmatmul.mubr.f32.gmra.mrb[0].mxu0 %v1210
  %v1291 = vpop.f32.mrb[0].mxu0
  %v1292 = vadd.f32 0.0, %v1291
  %v1293 = vpop.f32.mrb[0].mxu0
  %1294 = vmatprep.mubr.f32.mxu0 0.0
  %1295 = vmatmul.mubr.f32.gmra.mrb[0].mxu0 %v1212
  %v1296 = vpop.f32.mrb[0].mxu0
  %v1297 = vadd.f32 0.0, %v1296
  %v1298 = vpop.f32.mrb[0].mxu0
  %1299 = vmatprep.mubr.f32.mxu0 0.0
  %1300 = vmatmul.mubr.f32.gmra.mrb[0].mxu0 %v1214
  %v1301 = vpop.f32.mrb[0].mxu0
  %v1302 = vadd.f32 0.0, %v1301
  %v1303 = vpop.f32.mrb[0].mxu0
  %1304 = vdwg.mxu0
  %v1305 = vpack.c.bf16 %v1292, %v1287
  %v1306 = vpack.c.bf16 %v1302, %v1297
  %1309 = vrot.lane.b32.xlu0 %v1305, 37
  %v1310 = vpop.permute.xlu0 %1309
  %1311 = vrot.lane.b32.xlu0 %v1306, 37
  %v1312 = vpop.permute.xlu0 %1311
  %vm1315 = vcmask 449832
  %1316 = vst.msk [vmem:[#allocation4] sm:$0xff] %vm1315, %v1310
  %1317 = vst.msk [vmem:[#allocation4 + $0x18] sm:$0xff] %vm1315, %v1312
  %1318 = vrot.lane.b32.xlu0 %v1187, 108
  %v1319 = vpop.permute.xlu0 %1318
  %1320 = vrot.lane.b32.xlu0 %v1188, 108
  %v1321 = vpop.permute.xlu0 %1320
  %1322 = vrot.lane.b32.xlu0 %v1189, 108
  %v1323 = vpop.permute.xlu0 %1322
  %1324 = vrot.lane.b32.xlu0 %v1190, 108
  %v1325 = vpop.permute.xlu0 %1324
  %v1326 = vsel %vm1207, %v1319, 0
  %v1328 = vsel %vm1207, %v1321, 0
  %v1330 = vsel %vm1207, %v1323, 0
  %v1332 = vsel %vm1207, %v1325, 0
  %1334 = vmatprep.subr.mxu0 0.0
  %1335 = vmatpush1.msra.mxu0 %v1193
  %1336 = vmatprep.subr.mxu0 0.0
  %1337 = vmatpush1.msra.mxu0 %v1218
  %1338 = vmatprep.subr.mxu0 0.0
  %1339 = vmatpush1.msra.mxu0 0.0
  %1340 = vmatprep.subr.mxu0 0.0
  %1341 = vmatpush1.msra.mxu0 0.0
  %1342 = vmatprep.subr.mxu0 0.0
  %1343 = vmatpush1.msra.mxu0 0.0
  %1344 = vmatprep.subr.mxu0 0.0
  %1345 = vmatpush1.msra.mxu0 0.0
  %1346 = vmatprep.subr.mxu0 0.0
  %1347 = vmatpush1.msra.mxu0 0.0
  %1348 = vmatprep.subr.mxu0 0.0
  %1349 = vmatpush1.msra.mxu0 0.0
  %1350 = vmatprep.subr.mxu0 0.0
  %1351 = vmatpush1.msra.mxu0 0.0
  %1352 = vmatprep.subr.mxu0 0.0
  %1353 = vmatpush1.msra.mxu0 0.0
  %1354 = vmatprep.subr.mxu0 0.0
  %1355 = vmatpush1.msra.mxu0 0.0
  %1356 = vmatprep.subr.mxu0 0.0
  %1357 = vmatpush1.msra.mxu0 0.0
  %1358 = vmatprep.subr.mxu0 0.0
  %1359 = vmatpush1.msra.mxu0 0.0
  %1360 = vmatprep.subr.mxu0 0.0
  %1361 = vmatpush1.msra.mxu0 0.0
  %1362 = vmatprep.subr.mxu0 0.0
  %1363 = vmatpush1.msra.mxu0 0.0
  %1364 = vmatprep.subr.mxu0 0.0
  %1365 = vmatpush1.msra.mxu0 0.0
  %1366 = vmatprep.subr.mxu0 0.0
  %1367 = vmatpush1.msra.mxu0 0.0
  %1368 = vmatprep.subr.mxu0 0.0
  %1369 = vmatpush1.msra.mxu0 0.0
  %1370 = vmatprep.subr.mxu0 0.0
  %1371 = vmatpush1.msra.mxu0 0.0
  %1372 = vmatprep.subr.mxu0 0.0
  %1373 = vmatpush1.msra.mxu0 0.0
  %1374 = vmatprep.subr.mxu0 0.0
  %1375 = vmatpush1.msra.mxu0 0.0
  %1376 = vmatprep.subr.mxu0 0.0
  %1377 = vmatpush1.msra.mxu0 0.0
  %1378 = vmatprep.subr.mxu0 0.0
  %1379 = vmatpush1.msra.mxu0 0.0
  %1380 = vmatprep.subr.mxu0 0.0
  %1381 = vmatpush1.msra.mxu0 0.0
  %1382 = vmatprep.subr.mxu0 0.0
  %1383 = vmatpush1.msra.mxu0 0.0
  %1384 = vmatprep.subr.mxu0 0.0
  %1385 = vmatpush1.msra.mxu0 0.0
  %1386 = vmatprep.subr.mxu0 0.0
  %1387 = vmatpush1.msra.mxu0 0.0
  %1388 = vmatprep.subr.mxu0 0.0
  %1389 = vmatpush1.msra.mxu0 0.0
  %1390 = vmatprep.subr.mxu0 0.0
  %1391 = vmatpush1.msra.mxu0 0.0
  %1392 = vmatprep.subr.mxu0 0.0
  %1393 = vmatpush1.msra.mxu0 0.0
  %1394 = vmatprep.subr.mxu0 0.0
  %1395 = vmatpush1.msra.mxu0 0.0
  %1396 = vmatprep.subr.mxu0 0.0
  %1397 = vmatpush1.msra.mxu0 0.0
  %1398 = vmatprep.mubr.f32.mxu0 0.0
  %1399 = vmatmul.mubr.f32.gmra.mrb[0].mxu0 %v1326
  %v1400 = vpop.f32.mrb[0].mxu0
  %v1401 = vadd.f32 0.0, %v1400
  %v1402 = vpop.f32.mrb[0].mxu0
  %1403 = vmatprep.mubr.f32.mxu0 0.0
  %1404 = vmatmul.mubr.f32.gmra.mrb[0].mxu0 %v1328
  %v1405 = vpop.f32.mrb[0].mxu0
  %v1406 = vadd.f32 0.0, %v1405
  %v1407 = vpop.f32.mrb[0].mxu0
  %1408 = vmatprep.mubr.f32.mxu0 0.0
  %1409 = vmatmul.mubr.f32.gmra.mrb[0].mxu0 %v1330
  %v1410 = vpop.f32.mrb[0].mxu0
  %v1411 = vadd.f32 0.0, %v1410
  %v1412 = vpop.f32.mrb[0].mxu0
  %1413 = vmatprep.mubr.f32.mxu0 0.0
  %1414 = vmatmul.mubr.f32.gmra.mrb[0].mxu0 %v1332
  %v1415 = vpop.f32.mrb[0].mxu0
  %v1416 = vadd.f32 0.0, %v1415
  %v1417 = vpop.f32.mrb[0].mxu0
  %1418 = vdwg.mxu0
  %v1419 = vpack.c.bf16 %v1406, %v1401
  %v1420 = vpack.c.bf16 %v1416, %v1411
  %1423 = vrot.lane.b32.xlu0 %v1419, 73
  %v1424 = vpop.permute.xlu0 %1423
  %1425 = vrot.lane.b32.xlu0 %v1420, 73
  %v1426 = vpop.permute.xlu0 %1425
  %vm1429 = vcmask 745032
  %1430 = vst.msk [vmem:[#allocation4] sm:$0xff] %vm1429, %v1424
  %1431 = vst.msk [vmem:[#allocation4 + $0x18] sm:$0xff] %vm1429, %v1426
  %1432 = vrot.lane.b32.xlu0 %v1187, 98
  %v1433 = vpop.permute.xlu0 %1432
  %1434 = vrot.lane.b32.xlu0 %v1188, 98
  %v1435 = vpop.permute.xlu0 %1434
  %1436 = vrot.lane.b32.xlu0 %v1189, 98
  %v1437 = vpop.permute.xlu0 %1436
  %1438 = vrot.lane.b32.xlu0 %v1190, 98
  %v1439 = vpop.permute.xlu0 %1438
  %v1440 = vsel %vm1207, %v1433, 0
  %v1442 = vsel %vm1207, %v1435, 0
  %v1444 = vsel %vm1207, %v1437, 0
  %v1446 = vsel %vm1207, %v1439, 0
  %1448 = vmatprep.subr.mxu0 0.0
  %1449 = vmatpush1.msra.mxu0 %v1193
  %1450 = vmatprep.subr.mxu0 0.0
  %1451 = vmatpush1.msra.mxu0 %v1218
  %1452 = vmatprep.subr.mxu0 0.0
  %1453 = vmatpush1.msra.mxu0 0.0
  %1454 = vmatprep.subr.mxu0 0.0
  %1455 = vmatpush1.msra.mxu0 0.0
  %1456 = vmatprep.subr.mxu0 0.0
  %1457 = vmatpush1.msra.mxu0 0.0
  %1458 = vmatprep.subr.mxu0 0.0
  %1459 = vmatpush1.msra.mxu0 0.0
  %1460 = vmatprep.subr.mxu0 0.0
  %1461 = vmatpush1.msra.mxu0 0.0
  %1462 = vmatprep.subr.mxu0 0.0
  %1463 = vmatpush1.msra.mxu0 0.0
  %1464 = vmatprep.subr.mxu0 0.0
  %1465 = vmatpush1.msra.mxu0 0.0
  %1466 = vmatprep.subr.mxu0 0.0
  %1467 = vmatpush1.msra.mxu0 0.0
  %1468 = vmatprep.subr.mxu0 0.0
  %1469 = vmatpush1.msra.mxu0 0.0
  %1470 = vmatprep.subr.mxu0 0.0
  %1471 = vmatpush1.msra.mxu0 0.0
  %1472 = vmatprep.subr.mxu0 0.0
  %1473 = vmatpush1.msra.mxu0 0.0
  %1474 = vmatprep.subr.mxu0 0.0
  %1475 = vmatpush1.msra.mxu0 0.0
  %1476 = vmatprep.subr.mxu0 0.0
  %1477 = vmatpush1.msra.mxu0 0.0
  %1478 = vmatprep.subr.mxu0 0.0
  %1479 = vmatpush1.msra.mxu0 0.0
  %1480 = vmatprep.subr.mxu0 0.0
  %1481 = vmatpush1.msra.mxu0 0.0
  %1482 = vmatprep.subr.mxu0 0.0
  %1483 = vmatpush1.msra.mxu0 0.0
  %1484 = vmatprep.subr.mxu0 0.0
  %1485 = vmatpush1.msra.mxu0 0.0
  %1486 = vmatprep.subr.mxu0 0.0
  %1487 = vmatpush1.msra.mxu0 0.0
  %1488 = vmatprep.subr.mxu0 0.0
  %1489 = vmatpush1.msra.mxu0 0.0
  %1490 = vmatprep.subr.mxu0 0.0
  %1491 = vmatpush1.msra.mxu0 0.0
  %1492 = vmatprep.subr.mxu0 0.0
  %1493 = vmatpush1.msra.mxu0 0.0
  %1494 = vmatprep.subr.mxu0 0.0
  %1495 = vmatpush1.msra.mxu0 0.0
  %1496 = vmatprep.subr.mxu0 0.0
  %1497 = vmatpush1.msra.mxu0 0.0
  %1498 = vmatprep.subr.mxu0 0.0
  %1499 = vmatpush1.msra.mxu0 0.0
  %1500 = vmatprep.subr.mxu0 0.0
  %1501 = vmatpush1.msra.mxu0 0.0
  %1502 = vmatprep.subr.mxu0 0.0
  %1503 = vmatpush1.msra.mxu0 0.0
  %1504 = vmatprep.subr.mxu0 0.0
  %1505 = vmatpush1.msra.mxu0 0.0
  %1506 = vmatprep.subr.mxu0 0.0
  %1507 = vmatpush1.msra.mxu0 0.0
  %1508 = vmatprep.subr.mxu0 0.0
  %1509 = vmatpush1.msra.mxu0 0.0
  %1510 = vmatprep.subr.mxu0 0.0
  %1511 = vmatpush1.msra.mxu0 0.0
  %1512 = vmatprep.mubr.f32.mxu0 0.0
  %1513 = vmatmul.mubr.f32.gmra.mrb[0].mxu0 %v1440
  %v1514 = vpop.f32.mrb[0].mxu0
  %v1515 = vadd.f32 0.0, %v1514
  %v1516 = vpop.f32.mrb[0].mxu0
  %1517 = vmatprep.mubr.f32.mxu0 0.0
  %1518 = vmatmul.mubr.f32.gmra.mrb[0].mxu0 %v1442
  %v1519 = vpop.f32.mrb[0].mxu0
  %v1520 = vadd.f32 0.0, %v1519
  %v1521 = vpop.f32.mrb[0].mxu0
  %1522 = vmatprep.mubr.f32.mxu0 0.0
  %1523 = vmatmul.mubr.f32.gmra.mrb[0].mxu0 %v1444
  %v1524 = vpop.f32.mrb[0].mxu0
  %v1525 = vadd.f32 0.0, %v1524
  %v1526 = vpop.f32.mrb[0].mxu0
  %1527 = vmatprep.mubr.f32.mxu0 0.0
  %1528 = vmatmul.mubr.f32.gmra.mrb[0].mxu0 %v1446
  %v1529 = vpop.f32.mrb[0].mxu0
  %v1530 = vadd.f32 0.0, %v1529
  %v1531 = vpop.f32.mrb[0].mxu0
  %1532 = vdwg.mxu0
  %v1533 = vpack.c.bf16 %v1520, %v1515
  %v1534 = vpack.c.bf16 %v1530, %v1525
  %1537 = vrot.lane.b32.xlu0 %v1533, 109
  %v1538 = vpop.permute.xlu0 %1537
  %1539 = vrot.lane.b32.xlu0 %v1534, 109
  %v1540 = vpop.permute.xlu0 %1539
  %vm1543 = vcmask 1040232
  %1544 = vst.msk [vmem:[#allocation4] sm:$0xff] %vm1543, %v1538
  %1545 = vst.msk [vmem:[#allocation4 + $0x18] sm:$0xff] %vm1543, %v1540
  %1546 = vrot.lane.b32.xlu0 %v1187, 88
  %v1547 = vpop.permute.xlu0 %1546
  %1548 = vrot.lane.b32.xlu0 %v1188, 88
  %v1549 = vpop.permute.xlu0 %1548
  %1550 = vrot.lane.b32.xlu0 %v1189, 88
  %v1551 = vpop.permute.xlu0 %1550
  %1552 = vrot.lane.b32.xlu0 %v1190, 88
  %v1553 = vpop.permute.xlu0 %1552
  %v1554 = vsel %vm1207, %v1547, 0
  %v1556 = vsel %vm1207, %v1549, 0
  %v1558 = vsel %vm1207, %v1551, 0
  %v1560 = vsel %vm1207, %v1553, 0
  %1562 = vmatprep.subr.mxu0 0.0
  %1563 = vmatpush1.msra.mxu0 %v1193
  %1564 = vmatprep.subr.mxu0 0.0
  %1565 = vmatpush1.msra.mxu0 %v1218
  %1566 = vmatprep.subr.mxu0 0.0
  %1567 = vmatpush1.msra.mxu0 0.0
  %1568 = vmatprep.subr.mxu0 0.0
  %1569 = vmatpush1.msra.mxu0 0.0
  %1570 = vmatprep.subr.mxu0 0.0
  %1571 = vmatpush1.msra.mxu0 0.0
  %1572 = vmatprep.subr.mxu0 0.0
  %1573 = vmatpush1.msra.mxu0 0.0
  %1574 = vmatprep.subr.mxu0 0.0
  %1575 = vmatpush1.msra.mxu0 0.0
  %1576 = vmatprep.subr.mxu0 0.0
  %1577 = vmatpush1.msra.mxu0 0.0
  %1578 = vmatprep.subr.mxu0 0.0
  %1579 = vmatpush1.msra.mxu0 0.0
  %1580 = vmatprep.subr.mxu0 0.0
  %1581 = vmatpush1.msra.mxu0 0.0
  %1582 = vmatprep.subr.mxu0 0.0
  %1583 = vmatpush1.msra.mxu0 0.0
  %1584 = vmatprep.subr.mxu0 0.0
  %1585 = vmatpush1.msra.mxu0 0.0
  %1586 = vmatprep.subr.mxu0 0.0
  %1587 = vmatpush1.msra.mxu0 0.0
  %1588 = vmatprep.subr.mxu0 0.0
  %1589 = vmatpush1.msra.mxu0 0.0
  %1590 = vmatprep.subr.mxu0 0.0
  %1591 = vmatpush1.msra.mxu0 0.0
  %1592 = vmatprep.subr.mxu0 0.0
  %1593 = vmatpush1.msra.mxu0 0.0
  %1594 = vmatprep.subr.mxu0 0.0
  %1595 = vmatpush1.msra.mxu0 0.0
  %1596 = vmatprep.subr.mxu0 0.0
  %1597 = vmatpush1.msra.mxu0 0.0
  %1598 = vmatprep.subr.mxu0 0.0
  %1599 = vmatpush1.msra.mxu0 0.0
  %1600 = vmatprep.subr.mxu0 0.0
  %1601 = vmatpush1.msra.mxu0 0.0
  %1602 = vmatprep.subr.mxu0 0.0
  %1603 = vmatpush1.msra.mxu0 0.0
  %1604 = vmatprep.subr.mxu0 0.0
  %1605 = vmatpush1.msra.mxu0 0.0
  %1606 = vmatprep.subr.mxu0 0.0
  %1607 = vmatpush1.msra.mxu0 0.0
  %1608 = vmatprep.subr.mxu0 0.0
  %1609 = vmatpush1.msra.mxu0 0.0
  %1610 = vmatprep.subr.mxu0 0.0
  %1611 = vmatpush1.msra.mxu0 0.0
  %1612 = vmatprep.subr.mxu0 0.0
  %1613 = vmatpush1.msra.mxu0 0.0
  %1614 = vmatprep.subr.mxu0 0.0
  %1615 = vmatpush1.msra.mxu0 0.0
  %1616 = vmatprep.subr.mxu0 0.0
  %1617 = vmatpush1.msra.mxu0 0.0
  %1618 = vmatprep.subr.mxu0 0.0
  %1619 = vmatpush1.msra.mxu0 0.0
  %1620 = vmatprep.subr.mxu0 0.0
  %1621 = vmatpush1.msra.mxu0 0.0
  %1622 = vmatprep.subr.mxu0 0.0
  %1623 = vmatpush1.msra.mxu0 0.0
  %1624 = vmatprep.subr.mxu0 0.0
  %1625 = vmatpush1.msra.mxu0 0.0
  %1626 = vmatprep.mubr.f32.mxu0 0.0
  %1627 = vmatmul.mubr.f32.gmra.mrb[0].mxu0 %v1554
  %v1628 = vpop.f32.mrb[0].mxu0
  %v1629 = vadd.f32 0.0, %v1628
  %v1630 = vpop.f32.mrb[0].mxu0
  %1631 = vmatprep.mubr.f32.mxu0 0.0
  %1632 = vmatmul.mubr.f32.gmra.mrb[0].mxu0 %v1556
  %v1633 = vpop.f32.mrb[0].mxu0
  %v1634 = vadd.f32 0.0, %v1633
  %v1635 = vpop.f32.mrb[0].mxu0
  %1636 = vmatprep.mubr.f32.mxu0 0.0
  %1637 = vmatmul.mubr.f32.gmra.mrb[0].mxu0 %v1558
  %v1638 = vpop.f32.mrb[0].mxu0
  %v1639 = vadd.f32 0.0, %v1638
  %v1640 = vpop.f32.mrb[0].mxu0
  %1641 = vmatprep.mubr.f32.mxu0 0.0
  %1642 = vmatmul.mubr.f32.gmra.mrb[0].mxu0 %v1560
  %v1643 = vpop.f32.mrb[0].mxu0
  %v1644 = vadd.f32 0.0, %v1643
  %v1645 = vpop.f32.mrb[0].mxu0
  %1646 = vdwg.mxu0
  %v1647 = vpack.c.bf16 %v1634, %v1629
  %v1648 = vpack.c.bf16 %v1644, %v1639
  %1651 = vrot.lane.b32.xlu0 %v1647, 17
  %v1652 = vpop.permute.xlu0 %1651
  %1653 = vrot.lane.b32.xlu0 %v1648, 17
  %v1654 = vpop.permute.xlu0 %1653
  %vm1657 = vcmask 285832
  %1658 = vst.msk [vmem:[#allocation4 + $0x8] sm:$0xff] %vm1657, %v1652
  %1659 = vst.msk [vmem:[#allocation4 + $0x20] sm:$0xff] %vm1657, %v1654
  %1660 = vrot.lane.b32.xlu0 %v1187, 78
  %v1661 = vpop.permute.xlu0 %1660
  %1662 = vrot.lane.b32.xlu0 %v1188, 78
  %v1663 = vpop.permute.xlu0 %1662
  %1664 = vrot.lane.b32.xlu0 %v1189, 78
  %v1665 = vpop.permute.xlu0 %1664
  %1666 = vrot.lane.b32.xlu0 %v1190, 78
  %v1667 = vpop.permute.xlu0 %1666
  %v1668 = vsel %vm1207, %v1661, 0
  %v1670 = vsel %vm1207, %v1663, 0
  %v1672 = vsel %vm1207, %v1665, 0
  %v1674 = vsel %vm1207, %v1667, 0
  %1676 = vmatprep.subr.mxu0 0.0
  %1677 = vmatpush1.msra.mxu0 %v1193
  %1678 = vmatprep.subr.mxu0 0.0
  %1679 = vmatpush1.msra.mxu0 %v1218
  %1680 = vmatprep.subr.mxu0 0.0
  %1681 = vmatpush1.msra.mxu0 0.0
  %1682 = vmatprep.subr.mxu0 0.0
  %1683 = vmatpush1.msra.mxu0 0.0
  %1684 = vmatprep.subr.mxu0 0.0
  %1685 = vmatpush1.msra.mxu0 0.0
  %1686 = vmatprep.subr.mxu0 0.0
  %1687 = vmatpush1.msra.mxu0 0.0
  %1688 = vmatprep.subr.mxu0 0.0
  %1689 = vmatpush1.msra.mxu0 0.0
  %1690 = vmatprep.subr.mxu0 0.0
  %1691 = vmatpush1.msra.mxu0 0.0
  %1692 = vmatprep.subr.mxu0 0.0
  %1693 = vmatpush1.msra.mxu0 0.0
  %1694 = vmatprep.subr.mxu0 0.0
  %1695 = vmatpush1.msra.mxu0 0.0
  %1696 = vmatprep.subr.mxu0 0.0
  %1697 = vmatpush1.msra.mxu0 0.0
  %1698 = vmatprep.subr.mxu0 0.0
  %1699 = vmatpush1.msra.mxu0 0.0
  %1700 = vmatprep.subr.mxu0 0.0
  %1701 = vmatpush1.msra.mxu0 0.0
  %1702 = vmatprep.subr.mxu0 0.0
  %1703 = vmatpush1.msra.mxu0 0.0
  %1704 = vmatprep.subr.mxu0 0.0
  %1705 = vmatpush1.msra.mxu0 0.0
  %1706 = vmatprep.subr.mxu0 0.0
  %1707 = vmatpush1.msra.mxu0 0.0
  %1708 = vmatprep.subr.mxu0 0.0
  %1709 = vmatpush1.msra.mxu0 0.0
  %1710 = vmatprep.subr.mxu0 0.0
  %1711 = vmatpush1.msra.mxu0 0.0
  %1712 = vmatprep.subr.mxu0 0.0
  %1713 = vmatpush1.msra.mxu0 0.0
  %1714 = vmatprep.subr.mxu0 0.0
  %1715 = vmatpush1.msra.mxu0 0.0
  %1716 = vmatprep.subr.mxu0 0.0
  %1717 = vmatpush1.msra.mxu0 0.0
  %1718 = vmatprep.subr.mxu0 0.0
  %1719 = vmatpush1.msra.mxu0 0.0
  %1720 = vmatprep.subr.mxu0 0.0
  %1721 = vmatpush1.msra.mxu0 0.0
  %1722 = vmatprep.subr.mxu0 0.0
  %1723 = vmatpush1.msra.mxu0 0.0
  %1724 = vmatprep.subr.mxu0 0.0
  %1725 = vmatpush1.msra.mxu0 0.0
  %1726 = vmatprep.subr.mxu0 0.0
  %1727 = vmatpush1.msra.mxu0 0.0
  %1728 = vmatprep.subr.mxu0 0.0
  %1729 = vmatpush1.msra.mxu0 0.0
  %1730 = vmatprep.subr.mxu0 0.0
  %1731 = vmatpush1.msra.mxu0 0.0
  %1732 = vmatprep.subr.mxu0 0.0
  %1733 = vmatpush1.msra.mxu0 0.0
  %1734 = vmatprep.subr.mxu0 0.0
  %1735 = vmatpush1.msra.mxu0 0.0
  %1736 = vmatprep.subr.mxu0 0.0
  %1737 = vmatpush1.msra.mxu0 0.0
  %1738 = vmatprep.subr.mxu0 0.0
  %1739 = vmatpush1.msra.mxu0 0.0
  %1740 = vmatprep.mubr.f32.mxu0 0.0
  %1741 = vmatmul.mubr.f32.gmra.mrb[0].mxu0 %v1668
  %v1742 = vpop.f32.mrb[0].mxu0
  %v1743 = vadd.f32 0.0, %v1742
  %v1744 = vpop.f32.mrb[0].mxu0
  %1745 = vmatprep.mubr.f32.mxu0 0.0
  %1746 = vmatmul.mubr.f32.gmra.mrb[0].mxu0 %v1670
  %v1747 = vpop.f32.mrb[0].mxu0
  %v1748 = vadd.f32 0.0, %v1747
  %v1749 = vpop.f32.mrb[0].mxu0
  %1750 = vmatprep.mubr.f32.mxu0 0.0
  %1751 = vmatmul.mubr.f32.gmra.mrb[0].mxu0 %v1672
  %v1752 = vpop.f32.mrb[0].mxu0
  %v1753 = vadd.f32 0.0, %v1752
  %v1754 = vpop.f32.mrb[0].mxu0
  %1755 = vmatprep.mubr.f32.mxu0 0.0
  %1756 = vmatmul.mubr.f32.gmra.mrb[0].mxu0 %v1674
  %v1757 = vpop.f32.mrb[0].mxu0
  %v1758 = vadd.f32 0.0, %v1757
  %v1759 = vpop.f32.mrb[0].mxu0
  %1760 = vdwg.mxu0
  %v1761 = vpack.c.bf16 %v1748, %v1743
  %v1762 = vpack.c.bf16 %v1758, %v1753
  %1765 = vrot.lane.b32.xlu0 %v1761, 53
  %v1766 = vpop.permute.xlu0 %1765
  %1767 = vrot.lane.b32.xlu0 %v1762, 53
  %v1768 = vpop.permute.xlu0 %1767
  %vm1771 = vcmask 581032
  %1772 = vst.msk [vmem:[#allocation4 + $0x8] sm:$0xff] %vm1771, %v1766
  %1773 = vst.msk [vmem:[#allocation4 + $0x20] sm:$0xff] %vm1771, %v1768
  %1774 = vrot.lane.b32.xlu0 %v1187, 68
  %v1775 = vpop.permute.xlu0 %1774
  %1776 = vrot.lane.b32.xlu0 %v1188, 68
  %v1777 = vpop.permute.xlu0 %1776
  %1778 = vrot.lane.b32.xlu0 %v1189, 68
  %v1779 = vpop.permute.xlu0 %1778
  %1780 = vrot.lane.b32.xlu0 %v1190, 68
  %v1781 = vpop.permute.xlu0 %1780
  %v1782 = vsel %vm1207, %v1775, 0
  %v1784 = vsel %vm1207, %v1777, 0
  %v1786 = vsel %vm1207, %v1779, 0
  %v1788 = vsel %vm1207, %v1781, 0
  %1790 = vmatprep.subr.mxu0 0.0
  %1791 = vmatpush1.msra.mxu0 %v1193
  %1792 = vmatprep.subr.mxu0 0.0
  %1793 = vmatpush1.msra.mxu0 %v1218
  %1794 = vmatprep.subr.mxu0 0.0
  %1795 = vmatpush1.msra.mxu0 0.0
  %1796 = vmatprep.subr.mxu0 0.0
  %1797 = vmatpush1.msra.mxu0 0.0
  %1798 = vmatprep.subr.mxu0 0.0
  %1799 = vmatpush1.msra.mxu0 0.0
  %1800 = vmatprep.subr.mxu0 0.0
  %1801 = vmatpush1.msra.mxu0 0.0
  %1802 = vmatprep.subr.mxu0 0.0
  %1803 = vmatpush1.msra.mxu0 0.0
  %1804 = vmatprep.subr.mxu0 0.0
  %1805 = vmatpush1.msra.mxu0 0.0
  %1806 = vmatprep.subr.mxu0 0.0
  %1807 = vmatpush1.msra.mxu0 0.0
  %1808 = vmatprep.subr.mxu0 0.0
  %1809 = vmatpush1.msra.mxu0 0.0
  %1810 = vmatprep.subr.mxu0 0.0
  %1811 = vmatpush1.msra.mxu0 0.0
  %1812 = vmatprep.subr.mxu0 0.0
  %1813 = vmatpush1.msra.mxu0 0.0
  %1814 = vmatprep.subr.mxu0 0.0
  %1815 = vmatpush1.msra.mxu0 0.0
  %1816 = vmatprep.subr.mxu0 0.0
  %1817 = vmatpush1.msra.mxu0 0.0
  %1818 = vmatprep.subr.mxu0 0.0
  %1819 = vmatpush1.msra.mxu0 0.0
  %1820 = vmatprep.subr.mxu0 0.0
  %1821 = vmatpush1.msra.mxu0 0.0
  %1822 = vmatprep.subr.mxu0 0.0
  %1823 = vmatpush1.msra.mxu0 0.0
  %1824 = vmatprep.subr.mxu0 0.0
  %1825 = vmatpush1.msra.mxu0 0.0
  %1826 = vmatprep.subr.mxu0 0.0
  %1827 = vmatpush1.msra.mxu0 0.0
  %1828 = vmatprep.subr.mxu0 0.0
  %1829 = vmatpush1.msra.mxu0 0.0
  %1830 = vmatprep.subr.mxu0 0.0
  %1831 = vmatpush1.msra.mxu0 0.0
  %1832 = vmatprep.subr.mxu0 0.0
  %1833 = vmatpush1.msra.mxu0 0.0
  %1834 = vmatprep.subr.mxu0 0.0
  %1835 = vmatpush1.msra.mxu0 0.0
  %1836 = vmatprep.subr.mxu0 0.0
  %1837 = vmatpush1.msra.mxu0 0.0
  %1838 = vmatprep.subr.mxu0 0.0
  %1839 = vmatpush1.msra.mxu0 0.0
  %1840 = vmatprep.subr.mxu0 0.0
  %1841 = vmatpush1.msra.mxu0 0.0
  %1842 = vmatprep.subr.mxu0 0.0
  %1843 = vmatpush1.msra.mxu0 0.0
  %1844 = vmatprep.subr.mxu0 0.0
  %1845 = vmatpush1.msra.mxu0 0.0
  %1846 = vmatprep.subr.mxu0 0.0
  %1847 = vmatpush1.msra.mxu0 0.0
  %1848 = vmatprep.subr.mxu0 0.0
  %1849 = vmatpush1.msra.mxu0 0.0
  %1850 = vmatprep.subr.mxu0 0.0
  %1851 = vmatpush1.msra.mxu0 0.0
  %1852 = vmatprep.subr.mxu0 0.0
  %1853 = vmatpush1.msra.mxu0 0.0
  %1854 = vmatprep.mubr.f32.mxu0 0.0
  %1855 = vmatmul.mubr.f32.gmra.mrb[0].mxu0 %v1782
  %v1856 = vpop.f32.mrb[0].mxu0
  %v1857 = vadd.f32 0.0, %v1856
  %v1858 = vpop.f32.mrb[0].mxu0
  %1859 = vmatprep.mubr.f32.mxu0 0.0
  %1860 = vmatmul.mubr.f32.gmra.mrb[0].mxu0 %v1784
  %v1861 = vpop.f32.mrb[0].mxu0
  %v1862 = vadd.f32 0.0, %v1861
  %v1863 = vpop.f32.mrb[0].mxu0
  %1864 = vmatprep.mubr.f32.mxu0 0.0
  %1865 = vmatmul.mubr.f32.gmra.mrb[0].mxu0 %v1786
  %v1866 = vpop.f32.mrb[0].mxu0
  %v1867 = vadd.f32 0.0, %v1866
  %v1868 = vpop.f32.mrb[0].mxu0
  %1869 = vmatprep.mubr.f32.mxu0 0.0
  %1870 = vmatmul.mubr.f32.gmra.mrb[0].mxu0 %v1788
  %v1871 = vpop.f32.mrb[0].mxu0
  %v1872 = vadd.f32 0.0, %v1871
  %v1873 = vpop.f32.mrb[0].mxu0
  %1874 = vdwg.mxu0
  %v1875 = vpack.c.bf16 %v1862, %v1857
  %v1876 = vpack.c.bf16 %v1872, %v1867
  %1879 = vrot.lane.b32.xlu0 %v1875, 89
  %v1880 = vpop.permute.xlu0 %1879
  %1881 = vrot.lane.b32.xlu0 %v1876, 89
  %v1882 = vpop.permute.xlu0 %1881
  %vm1885 = vcmask 876232
  %1886 = vst.msk [vmem:[#allocation4 + $0x8] sm:$0xff] %vm1885, %v1880
  %1887 = vst.msk [vmem:[#allocation4 + $0x20] sm:$0xff] %vm1885, %v1882
  %1888 = vrot.lane.b32.xlu0 %v1187, 58
  %v1889 = vpop.permute.xlu0 %1888
  %1890 = vrot.lane.b32.xlu0 %v1188, 58
  %v1891 = vpop.permute.xlu0 %1890
  %1892 = vrot.lane.b32.xlu0 %v1189, 58
  %v1893 = vpop.permute.xlu0 %1892
  %1894 = vrot.lane.b32.xlu0 %v1190, 58
  %v1895 = vpop.permute.xlu0 %1894
  %v1896 = vsel %vm1207, %v1889, 0
  %v1898 = vsel %vm1207, %v1891, 0
  %v1900 = vsel %vm1207, %v1893, 0
  %v1902 = vsel %vm1207, %v1895, 0
  %1904 = vmatprep.subr.mxu0 0.0
  %1905 = vmatpush1.msra.mxu0 %v1193
  %1906 = vmatprep.subr.mxu0 0.0
  %1907 = vmatpush1.msra.mxu0 %v1218
  %1908 = vmatprep.subr.mxu0 0.0
  %1909 = vmatpush1.msra.mxu0 0.0
  %1910 = vmatprep.subr.mxu0 0.0
  %1911 = vmatpush1.msra.mxu0 0.0
  %1912 = vmatprep.subr.mxu0 0.0
  %1913 = vmatpush1.msra.mxu0 0.0
  %1914 = vmatprep.subr.mxu0 0.0
  %1915 = vmatpush1.msra.mxu0 0.0
  %1916 = vmatprep.subr.mxu0 0.0
  %1917 = vmatpush1.msra.mxu0 0.0
  %1918 = vmatprep.subr.mxu0 0.0
  %1919 = vmatpush1.msra.mxu0 0.0
  %1920 = vmatprep.subr.mxu0 0.0
  %1921 = vmatpush1.msra.mxu0 0.0
  %1922 = vmatprep.subr.mxu0 0.0
  %1923 = vmatpush1.msra.mxu0 0.0
  %1924 = vmatprep.subr.mxu0 0.0
  %1925 = vmatpush1.msra.mxu0 0.0
  %1926 = vmatprep.subr.mxu0 0.0
  %1927 = vmatpush1.msra.mxu0 0.0
  %1928 = vmatprep.subr.mxu0 0.0
  %1929 = vmatpush1.msra.mxu0 0.0
  %1930 = vmatprep.subr.mxu0 0.0
  %1931 = vmatpush1.msra.mxu0 0.0
  %1932 = vmatprep.subr.mxu0 0.0
  %1933 = vmatpush1.msra.mxu0 0.0
  %1934 = vmatprep.subr.mxu0 0.0
  %1935 = vmatpush1.msra.mxu0 0.0
  %1936 = vmatprep.subr.mxu0 0.0
  %1937 = vmatpush1.msra.mxu0 0.0
  %1938 = vmatprep.subr.mxu0 0.0
  %1939 = vmatpush1.msra.mxu0 0.0
  %1940 = vmatprep.subr.mxu0 0.0
  %1941 = vmatpush1.msra.mxu0 0.0
  %1942 = vmatprep.subr.mxu0 0.0
  %1943 = vmatpush1.msra.mxu0 0.0
  %1944 = vmatprep.subr.mxu0 0.0
  %1945 = vmatpush1.msra.mxu0 0.0
  %1946 = vmatprep.subr.mxu0 0.0
  %1947 = vmatpush1.msra.mxu0 0.0
  %1948 = vmatprep.subr.mxu0 0.0
  %1949 = vmatpush1.msra.mxu0 0.0
  %1950 = vmatprep.subr.mxu0 0.0
  %1951 = vmatpush1.msra.mxu0 0.0
  %1952 = vmatprep.subr.mxu0 0.0
  %1953 = vmatpush1.msra.mxu0 0.0
  %1954 = vmatprep.subr.mxu0 0.0
  %1955 = vmatpush1.msra.mxu0 0.0
  %1956 = vmatprep.subr.mxu0 0.0
  %1957 = vmatpush1.msra.mxu0 0.0
  %1958 = vmatprep.subr.mxu0 0.0
  %1959 = vmatpush1.msra.mxu0 0.0
  %1960 = vmatprep.subr.mxu0 0.0
  %1961 = vmatpush1.msra.mxu0 0.0
  %1962 = vmatprep.subr.mxu0 0.0
  %1963 = vmatpush1.msra.mxu0 0.0
  %1964 = vmatprep.subr.mxu0 0.0
  %1965 = vmatpush1.msra.mxu0 0.0
  %1966 = vmatprep.subr.mxu0 0.0
  %1967 = vmatpush1.msra.mxu0 0.0
  %1968 = vmatprep.mubr.f32.mxu0 0.0
  %1969 = vmatmul.mubr.f32.gmra.mrb[0].mxu0 %v1896
  %v1970 = vpop.f32.mrb[0].mxu0
  %v1971 = vadd.f32 0.0, %v1970
  %v1972 = vpop.f32.mrb[0].mxu0
  %1973 = vmatprep.mubr.f32.mxu0 0.0
  %1974 = vmatmul.mubr.f32.gmra.mrb[0].mxu0 %v1898
  %v1975 = vpop.f32.mrb[0].mxu0
  %v1976 = vadd.f32 0.0, %v1975
  %v1977 = vpop.f32.mrb[0].mxu0
  %1978 = vmatprep.mubr.f32.mxu0 0.0
  %1979 = vmatmul.mubr.f32.gmra.mrb[0].mxu0 %v1900
  %v1980 = vpop.f32.mrb[0].mxu0
  %v1981 = vadd.f32 0.0, %v1980
  %v1982 = vpop.f32.mrb[0].mxu0
  %1983 = vmatprep.mubr.f32.mxu0 0.0
  %1984 = vmatmul.mubr.f32.gmra.mrb[0].mxu0 %v1902
  %v1985 = vpop.f32.mrb[0].mxu0
  %v1986 = vadd.f32 0.0, %v1985
  %v1987 = vpop.f32.mrb[0].mxu0
  %1988 = vdwg.mxu0
  %v1989 = vpack.c.bf16 %v1976, %v1971
  %v1990 = vpack.c.bf16 %v1986, %v1981
  %1993 = vrot.lane.b32.xlu0 %v1989, 125
  %v1994 = vpop.permute.xlu0 %1993
  %1995 = vrot.lane.b32.xlu0 %v1990, 125
  %v1996 = vpop.permute.xlu0 %1995
  %vm1999 = vcmask 1048552
  %2000 = vst.msk [vmem:[#allocation4 + $0x8] sm:$0xff] %vm1999, %v1994
  %vm2001 = vcmask 121856
  %2002 = vst.msk [vmem:[#allocation4 + $0x10] sm:$0xff] %vm2001, %v1994
  %2003 = vst.msk [vmem:[#allocation4 + $0x20] sm:$0xff] %vm1999, %v1996
  %2004 = vst.msk [vmem:[#allocation4 + $0x28] sm:$0xff] %vm2001, %v1996
  %2005 = vrot.lane.b32.xlu0 %v1187, 48
  %v2006 = vpop.permute.xlu0 %2005
  %2007 = vrot.lane.b32.xlu0 %v1188, 48
  %v2008 = vpop.permute.xlu0 %2007
  %2009 = vrot.lane.b32.xlu0 %v1189, 48
  %v2010 = vpop.permute.xlu0 %2009
  %2011 = vrot.lane.b32.xlu0 %v1190, 48
  %v2012 = vpop.permute.xlu0 %2011
  %v2013 = vsel %vm1207, %v2006, 0
  %v2015 = vsel %vm1207, %v2008, 0
  %v2017 = vsel %vm1207, %v2010, 0
  %v2019 = vsel %vm1207, %v2012, 0
  %2021 = vmatprep.subr.mxu0 0.0
  %2022 = vmatpush1.msra.mxu0 %v1193
  %2023 = vmatprep.subr.mxu0 0.0
  %2024 = vmatpush1.msra.mxu0 %v1218
  %2025 = vmatprep.subr.mxu0 0.0
  %2026 = vmatpush1.msra.mxu0 0.0
  %2027 = vmatprep.subr.mxu0 0.0
  %2028 = vmatpush1.msra.mxu0 0.0
  %2029 = vmatprep.subr.mxu0 0.0
  %2030 = vmatpush1.msra.mxu0 0.0
  %2031 = vmatprep.subr.mxu0 0.0
  %2032 = vmatpush1.msra.mxu0 0.0
  %2033 = vmatprep.subr.mxu0 0.0
  %2034 = vmatpush1.msra.mxu0 0.0
  %2035 = vmatprep.subr.mxu0 0.0
  %2036 = vmatpush1.msra.mxu0 0.0
  %2037 = vmatprep.subr.mxu0 0.0
  %2038 = vmatpush1.msra.mxu0 0.0
  %2039 = vmatprep.subr.mxu0 0.0
  %2040 = vmatpush1.msra.mxu0 0.0
  %2041 = vmatprep.subr.mxu0 0.0
  %2042 = vmatpush1.msra.mxu0 0.0
  %2043 = vmatprep.subr.mxu0 0.0
  %2044 = vmatpush1.msra.mxu0 0.0
  %2045 = vmatprep.subr.mxu0 0.0
  %2046 = vmatpush1.msra.mxu0 0.0
  %2047 = vmatprep.subr.mxu0 0.0
  %2048 = vmatpush1.msra.mxu0 0.0
  %2049 = vmatprep.subr.mxu0 0.0
  %2050 = vmatpush1.msra.mxu0 0.0
  %2051 = vmatprep.subr.mxu0 0.0
  %2052 = vmatpush1.msra.mxu0 0.0
  %2053 = vmatprep.subr.mxu0 0.0
  %2054 = vmatpush1.msra.mxu0 0.0
  %2055 = vmatprep.subr.mxu0 0.0
  %2056 = vmatpush1.msra.mxu0 0.0
  %2057 = vmatprep.subr.mxu0 0.0
  %2058 = vmatpush1.msra.mxu0 0.0
  %2059 = vmatprep.subr.mxu0 0.0
  %2060 = vmatpush1.msra.mxu0 0.0
  %2061 = vmatprep.subr.mxu0 0.0
  %2062 = vmatpush1.msra.mxu0 0.0
  %2063 = vmatprep.subr.mxu0 0.0
  %2064 = vmatpush1.msra.mxu0 0.0
  %2065 = vmatprep.subr.mxu0 0.0
  %2066 = vmatpush1.msra.mxu0 0.0
  %2067 = vmatprep.subr.mxu0 0.0
  %2068 = vmatpush1.msra.mxu0 0.0
  %2069 = vmatprep.subr.mxu0 0.0
  %2070 = vmatpush1.msra.mxu0 0.0
  %2071 = vmatprep.subr.mxu0 0.0
  %2072 = vmatpush1.msra.mxu0 0.0
  %2073 = vmatprep.subr.mxu0 0.0
  %2074 = vmatpush1.msra.mxu0 0.0
  %2075 = vmatprep.subr.mxu0 0.0
  %2076 = vmatpush1.msra.mxu0 0.0
  %2077 = vmatprep.subr.mxu0 0.0
  %2078 = vmatpush1.msra.mxu0 0.0
  %2079 = vmatprep.subr.mxu0 0.0
  %2080 = vmatpush1.msra.mxu0 0.0
  %2081 = vmatprep.subr.mxu0 0.0
  %2082 = vmatpush1.msra.mxu0 0.0
  %2083 = vmatprep.subr.mxu0 0.0
  %2084 = vmatpush1.msra.mxu0 0.0
  %2085 = vmatprep.mubr.f32.mxu0 0.0
  %2086 = vmatmul.mubr.f32.gmra.mrb[0].mxu0 %v2013
  %v2087 = vpop.f32.mrb[0].mxu0
  %v2088 = vadd.f32 0.0, %v2087
  %v2089 = vpop.f32.mrb[0].mxu0
  %2090 = vmatprep.mubr.f32.mxu0 0.0
  %2091 = vmatmul.mubr.f32.gmra.mrb[0].mxu0 %v2015
  %v2092 = vpop.f32.mrb[0].mxu0
  %v2093 = vadd.f32 0.0, %v2092
  %v2094 = vpop.f32.mrb[0].mxu0
  %2095 = vmatprep.mubr.f32.mxu0 0.0
  %2096 = vmatmul.mubr.f32.gmra.mrb[0].mxu0 %v2017
  %v2097 = vpop.f32.mrb[0].mxu0
  %v2098 = vadd.f32 0.0, %v2097
  %v2099 = vpop.f32.mrb[0].mxu0
  %2100 = vmatprep.mubr.f32.mxu0 0.0
  %2101 = vmatmul.mubr.f32.gmra.mrb[0].mxu0 %v2019
  %v2102 = vpop.f32.mrb[0].mxu0
  %v2103 = vadd.f32 0.0, %v2102
  %v2104 = vpop.f32.mrb[0].mxu0
  %2105 = vdwg.mxu0
  %v2106 = vpack.c.bf16 %v2093, %v2088
  %v2107 = vpack.c.bf16 %v2103, %v2098
  %2110 = vrot.lane.b32.xlu0 %v2106, 33
  %v2111 = vpop.permute.xlu0 %2110
  %2112 = vrot.lane.b32.xlu0 %v2107, 33
  %v2113 = vpop.permute.xlu0 %2112
  %vm2116 = vcmask 417032
  %2117 = vst.msk [vmem:[#allocation4 + $0x10] sm:$0xff] %vm2116, %v2111
  %2118 = vst.msk [vmem:[#allocation4 + $0x28] sm:$0xff] %vm2116, %v2113
  %v2119 = vld [vmem:[%s1 + $0x24] sm:$0xff]
  %v2120 = vld [vmem:[%s1 + $0x2c] sm:$0xf]
  %v2121 = vld [vmem:[%s1 + $0x80] sm:$0xff]
  %v2122 = vld [vmem:[%s1 + $0x88] sm:$0xf]
  %v2123 = vld [vmem:[%s1 + $0xdc] sm:$0xff]
  %v2124 = vld [vmem:[%s1 + $0xe4] sm:$0xf]
  %v2125 = vld [vmem:[%s1 + $0x138] sm:$0xff]
  %v2126 = vld [vmem:[%s1 + $0x140] sm:$0xf]
  %v2127 = vld [vmem:[%s2] sm:$0xff]
  %v2128 = vld [vmem:[%s2 + $0x8] sm:$0xff]
  %v2129 = vld [vmem:[%s2 + $0x10] sm:$0xff]
  %v2130 = vld [vmem:[%s2 + $0x18] sm:$0xff]
  %v2131 = vld [vmem:[#allocation4] sm:$0xff]
  %v2132 = vld [vmem:[#allocation4 + $0x8] sm:$0xff]
  %v2133 = vld [vmem:[#allocation4 + $0x10] sm:$0xff]
  %v2134 = vld [vmem:[#allocation4 + $0x18] sm:$0xff]
  %v2135 = vld [vmem:[#allocation4 + $0x20] sm:$0xff]
  %v2136 = vld [vmem:[#allocation4 + $0x28] sm:$0xff]
  %2137 = vst [vmem:[#allocation9] sm:$0xff] %v2131
  %2138 = vst [vmem:[#allocation9 + $0x8] sm:$0xff] %v2132
  %vm2139 = vcmask 556032
  %2140 = vst.msk [vmem:[#allocation9 + $0x10] sm:$0xff] %vm2139, %v2133
  %2141 = vst [vmem:[#allocation9 + $0x50] sm:$0xff] %v2134
  %2142 = vst [vmem:[#allocation9 + $0x58] sm:$0xff] %v2135
  %2143 = vst.msk [vmem:[#allocation9 + $0x60] sm:$0xff] %vm2139, %v2136
  %v2144 = vld [vmem:[#allocation4] sm:$0xff]
  %v2145 = vld [vmem:[#allocation4 + $0x8] sm:$0xff]
  %v2146 = vld [vmem:[#allocation4 + $0x10] sm:$0xff]
  %v2147 = vld [vmem:[#allocation4 + $0x18] sm:$0xff]
  %v2148 = vld [vmem:[#allocation4 + $0x20] sm:$0xff]
  %v2149 = vld [vmem:[#allocation4 + $0x28] sm:$0xff]
  %2156 = vrot.lane.b32.xlu0 %v2144, 127
  %v2157 = vpop.permute.xlu0 %2156
  %2158 = vrot.lane.b32.xlu0 %v2145, 127
  %v2159 = vpop.permute.xlu0 %2158
  %2160 = vrot.lane.b32.xlu0 %v2146, 127
  %v2161 = vpop.permute.xlu0 %2160
  %2162 = vrot.lane.b32.xlu0 %v2147, 127
  %v2163 = vpop.permute.xlu0 %2162
  %2164 = vrot.lane.b32.xlu0 %v2148, 127
  %v2165 = vpop.permute.xlu0 %2164
  %2166 = vrot.lane.b32.xlu0 %v2149, 127
  %v2167 = vpop.permute.xlu0 %2166
  %vm2168 = vcmask 1039360
  %v2169 = vsel %vm2168, %v2157, %v2159
  %v2170 = vsel %vm2168, %v2159, %v2161
  %v2171 = vsel %vm2168, %v2163, %v2165
  %v2172 = vsel %vm2168, %v2165, %v2167
  %2179 = vst [vmem:[#allocation9 + $0xa0] sm:$0xff] %v2169
  %2180 = vst [vmem:[#allocation9 + $0xa8] sm:$0xff] %v2170
  %2181 = vst.msk [vmem:[#allocation9 + $0xb0] sm:$0xff] %vm2139, %v2161
  %2182 = vst [vmem:[#allocation9 + $0xf0] sm:$0xff] %v2171
  %2183 = vst [vmem:[#allocation9 + $0xf8] sm:$0xff] %v2172
  %2184 = vst.msk [vmem:[#allocation9 + $0x100] sm:$0xff] %vm2139, %v2167
  %v2185 = vld [vmem:[#allocation4] sm:$0xff]
  %v2186 = vld [vmem:[#allocation4 + $0x8] sm:$0xff]
  %v2187 = vld [vmem:[#allocation4 + $0x10] sm:$0xff]
  %v2188 = vld [vmem:[#allocation4 + $0x18] sm:$0xff]
  %v2189 = vld [vmem:[#allocation4 + $0x20] sm:$0xff]
  %v2190 = vld [vmem:[#allocation4 + $0x28] sm:$0xff]
  %2197 = vrot.lane.b32.xlu0 %v2185, 126
  %v2198 = vpop.permute.xlu0 %2197
  %2199 = vrot.lane.b32.xlu0 %v2186, 126
  %v2200 = vpop.permute.xlu0 %2199
  %2201 = vrot.lane.b32.xlu0 %v2187, 126
  %v2202 = vpop.permute.xlu0 %2201
  %2203 = vrot.lane.b32.xlu0 %v2188, 126
  %v2204 = vpop.permute.xlu0 %2203
  %2205 = vrot.lane.b32.xlu0 %v2189, 126
  %v2206 = vpop.permute.xlu0 %2205
  %2207 = vrot.lane.b32.xlu0 %v2190, 126
  %v2208 = vpop.permute.xlu0 %2207
  %vm2209 = vcmask 1031168
  %v2210 = vsel %vm2209, %v2198, %v2200
  %v2211 = vsel %vm2209, %v2200, %v2202
  %v2212 = vsel %vm2209, %v2204, %v2206
  %v2213 = vsel %vm2209, %v2206, %v2208
  %2220 = vst [vmem:[#allocation9 + $0x140] sm:$0xff] %v2210
  %2221 = vst [vmem:[#allocation9 + $0x148] sm:$0xff] %v2211
  %2222 = vst.msk [vmem:[#allocation9 + $0x150] sm:$0xff] %vm2139, %v2202
  %2223 = vst [vmem:[#allocation9 + $0x190] sm:$0xff] %v2212
  %2224 = vst [vmem:[#allocation9 + $0x198] sm:$0xff] %v2213
  %2225 = vst.msk [vmem:[#allocation9 + $0x1a0] sm:$0xff] %vm2139, %v2208
  %v2226 = vld [vmem:[#allocation4] sm:$0xff]
  %v2227 = vld [vmem:[#allocation4 + $0x8] sm:$0xff]
  %v2228 = vld [vmem:[#allocation4 + $0x10] sm:$0xff]
  %v2229 = vld [vmem:[#allocation4 + $0x18] sm:$0xff]
  %v2230 = vld [vmem:[#allocation4 + $0x20] sm:$0xff]
  %v2231 = vld [vmem:[#allocation4 + $0x28] sm:$0xff]
  %2238 = vrot.lane.b32.xlu0 %v2226, 110
  %v2239 = vpop.permute.xlu0 %2238
  %2240 = vrot.lane.b32.xlu0 %v2227, 110
  %v2241 = vpop.permute.xlu0 %2240
  %2242 = vrot.lane.b32.xlu0 %v2228, 110
  %v2243 = vpop.permute.xlu0 %2242
  %2244 = vrot.lane.b32.xlu0 %v2229, 110
  %v2245 = vpop.permute.xlu0 %2244
  %2246 = vrot.lane.b32.xlu0 %v2230, 110
  %v2247 = vpop.permute.xlu0 %2246
  %2248 = vrot.lane.b32.xlu0 %v2231, 110
  %v2249 = vpop.permute.xlu0 %2248
  %vm2250 = vcmask 900096
  %v2251 = vsel %vm2250, %v2239, %v2241
  %v2252 = vsel %vm2250, %v2241, %v2243
  %v2253 = vsel %vm2250, %v2245, %v2247
  %v2254 = vsel %vm2250, %v2247, %v2249
  %2261 = vst [vmem:[#allocation9 + $0x1e0] sm:$0xff] %v2251
  %2262 = vst [vmem:[#allocation9 + $0x1e8] sm:$0xff] %v2252
  %2263 = vst.msk [vmem:[#allocation9 + $0x1f0] sm:$0xff] %vm2139, %v2243
  %2264 = vst [vmem:[#allocation9 + $0x230] sm:$0xff] %v2253
  %2265 = vst [vmem:[#allocation9 + $0x238] sm:$0xff] %v2254
  %2266 = vst.msk [vmem:[#allocation9 + $0x240] sm:$0xff] %vm2139, %v2249
  %v2267 = vld [vmem:[#allocation4] sm:$0xff]
  %v2268 = vld [vmem:[#allocation4 + $0x8] sm:$0xff]
  %v2269 = vld [vmem:[#allocation4 + $0x10] sm:$0xff]
  %v2270 = vld [vmem:[#allocation4 + $0x18] sm:$0xff]
  %v2271 = vld [vmem:[#allocation4 + $0x20] sm:$0xff]
  %v2272 = vld [vmem:[#allocation4 + $0x28] sm:$0xff]
  %2279 = vrot.lane.b32.xlu0 %v2267, 109
  %v2280 = vpop.permute.xlu0 %2279
  %2281 = vrot.lane.b32.xlu0 %v2268, 109
  %v2282 = vpop.permute.xlu0 %2281
  %2283 = vrot.lane.b32.xlu0 %v2269, 109
  %v2284 = vpop.permute.xlu0 %2283
  %2285 = vrot.lane.b32.xlu0 %v2270, 109
  %v2286 = vpop.permute.xlu0 %2285
  %2287 = vrot.lane.b32.xlu0 %v2271, 109
  %v2288 = vpop.permute.xlu0 %2287
  %2289 = vrot.lane.b32.xlu0 %v2272, 109
  %v2290 = vpop.permute.xlu0 %2289
  %vm2291 = vcmask 891904
  %v2292 = vsel %vm2291, %v2280, %v2282
  %v2293 = vsel %vm2291, %v2282, %v2284
  %v2294 = vsel %vm2291, %v2286, %v2288
  %v2295 = vsel %vm2291, %v2288, %v2290
  %2302 = vst [vmem:[#allocation9 + $0x280] sm:$0xff] %v2292
  %2303 = vst [vmem:[#allocation9 + $0x288] sm:$0xff] %v2293
  %2304 = vst.msk [vmem:[#allocation9 + $0x290] sm:$0xff] %vm2139, %v2284
  %2305 = vst [vmem:[#allocation9 + $0x2d0] sm:$0xff] %v2294
  %2306 = vst [vmem:[#allocation9 + $0x2d8] sm:$0xff] %v2295
  %2307 = vst.msk [vmem:[#allocation9 + $0x2e0] sm:$0xff] %vm2139, %v2290
  %v2308 = vld [vmem:[#allocation4] sm:$0xff]
  %v2309 = vld [vmem:[#allocation4 + $0x8] sm:$0xff]
  %v2310 = vld [vmem:[#allocation4 + $0x10] sm:$0xff]
  %v2311 = vld [vmem:[#allocation4 + $0x18] sm:$0xff]
  %v2312 = vld [vmem:[#allocation4 + $0x20] sm:$0xff]
  %v2313 = vld [vmem:[#allocation4 + $0x28] sm:$0xff]
  %2320 = vrot.lane.b32.xlu0 %v2308, 108
  %v2321 = vpop.permute.xlu0 %2320
  %2322 = vrot.lane.b32.xlu0 %v2309, 108
  %v2323 = vpop.permute.xlu0 %2322
  %2324 = vrot.lane.b32.xlu0 %v2310, 108
  %v2325 = vpop.permute.xlu0 %2324
  %2326 = vrot.lane.b32.xlu0 %v2311, 108
  %v2327 = vpop.permute.xlu0 %2326
  %2328 = vrot.lane.b32.xlu0 %v2312, 108
  %v2329 = vpop.permute.xlu0 %2328
  %2330 = vrot.lane.b32.xlu0 %v2313, 108
  %v2331 = vpop.permute.xlu0 %2330
  %vm2332 = vcmask 883712
  %v2333 = vsel %vm2332, %v2321, %v2323
  %v2334 = vsel %vm2332, %v2323, %v2325
  %v2335 = vsel %vm2332, %v2327, %v2329
  %v2336 = vsel %vm2332, %v2329, %v2331
  %2343 = vst [vmem:[#allocation9 + $0x320] sm:$0xff] %v2333
  %2344 = vst [vmem:[#allocation9 + $0x328] sm:$0xff] %v2334
  %2345 = vst.msk [vmem:[#allocation9 + $0x330] sm:$0xff] %vm2139, %v2325
  %2346 = vst [vmem:[#allocation9 + $0x370] sm:$0xff] %v2335
  %2347 = vst [vmem:[#allocation9 + $0x378] sm:$0xff] %v2336
  %2348 = vst.msk [vmem:[#allocation9 + $0x380] sm:$0xff] %vm2139, %v2331
  %v2349 = vld [vmem:[#allocation4] sm:$0xff]
  %v2350 = vld [vmem:[#allocation4 + $0x8] sm:$0xff]
  %v2351 = vld [vmem:[#allocation4 + $0x10] sm:$0xff]
  %v2352 = vld [vmem:[#allocation4 + $0x18] sm:$0xff]
  %v2353 = vld [vmem:[#allocation4 + $0x20] sm:$0xff]
  %v2354 = vld [vmem:[#allocation4 + $0x28] sm:$0xff]
  %2361 = vrot.lane.b32.xlu0 %v2349, 92
  %v2362 = vpop.permute.xlu0 %2361
  %2363 = vrot.lane.b32.xlu0 %v2350, 92
  %v2364 = vpop.permute.xlu0 %2363
  %2365 = vrot.lane.b32.xlu0 %v2351, 92
  %v2366 = vpop.permute.xlu0 %2365
  %2367 = vrot.lane.b32.xlu0 %v2352, 92
  %v2368 = vpop.permute.xlu0 %2367
  %2369 = vrot.lane.b32.xlu0 %v2353, 92
  %v2370 = vpop.permute.xlu0 %2369
  %2371 = vrot.lane.b32.xlu0 %v2354, 92
  %v2372 = vpop.permute.xlu0 %2371
  %vm2373 = vcmask 752640
  %v2374 = vsel %vm2373, %v2362, %v2364
  %v2375 = vsel %vm2373, %v2364, %v2366
  %v2376 = vsel %vm2373, %v2368, %v2370
  %v2377 = vsel %vm2373, %v2370, %v2372
  %2384 = vst [vmem:[#allocation9 + $0x3c0] sm:$0xff] %v2374
  %2385 = vst [vmem:[#allocation9 + $0x3c8] sm:$0xff] %v2375
  %2386 = vst.msk [vmem:[#allocation9 + $0x3d0] sm:$0xff] %vm2139, %v2366
  %2387 = vst [vmem:[#allocation9 + $0x410] sm:$0xff] %v2376
  %2388 = vst [vmem:[#allocation9 + $0x418] sm:$0xff] %v2377
  %2389 = vst.msk [vmem:[#allocation9 + $0x420] sm:$0xff] %vm2139, %v2372
  %v2390 = vld [vmem:[#allocation4] sm:$0xff]
  %v2391 = vld [vmem:[#allocation4 + $0x8] sm:$0xff]
  %v2392 = vld [vmem:[#allocation4 + $0x10] sm:$0xff]
  %v2393 = vld [vmem:[#allocation4 + $0x18] sm:$0xff]
  %v2394 = vld [vmem:[#allocation4 + $0x20] sm:$0xff]
  %v2395 = vld [vmem:[#allocation4 + $0x28] sm:$0xff]
  %2402 = vrot.lane.b32.xlu0 %v2390, 91
  %v2403 = vpop.permute.xlu0 %2402
  %2404 = vrot.lane.b32.xlu0 %v2391, 91
  %v2405 = vpop.permute.xlu0 %2404
  %2406 = vrot.lane.b32.xlu0 %v2392, 91
  %v2407 = vpop.permute.xlu0 %2406
  %2408 = vrot.lane.b32.xlu0 %v2393, 91
  %v2409 = vpop.permute.xlu0 %2408
  %2410 = vrot.lane.b32.xlu0 %v2394, 91
  %v2411 = vpop.permute.xlu0 %2410
  %2412 = vrot.lane.b32.xlu0 %v2395, 91
  %v2413 = vpop.permute.xlu0 %2412
  %vm2414 = vcmask 744448
  %v2415 = vsel %vm2414, %v2403, %v2405
  %v2416 = vsel %vm2414, %v2405, %v2407
  %v2417 = vsel %vm2414, %v2409, %v2411
  %v2418 = vsel %vm2414, %v2411, %v2413
  %2425 = vst [vmem:[#allocation9 + $0x460] sm:$0xff] %v2415
  %2426 = vst [vmem:[#allocation9 + $0x468] sm:$0xff] %v2416
  %2427 = vst.msk [vmem:[#allocation9 + $0x470] sm:$0xff] %vm2139, %v2407
  %2428 = vst [vmem:[#allocation9 + $0x4b0] sm:$0xff] %v2417
  %2429 = vst [vmem:[#allocation9 + $0x4b8] sm:$0xff] %v2418
  %2430 = vst.msk [vmem:[#allocation9 + $0x4c0] sm:$0xff] %vm2139, %v2413
  %v2431 = vld [vmem:[#allocation4] sm:$0xff]
  %v2432 = vld [vmem:[#allocation4 + $0x8] sm:$0xff]
  %v2433 = vld [vmem:[#allocation4 + $0x10] sm:$0xff]
  %v2434 = vld [vmem:[#allocation4 + $0x18] sm:$0xff]
  %v2435 = vld [vmem:[#allocation4 + $0x20] sm:$0xff]
  %v2436 = vld [vmem:[#allocation4 + $0x28] sm:$0xff]
  %2443 = vrot.lane.b32.xlu0 %v2431, 90
  %v2444 = vpop.permute.xlu0 %2443
  %2445 = vrot.lane.b32.xlu0 %v2432, 90
  %v2446 = vpop.permute.xlu0 %2445
  %2447 = vrot.lane.b32.xlu0 %v2433, 90
  %v2448 = vpop.permute.xlu0 %2447
  %2449 = vrot.lane.b32.xlu0 %v2434, 90
  %v2450 = vpop.permute.xlu0 %2449
  %2451 = vrot.lane.b32.xlu0 %v2435, 90
  %v2452 = vpop.permute.xlu0 %2451
  %2453 = vrot.lane.b32.xlu0 %v2436, 90
  %v2454 = vpop.permute.xlu0 %2453
  %vm2455 = vcmask 736256
  %v2456 = vsel %vm2455, %v2444, %v2446
  %v2457 = vsel %vm2455, %v2446, %v2448
  %v2458 = vsel %vm2455, %v2450, %v2452
  %v2459 = vsel %vm2455, %v2452, %v2454
  %2466 = vst [vmem:[#allocation9 + $0x500] sm:$0xff] %v2456
  %2467 = vst [vmem:[#allocation9 + $0x508] sm:$0xff] %v2457
  %2468 = vst.msk [vmem:[#allocation9 + $0x510] sm:$0xff] %vm2139, %v2448
  %2469 = vst [vmem:[#allocation9 + $0x550] sm:$0xff] %v2458
  %2470 = vst [vmem:[#allocation9 + $0x558] sm:$0xff] %v2459
  %2471 = vst.msk [vmem:[#allocation9 + $0x560] sm:$0xff] %vm2139, %v2454
  %v2472 = vld [vmem:[#allocation9] sm:$0xff]
  %v2473 = vld [vmem:[#allocation9 + $0x8] sm:$0xff]
  %v2474 = vld [vmem:[#allocation9 + $0x10] sm:$0xff]
  %v2475 = vld [vmem:[#allocation9 + $0x50] sm:$0xff]
  %v2476 = vld [vmem:[#allocation9 + $0x58] sm:$0xff]
  %v2477 = vld [vmem:[#allocation9 + $0x60] sm:$0xff]
  %v2478 = vld [vmem:[#allocation9 + $0xa0] sm:$0xff]
  %v2479 = vld [vmem:[#allocation9 + $0xa8] sm:$0xff]
  %v2480 = vld [vmem:[#allocation9 + $0xb0] sm:$0xff]
  %v2481 = vld [vmem:[#allocation9 + $0xf0] sm:$0xff]
  %v2482 = vld [vmem:[#allocation9 + $0xf8] sm:$0xff]
  %v2483 = vld [vmem:[#allocation9 + $0x100] sm:$0xff]
  %v2484 = vld [vmem:[#allocation9 + $0x140] sm:$0xff]
  %v2485 = vld [vmem:[#allocation9 + $0x148] sm:$0xff]
  %v2486 = vld [vmem:[#allocation9 + $0x150] sm:$0xff]
  %v2487 = vld [vmem:[#allocation9 + $0x190] sm:$0xff]
  %v2488 = vld [vmem:[#allocation9 + $0x198] sm:$0xff]
  %v2489 = vld [vmem:[#allocation9 + $0x1a0] sm:$0xff]
  %v2490 = vld [vmem:[#allocation9 + $0x1e0] sm:$0xff]
  %v2491 = vld [vmem:[#allocation9 + $0x1e8] sm:$0xff]
  %v2492 = vld [vmem:[#allocation9 + $0x1f0] sm:$0xff]
  %v2493 = vld [vmem:[#allocation9 + $0x230] sm:$0xff]
  %v2494 = vld [vmem:[#allocation9 + $0x238] sm:$0xff]
  %v2495 = vld [vmem:[#allocation9 + $0x240] sm:$0xff]
  %v2496 = vld [vmem:[#allocation9 + $0x280] sm:$0xff]
  %v2497 = vld [vmem:[#allocation9 + $0x288] sm:$0xff]
  %v2498 = vld [vmem:[#allocation9 + $0x290] sm:$0xff]
  %v2499 = vld [vmem:[#allocation9 + $0x2d0] sm:$0xff]
  %v2500 = vld [vmem:[#allocation9 + $0x2d8] sm:$0xff]
  %v2501 = vld [vmem:[#allocation9 + $0x2e0] sm:$0xff]
  %v2502 = vld [vmem:[#allocation9 + $0x320] sm:$0xff]
  %v2503 = vld [vmem:[#allocation9 + $0x328] sm:$0xff]
  %v2504 = vld [vmem:[#allocation9 + $0x330] sm:$0xff]
  %v2505 = vld [vmem:[#allocation9 + $0x370] sm:$0xff]
  %v2506 = vld [vmem:[#allocation9 + $0x378] sm:$0xff]
  %v2507 = vld [vmem:[#allocation9 + $0x380] sm:$0xff]
  %v2508 = vld [vmem:[#allocation9 + $0x3c0] sm:$0xff]
  %v2509 = vld [vmem:[#allocation9 + $0x3c8] sm:$0xff]
  %v2510 = vld [vmem:[#allocation9 + $0x3d0] sm:$0xff]
  %v2511 = vld [vmem:[#allocation9 + $0x410] sm:$0xff]
  %v2512 = vld [vmem:[#allocation9 + $0x418] sm:$0xff]
  %v2513 = vld [vmem:[#allocation9 + $0x420] sm:$0xff]
  %v2514 = vld [vmem:[#allocation9 + $0x460] sm:$0xff]
  %v2515 = vld [vmem:[#allocation9 + $0x468] sm:$0xff]
  %v2516 = vld [vmem:[#allocation9 + $0x470] sm:$0xff]
  %v2517 = vld [vmem:[#allocation9 + $0x4b0] sm:$0xff]
  %v2518 = vld [vmem:[#allocation9 + $0x4b8] sm:$0xff]
  %v2519 = vld [vmem:[#allocation9 + $0x4c0] sm:$0xff]
  %v2520 = vld [vmem:[#allocation9 + $0x500] sm:$0xff]
  %v2521 = vld [vmem:[#allocation9 + $0x508] sm:$0xff]
  %v2522 = vld [vmem:[#allocation9 + $0x510] sm:$0xff]
  %v2523 = vld [vmem:[#allocation9 + $0x550] sm:$0xff]
  %v2524 = vld [vmem:[#allocation9 + $0x558] sm:$0xff]
  %v2525 = vld [vmem:[#allocation9 + $0x560] sm:$0xff]
  %v2534 = vunpack.c.l.b16 %v2119
  %v2535 = vunpack.c.h.b16 %v2119
  %v2536 = vunpack.c.l.b16 %v2120
  %v2537 = vunpack.c.l.b16 %v2121
  %v2538 = vunpack.c.h.b16 %v2121
  %v2539 = vunpack.c.l.b16 %v2122
  %v2540 = vunpack.c.l.b16 %v2123
  %v2541 = vunpack.c.h.b16 %v2123
  %v2542 = vunpack.c.l.b16 %v2124
  %v2543 = vunpack.c.l.b16 %v2125
  %v2544 = vunpack.c.h.b16 %v2125
  %v2545 = vunpack.c.l.b16 %v2126
  %v2546 = vpack.c.b16 %v2537, %v2534
  %v2547 = vpack.c.b16 %v2538, %v2535
  %v2548 = vpack.c.b16 %v2539, %v2536
  %v2549 = vpack.c.b16 %v2543, %v2540
  %v2550 = vpack.c.b16 %v2544, %v2541
  %v2551 = vpack.c.b16 %v2545, %v2542
  %v2557 = vsel %vm1074, %v2548, 0
  %v2560 = vsel %vm1074, %v2551, 0
  %2562 = vmatprep.subr.bf16.mxu0 %v2473
  %2563 = vmatpush1.bf16.msra.mxu0 %v2472
  %2564 = vmatprep.subr.bf16.mxu0 %v2476
  %2565 = vmatpush1.bf16.msra.mxu0 %v2475
  %2566 = vmatprep.subr.bf16.mxu0 %v2479
  %2567 = vmatpush1.bf16.msra.mxu0 %v2478
  %2568 = vmatprep.subr.bf16.mxu0 %v2482
  %2569 = vmatpush1.bf16.msra.mxu0 %v2481
  %2570 = vmatprep.subr.bf16.mxu0 %v2485
  %2571 = vmatpush1.bf16.msra.mxu0 %v2484
  %2572 = vmatprep.subr.bf16.mxu0 %v2488
  %2573 = vmatpush1.bf16.msra.mxu0 %v2487
  %2574 = vmatprep.subr.bf16.mxu0 %v2491
  %2575 = vmatpush1.bf16.msra.mxu0 %v2490
  %2576 = vmatprep.subr.bf16.mxu0 %v2494
  %2577 = vmatpush1.bf16.msra.mxu0 %v2493
  %2578 = vmatprep.subr.bf16.mxu0 %v2497
  %2579 = vmatpush1.bf16.msra.mxu0 %v2496
  %2580 = vmatprep.subr.bf16.mxu0 %v2500
  %2581 = vmatpush1.bf16.msra.mxu0 %v2499
  %2582 = vmatprep.subr.bf16.mxu0 %v2503
  %2583 = vmatpush1.bf16.msra.mxu0 %v2502
  %2584 = vmatprep.subr.bf16.mxu0 %v2506
  %2585 = vmatpush1.bf16.msra.mxu0 %v2505
  %2586 = vmatprep.subr.bf16.mxu0 %v2509
  %2587 = vmatpush1.bf16.msra.mxu0 %v2508
  %2588 = vmatprep.subr.bf16.mxu0 %v2512
  %2589 = vmatpush1.bf16.msra.mxu0 %v2511
  %2590 = vmatprep.subr.bf16.mxu0 %v2515
  %2591 = vmatpush1.bf16.msra.mxu0 %v2514
  %2592 = vmatprep.subr.bf16.mxu0 %v2518
  %2593 = vmatpush1.bf16.msra.mxu0 %v2517
  %2594 = vmatprep.mubr.bf16.mxu0 %v2547
  %2595 = vmatmul.mubr.bf16.gmra.mrb[0].mxu0 %v2546
  %v2596 = vpop.f32.mrb[0].mxu0
  %v2597 = vadd.f32 0.0, %v2596
  %v2598 = vpop.f32.mrb[0].mxu0
  %v2599 = vadd.f32 0.0, %v2598
  %v2600 = vpop.f32.mrb[0].mxu0
  %v2601 = vadd.f32 0.0, %v2600
  %v2602 = vpop.f32.mrb[0].mxu0
  %v2603 = vadd.f32 0.0, %v2602
  %2604 = vmatprep.mubr.bf16.mxu0 %v2550
  %2605 = vmatmul.mubr.bf16.gmra.mrb[0].mxu0 %v2549
  %v2606 = vpop.f32.mrb[0].mxu0
  %v2607 = vadd.f32 0.0, %v2606
  %v2608 = vpop.f32.mrb[0].mxu0
  %v2609 = vadd.f32 0.0, %v2608
  %v2610 = vpop.f32.mrb[0].mxu0
  %v2611 = vadd.f32 0.0, %v2610
  %v2612 = vpop.f32.mrb[0].mxu0
  %v2613 = vadd.f32 0.0, %v2612
  %2614 = vdwg.mxu0
  %2615 = vmatprep.subr.bf16.mxu0 %v2521
  %2616 = vmatpush1.bf16.msra.mxu0 %v2520
  %2617 = vmatprep.subr.bf16.mxu0 %v2524
  %2618 = vmatpush1.bf16.msra.mxu0 %v2523
  %2619 = vmatprep.subr.bf16.mxu0 0
  %2620 = vmatpush1.bf16.msra.mxu0 0
  %2621 = vmatprep.subr.bf16.mxu0 0
  %2622 = vmatpush1.bf16.msra.mxu0 0
  %2623 = vmatprep.subr.bf16.mxu0 0
  %2624 = vmatpush1.bf16.msra.mxu0 0
  %2625 = vmatprep.subr.bf16.mxu0 0
  %2626 = vmatpush1.bf16.msra.mxu0 0
  %2627 = vmatprep.subr.bf16.mxu0 0
  %2628 = vmatpush1.bf16.msra.mxu0 0
  %2629 = vmatprep.subr.bf16.mxu0 0
  %2630 = vmatpush1.bf16.msra.mxu0 0
  %2631 = vmatprep.subr.bf16.mxu0 0
  %2632 = vmatpush1.bf16.msra.mxu0 0
  %2633 = vmatprep.subr.bf16.mxu0 0
  %2634 = vmatpush1.bf16.msra.mxu0 0
  %2635 = vmatprep.subr.bf16.mxu0 0
  %2636 = vmatpush1.bf16.msra.mxu0 0
  %2637 = vmatprep.subr.bf16.mxu0 0
  %2638 = vmatpush1.bf16.msra.mxu0 0
  %2639 = vmatprep.subr.bf16.mxu0 0
  %2640 = vmatpush1.bf16.msra.mxu0 0
  %2641 = vmatprep.subr.bf16.mxu0 0
  %2642 = vmatpush1.bf16.msra.mxu0 0
  %2643 = vmatprep.subr.bf16.mxu0 0
  %2644 = vmatpush1.bf16.msra.mxu0 0
  %2645 = vmatprep.subr.bf16.mxu0 0
  %2646 = vmatpush1.bf16.msra.mxu0 0
  %2647 = vmatprep.mubr.bf16.mxu0 0
  %2648 = vmatmul.mubr.bf16.gmra.mrb[0].mxu0 %v2557
  %v2649 = vpop.f32.mrb[0].mxu0
  %v2650 = vadd.f32 %v2597, %v2649
  %v2651 = vpop.f32.mrb[0].mxu0
  %v2652 = vadd.f32 %v2599, %v2651
  %v2653 = vpop.f32.mrb[0].mxu0
  %v2654 = vadd.f32 %v2601, %v2653
  %v2655 = vpop.f32.mrb[0].mxu0
  %v2656 = vadd.f32 %v2603, %v2655
  %2657 = vmatprep.mubr.bf16.mxu0 0
  %2658 = vmatmul.mubr.bf16.gmra.mrb[0].mxu0 %v2560
  %v2659 = vpop.f32.mrb[0].mxu0
  %v2660 = vadd.f32 %v2607, %v2659
  %v2661 = vpop.f32.mrb[0].mxu0
  %v2662 = vadd.f32 %v2609, %v2661
  %v2663 = vpop.f32.mrb[0].mxu0
  %v2664 = vadd.f32 %v2611, %v2663
  %v2665 = vpop.f32.mrb[0].mxu0
  %v2666 = vadd.f32 %v2613, %v2665
  %2667 = vdwg.mxu0
  %2668 = vmatprep.subr.bf16.mxu0 0
  %2669 = vmatpush1.bf16.msra.mxu0 %v2474
  %2670 = vmatprep.subr.bf16.mxu0 0
  %2671 = vmatpush1.bf16.msra.mxu0 %v2477
  %2672 = vmatprep.subr.bf16.mxu0 0
  %2673 = vmatpush1.bf16.msra.mxu0 %v2480
  %2674 = vmatprep.subr.bf16.mxu0 0
  %2675 = vmatpush1.bf16.msra.mxu0 %v2483
  %2676 = vmatprep.subr.bf16.mxu0 0
  %2677 = vmatpush1.bf16.msra.mxu0 %v2486
  %2678 = vmatprep.subr.bf16.mxu0 0
  %2679 = vmatpush1.bf16.msra.mxu0 %v2489
  %2680 = vmatprep.subr.bf16.mxu0 0
  %2681 = vmatpush1.bf16.msra.mxu0 %v2492
  %2682 = vmatprep.subr.bf16.mxu0 0
  %2683 = vmatpush1.bf16.msra.mxu0 %v2495
  %2684 = vmatprep.subr.bf16.mxu0 0
  %2685 = vmatpush1.bf16.msra.mxu0 %v2498
  %2686 = vmatprep.subr.bf16.mxu0 0
  %2687 = vmatpush1.bf16.msra.mxu0 %v2501
  %2688 = vmatprep.subr.bf16.mxu0 0
  %2689 = vmatpush1.bf16.msra.mxu0 %v2504
  %2690 = vmatprep.subr.bf16.mxu0 0
  %2691 = vmatpush1.bf16.msra.mxu0 %v2507
  %2692 = vmatprep.subr.bf16.mxu0 0
  %2693 = vmatpush1.bf16.msra.mxu0 %v2510
  %2694 = vmatprep.subr.bf16.mxu0 0
  %2695 = vmatpush1.bf16.msra.mxu0 %v2513
  %2696 = vmatprep.subr.bf16.mxu0 0
  %2697 = vmatpush1.bf16.msra.mxu0 %v2516
  %2698 = vmatprep.subr.bf16.mxu0 0
  %2699 = vmatpush1.bf16.msra.mxu0 %v2519
  %2700 = vmatprep.mubr.bf16.mxu0 %v2547
  %2701 = vmatmul.mubr.bf16.gmra.mrb[0].mxu0 %v2546
  %v2702 = vpop.f32.mrb[0].mxu0
  %v2703 = vadd.f32 0.0, %v2702
  %v2704 = vpop.f32.mrb[0].mxu0
  %v2705 = vpop.f32.mrb[0].mxu0
  %v2706 = vadd.f32 0.0, %v2705
  %v2707 = vpop.f32.mrb[0].mxu0
  %2708 = vmatprep.mubr.bf16.mxu0 %v2550
  %2709 = vmatmul.mubr.bf16.gmra.mrb[0].mxu0 %v2549
  %v2710 = vpop.f32.mrb[0].mxu0
  %v2711 = vadd.f32 0.0, %v2710
  %v2712 = vpop.f32.mrb[0].mxu0
  %v2713 = vpop.f32.mrb[0].mxu0
  %v2714 = vadd.f32 0.0, %v2713
  %v2715 = vpop.f32.mrb[0].mxu0
  %2716 = vdwg.mxu0
  %2717 = vmatprep.subr.bf16.mxu0 0
  %2718 = vmatpush1.bf16.msra.mxu0 %v2522
  %2719 = vmatprep.subr.bf16.mxu0 0
  %2720 = vmatpush1.bf16.msra.mxu0 %v2525
  %2721 = vmatprep.subr.bf16.mxu0 0
  %2722 = vmatpush1.bf16.msra.mxu0 0
  %2723 = vmatprep.subr.bf16.mxu0 0
  %2724 = vmatpush1.bf16.msra.mxu0 0
  %2725 = vmatprep.subr.bf16.mxu0 0
  %2726 = vmatpush1.bf16.msra.mxu0 0
  %2727 = vmatprep.subr.bf16.mxu0 0
  %2728 = vmatpush1.bf16.msra.mxu0 0
  %2729 = vmatprep.subr.bf16.mxu0 0
  %2730 = vmatpush1.bf16.msra.mxu0 0
  %2731 = vmatprep.subr.bf16.mxu0 0
  %2732 = vmatpush1.bf16.msra.mxu0 0
  %2733 = vmatprep.subr.bf16.mxu0 0
  %2734 = vmatpush1.bf16.msra.mxu0 0
  %2735 = vmatprep.subr.bf16.mxu0 0
  %2736 = vmatpush1.bf16.msra.mxu0 0
  %2737 = vmatprep.subr.bf16.mxu0 0
  %2738 = vmatpush1.bf16.msra.mxu0 0
  %2739 = vmatprep.subr.bf16.mxu0 0
  %2740 = vmatpush1.bf16.msra.mxu0 0
  %2741 = vmatprep.subr.bf16.mxu0 0
  %2742 = vmatpush1.bf16.msra.mxu0 0
  %2743 = vmatprep.subr.bf16.mxu0 0
  %2744 = vmatpush1.bf16.msra.mxu0 0
  %2745 = vmatprep.subr.bf16.mxu0 0
  %2746 = vmatpush1.bf16.msra.mxu0 0
  %2747 = vmatprep.subr.bf16.mxu0 0
  %2748 = vmatpush1.bf16.msra.mxu0 0
  %2749 = vmatprep.mubr.bf16.mxu0 0
  %2750 = vmatmul.mubr.bf16.gmra.mrb[0].mxu0 %v2557
  %v2751 = vpop.f32.mrb[0].mxu0
  %v2752 = vadd.f32 %v2703, %v2751
  %v2753 = vpop.f32.mrb[0].mxu0
  %v2754 = vpop.f32.mrb[0].mxu0
  %v2755 = vadd.f32 %v2706, %v2754
  %v2756 = vpop.f32.mrb[0].mxu0
  %2757 = vmatprep.mubr.bf16.mxu0 0
  %2758 = vmatmul.mubr.bf16.gmra.mrb[0].mxu0 %v2560
  %v2759 = vpop.f32.mrb[0].mxu0
  %v2760 = vadd.f32 %v2711, %v2759
  %v2761 = vpop.f32.mrb[0].mxu0
  %v2762 = vpop.f32.mrb[0].mxu0
  %v2763 = vadd.f32 %v2714, %v2762
  %v2764 = vpop.f32.mrb[0].mxu0
  %2765 = vdwg.mxu0
  %2767 = vset.pattern.permute.xlu0 7
  %2768 = vperm.xlu0 %2767, %v2127
  %v2769 = vpop.permute.xlu0 %2768
  %2772 = vset.pattern.permute.xlu0 7
  %2773 = vperm.xlu0 %2772, %v2128
  %v2774 = vpop.permute.xlu0 %2773
  %2777 = vset.pattern.permute.xlu0 7
  %2778 = vperm.xlu0 %2777, %v2129
  %v2779 = vpop.permute.xlu0 %2778
  %2782 = vset.pattern.permute.xlu0 7
  %2783 = vperm.xlu0 %2782, %v2130
  %v2784 = vpop.permute.xlu0 %2783
  %v2786 = vmul.f32 %v2650, %v2769
  %v2787 = vmul.f32 %v2652, %v2769
  %v2788 = vmul.f32 %v2752, %v2769
  %v2789 = vmul.f32 %v2654, %v2774
  %v2790 = vmul.f32 %v2656, %v2774
  %v2791 = vmul.f32 %v2755, %v2774
  %v2792 = vmul.f32 %v2660, %v2779
  %v2793 = vmul.f32 %v2662, %v2779
  %v2794 = vmul.f32 %v2760, %v2779
  %v2795 = vmul.f32 %v2664, %v2784
  %v2796 = vmul.f32 %v2666, %v2784
  %v2797 = vmul.f32 %v2763, %v2784
  %2798 = vset.pattern.permute.xlu0 8
  %2799 = vperm.xlu0 %2798, %v2127
  %v2800 = vpop.permute.xlu0 %2799
  %2802 = vset.pattern.permute.xlu0 8
  %2803 = vperm.xlu0 %2802, %v2128
  %v2804 = vpop.permute.xlu0 %2803
  %2806 = vset.pattern.permute.xlu0 8
  %2807 = vperm.xlu0 %2806, %v2129
  %v2808 = vpop.permute.xlu0 %2807
  %2810 = vset.pattern.permute.xlu0 8
  %2811 = vperm.xlu0 %2810, %v2130
  %v2812 = vpop.permute.xlu0 %2811
  %v2814 = vadd.f32 %v2786, %v2800
  %v2815 = vadd.f32 %v2787, %v2800
  %v2816 = vadd.f32 %v2788, %v2800
  %v2817 = vadd.f32 %v2789, %v2804
  %v2818 = vadd.f32 %v2790, %v2804
  %v2819 = vadd.f32 %v2791, %v2804
  %v2820 = vadd.f32 %v2792, %v2808
  %v2821 = vadd.f32 %v2793, %v2808
  %v2822 = vadd.f32 %v2794, %v2808
  %v2823 = vadd.f32 %v2795, %v2812
  %v2824 = vadd.f32 %v2796, %v2812
  %v2825 = vadd.f32 %v2797, %v2812
  %v2826 = vmax.f32 %v2814, 0.0
  %v2827 = vmax.f32 %v2815, 0.0
  %v2828 = vmax.f32 %v2816, 0.0
  %v2829 = vmax.f32 %v2817, 0.0
  %v2830 = vmax.f32 %v2818, 0.0
  %v2831 = vmax.f32 %v2819, 0.0
  %v2832 = vmax.f32 %v2820, 0.0
  %v2833 = vmax.f32 %v2821, 0.0
  %v2834 = vmax.f32 %v2822, 0.0
  %v2835 = vmax.f32 %v2823, 0.0
  %v2836 = vmax.f32 %v2824, 0.0
  %v2837 = vmax.f32 %v2825, 0.0
  %v2839 = vlaneseq
  %v2840 = vshrl.u32 %v2839, 7
  %v2841 = vsub.s32 0, %v2840
  %v2842 = vrot.slane %v70, %v2841
  %v2843 = vlaneseq
  %v2844 = vshrl.u32 %v2843, 7
  %v2845 = vsub.s32 1, %v2844
  %v2846 = vrot.slane %v70, %v2845
  %v2847 = vlaneseq
  %v2848 = vshrl.u32 %v2847, 7
  %v2849 = vsub.s32 2, %v2848
  %v2850 = vrot.slane %v70, %v2849
  %v2854 = vmul.f32 %v2826, %v2842
  %v2855 = vmul.f32 %v2827, %v2846
  %v2856 = vmul.f32 %v2828, %v2850
  %v2857 = vmul.f32 %v2829, %v2842
  %v2858 = vmul.f32 %v2830, %v2846
  %v2859 = vmul.f32 %v2831, %v2850
  %v2860 = vmul.f32 %v2832, %v2842
  %v2861 = vmul.f32 %v2833, %v2846
  %v2862 = vmul.f32 %v2834, %v2850
  %v2863 = vmul.f32 %v2835, %v2842
  %v2864 = vmul.f32 %v2836, %v2846
  %v2865 = vmul.f32 %v2837, %v2850
  %v2866 = vld [vmem:[%s1 + $0x58] sm:$0xf]
  %v2867 = vld [vmem:[%s1 + $0xb4] sm:$0xf]
  %v2868 = vld [vmem:[%s1 + $0x110] sm:$0x1]
  %v2869 = vunpack.c.l.bf16 %v2866
  %v2870 = vunpack.c.l.bf16 %v2867
  %v2871 = vunpack.c.l.bf16 %v2868
  %2876 = vrot.lane.b32.xlu0 %v2854, 110
  %v2877 = vpop.permute.xlu0 %2876
  %2878 = vrot.lane.b32.xlu0 %v2857, 110
  %v2879 = vpop.permute.xlu0 %2878
  %2880 = vrot.lane.b32.xlu0 %v2860, 110
  %v2881 = vpop.permute.xlu0 %2880
  %2882 = vrot.lane.b32.xlu0 %v2863, 110
  %v2883 = vpop.permute.xlu0 %2882
  %vm2884 = vcmask 146432
  %v2885 = vsel %vm2884, %v2877, 0
  %v2887 = vsel %vm2884, %v2879, 0
  %v2889 = vsel %vm2884, %v2881, 0
  %v2891 = vsel %vm2884, %v2883, 0
  %v2894 = vsel %vm1216, %v2871, 0
  %2896 = vmatprep.subr.mxu0 0.0
  %2897 = vmatpush1.msra.mxu0 %v2869
  %2898 = vmatprep.subr.mxu0 0.0
  %2899 = vmatpush1.msra.mxu0 %v2870
  %2900 = vmatprep.subr.mxu0 0.0
  %2901 = vmatpush1.msra.mxu0 %v2894
  %2902 = vmatprep.subr.mxu0 0.0
  %2903 = vmatpush1.msra.mxu0 0.0
  %2904 = vmatprep.subr.mxu0 0.0
  %2905 = vmatpush1.msra.mxu0 0.0
  %2906 = vmatprep.subr.mxu0 0.0
  %2907 = vmatpush1.msra.mxu0 0.0
  %2908 = vmatprep.subr.mxu0 0.0
  %2909 = vmatpush1.msra.mxu0 0.0
  %2910 = vmatprep.subr.mxu0 0.0
  %2911 = vmatpush1.msra.mxu0 0.0
  %2912 = vmatprep.subr.mxu0 0.0
  %2913 = vmatpush1.msra.mxu0 0.0
  %2914 = vmatprep.subr.mxu0 0.0
  %2915 = vmatpush1.msra.mxu0 0.0
  %2916 = vmatprep.subr.mxu0 0.0
  %2917 = vmatpush1.msra.mxu0 0.0
  %2918 = vmatprep.subr.mxu0 0.0
  %2919 = vmatpush1.msra.mxu0 0.0
  %2920 = vmatprep.subr.mxu0 0.0
  %2921 = vmatpush1.msra.mxu0 0.0
  %2922 = vmatprep.subr.mxu0 0.0
  %2923 = vmatpush1.msra.mxu0 0.0
  %2924 = vmatprep.subr.mxu0 0.0
  %2925 = vmatpush1.msra.mxu0 0.0
  %2926 = vmatprep.subr.mxu0 0.0
  %2927 = vmatpush1.msra.mxu0 0.0
  %2928 = vmatprep.subr.mxu0 0.0
  %2929 = vmatpush1.msra.mxu0 0.0
  %2930 = vmatprep.subr.mxu0 0.0
  %2931 = vmatpush1.msra.mxu0 0.0
  %2932 = vmatprep.subr.mxu0 0.0
  %2933 = vmatpush1.msra.mxu0 0.0
  %2934 = vmatprep.subr.mxu0 0.0
  %2935 = vmatpush1.msra.mxu0 0.0
  %2936 = vmatprep.subr.mxu0 0.0
  %2937 = vmatpush1.msra.mxu0 0.0
  %2938 = vmatprep.subr.mxu0 0.0
  %2939 = vmatpush1.msra.mxu0 0.0
  %2940 = vmatprep.subr.mxu0 0.0
  %2941 = vmatpush1.msra.mxu0 0.0
  %2942 = vmatprep.subr.mxu0 0.0
  %2943 = vmatpush1.msra.mxu0 0.0
  %2944 = vmatprep.subr.mxu0 0.0
  %2945 = vmatpush1.msra.mxu0 0.0
  %2946 = vmatprep.subr.mxu0 0.0
  %2947 = vmatpush1.msra.mxu0 0.0
  %2948 = vmatprep.subr.mxu0 0.0
  %2949 = vmatpush1.msra.mxu0 0.0
  %2950 = vmatprep.subr.mxu0 0.0
  %2951 = vmatpush1.msra.mxu0 0.0
  %2952 = vmatprep.subr.mxu0 0.0
  %2953 = vmatpush1.msra.mxu0 0.0
  %2954 = vmatprep.subr.mxu0 0.0
  %2955 = vmatpush1.msra.mxu0 0.0
  %2956 = vmatprep.subr.mxu0 0.0
  %2957 = vmatpush1.msra.mxu0 0.0
  %2958 = vmatprep.subr.mxu0 0.0
  %2959 = vmatpush1.msra.mxu0 0.0
  %2960 = vmatprep.mubr.f32.mxu0 0.0
  %2961 = vmatmul.mubr.f32.gmra.mrb[0].mxu0 %v2885
  %v2962 = vpop.f32.mrb[0].mxu0
  %v2963 = vadd.f32 0.0, %v2962
  %v2964 = vpop.f32.mrb[0].mxu0
  %2965 = vmatprep.mubr.f32.mxu0 0.0
  %2966 = vmatmul.mubr.f32.gmra.mrb[0].mxu0 %v2887
  %v2967 = vpop.f32.mrb[0].mxu0
  %v2968 = vadd.f32 0.0, %v2967
  %v2969 = vpop.f32.mrb[0].mxu0
  %2970 = vmatprep.mubr.f32.mxu0 0.0
  %2971 = vmatmul.mubr.f32.gmra.mrb[0].mxu0 %v2889
  %v2972 = vpop.f32.mrb[0].mxu0
  %v2973 = vadd.f32 0.0, %v2972
  %v2974 = vpop.f32.mrb[0].mxu0
  %2975 = vmatprep.mubr.f32.mxu0 0.0
  %2976 = vmatmul.mubr.f32.gmra.mrb[0].mxu0 %v2891
  %v2977 = vpop.f32.mrb[0].mxu0
  %v2978 = vadd.f32 0.0, %v2977
  %v2979 = vpop.f32.mrb[0].mxu0
  %2980 = vdwg.mxu0
  %v2981 = vpack.c.bf16 %v2968, %v2963
  %v2982 = vpack.c.bf16 %v2978, %v2973
  %2985 = vrot.lane.b32.xlu0 %v2981, 69
  %v2986 = vpop.permute.xlu0 %2985
  %2987 = vrot.lane.b32.xlu0 %v2982, 69
  %v2988 = vpop.permute.xlu0 %2987
  %vm2991 = vcmask 843304
  %2992 = vst.msk [vmem:[#allocation5] sm:$0xff] %vm2991, %v2986
  %2993 = vst.msk [vmem:[#allocation5 + $0x50] sm:$0xff] %vm2991, %v2988
  %2994 = vrot.lane.b32.xlu0 %v2854, 92
  %v2995 = vpop.permute.xlu0 %2994
  %2996 = vrot.lane.b32.xlu0 %v2857, 92
  %v2997 = vpop.permute.xlu0 %2996
  %2998 = vrot.lane.b32.xlu0 %v2860, 92
  %v2999 = vpop.permute.xlu0 %2998
  %3000 = vrot.lane.b32.xlu0 %v2863, 92
  %v3001 = vpop.permute.xlu0 %3000
  %v3002 = vsel %vm2884, %v2995, 0
  %v3004 = vsel %vm2884, %v2997, 0
  %v3006 = vsel %vm2884, %v2999, 0
  %v3008 = vsel %vm2884, %v3001, 0
  %3010 = vmatprep.subr.mxu0 0.0
  %3011 = vmatpush1.msra.mxu0 %v2869
  %3012 = vmatprep.subr.mxu0 0.0
  %3013 = vmatpush1.msra.mxu0 %v2870
  %3014 = vmatprep.subr.mxu0 0.0
  %3015 = vmatpush1.msra.mxu0 %v2894
  %3016 = vmatprep.subr.mxu0 0.0
  %3017 = vmatpush1.msra.mxu0 0.0
  %3018 = vmatprep.subr.mxu0 0.0
  %3019 = vmatpush1.msra.mxu0 0.0
  %3020 = vmatprep.subr.mxu0 0.0
  %3021 = vmatpush1.msra.mxu0 0.0
  %3022 = vmatprep.subr.mxu0 0.0
  %3023 = vmatpush1.msra.mxu0 0.0
  %3024 = vmatprep.subr.mxu0 0.0
  %3025 = vmatpush1.msra.mxu0 0.0
  %3026 = vmatprep.subr.mxu0 0.0
  %3027 = vmatpush1.msra.mxu0 0.0
  %3028 = vmatprep.subr.mxu0 0.0
  %3029 = vmatpush1.msra.mxu0 0.0
  %3030 = vmatprep.subr.mxu0 0.0
  %3031 = vmatpush1.msra.mxu0 0.0
  %3032 = vmatprep.subr.mxu0 0.0
  %3033 = vmatpush1.msra.mxu0 0.0
  %3034 = vmatprep.subr.mxu0 0.0
  %3035 = vmatpush1.msra.mxu0 0.0
  %3036 = vmatprep.subr.mxu0 0.0
  %3037 = vmatpush1.msra.mxu0 0.0
  %3038 = vmatprep.subr.mxu0 0.0
  %3039 = vmatpush1.msra.mxu0 0.0
  %3040 = vmatprep.subr.mxu0 0.0
  %3041 = vmatpush1.msra.mxu0 0.0
  %3042 = vmatprep.subr.mxu0 0.0
  %3043 = vmatpush1.msra.mxu0 0.0
  %3044 = vmatprep.subr.mxu0 0.0
  %3045 = vmatpush1.msra.mxu0 0.0
  %3046 = vmatprep.subr.mxu0 0.0
  %3047 = vmatpush1.msra.mxu0 0.0
  %3048 = vmatprep.subr.mxu0 0.0
  %3049 = vmatpush1.msra.mxu0 0.0
  %3050 = vmatprep.subr.mxu0 0.0
  %3051 = vmatpush1.msra.mxu0 0.0
  %3052 = vmatprep.subr.mxu0 0.0
  %3053 = vmatpush1.msra.mxu0 0.0
  %3054 = vmatprep.subr.mxu0 0.0
  %3055 = vmatpush1.msra.mxu0 0.0
  %3056 = vmatprep.subr.mxu0 0.0
  %3057 = vmatpush1.msra.mxu0 0.0
  %3058 = vmatprep.subr.mxu0 0.0
  %3059 = vmatpush1.msra.mxu0 0.0
  %3060 = vmatprep.subr.mxu0 0.0
  %3061 = vmatpush1.msra.mxu0 0.0
  %3062 = vmatprep.subr.mxu0 0.0
  %3063 = vmatpush1.msra.mxu0 0.0
  %3064 = vmatprep.subr.mxu0 0.0
  %3065 = vmatpush1.msra.mxu0 0.0
  %3066 = vmatprep.subr.mxu0 0.0
  %3067 = vmatpush1.msra.mxu0 0.0
  %3068 = vmatprep.subr.mxu0 0.0
  %3069 = vmatpush1.msra.mxu0 0.0
  %3070 = vmatprep.subr.mxu0 0.0
  %3071 = vmatpush1.msra.mxu0 0.0
  %3072 = vmatprep.subr.mxu0 0.0
  %3073 = vmatpush1.msra.mxu0 0.0
  %3074 = vmatprep.mubr.f32.mxu0 0.0
  %3075 = vmatmul.mubr.f32.gmra.mrb[0].mxu0 %v3002
  %v3076 = vpop.f32.mrb[0].mxu0
  %v3077 = vadd.f32 0.0, %v3076
  %v3078 = vpop.f32.mrb[0].mxu0
  %3079 = vmatprep.mubr.f32.mxu0 0.0
  %3080 = vmatmul.mubr.f32.gmra.mrb[0].mxu0 %v3004
  %v3081 = vpop.f32.mrb[0].mxu0
  %v3082 = vadd.f32 0.0, %v3081
  %v3083 = vpop.f32.mrb[0].mxu0
  %3084 = vmatprep.mubr.f32.mxu0 0.0
  %3085 = vmatmul.mubr.f32.gmra.mrb[0].mxu0 %v3006
  %v3086 = vpop.f32.mrb[0].mxu0
  %v3087 = vadd.f32 0.0, %v3086
  %v3088 = vpop.f32.mrb[0].mxu0
  %3089 = vmatprep.mubr.f32.mxu0 0.0
  %3090 = vmatmul.mubr.f32.gmra.mrb[0].mxu0 %v3008
  %v3091 = vpop.f32.mrb[0].mxu0
  %v3092 = vadd.f32 0.0, %v3091
  %v3093 = vpop.f32.mrb[0].mxu0
  %3094 = vdwg.mxu0
  %v3095 = vpack.c.bf16 %v3082, %v3077
  %v3096 = vpack.c.bf16 %v3092, %v3087
  %3099 = vrot.lane.b32.xlu0 %v3095, 9
  %v3100 = vpop.permute.xlu0 %3099
  %3101 = vrot.lane.b32.xlu0 %v3096, 9
  %v3102 = vpop.permute.xlu0 %3101
  %vm3105 = vcmask 351304
  %3106 = vst.msk [vmem:[#allocation5 + $0x8] sm:$0xff] %vm3105, %v3100
  %3107 = vst.msk [vmem:[#allocation5 + $0x58] sm:$0xff] %vm3105, %v3102
  %3108 = vrot.lane.b32.xlu0 %v2854, 74
  %v3109 = vpop.permute.xlu0 %3108
  %3110 = vrot.lane.b32.xlu0 %v2857, 74
  %v3111 = vpop.permute.xlu0 %3110
  %3112 = vrot.lane.b32.xlu0 %v2860, 74
  %v3113 = vpop.permute.xlu0 %3112
  %3114 = vrot.lane.b32.xlu0 %v2863, 74
  %v3115 = vpop.permute.xlu0 %3114
  %v3116 = vsel %vm2884, %v3109, 0
  %v3118 = vsel %vm2884, %v3111, 0
  %v3120 = vsel %vm2884, %v3113, 0
  %v3122 = vsel %vm2884, %v3115, 0
  %3124 = vmatprep.subr.mxu0 0.0
  %3125 = vmatpush1.msra.mxu0 %v2869
  %3126 = vmatprep.subr.mxu0 0.0
  %3127 = vmatpush1.msra.mxu0 %v2870
  %3128 = vmatprep.subr.mxu0 0.0
  %3129 = vmatpush1.msra.mxu0 %v2894
  %3130 = vmatprep.subr.mxu0 0.0
  %3131 = vmatpush1.msra.mxu0 0.0
  %3132 = vmatprep.subr.mxu0 0.0
  %3133 = vmatpush1.msra.mxu0 0.0
  %3134 = vmatprep.subr.mxu0 0.0
  %3135 = vmatpush1.msra.mxu0 0.0
  %3136 = vmatprep.subr.mxu0 0.0
  %3137 = vmatpush1.msra.mxu0 0.0
  %3138 = vmatprep.subr.mxu0 0.0
  %3139 = vmatpush1.msra.mxu0 0.0
  %3140 = vmatprep.subr.mxu0 0.0
  %3141 = vmatpush1.msra.mxu0 0.0
  %3142 = vmatprep.subr.mxu0 0.0
  %3143 = vmatpush1.msra.mxu0 0.0
  %3144 = vmatprep.subr.mxu0 0.0
  %3145 = vmatpush1.msra.mxu0 0.0
  %3146 = vmatprep.subr.mxu0 0.0
  %3147 = vmatpush1.msra.mxu0 0.0
  %3148 = vmatprep.subr.mxu0 0.0
  %3149 = vmatpush1.msra.mxu0 0.0
  %3150 = vmatprep.subr.mxu0 0.0
  %3151 = vmatpush1.msra.mxu0 0.0
  %3152 = vmatprep.subr.mxu0 0.0
  %3153 = vmatpush1.msra.mxu0 0.0
  %3154 = vmatprep.subr.mxu0 0.0
  %3155 = vmatpush1.msra.mxu0 0.0
  %3156 = vmatprep.subr.mxu0 0.0
  %3157 = vmatpush1.msra.mxu0 0.0
  %3158 = vmatprep.subr.mxu0 0.0
  %3159 = vmatpush1.msra.mxu0 0.0
  %3160 = vmatprep.subr.mxu0 0.0
  %3161 = vmatpush1.msra.mxu0 0.0
  %3162 = vmatprep.subr.mxu0 0.0
  %3163 = vmatpush1.msra.mxu0 0.0
  %3164 = vmatprep.subr.mxu0 0.0
  %3165 = vmatpush1.msra.mxu0 0.0
  %3166 = vmatprep.subr.mxu0 0.0
  %3167 = vmatpush1.msra.mxu0 0.0
  %3168 = vmatprep.subr.mxu0 0.0
  %3169 = vmatpush1.msra.mxu0 0.0
  %3170 = vmatprep.subr.mxu0 0.0
  %3171 = vmatpush1.msra.mxu0 0.0
  %3172 = vmatprep.subr.mxu0 0.0
  %3173 = vmatpush1.msra.mxu0 0.0
  %3174 = vmatprep.subr.mxu0 0.0
  %3175 = vmatpush1.msra.mxu0 0.0
  %3176 = vmatprep.subr.mxu0 0.0
  %3177 = vmatpush1.msra.mxu0 0.0
  %3178 = vmatprep.subr.mxu0 0.0
  %3179 = vmatpush1.msra.mxu0 0.0
  %3180 = vmatprep.subr.mxu0 0.0
  %3181 = vmatpush1.msra.mxu0 0.0
  %3182 = vmatprep.subr.mxu0 0.0
  %3183 = vmatpush1.msra.mxu0 0.0
  %3184 = vmatprep.subr.mxu0 0.0
  %3185 = vmatpush1.msra.mxu0 0.0
  %3186 = vmatprep.subr.mxu0 0.0
  %3187 = vmatpush1.msra.mxu0 0.0
  %3188 = vmatprep.mubr.f32.mxu0 0.0
  %3189 = vmatmul.mubr.f32.gmra.mrb[0].mxu0 %v3116
  %v3190 = vpop.f32.mrb[0].mxu0
  %v3191 = vadd.f32 0.0, %v3190
  %v3192 = vpop.f32.mrb[0].mxu0
  %3193 = vmatprep.mubr.f32.mxu0 0.0
  %3194 = vmatmul.mubr.f32.gmra.mrb[0].mxu0 %v3118
  %v3195 = vpop.f32.mrb[0].mxu0
  %v3196 = vadd.f32 0.0, %v3195
  %v3197 = vpop.f32.mrb[0].mxu0
  %3198 = vmatprep.mubr.f32.mxu0 0.0
  %3199 = vmatmul.mubr.f32.gmra.mrb[0].mxu0 %v3120
  %v3200 = vpop.f32.mrb[0].mxu0
  %v3201 = vadd.f32 0.0, %v3200
  %v3202 = vpop.f32.mrb[0].mxu0
  %3203 = vmatprep.mubr.f32.mxu0 0.0
  %3204 = vmatmul.mubr.f32.gmra.mrb[0].mxu0 %v3122
  %v3205 = vpop.f32.mrb[0].mxu0
  %v3206 = vadd.f32 0.0, %v3205
  %v3207 = vpop.f32.mrb[0].mxu0
  %3208 = vdwg.mxu0
  %v3209 = vpack.c.bf16 %v3196, %v3191
  %v3210 = vpack.c.bf16 %v3206, %v3201
  %3213 = vrot.lane.b32.xlu0 %v3209, 77
  %v3214 = vpop.permute.xlu0 %3213
  %3215 = vrot.lane.b32.xlu0 %v3210, 77
  %v3216 = vpop.permute.xlu0 %3215
  %vm3219 = vcmask 908904
  %3220 = vst.msk [vmem:[#allocation5 + $0x8] sm:$0xff] %vm3219, %v3214
  %3221 = vst.msk [vmem:[#allocation5 + $0x58] sm:$0xff] %vm3219, %v3216
  %3222 = vrot.lane.b32.xlu0 %v2854, 56
  %v3223 = vpop.permute.xlu0 %3222
  %3224 = vrot.lane.b32.xlu0 %v2857, 56
  %v3225 = vpop.permute.xlu0 %3224
  %3226 = vrot.lane.b32.xlu0 %v2860, 56
  %v3227 = vpop.permute.xlu0 %3226
  %3228 = vrot.lane.b32.xlu0 %v2863, 56
  %v3229 = vpop.permute.xlu0 %3228
  %v3230 = vsel %vm2884, %v3223, 0
  %v3232 = vsel %vm2884, %v3225, 0
  %v3234 = vsel %vm2884, %v3227, 0
  %v3236 = vsel %vm2884, %v3229, 0
  %3238 = vmatprep.subr.mxu0 0.0
  %3239 = vmatpush1.msra.mxu0 %v2869
  %3240 = vmatprep.subr.mxu0 0.0
  %3241 = vmatpush1.msra.mxu0 %v2870
  %3242 = vmatprep.subr.mxu0 0.0
  %3243 = vmatpush1.msra.mxu0 %v2894
  %3244 = vmatprep.subr.mxu0 0.0
  %3245 = vmatpush1.msra.mxu0 0.0
  %3246 = vmatprep.subr.mxu0 0.0
  %3247 = vmatpush1.msra.mxu0 0.0
  %3248 = vmatprep.subr.mxu0 0.0
  %3249 = vmatpush1.msra.mxu0 0.0
  %3250 = vmatprep.subr.mxu0 0.0
  %3251 = vmatpush1.msra.mxu0 0.0
  %3252 = vmatprep.subr.mxu0 0.0
  %3253 = vmatpush1.msra.mxu0 0.0
  %3254 = vmatprep.subr.mxu0 0.0
  %3255 = vmatpush1.msra.mxu0 0.0
  %3256 = vmatprep.subr.mxu0 0.0
  %3257 = vmatpush1.msra.mxu0 0.0
  %3258 = vmatprep.subr.mxu0 0.0
  %3259 = vmatpush1.msra.mxu0 0.0
  %3260 = vmatprep.subr.mxu0 0.0
  %3261 = vmatpush1.msra.mxu0 0.0
  %3262 = vmatprep.subr.mxu0 0.0
  %3263 = vmatpush1.msra.mxu0 0.0
  %3264 = vmatprep.subr.mxu0 0.0
  %3265 = vmatpush1.msra.mxu0 0.0
  %3266 = vmatprep.subr.mxu0 0.0
  %3267 = vmatpush1.msra.mxu0 0.0
  %3268 = vmatprep.subr.mxu0 0.0
  %3269 = vmatpush1.msra.mxu0 0.0
  %3270 = vmatprep.subr.mxu0 0.0
  %3271 = vmatpush1.msra.mxu0 0.0
  %3272 = vmatprep.subr.mxu0 0.0
  %3273 = vmatpush1.msra.mxu0 0.0
  %3274 = vmatprep.subr.mxu0 0.0
  %3275 = vmatpush1.msra.mxu0 0.0
  %3276 = vmatprep.subr.mxu0 0.0
  %3277 = vmatpush1.msra.mxu0 0.0
  %3278 = vmatprep.subr.mxu0 0.0
  %3279 = vmatpush1.msra.mxu0 0.0
  %3280 = vmatprep.subr.mxu0 0.0
  %3281 = vmatpush1.msra.mxu0 0.0
  %3282 = vmatprep.subr.mxu0 0.0
  %3283 = vmatpush1.msra.mxu0 0.0
  %3284 = vmatprep.subr.mxu0 0.0
  %3285 = vmatpush1.msra.mxu0 0.0
  %3286 = vmatprep.subr.mxu0 0.0
  %3287 = vmatpush1.msra.mxu0 0.0
  %3288 = vmatprep.subr.mxu0 0.0
  %3289 = vmatpush1.msra.mxu0 0.0
  %3290 = vmatprep.subr.mxu0 0.0
  %3291 = vmatpush1.msra.mxu0 0.0
  %3292 = vmatprep.subr.mxu0 0.0
  %3293 = vmatpush1.msra.mxu0 0.0
  %3294 = vmatprep.subr.mxu0 0.0
  %3295 = vmatpush1.msra.mxu0 0.0
  %3296 = vmatprep.subr.mxu0 0.0
  %3297 = vmatpush1.msra.mxu0 0.0
  %3298 = vmatprep.subr.mxu0 0.0
  %3299 = vmatpush1.msra.mxu0 0.0
  %3300 = vmatprep.subr.mxu0 0.0
  %3301 = vmatpush1.msra.mxu0 0.0
  %3302 = vmatprep.mubr.f32.mxu0 0.0
  %3303 = vmatmul.mubr.f32.gmra.mrb[0].mxu0 %v3230
  %v3304 = vpop.f32.mrb[0].mxu0
  %v3305 = vadd.f32 0.0, %v3304
  %v3306 = vpop.f32.mrb[0].mxu0
  %3307 = vmatprep.mubr.f32.mxu0 0.0
  %3308 = vmatmul.mubr.f32.gmra.mrb[0].mxu0 %v3232
  %v3309 = vpop.f32.mrb[0].mxu0
  %v3310 = vadd.f32 0.0, %v3309
  %v3311 = vpop.f32.mrb[0].mxu0
  %3312 = vmatprep.mubr.f32.mxu0 0.0
  %3313 = vmatmul.mubr.f32.gmra.mrb[0].mxu0 %v3234
  %v3314 = vpop.f32.mrb[0].mxu0
  %v3315 = vadd.f32 0.0, %v3314
  %v3316 = vpop.f32.mrb[0].mxu0
  %3317 = vmatprep.mubr.f32.mxu0 0.0
  %3318 = vmatmul.mubr.f32.gmra.mrb[0].mxu0 %v3236
  %v3319 = vpop.f32.mrb[0].mxu0
  %v3320 = vadd.f32 0.0, %v3319
  %v3321 = vpop.f32.mrb[0].mxu0
  %3322 = vdwg.mxu0
  %v3323 = vpack.c.bf16 %v3310, %v3305
  %v3324 = vpack.c.bf16 %v3320, %v3315
  %3327 = vrot.lane.b32.xlu0 %v3323, 17
  %v3328 = vpop.permute.xlu0 %3327
  %3329 = vrot.lane.b32.xlu0 %v3324, 17
  %v3330 = vpop.permute.xlu0 %3329
  %vm3333 = vcmask 416904
  %3334 = vst.msk [vmem:[#allocation5 + $0x10] sm:$0xff] %vm3333, %v3328
  %3335 = vst.msk [vmem:[#allocation5 + $0x60] sm:$0xff] %vm3333, %v3330
  %3336 = vrot.lane.b32.xlu0 %v2854, 38
  %v3337 = vpop.permute.xlu0 %3336
  %3338 = vrot.lane.b32.xlu0 %v2857, 38
  %v3339 = vpop.permute.xlu0 %3338
  %3340 = vrot.lane.b32.xlu0 %v2860, 38
  %v3341 = vpop.permute.xlu0 %3340
  %3342 = vrot.lane.b32.xlu0 %v2863, 38
  %v3343 = vpop.permute.xlu0 %3342
  %v3344 = vsel %vm2884, %v3337, 0
  %v3346 = vsel %vm2884, %v3339, 0
  %v3348 = vsel %vm2884, %v3341, 0
  %v3350 = vsel %vm2884, %v3343, 0
  %3352 = vmatprep.subr.mxu0 0.0
  %3353 = vmatpush1.msra.mxu0 %v2869
  %3354 = vmatprep.subr.mxu0 0.0
  %3355 = vmatpush1.msra.mxu0 %v2870
  %3356 = vmatprep.subr.mxu0 0.0
  %3357 = vmatpush1.msra.mxu0 %v2894
  %3358 = vmatprep.subr.mxu0 0.0
  %3359 = vmatpush1.msra.mxu0 0.0
  %3360 = vmatprep.subr.mxu0 0.0
  %3361 = vmatpush1.msra.mxu0 0.0
  %3362 = vmatprep.subr.mxu0 0.0
  %3363 = vmatpush1.msra.mxu0 0.0
  %3364 = vmatprep.subr.mxu0 0.0
  %3365 = vmatpush1.msra.mxu0 0.0
  %3366 = vmatprep.subr.mxu0 0.0
  %3367 = vmatpush1.msra.mxu0 0.0
  %3368 = vmatprep.subr.mxu0 0.0
  %3369 = vmatpush1.msra.mxu0 0.0
  %3370 = vmatprep.subr.mxu0 0.0
  %3371 = vmatpush1.msra.mxu0 0.0
  %3372 = vmatprep.subr.mxu0 0.0
  %3373 = vmatpush1.msra.mxu0 0.0
  %3374 = vmatprep.subr.mxu0 0.0
  %3375 = vmatpush1.msra.mxu0 0.0
  %3376 = vmatprep.subr.mxu0 0.0
  %3377 = vmatpush1.msra.mxu0 0.0
  %3378 = vmatprep.subr.mxu0 0.0
  %3379 = vmatpush1.msra.mxu0 0.0
  %3380 = vmatprep.subr.mxu0 0.0
  %3381 = vmatpush1.msra.mxu0 0.0
  %3382 = vmatprep.subr.mxu0 0.0
  %3383 = vmatpush1.msra.mxu0 0.0
  %3384 = vmatprep.subr.mxu0 0.0
  %3385 = vmatpush1.msra.mxu0 0.0
  %3386 = vmatprep.subr.mxu0 0.0
  %3387 = vmatpush1.msra.mxu0 0.0
  %3388 = vmatprep.subr.mxu0 0.0
  %3389 = vmatpush1.msra.mxu0 0.0
  %3390 = vmatprep.subr.mxu0 0.0
  %3391 = vmatpush1.msra.mxu0 0.0
  %3392 = vmatprep.subr.mxu0 0.0
  %3393 = vmatpush1.msra.mxu0 0.0
  %3394 = vmatprep.subr.mxu0 0.0
  %3395 = vmatpush1.msra.mxu0 0.0
  %3396 = vmatprep.subr.mxu0 0.0
  %3397 = vmatpush1.msra.mxu0 0.0
  %3398 = vmatprep.subr.mxu0 0.0
  %3399 = vmatpush1.msra.mxu0 0.0
  %3400 = vmatprep.subr.mxu0 0.0
  %3401 = vmatpush1.msra.mxu0 0.0
  %3402 = vmatprep.subr.mxu0 0.0
  %3403 = vmatpush1.msra.mxu0 0.0
  %3404 = vmatprep.subr.mxu0 0.0
  %3405 = vmatpush1.msra.mxu0 0.0
  %3406 = vmatprep.subr.mxu0 0.0
  %3407 = vmatpush1.msra.mxu0 0.0
  %3408 = vmatprep.subr.mxu0 0.0
  %3409 = vmatpush1.msra.mxu0 0.0
  %3410 = vmatprep.subr.mxu0 0.0
  %3411 = vmatpush1.msra.mxu0 0.0
  %3412 = vmatprep.subr.mxu0 0.0
  %3413 = vmatpush1.msra.mxu0 0.0
  %3414 = vmatprep.subr.mxu0 0.0
  %3415 = vmatpush1.msra.mxu0 0.0
  %3416 = vmatprep.mubr.f32.mxu0 0.0
  %3417 = vmatmul.mubr.f32.gmra.mrb[0].mxu0 %v3344
  %v3418 = vpop.f32.mrb[0].mxu0
  %v3419 = vadd.f32 0.0, %v3418
  %v3420 = vpop.f32.mrb[0].mxu0
  %3421 = vmatprep.mubr.f32.mxu0 0.0
  %3422 = vmatmul.mubr.f32.gmra.mrb[0].mxu0 %v3346
  %v3423 = vpop.f32.mrb[0].mxu0
  %v3424 = vadd.f32 0.0, %v3423
  %v3425 = vpop.f32.mrb[0].mxu0
  %3426 = vmatprep.mubr.f32.mxu0 0.0
  %3427 = vmatmul.mubr.f32.gmra.mrb[0].mxu0 %v3348
  %v3428 = vpop.f32.mrb[0].mxu0
  %v3429 = vadd.f32 0.0, %v3428
  %v3430 = vpop.f32.mrb[0].mxu0
  %3431 = vmatprep.mubr.f32.mxu0 0.0
  %3432 = vmatmul.mubr.f32.gmra.mrb[0].mxu0 %v3350
  %v3433 = vpop.f32.mrb[0].mxu0
  %v3434 = vadd.f32 0.0, %v3433
  %v3435 = vpop.f32.mrb[0].mxu0
  %3436 = vdwg.mxu0
  %v3437 = vpack.c.bf16 %v3424, %v3419
  %v3438 = vpack.c.bf16 %v3434, %v3429
  %3441 = vrot.lane.b32.xlu0 %v3437, 85
  %v3442 = vpop.permute.xlu0 %3441
  %3443 = vrot.lane.b32.xlu0 %v3438, 85
  %v3444 = vpop.permute.xlu0 %3443
  %vm3447 = vcmask 974504
  %3448 = vst.msk [vmem:[#allocation5 + $0x10] sm:$0xff] %vm3447, %v3442
  %3449 = vst.msk [vmem:[#allocation5 + $0x60] sm:$0xff] %vm3447, %v3444
  %3450 = vrot.lane.b32.xlu0 %v2854, 20
  %v3451 = vpop.permute.xlu0 %3450
  %3452 = vrot.lane.b32.xlu0 %v2857, 20
  %v3453 = vpop.permute.xlu0 %3452
  %3454 = vrot.lane.b32.xlu0 %v2860, 20
  %v3455 = vpop.permute.xlu0 %3454
  %3456 = vrot.lane.b32.xlu0 %v2863, 20
  %v3457 = vpop.permute.xlu0 %3456
  %v3458 = vsel %vm2884, %v3451, 0
  %v3460 = vsel %vm2884, %v3453, 0
  %v3462 = vsel %vm2884, %v3455, 0
  %v3464 = vsel %vm2884, %v3457, 0
  %3466 = vmatprep.subr.mxu0 0.0
  %3467 = vmatpush1.msra.mxu0 %v2869
  %3468 = vmatprep.subr.mxu0 0.0
  %3469 = vmatpush1.msra.mxu0 %v2870
  %3470 = vmatprep.subr.mxu0 0.0
  %3471 = vmatpush1.msra.mxu0 %v2894
  %3472 = vmatprep.subr.mxu0 0.0
  %3473 = vmatpush1.msra.mxu0 0.0
  %3474 = vmatprep.subr.mxu0 0.0
  %3475 = vmatpush1.msra.mxu0 0.0
  %3476 = vmatprep.subr.mxu0 0.0
  %3477 = vmatpush1.msra.mxu0 0.0
  %3478 = vmatprep.subr.mxu0 0.0
  %3479 = vmatpush1.msra.mxu0 0.0
  %3480 = vmatprep.subr.mxu0 0.0
  %3481 = vmatpush1.msra.mxu0 0.0
  %3482 = vmatprep.subr.mxu0 0.0
  %3483 = vmatpush1.msra.mxu0 0.0
  %3484 = vmatprep.subr.mxu0 0.0
  %3485 = vmatpush1.msra.mxu0 0.0
  %3486 = vmatprep.subr.mxu0 0.0
  %3487 = vmatpush1.msra.mxu0 0.0
  %3488 = vmatprep.subr.mxu0 0.0
  %3489 = vmatpush1.msra.mxu0 0.0
  %3490 = vmatprep.subr.mxu0 0.0
  %3491 = vmatpush1.msra.mxu0 0.0
  %3492 = vmatprep.subr.mxu0 0.0
  %3493 = vmatpush1.msra.mxu0 0.0
  %3494 = vmatprep.subr.mxu0 0.0
  %3495 = vmatpush1.msra.mxu0 0.0
  %3496 = vmatprep.subr.mxu0 0.0
  %3497 = vmatpush1.msra.mxu0 0.0
  %3498 = vmatprep.subr.mxu0 0.0
  %3499 = vmatpush1.msra.mxu0 0.0
  %3500 = vmatprep.subr.mxu0 0.0
  %3501 = vmatpush1.msra.mxu0 0.0
  %3502 = vmatprep.subr.mxu0 0.0
  %3503 = vmatpush1.msra.mxu0 0.0
  %3504 = vmatprep.subr.mxu0 0.0
  %3505 = vmatpush1.msra.mxu0 0.0
  %3506 = vmatprep.subr.mxu0 0.0
  %3507 = vmatpush1.msra.mxu0 0.0
  %3508 = vmatprep.subr.mxu0 0.0
  %3509 = vmatpush1.msra.mxu0 0.0
  %3510 = vmatprep.subr.mxu0 0.0
  %3511 = vmatpush1.msra.mxu0 0.0
  %3512 = vmatprep.subr.mxu0 0.0
  %3513 = vmatpush1.msra.mxu0 0.0
  %3514 = vmatprep.subr.mxu0 0.0
  %3515 = vmatpush1.msra.mxu0 0.0
  %3516 = vmatprep.subr.mxu0 0.0
  %3517 = vmatpush1.msra.mxu0 0.0
  %3518 = vmatprep.subr.mxu0 0.0
  %3519 = vmatpush1.msra.mxu0 0.0
  %3520 = vmatprep.subr.mxu0 0.0
  %3521 = vmatpush1.msra.mxu0 0.0
  %3522 = vmatprep.subr.mxu0 0.0
  %3523 = vmatpush1.msra.mxu0 0.0
  %3524 = vmatprep.subr.mxu0 0.0
  %3525 = vmatpush1.msra.mxu0 0.0
  %3526 = vmatprep.subr.mxu0 0.0
  %3527 = vmatpush1.msra.mxu0 0.0
  %3528 = vmatprep.subr.mxu0 0.0
  %3529 = vmatpush1.msra.mxu0 0.0
  %3530 = vmatprep.mubr.f32.mxu0 0.0
  %3531 = vmatmul.mubr.f32.gmra.mrb[0].mxu0 %v3458
  %v3532 = vpop.f32.mrb[0].mxu0
  %v3533 = vadd.f32 0.0, %v3532
  %v3534 = vpop.f32.mrb[0].mxu0
  %3535 = vmatprep.mubr.f32.mxu0 0.0
  %3536 = vmatmul.mubr.f32.gmra.mrb[0].mxu0 %v3460
  %v3537 = vpop.f32.mrb[0].mxu0
  %v3538 = vadd.f32 0.0, %v3537
  %v3539 = vpop.f32.mrb[0].mxu0
  %3540 = vmatprep.mubr.f32.mxu0 0.0
  %3541 = vmatmul.mubr.f32.gmra.mrb[0].mxu0 %v3462
  %v3542 = vpop.f32.mrb[0].mxu0
  %v3543 = vadd.f32 0.0, %v3542
  %v3544 = vpop.f32.mrb[0].mxu0
  %3545 = vmatprep.mubr.f32.mxu0 0.0
  %3546 = vmatmul.mubr.f32.gmra.mrb[0].mxu0 %v3464
  %v3547 = vpop.f32.mrb[0].mxu0
  %v3548 = vadd.f32 0.0, %v3547
  %v3549 = vpop.f32.mrb[0].mxu0
  %3550 = vdwg.mxu0
  %v3551 = vpack.c.bf16 %v3538, %v3533
  %v3552 = vpack.c.bf16 %v3548, %v3543
  %3555 = vrot.lane.b32.xlu0 %v3551, 25
  %v3556 = vpop.permute.xlu0 %3555
  %3557 = vrot.lane.b32.xlu0 %v3552, 25
  %v3558 = vpop.permute.xlu0 %3557
  %vm3561 = vcmask 482504
  %3562 = vst.msk [vmem:[#allocation5 + $0x18] sm:$0xff] %vm3561, %v3556
  %3563 = vst.msk [vmem:[#allocation5 + $0x68] sm:$0xff] %vm3561, %v3558
  %3568 = vrot.lane.b32.xlu0 %v2854, 2
  %v3569 = vpop.permute.xlu0 %3568
  %3570 = vrot.lane.b32.xlu0 %v2855, 2
  %v3571 = vpop.permute.xlu0 %3570
  %3572 = vrot.lane.b32.xlu0 %v2857, 2
  %v3573 = vpop.permute.xlu0 %3572
  %3574 = vrot.lane.b32.xlu0 %v2858, 2
  %v3575 = vpop.permute.xlu0 %3574
  %3576 = vrot.lane.b32.xlu0 %v2860, 2
  %v3577 = vpop.permute.xlu0 %3576
  %3578 = vrot.lane.b32.xlu0 %v2861, 2
  %v3579 = vpop.permute.xlu0 %3578
  %3580 = vrot.lane.b32.xlu0 %v2863, 2
  %v3581 = vpop.permute.xlu0 %3580
  %3582 = vrot.lane.b32.xlu0 %v2864, 2
  %v3583 = vpop.permute.xlu0 %3582
  %vm3584 = vcmask 15360
  %v3585 = vsel %vm3584, %v3569, %v3571
  %v3586 = vsel %vm3584, %v3573, %v3575
  %v3587 = vsel %vm3584, %v3577, %v3579
  %v3588 = vsel %vm3584, %v3581, %v3583
  %v3589 = vsel %vm2884, %v3585, 0
  %v3591 = vsel %vm2884, %v3586, 0
  %v3593 = vsel %vm2884, %v3587, 0
  %v3595 = vsel %vm2884, %v3588, 0
  %3597 = vmatprep.subr.mxu0 0.0
  %3598 = vmatpush1.msra.mxu0 %v2869
  %3599 = vmatprep.subr.mxu0 0.0
  %3600 = vmatpush1.msra.mxu0 %v2870
  %3601 = vmatprep.subr.mxu0 0.0
  %3602 = vmatpush1.msra.mxu0 %v2894
  %3603 = vmatprep.subr.mxu0 0.0
  %3604 = vmatpush1.msra.mxu0 0.0
  %3605 = vmatprep.subr.mxu0 0.0
  %3606 = vmatpush1.msra.mxu0 0.0
  %3607 = vmatprep.subr.mxu0 0.0
  %3608 = vmatpush1.msra.mxu0 0.0
  %3609 = vmatprep.subr.mxu0 0.0
  %3610 = vmatpush1.msra.mxu0 0.0
  %3611 = vmatprep.subr.mxu0 0.0
  %3612 = vmatpush1.msra.mxu0 0.0
  %3613 = vmatprep.subr.mxu0 0.0
  %3614 = vmatpush1.msra.mxu0 0.0
  %3615 = vmatprep.subr.mxu0 0.0
  %3616 = vmatpush1.msra.mxu0 0.0
  %3617 = vmatprep.subr.mxu0 0.0
  %3618 = vmatpush1.msra.mxu0 0.0
  %3619 = vmatprep.subr.mxu0 0.0
  %3620 = vmatpush1.msra.mxu0 0.0
  %3621 = vmatprep.subr.mxu0 0.0
  %3622 = vmatpush1.msra.mxu0 0.0
  %3623 = vmatprep.subr.mxu0 0.0
  %3624 = vmatpush1.msra.mxu0 0.0
  %3625 = vmatprep.subr.mxu0 0.0
  %3626 = vmatpush1.msra.mxu0 0.0
  %3627 = vmatprep.subr.mxu0 0.0
  %3628 = vmatpush1.msra.mxu0 0.0
  %3629 = vmatprep.subr.mxu0 0.0
  %3630 = vmatpush1.msra.mxu0 0.0
  %3631 = vmatprep.subr.mxu0 0.0
  %3632 = vmatpush1.msra.mxu0 0.0
  %3633 = vmatprep.subr.mxu0 0.0
  %3634 = vmatpush1.msra.mxu0 0.0
  %3635 = vmatprep.subr.mxu0 0.0
  %3636 = vmatpush1.msra.mxu0 0.0
  %3637 = vmatprep.subr.mxu0 0.0
  %3638 = vmatpush1.msra.mxu0 0.0
  %3639 = vmatprep.subr.mxu0 0.0
  %3640 = vmatpush1.msra.mxu0 0.0
  %3641 = vmatprep.subr.mxu0 0.0
  %3642 = vmatpush1.msra.mxu0 0.0
  %3643 = vmatprep.subr.mxu0 0.0
  %3644 = vmatpush1.msra.mxu0 0.0
  %3645 = vmatprep.subr.mxu0 0.0
  %3646 = vmatpush1.msra.mxu0 0.0
  %3647 = vmatprep.subr.mxu0 0.0
  %3648 = vmatpush1.msra.mxu0 0.0
  %3649 = vmatprep.subr.mxu0 0.0
  %3650 = vmatpush1.msra.mxu0 0.0
  %3651 = vmatprep.subr.mxu0 0.0
  %3652 = vmatpush1.msra.mxu0 0.0
  %3653 = vmatprep.subr.mxu0 0.0
  %3654 = vmatpush1.msra.mxu0 0.0
  %3655 = vmatprep.subr.mxu0 0.0
  %3656 = vmatpush1.msra.mxu0 0.0
  %3657 = vmatprep.subr.mxu0 0.0
  %3658 = vmatpush1.msra.mxu0 0.0
  %3659 = vmatprep.subr.mxu0 0.0
  %3660 = vmatpush1.msra.mxu0 0.0
  %3661 = vmatprep.mubr.f32.mxu0 0.0
  %3662 = vmatmul.mubr.f32.gmra.mrb[0].mxu0 %v3589
  %v3663 = vpop.f32.mrb[0].mxu0
  %v3664 = vadd.f32 0.0, %v3663
  %v3665 = vpop.f32.mrb[0].mxu0
  %3666 = vmatprep.mubr.f32.mxu0 0.0
  %3667 = vmatmul.mubr.f32.gmra.mrb[0].mxu0 %v3591
  %v3668 = vpop.f32.mrb[0].mxu0
  %v3669 = vadd.f32 0.0, %v3668
  %v3670 = vpop.f32.mrb[0].mxu0
  %3671 = vmatprep.mubr.f32.mxu0 0.0
  %3672 = vmatmul.mubr.f32.gmra.mrb[0].mxu0 %v3593
  %v3673 = vpop.f32.mrb[0].mxu0
  %v3674 = vadd.f32 0.0, %v3673
  %v3675 = vpop.f32.mrb[0].mxu0
  %3676 = vmatprep.mubr.f32.mxu0 0.0
  %3677 = vmatmul.mubr.f32.gmra.mrb[0].mxu0 %v3595
  %v3678 = vpop.f32.mrb[0].mxu0
  %v3679 = vadd.f32 0.0, %v3678
  %v3680 = vpop.f32.mrb[0].mxu0
  %3681 = vdwg.mxu0
  %v3682 = vpack.c.bf16 %v3669, %v3664
  %v3683 = vpack.c.bf16 %v3679, %v3674
  %3686 = vrot.lane.b32.xlu0 %v3682, 93
  %v3687 = vpop.permute.xlu0 %3686
  %3688 = vrot.lane.b32.xlu0 %v3683, 93
  %v3689 = vpop.permute.xlu0 %3688
  %vm3692 = vcmask 1040104
  %3693 = vst.msk [vmem:[#allocation5 + $0x18] sm:$0xff] %vm3692, %v3687
  %3694 = vst.msk [vmem:[#allocation5 + $0x68] sm:$0xff] %vm3692, %v3689
  %3695 = vrot.lane.b32.xlu0 %v2855, 112
  %v3696 = vpop.permute.xlu0 %3695
  %3697 = vrot.lane.b32.xlu0 %v2858, 112
  %v3698 = vpop.permute.xlu0 %3697
  %3699 = vrot.lane.b32.xlu0 %v2861, 112
  %v3700 = vpop.permute.xlu0 %3699
  %3701 = vrot.lane.b32.xlu0 %v2864, 112
  %v3702 = vpop.permute.xlu0 %3701
  %v3703 = vsel %vm2884, %v3696, 0
  %v3705 = vsel %vm2884, %v3698, 0
  %v3707 = vsel %vm2884, %v3700, 0
  %v3709 = vsel %vm2884, %v3702, 0
  %3711 = vmatprep.subr.mxu0 0.0
  %3712 = vmatpush1.msra.mxu0 %v2869
  %3713 = vmatprep.subr.mxu0 0.0
  %3714 = vmatpush1.msra.mxu0 %v2870
  %3715 = vmatprep.subr.mxu0 0.0
  %3716 = vmatpush1.msra.mxu0 %v2894
  %3717 = vmatprep.subr.mxu0 0.0
  %3718 = vmatpush1.msra.mxu0 0.0
  %3719 = vmatprep.subr.mxu0 0.0
  %3720 = vmatpush1.msra.mxu0 0.0
  %3721 = vmatprep.subr.mxu0 0.0
  %3722 = vmatpush1.msra.mxu0 0.0
  %3723 = vmatprep.subr.mxu0 0.0
  %3724 = vmatpush1.msra.mxu0 0.0
  %3725 = vmatprep.subr.mxu0 0.0
  %3726 = vmatpush1.msra.mxu0 0.0
  %3727 = vmatprep.subr.mxu0 0.0
  %3728 = vmatpush1.msra.mxu0 0.0
  %3729 = vmatprep.subr.mxu0 0.0
  %3730 = vmatpush1.msra.mxu0 0.0
  %3731 = vmatprep.subr.mxu0 0.0
  %3732 = vmatpush1.msra.mxu0 0.0
  %3733 = vmatprep.subr.mxu0 0.0
  %3734 = vmatpush1.msra.mxu0 0.0
  %3735 = vmatprep.subr.mxu0 0.0
  %3736 = vmatpush1.msra.mxu0 0.0
  %3737 = vmatprep.subr.mxu0 0.0
  %3738 = vmatpush1.msra.mxu0 0.0
  %3739 = vmatprep.subr.mxu0 0.0
  %3740 = vmatpush1.msra.mxu0 0.0
  %3741 = vmatprep.subr.mxu0 0.0
  %3742 = vmatpush1.msra.mxu0 0.0
  %3743 = vmatprep.subr.mxu0 0.0
  %3744 = vmatpush1.msra.mxu0 0.0
  %3745 = vmatprep.subr.mxu0 0.0
  %3746 = vmatpush1.msra.mxu0 0.0
  %3747 = vmatprep.subr.mxu0 0.0
  %3748 = vmatpush1.msra.mxu0 0.0
  %3749 = vmatprep.subr.mxu0 0.0
  %3750 = vmatpush1.msra.mxu0 0.0
  %3751 = vmatprep.subr.mxu0 0.0
  %3752 = vmatpush1.msra.mxu0 0.0
  %3753 = vmatprep.subr.mxu0 0.0
  %3754 = vmatpush1.msra.mxu0 0.0
  %3755 = vmatprep.subr.mxu0 0.0
  %3756 = vmatpush1.msra.mxu0 0.0
  %3757 = vmatprep.subr.mxu0 0.0
  %3758 = vmatpush1.msra.mxu0 0.0
  %3759 = vmatprep.subr.mxu0 0.0
  %3760 = vmatpush1.msra.mxu0 0.0
  %3761 = vmatprep.subr.mxu0 0.0
  %3762 = vmatpush1.msra.mxu0 0.0
  %3763 = vmatprep.subr.mxu0 0.0
  %3764 = vmatpush1.msra.mxu0 0.0
  %3765 = vmatprep.subr.mxu0 0.0
  %3766 = vmatpush1.msra.mxu0 0.0
  %3767 = vmatprep.subr.mxu0 0.0
  %3768 = vmatpush1.msra.mxu0 0.0
  %3769 = vmatprep.subr.mxu0 0.0
  %3770 = vmatpush1.msra.mxu0 0.0
  %3771 = vmatprep.subr.mxu0 0.0
  %3772 = vmatpush1.msra.mxu0 0.0
  %3773 = vmatprep.subr.mxu0 0.0
  %3774 = vmatpush1.msra.mxu0 0.0
  %3775 = vmatprep.mubr.f32.mxu0 0.0
  %3776 = vmatmul.mubr.f32.gmra.mrb[0].mxu0 %v3703
  %v3777 = vpop.f32.mrb[0].mxu0
  %v3778 = vadd.f32 0.0, %v3777
  %v3779 = vpop.f32.mrb[0].mxu0
  %3780 = vmatprep.mubr.f32.mxu0 0.0
  %3781 = vmatmul.mubr.f32.gmra.mrb[0].mxu0 %v3705
  %v3782 = vpop.f32.mrb[0].mxu0
  %v3783 = vadd.f32 0.0, %v3782
  %v3784 = vpop.f32.mrb[0].mxu0
  %3785 = vmatprep.mubr.f32.mxu0 0.0
  %3786 = vmatmul.mubr.f32.gmra.mrb[0].mxu0 %v3707
  %v3787 = vpop.f32.mrb[0].mxu0
  %v3788 = vadd.f32 0.0, %v3787
  %v3789 = vpop.f32.mrb[0].mxu0
  %3790 = vmatprep.mubr.f32.mxu0 0.0
  %3791 = vmatmul.mubr.f32.gmra.mrb[0].mxu0 %v3709
  %v3792 = vpop.f32.mrb[0].mxu0
  %v3793 = vadd.f32 0.0, %v3792
  %v3794 = vpop.f32.mrb[0].mxu0
  %3795 = vdwg.mxu0
  %v3796 = vpack.c.bf16 %v3783, %v3778
  %v3797 = vpack.c.bf16 %v3793, %v3788
  %3800 = vrot.lane.b32.xlu0 %v3796, 33
  %v3801 = vpop.permute.xlu0 %3800
  %3802 = vrot.lane.b32.xlu0 %v3797, 33
  %v3803 = vpop.permute.xlu0 %3802
  %vm3806 = vcmask 548104
  %3807 = vst.msk [vmem:[#allocation5 + $0x20] sm:$0xff] %vm3806, %v3801
  %3808 = vst.msk [vmem:[#allocation5 + $0x70] sm:$0xff] %vm3806, %v3803
  %3809 = vrot.lane.b32.xlu0 %v2855, 94
  %v3810 = vpop.permute.xlu0 %3809
  %3811 = vrot.lane.b32.xlu0 %v2858, 94
  %v3812 = vpop.permute.xlu0 %3811
  %3813 = vrot.lane.b32.xlu0 %v2861, 94
  %v3814 = vpop.permute.xlu0 %3813
  %3815 = vrot.lane.b32.xlu0 %v2864, 94
  %v3816 = vpop.permute.xlu0 %3815
  %v3817 = vsel %vm2884, %v3810, 0
  %v3819 = vsel %vm2884, %v3812, 0
  %v3821 = vsel %vm2884, %v3814, 0
  %v3823 = vsel %vm2884, %v3816, 0
  %3825 = vmatprep.subr.mxu0 0.0
  %3826 = vmatpush1.msra.mxu0 %v2869
  %3827 = vmatprep.subr.mxu0 0.0
  %3828 = vmatpush1.msra.mxu0 %v2870
  %3829 = vmatprep.subr.mxu0 0.0
  %3830 = vmatpush1.msra.mxu0 %v2894
  %3831 = vmatprep.subr.mxu0 0.0
  %3832 = vmatpush1.msra.mxu0 0.0
  %3833 = vmatprep.subr.mxu0 0.0
  %3834 = vmatpush1.msra.mxu0 0.0
  %3835 = vmatprep.subr.mxu0 0.0
  %3836 = vmatpush1.msra.mxu0 0.0
  %3837 = vmatprep.subr.mxu0 0.0
  %3838 = vmatpush1.msra.mxu0 0.0
  %3839 = vmatprep.subr.mxu0 0.0
  %3840 = vmatpush1.msra.mxu0 0.0
  %3841 = vmatprep.subr.mxu0 0.0
  %3842 = vmatpush1.msra.mxu0 0.0
  %3843 = vmatprep.subr.mxu0 0.0
  %3844 = vmatpush1.msra.mxu0 0.0
  %3845 = vmatprep.subr.mxu0 0.0
  %3846 = vmatpush1.msra.mxu0 0.0
  %3847 = vmatprep.subr.mxu0 0.0
  %3848 = vmatpush1.msra.mxu0 0.0
  %3849 = vmatprep.subr.mxu0 0.0
  %3850 = vmatpush1.msra.mxu0 0.0
  %3851 = vmatprep.subr.mxu0 0.0
  %3852 = vmatpush1.msra.mxu0 0.0
  %3853 = vmatprep.subr.mxu0 0.0
  %3854 = vmatpush1.msra.mxu0 0.0
  %3855 = vmatprep.subr.mxu0 0.0
  %3856 = vmatpush1.msra.mxu0 0.0
  %3857 = vmatprep.subr.mxu0 0.0
  %3858 = vmatpush1.msra.mxu0 0.0
  %3859 = vmatprep.subr.mxu0 0.0
  %3860 = vmatpush1.msra.mxu0 0.0
  %3861 = vmatprep.subr.mxu0 0.0
  %3862 = vmatpush1.msra.mxu0 0.0
  %3863 = vmatprep.subr.mxu0 0.0
  %3864 = vmatpush1.msra.mxu0 0.0
  %3865 = vmatprep.subr.mxu0 0.0
  %3866 = vmatpush1.msra.mxu0 0.0
  %3867 = vmatprep.subr.mxu0 0.0
  %3868 = vmatpush1.msra.mxu0 0.0
  %3869 = vmatprep.subr.mxu0 0.0
  %3870 = vmatpush1.msra.mxu0 0.0
  %3871 = vmatprep.subr.mxu0 0.0
  %3872 = vmatpush1.msra.mxu0 0.0
  %3873 = vmatprep.subr.mxu0 0.0
  %3874 = vmatpush1.msra.mxu0 0.0
  %3875 = vmatprep.subr.mxu0 0.0
  %3876 = vmatpush1.msra.mxu0 0.0
  %3877 = vmatprep.subr.mxu0 0.0
  %3878 = vmatpush1.msra.mxu0 0.0
  %3879 = vmatprep.subr.mxu0 0.0
  %3880 = vmatpush1.msra.mxu0 0.0
  %3881 = vmatprep.subr.mxu0 0.0
  %3882 = vmatpush1.msra.mxu0 0.0
  %3883 = vmatprep.subr.mxu0 0.0
  %3884 = vmatpush1.msra.mxu0 0.0
  %3885 = vmatprep.subr.mxu0 0.0
  %3886 = vmatpush1.msra.mxu0 0.0
  %3887 = vmatprep.subr.mxu0 0.0
  %3888 = vmatpush1.msra.mxu0 0.0
  %3889 = vmatprep.mubr.f32.mxu0 0.0
  %3890 = vmatmul.mubr.f32.gmra.mrb[0].mxu0 %v3817
  %v3891 = vpop.f32.mrb[0].mxu0
  %v3892 = vadd.f32 0.0, %v3891
  %v3893 = vpop.f32.mrb[0].mxu0
  %3894 = vmatprep.mubr.f32.mxu0 0.0
  %3895 = vmatmul.mubr.f32.gmra.mrb[0].mxu0 %v3819
  %v3896 = vpop.f32.mrb[0].mxu0
  %v3897 = vadd.f32 0.0, %v3896
  %v3898 = vpop.f32.mrb[0].mxu0
  %3899 = vmatprep.mubr.f32.mxu0 0.0
  %3900 = vmatmul.mubr.f32.gmra.mrb[0].mxu0 %v3821
  %v3901 = vpop.f32.mrb[0].mxu0
  %v3902 = vadd.f32 0.0, %v3901
  %v3903 = vpop.f32.mrb[0].mxu0
  %3904 = vmatprep.mubr.f32.mxu0 0.0
  %3905 = vmatmul.mubr.f32.gmra.mrb[0].mxu0 %v3823
  %v3906 = vpop.f32.mrb[0].mxu0
  %v3907 = vadd.f32 0.0, %v3906
  %v3908 = vpop.f32.mrb[0].mxu0
  %3909 = vdwg.mxu0
  %v3910 = vpack.c.bf16 %v3897, %v3892
  %v3911 = vpack.c.bf16 %v3907, %v3902
  %3914 = vrot.lane.b32.xlu0 %v3910, 101
  %v3915 = vpop.permute.xlu0 %3914
  %3916 = vrot.lane.b32.xlu0 %v3911, 101
  %v3917 = vpop.permute.xlu0 %3916
  %vm3920 = vcmask 1048360
  %3921 = vst.msk [vmem:[#allocation5 + $0x20] sm:$0xff] %vm3920, %v3915
  %vm3922 = vcmask 56320
  %3923 = vst.msk [vmem:[#allocation5 + $0x28] sm:$0xff] %vm3922, %v3915
  %3924 = vst.msk [vmem:[#allocation5 + $0x70] sm:$0xff] %vm3920, %v3917
  %3925 = vst.msk [vmem:[#allocation5 + $0x78] sm:$0xff] %vm3922, %v3917
  %3926 = vrot.lane.b32.xlu0 %v2855, 76
  %v3927 = vpop.permute.xlu0 %3926
  %3928 = vrot.lane.b32.xlu0 %v2858, 76
  %v3929 = vpop.permute.xlu0 %3928
  %3930 = vrot.lane.b32.xlu0 %v2861, 76
  %v3931 = vpop.permute.xlu0 %3930
  %3932 = vrot.lane.b32.xlu0 %v2864, 76
  %v3933 = vpop.permute.xlu0 %3932
  %v3934 = vsel %vm2884, %v3927, 0
  %v3936 = vsel %vm2884, %v3929, 0
  %v3938 = vsel %vm2884, %v3931, 0
  %v3940 = vsel %vm2884, %v3933, 0
  %3942 = vmatprep.subr.mxu0 0.0
  %3943 = vmatpush1.msra.mxu0 %v2869
  %3944 = vmatprep.subr.mxu0 0.0
  %3945 = vmatpush1.msra.mxu0 %v2870
  %3946 = vmatprep.subr.mxu0 0.0
  %3947 = vmatpush1.msra.mxu0 %v2894
  %3948 = vmatprep.subr.mxu0 0.0
  %3949 = vmatpush1.msra.mxu0 0.0
  %3950 = vmatprep.subr.mxu0 0.0
  %3951 = vmatpush1.msra.mxu0 0.0
  %3952 = vmatprep.subr.mxu0 0.0
  %3953 = vmatpush1.msra.mxu0 0.0
  %3954 = vmatprep.subr.mxu0 0.0
  %3955 = vmatpush1.msra.mxu0 0.0
  %3956 = vmatprep.subr.mxu0 0.0
  %3957 = vmatpush1.msra.mxu0 0.0
  %3958 = vmatprep.subr.mxu0 0.0
  %3959 = vmatpush1.msra.mxu0 0.0
  %3960 = vmatprep.subr.mxu0 0.0
  %3961 = vmatpush1.msra.mxu0 0.0
  %3962 = vmatprep.subr.mxu0 0.0
  %3963 = vmatpush1.msra.mxu0 0.0
  %3964 = vmatprep.subr.mxu0 0.0
  %3965 = vmatpush1.msra.mxu0 0.0
  %3966 = vmatprep.subr.mxu0 0.0
  %3967 = vmatpush1.msra.mxu0 0.0
  %3968 = vmatprep.subr.mxu0 0.0
  %3969 = vmatpush1.msra.mxu0 0.0
  %3970 = vmatprep.subr.mxu0 0.0
  %3971 = vmatpush1.msra.mxu0 0.0
  %3972 = vmatprep.subr.mxu0 0.0
  %3973 = vmatpush1.msra.mxu0 0.0
  %3974 = vmatprep.subr.mxu0 0.0
  %3975 = vmatpush1.msra.mxu0 0.0
  %3976 = vmatprep.subr.mxu0 0.0
  %3977 = vmatpush1.msra.mxu0 0.0
  %3978 = vmatprep.subr.mxu0 0.0
  %3979 = vmatpush1.msra.mxu0 0.0
  %3980 = vmatprep.subr.mxu0 0.0
  %3981 = vmatpush1.msra.mxu0 0.0
  %3982 = vmatprep.subr.mxu0 0.0
  %3983 = vmatpush1.msra.mxu0 0.0
  %3984 = vmatprep.subr.mxu0 0.0
  %3985 = vmatpush1.msra.mxu0 0.0
  %3986 = vmatprep.subr.mxu0 0.0
  %3987 = vmatpush1.msra.mxu0 0.0
  %3988 = vmatprep.subr.mxu0 0.0
  %3989 = vmatpush1.msra.mxu0 0.0
  %3990 = vmatprep.subr.mxu0 0.0
  %3991 = vmatpush1.msra.mxu0 0.0
  %3992 = vmatprep.subr.mxu0 0.0
  %3993 = vmatpush1.msra.mxu0 0.0
  %3994 = vmatprep.subr.mxu0 0.0
  %3995 = vmatpush1.msra.mxu0 0.0
  %3996 = vmatprep.subr.mxu0 0.0
  %3997 = vmatpush1.msra.mxu0 0.0
  %3998 = vmatprep.subr.mxu0 0.0
  %3999 = vmatpush1.msra.mxu0 0.0
  %4000 = vmatprep.subr.mxu0 0.0
  %4001 = vmatpush1.msra.mxu0 0.0
  %4002 = vmatprep.subr.mxu0 0.0
  %4003 = vmatpush1.msra.mxu0 0.0
  %4004 = vmatprep.subr.mxu0 0.0
  %4005 = vmatpush1.msra.mxu0 0.0
  %4006 = vmatprep.mubr.f32.mxu0 0.0
  %4007 = vmatmul.mubr.f32.gmra.mrb[0].mxu0 %v3934
  %v4008 = vpop.f32.mrb[0].mxu0
  %v4009 = vadd.f32 0.0, %v4008
  %v4010 = vpop.f32.mrb[0].mxu0
  %4011 = vmatprep.mubr.f32.mxu0 0.0
  %4012 = vmatmul.mubr.f32.gmra.mrb[0].mxu0 %v3936
  %v4013 = vpop.f32.mrb[0].mxu0
  %v4014 = vadd.f32 0.0, %v4013
  %v4015 = vpop.f32.mrb[0].mxu0
  %4016 = vmatprep.mubr.f32.mxu0 0.0
  %4017 = vmatmul.mubr.f32.gmra.mrb[0].mxu0 %v3938
  %v4018 = vpop.f32.mrb[0].mxu0
  %v4019 = vadd.f32 0.0, %v4018
  %v4020 = vpop.f32.mrb[0].mxu0
  %4021 = vmatprep.mubr.f32.mxu0 0.0
  %4022 = vmatmul.mubr.f32.gmra.mrb[0].mxu0 %v3940
  %v4023 = vpop.f32.mrb[0].mxu0
  %v4024 = vadd.f32 0.0, %v4023
  %v4025 = vpop.f32.mrb[0].mxu0
  %4026 = vdwg.mxu0
  %v4027 = vpack.c.bf16 %v4014, %v4009
  %v4028 = vpack.c.bf16 %v4024, %v4019
  %4031 = vrot.lane.b32.xlu0 %v4027, 41
  %v4032 = vpop.permute.xlu0 %4031
  %4033 = vrot.lane.b32.xlu0 %v4028, 41
  %v4034 = vpop.permute.xlu0 %4033
  %vm4037 = vcmask 613704
  %4038 = vst.msk [vmem:[#allocation5 + $0x28] sm:$0xff] %vm4037, %v4032
  %4039 = vst.msk [vmem:[#allocation5 + $0x78] sm:$0xff] %vm4037, %v4034
  %4040 = vrot.lane.b32.xlu0 %v2855, 58
  %v4041 = vpop.permute.xlu0 %4040
  %4042 = vrot.lane.b32.xlu0 %v2858, 58
  %v4043 = vpop.permute.xlu0 %4042
  %4044 = vrot.lane.b32.xlu0 %v2861, 58
  %v4045 = vpop.permute.xlu0 %4044
  %4046 = vrot.lane.b32.xlu0 %v2864, 58
  %v4047 = vpop.permute.xlu0 %4046
  %v4048 = vsel %vm2884, %v4041, 0
  %v4050 = vsel %vm2884, %v4043, 0
  %v4052 = vsel %vm2884, %v4045, 0
  %v4054 = vsel %vm2884, %v4047, 0
  %4056 = vmatprep.subr.mxu0 0.0
  %4057 = vmatpush1.msra.mxu0 %v2869
  %4058 = vmatprep.subr.mxu0 0.0
  %4059 = vmatpush1.msra.mxu0 %v2870
  %4060 = vmatprep.subr.mxu0 0.0
  %4061 = vmatpush1.msra.mxu0 %v2894
  %4062 = vmatprep.subr.mxu0 0.0
  %4063 = vmatpush1.msra.mxu0 0.0
  %4064 = vmatprep.subr.mxu0 0.0
  %4065 = vmatpush1.msra.mxu0 0.0
  %4066 = vmatprep.subr.mxu0 0.0
  %4067 = vmatpush1.msra.mxu0 0.0
  %4068 = vmatprep.subr.mxu0 0.0
  %4069 = vmatpush1.msra.mxu0 0.0
  %4070 = vmatprep.subr.mxu0 0.0
  %4071 = vmatpush1.msra.mxu0 0.0
  %4072 = vmatprep.subr.mxu0 0.0
  %4073 = vmatpush1.msra.mxu0 0.0
  %4074 = vmatprep.subr.mxu0 0.0
  %4075 = vmatpush1.msra.mxu0 0.0
  %4076 = vmatprep.subr.mxu0 0.0
  %4077 = vmatpush1.msra.mxu0 0.0
  %4078 = vmatprep.subr.mxu0 0.0
  %4079 = vmatpush1.msra.mxu0 0.0
  %4080 = vmatprep.subr.mxu0 0.0
  %4081 = vmatpush1.msra.mxu0 0.0
  %4082 = vmatprep.subr.mxu0 0.0
  %4083 = vmatpush1.msra.mxu0 0.0
  %4084 = vmatprep.subr.mxu0 0.0
  %4085 = vmatpush1.msra.mxu0 0.0
  %4086 = vmatprep.subr.mxu0 0.0
  %4087 = vmatpush1.msra.mxu0 0.0
  %4088 = vmatprep.subr.mxu0 0.0
  %4089 = vmatpush1.msra.mxu0 0.0
  %4090 = vmatprep.subr.mxu0 0.0
  %4091 = vmatpush1.msra.mxu0 0.0
  %4092 = vmatprep.subr.mxu0 0.0
  %4093 = vmatpush1.msra.mxu0 0.0
  %4094 = vmatprep.subr.mxu0 0.0
  %4095 = vmatpush1.msra.mxu0 0.0
  %4096 = vmatprep.subr.mxu0 0.0
  %4097 = vmatpush1.msra.mxu0 0.0
  %4098 = vmatprep.subr.mxu0 0.0
  %4099 = vmatpush1.msra.mxu0 0.0
  %4100 = vmatprep.subr.mxu0 0.0
  %4101 = vmatpush1.msra.mxu0 0.0
  %4102 = vmatprep.subr.mxu0 0.0
  %4103 = vmatpush1.msra.mxu0 0.0
  %4104 = vmatprep.subr.mxu0 0.0
  %4105 = vmatpush1.msra.mxu0 0.0
  %4106 = vmatprep.subr.mxu0 0.0
  %4107 = vmatpush1.msra.mxu0 0.0
  %4108 = vmatprep.subr.mxu0 0.0
  %4109 = vmatpush1.msra.mxu0 0.0
  %4110 = vmatprep.subr.mxu0 0.0
  %4111 = vmatpush1.msra.mxu0 0.0
  %4112 = vmatprep.subr.mxu0 0.0
  %4113 = vmatpush1.msra.mxu0 0.0
  %4114 = vmatprep.subr.mxu0 0.0
  %4115 = vmatpush1.msra.mxu0 0.0
  %4116 = vmatprep.subr.mxu0 0.0
  %4117 = vmatpush1.msra.mxu0 0.0
  %4118 = vmatprep.subr.mxu0 0.0
  %4119 = vmatpush1.msra.mxu0 0.0
  %4120 = vmatprep.mubr.f32.mxu0 0.0
  %4121 = vmatmul.mubr.f32.gmra.mrb[0].mxu0 %v4048
  %v4122 = vpop.f32.mrb[0].mxu0
  %v4123 = vadd.f32 0.0, %v4122
  %v4124 = vpop.f32.mrb[0].mxu0
  %4125 = vmatprep.mubr.f32.mxu0 0.0
  %4126 = vmatmul.mubr.f32.gmra.mrb[0].mxu0 %v4050
  %v4127 = vpop.f32.mrb[0].mxu0
  %v4128 = vadd.f32 0.0, %v4127
  %v4129 = vpop.f32.mrb[0].mxu0
  %4130 = vmatprep.mubr.f32.mxu0 0.0
  %4131 = vmatmul.mubr.f32.gmra.mrb[0].mxu0 %v4052
  %v4132 = vpop.f32.mrb[0].mxu0
  %v4133 = vadd.f32 0.0, %v4132
  %v4134 = vpop.f32.mrb[0].mxu0
  %4135 = vmatprep.mubr.f32.mxu0 0.0
  %4136 = vmatmul.mubr.f32.gmra.mrb[0].mxu0 %v4054
  %v4137 = vpop.f32.mrb[0].mxu0
  %v4138 = vadd.f32 0.0, %v4137
  %v4139 = vpop.f32.mrb[0].mxu0
  %4140 = vdwg.mxu0
  %v4141 = vpack.c.bf16 %v4128, %v4123
  %v4142 = vpack.c.bf16 %v4138, %v4133
  %4145 = vrot.lane.b32.xlu0 %v4141, 109
  %v4146 = vpop.permute.xlu0 %4145
  %4147 = vrot.lane.b32.xlu0 %v4142, 109
  %v4148 = vpop.permute.xlu0 %4147
  %vm4151 = vcmask 1048424
  %4152 = vst.msk [vmem:[#allocation5 + $0x28] sm:$0xff] %vm4151, %v4146
  %4153 = vst.msk [vmem:[#allocation5 + $0x30] sm:$0xff] %vm2001, %v4146
  %4154 = vst.msk [vmem:[#allocation5 + $0x78] sm:$0xff] %vm4151, %v4148
  %4155 = vst.msk [vmem:[#allocation5 + $0x80] sm:$0xff] %vm2001, %v4148
  %4156 = vrot.lane.b32.xlu0 %v2855, 40
  %v4157 = vpop.permute.xlu0 %4156
  %4158 = vrot.lane.b32.xlu0 %v2858, 40
  %v4159 = vpop.permute.xlu0 %4158
  %4160 = vrot.lane.b32.xlu0 %v2861, 40
  %v4161 = vpop.permute.xlu0 %4160
  %4162 = vrot.lane.b32.xlu0 %v2864, 40
  %v4163 = vpop.permute.xlu0 %4162
  %v4164 = vsel %vm2884, %v4157, 0
  %v4166 = vsel %vm2884, %v4159, 0
  %v4168 = vsel %vm2884, %v4161, 0
  %v4170 = vsel %vm2884, %v4163, 0
  %4172 = vmatprep.subr.mxu0 0.0
  %4173 = vmatpush1.msra.mxu0 %v2869
  %4174 = vmatprep.subr.mxu0 0.0
  %4175 = vmatpush1.msra.mxu0 %v2870
  %4176 = vmatprep.subr.mxu0 0.0
  %4177 = vmatpush1.msra.mxu0 %v2894
  %4178 = vmatprep.subr.mxu0 0.0
  %4179 = vmatpush1.msra.mxu0 0.0
  %4180 = vmatprep.subr.mxu0 0.0
  %4181 = vmatpush1.msra.mxu0 0.0
  %4182 = vmatprep.subr.mxu0 0.0
  %4183 = vmatpush1.msra.mxu0 0.0
  %4184 = vmatprep.subr.mxu0 0.0
  %4185 = vmatpush1.msra.mxu0 0.0
  %4186 = vmatprep.subr.mxu0 0.0
  %4187 = vmatpush1.msra.mxu0 0.0
  %4188 = vmatprep.subr.mxu0 0.0
  %4189 = vmatpush1.msra.mxu0 0.0
  %4190 = vmatprep.subr.mxu0 0.0
  %4191 = vmatpush1.msra.mxu0 0.0
  %4192 = vmatprep.subr.mxu0 0.0
  %4193 = vmatpush1.msra.mxu0 0.0
  %4194 = vmatprep.subr.mxu0 0.0
  %4195 = vmatpush1.msra.mxu0 0.0
  %4196 = vmatprep.subr.mxu0 0.0
  %4197 = vmatpush1.msra.mxu0 0.0
  %4198 = vmatprep.subr.mxu0 0.0
  %4199 = vmatpush1.msra.mxu0 0.0
  %4200 = vmatprep.subr.mxu0 0.0
  %4201 = vmatpush1.msra.mxu0 0.0
  %4202 = vmatprep.subr.mxu0 0.0
  %4203 = vmatpush1.msra.mxu0 0.0
  %4204 = vmatprep.subr.mxu0 0.0
  %4205 = vmatpush1.msra.mxu0 0.0
  %4206 = vmatprep.subr.mxu0 0.0
  %4207 = vmatpush1.msra.mxu0 0.0
  %4208 = vmatprep.subr.mxu0 0.0
  %4209 = vmatpush1.msra.mxu0 0.0
  %4210 = vmatprep.subr.mxu0 0.0
  %4211 = vmatpush1.msra.mxu0 0.0
  %4212 = vmatprep.subr.mxu0 0.0
  %4213 = vmatpush1.msra.mxu0 0.0
  %4214 = vmatprep.subr.mxu0 0.0
  %4215 = vmatpush1.msra.mxu0 0.0
  %4216 = vmatprep.subr.mxu0 0.0
  %4217 = vmatpush1.msra.mxu0 0.0
  %4218 = vmatprep.subr.mxu0 0.0
  %4219 = vmatpush1.msra.mxu0 0.0
  %4220 = vmatprep.subr.mxu0 0.0
  %4221 = vmatpush1.msra.mxu0 0.0
  %4222 = vmatprep.subr.mxu0 0.0
  %4223 = vmatpush1.msra.mxu0 0.0
  %4224 = vmatprep.subr.mxu0 0.0
  %4225 = vmatpush1.msra.mxu0 0.0
  %4226 = vmatprep.subr.mxu0 0.0
  %4227 = vmatpush1.msra.mxu0 0.0
  %4228 = vmatprep.subr.mxu0 0.0
  %4229 = vmatpush1.msra.mxu0 0.0
  %4230 = vmatprep.subr.mxu0 0.0
  %4231 = vmatpush1.msra.mxu0 0.0
  %4232 = vmatprep.subr.mxu0 0.0
  %4233 = vmatpush1.msra.mxu0 0.0
  %4234 = vmatprep.subr.mxu0 0.0
  %4235 = vmatpush1.msra.mxu0 0.0
  %4236 = vmatprep.mubr.f32.mxu0 0.0
  %4237 = vmatmul.mubr.f32.gmra.mrb[0].mxu0 %v4164
  %v4238 = vpop.f32.mrb[0].mxu0
  %v4239 = vadd.f32 0.0, %v4238
  %v4240 = vpop.f32.mrb[0].mxu0
  %4241 = vmatprep.mubr.f32.mxu0 0.0
  %4242 = vmatmul.mubr.f32.gmra.mrb[0].mxu0 %v4166
  %v4243 = vpop.f32.mrb[0].mxu0
  %v4244 = vadd.f32 0.0, %v4243
  %v4245 = vpop.f32.mrb[0].mxu0
  %4246 = vmatprep.mubr.f32.mxu0 0.0
  %4247 = vmatmul.mubr.f32.gmra.mrb[0].mxu0 %v4168
  %v4248 = vpop.f32.mrb[0].mxu0
  %v4249 = vadd.f32 0.0, %v4248
  %v4250 = vpop.f32.mrb[0].mxu0
  %4251 = vmatprep.mubr.f32.mxu0 0.0
  %4252 = vmatmul.mubr.f32.gmra.mrb[0].mxu0 %v4170
  %v4253 = vpop.f32.mrb[0].mxu0
  %v4254 = vadd.f32 0.0, %v4253
  %v4255 = vpop.f32.mrb[0].mxu0
  %4256 = vdwg.mxu0
  %v4257 = vpack.c.bf16 %v4244, %v4239
  %v4258 = vpack.c.bf16 %v4254, %v4249
  %4261 = vrot.lane.b32.xlu0 %v4257, 49
  %v4262 = vpop.permute.xlu0 %4261
  %4263 = vrot.lane.b32.xlu0 %v4258, 49
  %v4264 = vpop.permute.xlu0 %4263
  %vm4267 = vcmask 679304
  %4268 = vst.msk [vmem:[#allocation5 + $0x30] sm:$0xff] %vm4267, %v4262
  %4269 = vst.msk [vmem:[#allocation5 + $0x80] sm:$0xff] %vm4267, %v4264
  %4270 = vrot.lane.b32.xlu0 %v2855, 22
  %v4271 = vpop.permute.xlu0 %4270
  %4272 = vrot.lane.b32.xlu0 %v2858, 22
  %v4273 = vpop.permute.xlu0 %4272
  %4274 = vrot.lane.b32.xlu0 %v2861, 22
  %v4275 = vpop.permute.xlu0 %4274
  %4276 = vrot.lane.b32.xlu0 %v2864, 22
  %v4277 = vpop.permute.xlu0 %4276
  %v4278 = vsel %vm2884, %v4271, 0
  %v4280 = vsel %vm2884, %v4273, 0
  %v4282 = vsel %vm2884, %v4275, 0
  %v4284 = vsel %vm2884, %v4277, 0
  %4286 = vmatprep.subr.mxu0 0.0
  %4287 = vmatpush1.msra.mxu0 %v2869
  %4288 = vmatprep.subr.mxu0 0.0
  %4289 = vmatpush1.msra.mxu0 %v2870
  %4290 = vmatprep.subr.mxu0 0.0
  %4291 = vmatpush1.msra.mxu0 %v2894
  %4292 = vmatprep.subr.mxu0 0.0
  %4293 = vmatpush1.msra.mxu0 0.0
  %4294 = vmatprep.subr.mxu0 0.0
  %4295 = vmatpush1.msra.mxu0 0.0
  %4296 = vmatprep.subr.mxu0 0.0
  %4297 = vmatpush1.msra.mxu0 0.0
  %4298 = vmatprep.subr.mxu0 0.0
  %4299 = vmatpush1.msra.mxu0 0.0
  %4300 = vmatprep.subr.mxu0 0.0
  %4301 = vmatpush1.msra.mxu0 0.0
  %4302 = vmatprep.subr.mxu0 0.0
  %4303 = vmatpush1.msra.mxu0 0.0
  %4304 = vmatprep.subr.mxu0 0.0
  %4305 = vmatpush1.msra.mxu0 0.0
  %4306 = vmatprep.subr.mxu0 0.0
  %4307 = vmatpush1.msra.mxu0 0.0
  %4308 = vmatprep.subr.mxu0 0.0
  %4309 = vmatpush1.msra.mxu0 0.0
  %4310 = vmatprep.subr.mxu0 0.0
  %4311 = vmatpush1.msra.mxu0 0.0
  %4312 = vmatprep.subr.mxu0 0.0
  %4313 = vmatpush1.msra.mxu0 0.0
  %4314 = vmatprep.subr.mxu0 0.0
  %4315 = vmatpush1.msra.mxu0 0.0
  %4316 = vmatprep.subr.mxu0 0.0
  %4317 = vmatpush1.msra.mxu0 0.0
  %4318 = vmatprep.subr.mxu0 0.0
  %4319 = vmatpush1.msra.mxu0 0.0
  %4320 = vmatprep.subr.mxu0 0.0
  %4321 = vmatpush1.msra.mxu0 0.0
  %4322 = vmatprep.subr.mxu0 0.0
  %4323 = vmatpush1.msra.mxu0 0.0
  %4324 = vmatprep.subr.mxu0 0.0
  %4325 = vmatpush1.msra.mxu0 0.0
  %4326 = vmatprep.subr.mxu0 0.0
  %4327 = vmatpush1.msra.mxu0 0.0
  %4328 = vmatprep.subr.mxu0 0.0
  %4329 = vmatpush1.msra.mxu0 0.0
  %4330 = vmatprep.subr.mxu0 0.0
  %4331 = vmatpush1.msra.mxu0 0.0
  %4332 = vmatprep.subr.mxu0 0.0
  %4333 = vmatpush1.msra.mxu0 0.0
  %4334 = vmatprep.subr.mxu0 0.0
  %4335 = vmatpush1.msra.mxu0 0.0
  %4336 = vmatprep.subr.mxu0 0.0
  %4337 = vmatpush1.msra.mxu0 0.0
  %4338 = vmatprep.subr.mxu0 0.0
  %4339 = vmatpush1.msra.mxu0 0.0
  %4340 = vmatprep.subr.mxu0 0.0
  %4341 = vmatpush1.msra.mxu0 0.0
  %4342 = vmatprep.subr.mxu0 0.0
  %4343 = vmatpush1.msra.mxu0 0.0
  %4344 = vmatprep.subr.mxu0 0.0
  %4345 = vmatpush1.msra.mxu0 0.0
  %4346 = vmatprep.subr.mxu0 0.0
  %4347 = vmatpush1.msra.mxu0 0.0
  %4348 = vmatprep.subr.mxu0 0.0
  %4349 = vmatpush1.msra.mxu0 0.0
  %4350 = vmatprep.mubr.f32.mxu0 0.0
  %4351 = vmatmul.mubr.f32.gmra.mrb[0].mxu0 %v4278
  %v4352 = vpop.f32.mrb[0].mxu0
  %v4353 = vadd.f32 0.0, %v4352
  %v4354 = vpop.f32.mrb[0].mxu0
  %4355 = vmatprep.mubr.f32.mxu0 0.0
  %4356 = vmatmul.mubr.f32.gmra.mrb[0].mxu0 %v4280
  %v4357 = vpop.f32.mrb[0].mxu0
  %v4358 = vadd.f32 0.0, %v4357
  %v4359 = vpop.f32.mrb[0].mxu0
  %4360 = vmatprep.mubr.f32.mxu0 0.0
  %4361 = vmatmul.mubr.f32.gmra.mrb[0].mxu0 %v4282
  %v4362 = vpop.f32.mrb[0].mxu0
  %v4363 = vadd.f32 0.0, %v4362
  %v4364 = vpop.f32.mrb[0].mxu0
  %4365 = vmatprep.mubr.f32.mxu0 0.0
  %4366 = vmatmul.mubr.f32.gmra.mrb[0].mxu0 %v4284
  %v4367 = vpop.f32.mrb[0].mxu0
  %v4368 = vadd.f32 0.0, %v4367
  %v4369 = vpop.f32.mrb[0].mxu0
  %4370 = vdwg.mxu0
  %v4371 = vpack.c.bf16 %v4358, %v4353
  %v4372 = vpack.c.bf16 %v4368, %v4363
  %4375 = vrot.lane.b32.xlu0 %v4371, 117
  %v4376 = vpop.permute.xlu0 %4375
  %4377 = vrot.lane.b32.xlu0 %v4372, 117
  %v4378 = vpop.permute.xlu0 %4377
  %vm4381 = vcmask 1048488
  %4382 = vst.msk [vmem:[#allocation5 + $0x30] sm:$0xff] %vm4381, %v4376
  %vm4383 = vcmask 187392
  %4384 = vst.msk [vmem:[#allocation5 + $0x38] sm:$0xff] %vm4383, %v4376
  %4385 = vst.msk [vmem:[#allocation5 + $0x80] sm:$0xff] %vm4381, %v4378
  %4386 = vst.msk [vmem:[#allocation5 + $0x88] sm:$0xff] %vm4383, %v4378
  %4391 = vrot.lane.b32.xlu0 %v2855, 4
  %v4392 = vpop.permute.xlu0 %4391
  %4393 = vrot.lane.b32.xlu0 %v2856, 4
  %v4394 = vpop.permute.xlu0 %4393
  %4395 = vrot.lane.b32.xlu0 %v2858, 4
  %v4396 = vpop.permute.xlu0 %4395
  %4397 = vrot.lane.b32.xlu0 %v2859, 4
  %v4398 = vpop.permute.xlu0 %4397
  %4399 = vrot.lane.b32.xlu0 %v2861, 4
  %v4400 = vpop.permute.xlu0 %4399
  %4401 = vrot.lane.b32.xlu0 %v2862, 4
  %v4402 = vpop.permute.xlu0 %4401
  %4403 = vrot.lane.b32.xlu0 %v2864, 4
  %v4404 = vpop.permute.xlu0 %4403
  %4405 = vrot.lane.b32.xlu0 %v2865, 4
  %v4406 = vpop.permute.xlu0 %4405
  %vm4407 = vcmask 31744
  %v4408 = vsel %vm4407, %v4392, %v4394
  %v4409 = vsel %vm4407, %v4396, %v4398
  %v4410 = vsel %vm4407, %v4400, %v4402
  %v4411 = vsel %vm4407, %v4404, %v4406
  %v4412 = vsel %vm2884, %v4408, 0
  %v4414 = vsel %vm2884, %v4409, 0
  %v4416 = vsel %vm2884, %v4410, 0
  %v4418 = vsel %vm2884, %v4411, 0
  %4420 = vmatprep.subr.mxu0 0.0
  %4421 = vmatpush1.msra.mxu0 %v2869
  %4422 = vmatprep.subr.mxu0 0.0
  %4423 = vmatpush1.msra.mxu0 %v2870
  %4424 = vmatprep.subr.mxu0 0.0
  %4425 = vmatpush1.msra.mxu0 %v2894
  %4426 = vmatprep.subr.mxu0 0.0
  %4427 = vmatpush1.msra.mxu0 0.0
  %4428 = vmatprep.subr.mxu0 0.0
  %4429 = vmatpush1.msra.mxu0 0.0
  %4430 = vmatprep.subr.mxu0 0.0
  %4431 = vmatpush1.msra.mxu0 0.0
  %4432 = vmatprep.subr.mxu0 0.0
  %4433 = vmatpush1.msra.mxu0 0.0
  %4434 = vmatprep.subr.mxu0 0.0
  %4435 = vmatpush1.msra.mxu0 0.0
  %4436 = vmatprep.subr.mxu0 0.0
  %4437 = vmatpush1.msra.mxu0 0.0
  %4438 = vmatprep.subr.mxu0 0.0
  %4439 = vmatpush1.msra.mxu0 0.0
  %4440 = vmatprep.subr.mxu0 0.0
  %4441 = vmatpush1.msra.mxu0 0.0
  %4442 = vmatprep.subr.mxu0 0.0
  %4443 = vmatpush1.msra.mxu0 0.0
  %4444 = vmatprep.subr.mxu0 0.0
  %4445 = vmatpush1.msra.mxu0 0.0
  %4446 = vmatprep.subr.mxu0 0.0
  %4447 = vmatpush1.msra.mxu0 0.0
  %4448 = vmatprep.subr.mxu0 0.0
  %4449 = vmatpush1.msra.mxu0 0.0
  %4450 = vmatprep.subr.mxu0 0.0
  %4451 = vmatpush1.msra.mxu0 0.0
  %4452 = vmatprep.subr.mxu0 0.0
  %4453 = vmatpush1.msra.mxu0 0.0
  %4454 = vmatprep.subr.mxu0 0.0
  %4455 = vmatpush1.msra.mxu0 0.0
  %4456 = vmatprep.subr.mxu0 0.0
  %4457 = vmatpush1.msra.mxu0 0.0
  %4458 = vmatprep.subr.mxu0 0.0
  %4459 = vmatpush1.msra.mxu0 0.0
  %4460 = vmatprep.subr.mxu0 0.0
  %4461 = vmatpush1.msra.mxu0 0.0
  %4462 = vmatprep.subr.mxu0 0.0
  %4463 = vmatpush1.msra.mxu0 0.0
  %4464 = vmatprep.subr.mxu0 0.0
  %4465 = vmatpush1.msra.mxu0 0.0
  %4466 = vmatprep.subr.mxu0 0.0
  %4467 = vmatpush1.msra.mxu0 0.0
  %4468 = vmatprep.subr.mxu0 0.0
  %4469 = vmatpush1.msra.mxu0 0.0
  %4470 = vmatprep.subr.mxu0 0.0
  %4471 = vmatpush1.msra.mxu0 0.0
  %4472 = vmatprep.subr.mxu0 0.0
  %4473 = vmatpush1.msra.mxu0 0.0
  %4474 = vmatprep.subr.mxu0 0.0
  %4475 = vmatpush1.msra.mxu0 0.0
  %4476 = vmatprep.subr.mxu0 0.0
  %4477 = vmatpush1.msra.mxu0 0.0
  %4478 = vmatprep.subr.mxu0 0.0
  %4479 = vmatpush1.msra.mxu0 0.0
  %4480 = vmatprep.subr.mxu0 0.0
  %4481 = vmatpush1.msra.mxu0 0.0
  %4482 = vmatprep.subr.mxu0 0.0
  %4483 = vmatpush1.msra.mxu0 0.0
  %4484 = vmatprep.mubr.f32.mxu0 0.0
  %4485 = vmatmul.mubr.f32.gmra.mrb[0].mxu0 %v4412
  %v4486 = vpop.f32.mrb[0].mxu0
  %v4487 = vadd.f32 0.0, %v4486
  %v4488 = vpop.f32.mrb[0].mxu0
  %4489 = vmatprep.mubr.f32.mxu0 0.0
  %4490 = vmatmul.mubr.f32.gmra.mrb[0].mxu0 %v4414
  %v4491 = vpop.f32.mrb[0].mxu0
  %v4492 = vadd.f32 0.0, %v4491
  %v4493 = vpop.f32.mrb[0].mxu0
  %4494 = vmatprep.mubr.f32.mxu0 0.0
  %4495 = vmatmul.mubr.f32.gmra.mrb[0].mxu0 %v4416
  %v4496 = vpop.f32.mrb[0].mxu0
  %v4497 = vadd.f32 0.0, %v4496
  %v4498 = vpop.f32.mrb[0].mxu0
  %4499 = vmatprep.mubr.f32.mxu0 0.0
  %4500 = vmatmul.mubr.f32.gmra.mrb[0].mxu0 %v4418
  %v4501 = vpop.f32.mrb[0].mxu0
  %v4502 = vadd.f32 0.0, %v4501
  %v4503 = vpop.f32.mrb[0].mxu0
  %4504 = vdwg.mxu0
  %v4505 = vpack.c.bf16 %v4492, %v4487
  %v4506 = vpack.c.bf16 %v4502, %v4497
  %4509 = vrot.lane.b32.xlu0 %v4505, 57
  %v4510 = vpop.permute.xlu0 %4509
  %4511 = vrot.lane.b32.xlu0 %v4506, 57
  %v4512 = vpop.permute.xlu0 %4511
  %vm4515 = vcmask 744904
  %4516 = vst.msk [vmem:[#allocation5 + $0x38] sm:$0xff] %vm4515, %v4510
  %4517 = vst.msk [vmem:[#allocation5 + $0x88] sm:$0xff] %vm4515, %v4512
  %4518 = vrot.lane.b32.xlu0 %v2856, 114
  %v4519 = vpop.permute.xlu0 %4518
  %4520 = vrot.lane.b32.xlu0 %v2859, 114
  %v4521 = vpop.permute.xlu0 %4520
  %4522 = vrot.lane.b32.xlu0 %v2862, 114
  %v4523 = vpop.permute.xlu0 %4522
  %4524 = vrot.lane.b32.xlu0 %v2865, 114
  %v4525 = vpop.permute.xlu0 %4524
  %v4526 = vsel %vm2884, %v4519, 0
  %v4528 = vsel %vm2884, %v4521, 0
  %v4530 = vsel %vm2884, %v4523, 0
  %v4532 = vsel %vm2884, %v4525, 0
  %4534 = vmatprep.subr.mxu0 0.0
  %4535 = vmatpush1.msra.mxu0 %v2869
  %4536 = vmatprep.subr.mxu0 0.0
  %4537 = vmatpush1.msra.mxu0 %v2870
  %4538 = vmatprep.subr.mxu0 0.0
  %4539 = vmatpush1.msra.mxu0 %v2894
  %4540 = vmatprep.subr.mxu0 0.0
  %4541 = vmatpush1.msra.mxu0 0.0
  %4542 = vmatprep.subr.mxu0 0.0
  %4543 = vmatpush1.msra.mxu0 0.0
  %4544 = vmatprep.subr.mxu0 0.0
  %4545 = vmatpush1.msra.mxu0 0.0
  %4546 = vmatprep.subr.mxu0 0.0
  %4547 = vmatpush1.msra.mxu0 0.0
  %4548 = vmatprep.subr.mxu0 0.0
  %4549 = vmatpush1.msra.mxu0 0.0
  %4550 = vmatprep.subr.mxu0 0.0
  %4551 = vmatpush1.msra.mxu0 0.0
  %4552 = vmatprep.subr.mxu0 0.0
  %4553 = vmatpush1.msra.mxu0 0.0
  %4554 = vmatprep.subr.mxu0 0.0
  %4555 = vmatpush1.msra.mxu0 0.0
  %4556 = vmatprep.subr.mxu0 0.0
  %4557 = vmatpush1.msra.mxu0 0.0
  %4558 = vmatprep.subr.mxu0 0.0
  %4559 = vmatpush1.msra.mxu0 0.0
  %4560 = vmatprep.subr.mxu0 0.0
  %4561 = vmatpush1.msra.mxu0 0.0
  %4562 = vmatprep.subr.mxu0 0.0
  %4563 = vmatpush1.msra.mxu0 0.0
  %4564 = vmatprep.subr.mxu0 0.0
  %4565 = vmatpush1.msra.mxu0 0.0
  %4566 = vmatprep.subr.mxu0 0.0
  %4567 = vmatpush1.msra.mxu0 0.0
  %4568 = vmatprep.subr.mxu0 0.0
  %4569 = vmatpush1.msra.mxu0 0.0
  %4570 = vmatprep.subr.mxu0 0.0
  %4571 = vmatpush1.msra.mxu0 0.0
  %4572 = vmatprep.subr.mxu0 0.0
  %4573 = vmatpush1.msra.mxu0 0.0
  %4574 = vmatprep.subr.mxu0 0.0
  %4575 = vmatpush1.msra.mxu0 0.0
  %4576 = vmatprep.subr.mxu0 0.0
  %4577 = vmatpush1.msra.mxu0 0.0
  %4578 = vmatprep.subr.mxu0 0.0
  %4579 = vmatpush1.msra.mxu0 0.0
  %4580 = vmatprep.subr.mxu0 0.0
  %4581 = vmatpush1.msra.mxu0 0.0
  %4582 = vmatprep.subr.mxu0 0.0
  %4583 = vmatpush1.msra.mxu0 0.0
  %4584 = vmatprep.subr.mxu0 0.0
  %4585 = vmatpush1.msra.mxu0 0.0
  %4586 = vmatprep.subr.mxu0 0.0
  %4587 = vmatpush1.msra.mxu0 0.0
  %4588 = vmatprep.subr.mxu0 0.0
  %4589 = vmatpush1.msra.mxu0 0.0
  %4590 = vmatprep.subr.mxu0 0.0
  %4591 = vmatpush1.msra.mxu0 0.0
  %4592 = vmatprep.subr.mxu0 0.0
  %4593 = vmatpush1.msra.mxu0 0.0
  %4594 = vmatprep.subr.mxu0 0.0
  %4595 = vmatpush1.msra.mxu0 0.0
  %4596 = vmatprep.subr.mxu0 0.0
  %4597 = vmatpush1.msra.mxu0 0.0
  %4598 = vmatprep.mubr.f32.mxu0 0.0
  %4599 = vmatmul.mubr.f32.gmra.mrb[0].mxu0 %v4526
  %v4600 = vpop.f32.mrb[0].mxu0
  %v4601 = vadd.f32 0.0, %v4600
  %v4602 = vpop.f32.mrb[0].mxu0
  %4603 = vmatprep.mubr.f32.mxu0 0.0
  %4604 = vmatmul.mubr.f32.gmra.mrb[0].mxu0 %v4528
  %v4605 = vpop.f32.mrb[0].mxu0
  %v4606 = vadd.f32 0.0, %v4605
  %v4607 = vpop.f32.mrb[0].mxu0
  %4608 = vmatprep.mubr.f32.mxu0 0.0
  %4609 = vmatmul.mubr.f32.gmra.mrb[0].mxu0 %v4530
  %v4610 = vpop.f32.mrb[0].mxu0
  %v4611 = vadd.f32 0.0, %v4610
  %v4612 = vpop.f32.mrb[0].mxu0
  %4613 = vmatprep.mubr.f32.mxu0 0.0
  %4614 = vmatmul.mubr.f32.gmra.mrb[0].mxu0 %v4532
  %v4615 = vpop.f32.mrb[0].mxu0
  %v4616 = vadd.f32 0.0, %v4615
  %v4617 = vpop.f32.mrb[0].mxu0
  %4618 = vdwg.mxu0
  %v4619 = vpack.c.bf16 %v4606, %v4601
  %v4620 = vpack.c.bf16 %v4616, %v4611
  %4623 = vrot.lane.b32.xlu0 %v4619, 125
  %v4624 = vpop.permute.xlu0 %4623
  %4625 = vrot.lane.b32.xlu0 %v4620, 125
  %v4626 = vpop.permute.xlu0 %4625
  %4629 = vst.msk [vmem:[#allocation5 + $0x38] sm:$0xff] %vm1999, %v4624
  %vm4630 = vcmask 252928
  %4631 = vst.msk [vmem:[#allocation5 + $0x40] sm:$0xff] %vm4630, %v4624
  %4632 = vst.msk [vmem:[#allocation5 + $0x88] sm:$0xff] %vm1999, %v4626
  %4633 = vst.msk [vmem:[#allocation5 + $0x90] sm:$0xff] %vm4630, %v4626
  %4634 = vrot.lane.b32.xlu0 %v2856, 96
  %v4635 = vpop.permute.xlu0 %4634
  %4636 = vrot.lane.b32.xlu0 %v2859, 96
  %v4637 = vpop.permute.xlu0 %4636
  %4638 = vrot.lane.b32.xlu0 %v2862, 96
  %v4639 = vpop.permute.xlu0 %4638
  %4640 = vrot.lane.b32.xlu0 %v2865, 96
  %v4641 = vpop.permute.xlu0 %4640
  %v4642 = vsel %vm2884, %v4635, 0
  %v4644 = vsel %vm2884, %v4637, 0
  %v4646 = vsel %vm2884, %v4639, 0
  %v4648 = vsel %vm2884, %v4641, 0
  %4650 = vmatprep.subr.mxu0 0.0
  %4651 = vmatpush1.msra.mxu0 %v2869
  %4652 = vmatprep.subr.mxu0 0.0
  %4653 = vmatpush1.msra.mxu0 %v2870
  %4654 = vmatprep.subr.mxu0 0.0
  %4655 = vmatpush1.msra.mxu0 %v2894
  %4656 = vmatprep.subr.mxu0 0.0
  %4657 = vmatpush1.msra.mxu0 0.0
  %4658 = vmatprep.subr.mxu0 0.0
  %4659 = vmatpush1.msra.mxu0 0.0
  %4660 = vmatprep.subr.mxu0 0.0
  %4661 = vmatpush1.msra.mxu0 0.0
  %4662 = vmatprep.subr.mxu0 0.0
  %4663 = vmatpush1.msra.mxu0 0.0
  %4664 = vmatprep.subr.mxu0 0.0
  %4665 = vmatpush1.msra.mxu0 0.0
  %4666 = vmatprep.subr.mxu0 0.0
  %4667 = vmatpush1.msra.mxu0 0.0
  %4668 = vmatprep.subr.mxu0 0.0
  %4669 = vmatpush1.msra.mxu0 0.0
  %4670 = vmatprep.subr.mxu0 0.0
  %4671 = vmatpush1.msra.mxu0 0.0
  %4672 = vmatprep.subr.mxu0 0.0
  %4673 = vmatpush1.msra.mxu0 0.0
  %4674 = vmatprep.subr.mxu0 0.0
  %4675 = vmatpush1.msra.mxu0 0.0
  %4676 = vmatprep.subr.mxu0 0.0
  %4677 = vmatpush1.msra.mxu0 0.0
  %4678 = vmatprep.subr.mxu0 0.0
  %4679 = vmatpush1.msra.mxu0 0.0
  %4680 = vmatprep.subr.mxu0 0.0
  %4681 = vmatpush1.msra.mxu0 0.0
  %4682 = vmatprep.subr.mxu0 0.0
  %4683 = vmatpush1.msra.mxu0 0.0
  %4684 = vmatprep.subr.mxu0 0.0
  %4685 = vmatpush1.msra.mxu0 0.0
  %4686 = vmatprep.subr.mxu0 0.0
  %4687 = vmatpush1.msra.mxu0 0.0
  %4688 = vmatprep.subr.mxu0 0.0
  %4689 = vmatpush1.msra.mxu0 0.0
  %4690 = vmatprep.subr.mxu0 0.0
  %4691 = vmatpush1.msra.mxu0 0.0
  %4692 = vmatprep.subr.mxu0 0.0
  %4693 = vmatpush1.msra.mxu0 0.0
  %4694 = vmatprep.subr.mxu0 0.0
  %4695 = vmatpush1.msra.mxu0 0.0
  %4696 = vmatprep.subr.mxu0 0.0
  %4697 = vmatpush1.msra.mxu0 0.0
  %4698 = vmatprep.subr.mxu0 0.0
  %4699 = vmatpush1.msra.mxu0 0.0
  %4700 = vmatprep.subr.mxu0 0.0
  %4701 = vmatpush1.msra.mxu0 0.0
  %4702 = vmatprep.subr.mxu0 0.0
  %4703 = vmatpush1.msra.mxu0 0.0
  %4704 = vmatprep.subr.mxu0 0.0
  %4705 = vmatpush1.msra.mxu0 0.0
  %4706 = vmatprep.subr.mxu0 0.0
  %4707 = vmatpush1.msra.mxu0 0.0
  %4708 = vmatprep.subr.mxu0 0.0
  %4709 = vmatpush1.msra.mxu0 0.0
  %4710 = vmatprep.subr.mxu0 0.0
  %4711 = vmatpush1.msra.mxu0 0.0
  %4712 = vmatprep.subr.mxu0 0.0
  %4713 = vmatpush1.msra.mxu0 0.0
  %4714 = vmatprep.mubr.f32.mxu0 0.0
  %4715 = vmatmul.mubr.f32.gmra.mrb[0].mxu0 %v4642
  %v4716 = vpop.f32.mrb[0].mxu0
  %v4717 = vadd.f32 0.0, %v4716
  %v4718 = vpop.f32.mrb[0].mxu0
  %4719 = vmatprep.mubr.f32.mxu0 0.0
  %4720 = vmatmul.mubr.f32.gmra.mrb[0].mxu0 %v4644
  %v4721 = vpop.f32.mrb[0].mxu0
  %v4722 = vadd.f32 0.0, %v4721
  %v4723 = vpop.f32.mrb[0].mxu0
  %4724 = vmatprep.mubr.f32.mxu0 0.0
  %4725 = vmatmul.mubr.f32.gmra.mrb[0].mxu0 %v4646
  %v4726 = vpop.f32.mrb[0].mxu0
  %v4727 = vadd.f32 0.0, %v4726
  %v4728 = vpop.f32.mrb[0].mxu0
  %4729 = vmatprep.mubr.f32.mxu0 0.0
  %4730 = vmatmul.mubr.f32.gmra.mrb[0].mxu0 %v4648
  %v4731 = vpop.f32.mrb[0].mxu0
  %v4732 = vadd.f32 0.0, %v4731
  %v4733 = vpop.f32.mrb[0].mxu0
  %4734 = vdwg.mxu0
  %v4735 = vpack.c.bf16 %v4722, %v4717
  %v4736 = vpack.c.bf16 %v4732, %v4727
  %4739 = vrot.lane.b32.xlu0 %v4735, 65
  %v4740 = vpop.permute.xlu0 %4739
  %4741 = vrot.lane.b32.xlu0 %v4736, 65
  %v4742 = vpop.permute.xlu0 %4741
  %vm4745 = vcmask 810504
  %4746 = vst.msk [vmem:[#allocation5 + $0x40] sm:$0xff] %vm4745, %v4740
  %4747 = vst.msk [vmem:[#allocation5 + $0x90] sm:$0xff] %vm4745, %v4742
  %v4748 = vld [vmem:[%s1 + $0x30] sm:$0xff]
  %v4749 = vld [vmem:[%s1 + $0x38] sm:$0xf]
  %v4750 = vld [vmem:[%s1 + $0x8c] sm:$0xff]
  %v4751 = vld [vmem:[%s1 + $0x94] sm:$0xf]
  %v4752 = vld [vmem:[%s1 + $0xe8] sm:$0xff]
  %v4753 = vld [vmem:[%s1 + $0xf0] sm:$0xf]
  %v4754 = vld [vmem:[%s1 + $0x144] sm:$0xff]
  %v4755 = vld [vmem:[%s1 + $0x14c] sm:$0xf]
  %v4756 = vld [vmem:[%s2] sm:$0xff]
  %v4757 = vld [vmem:[%s2 + $0x8] sm:$0xff]
  %v4758 = vld [vmem:[%s2 + $0x10] sm:$0xff]
  %v4759 = vld [vmem:[%s2 + $0x18] sm:$0xff]
  %v4760 = vld [vmem:[#allocation5] sm:$0xff]
  %v4761 = vld [vmem:[#allocation5 + $0x8] sm:$0xff]
  %v4762 = vld [vmem:[#allocation5 + $0x10] sm:$0xff]
  %v4763 = vld [vmem:[#allocation5 + $0x18] sm:$0xff]
  %v4764 = vld [vmem:[#allocation5 + $0x20] sm:$0xff]
  %v4765 = vld [vmem:[#allocation5 + $0x28] sm:$0xff]
  %v4766 = vld [vmem:[#allocation5 + $0x30] sm:$0xff]
  %v4767 = vld [vmem:[#allocation5 + $0x38] sm:$0xff]
  %v4768 = vld [vmem:[#allocation5 + $0x40] sm:$0xff]
  %v4769 = vld [vmem:[#allocation5 + $0x48] sm:$0xff]
  %v4770 = vld [vmem:[#allocation5 + $0x50] sm:$0xff]
  %v4771 = vld [vmem:[#allocation5 + $0x58] sm:$0xff]
  %v4772 = vld [vmem:[#allocation5 + $0x60] sm:$0xff]
  %v4773 = vld [vmem:[#allocation5 + $0x68] sm:$0xff]
  %v4774 = vld [vmem:[#allocation5 + $0x70] sm:$0xff]
  %v4775 = vld [vmem:[#allocation5 + $0x78] sm:$0xff]
  %v4776 = vld [vmem:[#allocation5 + $0x80] sm:$0xff]
  %v4777 = vld [vmem:[#allocation5 + $0x88] sm:$0xff]
  %v4778 = vld [vmem:[#allocation5 + $0x90] sm:$0xff]
  %v4779 = vld [vmem:[#allocation5 + $0x98] sm:$0xff]
  %4780 = vst [vmem:[#allocation9] sm:$0xff] %v4760
  %4781 = vst [vmem:[#allocation9 + $0x8] sm:$0xff] %v4761
  %4782 = vst [vmem:[#allocation9 + $0x10] sm:$0xff] %v4762
  %4783 = vst [vmem:[#allocation9 + $0x18] sm:$0xff] %v4763
  %4784 = vst [vmem:[#allocation9 + $0x20] sm:$0xff] %v4764
  %4785 = vst [vmem:[#allocation9 + $0x28] sm:$0xff] %v4765
  %4786 = vst [vmem:[#allocation9 + $0x30] sm:$0xff] %v4766
  %4787 = vst [vmem:[#allocation9 + $0x38] sm:$0xff] %v4767
  %4788 = vst [vmem:[#allocation9 + $0x40] sm:$0xff] %v4768
  %4789 = vst.msk [vmem:[#allocation9 + $0x48] sm:$0xff] %vm4407, %v4769
  %4790 = vst [vmem:[#allocation9 + $0x50] sm:$0xff] %v4770
  %4791 = vst [vmem:[#allocation9 + $0x58] sm:$0xff] %v4771
  %4792 = vst [vmem:[#allocation9 + $0x60] sm:$0xff] %v4772
  %4793 = vst [vmem:[#allocation9 + $0x68] sm:$0xff] %v4773
  %4794 = vst [vmem:[#allocation9 + $0x70] sm:$0xff] %v4774
  %4795 = vst [vmem:[#allocation9 + $0x78] sm:$0xff] %v4775
  %4796 = vst [vmem:[#allocation9 + $0x80] sm:$0xff] %v4776
  %4797 = vst [vmem:[#allocation9 + $0x88] sm:$0xff] %v4777
  %4798 = vst [vmem:[#allocation9 + $0x90] sm:$0xff] %v4778
  %4799 = vst.msk [vmem:[#allocation9 + $0x98] sm:$0xff] %vm4407, %v4779
  %v4800 = vld [vmem:[#allocation5] sm:$0xff]
  %v4801 = vld [vmem:[#allocation5 + $0x8] sm:$0xff]
  %v4802 = vld [vmem:[#allocation5 + $0x10] sm:$0xff]
  %v4803 = vld [vmem:[#allocation5 + $0x18] sm:$0xff]
  %v4804 = vld [vmem:[#allocation5 + $0x20] sm:$0xff]
  %v4805 = vld [vmem:[#allocation5 + $0x28] sm:$0xff]
  %v4806 = vld [vmem:[#allocation5 + $0x30] sm:$0xff]
  %v4807 = vld [vmem:[#allocation5 + $0x38] sm:$0xff]
  %v4808 = vld [vmem:[#allocation5 + $0x40] sm:$0xff]
  %v4809 = vld [vmem:[#allocation5 + $0x48] sm:$0xff]
  %v4810 = vld [vmem:[#allocation5 + $0x50] sm:$0xff]
  %v4811 = vld [vmem:[#allocation5 + $0x58] sm:$0xff]
  %v4812 = vld [vmem:[#allocation5 + $0x60] sm:$0xff]
  %v4813 = vld [vmem:[#allocation5 + $0x68] sm:$0xff]
  %v4814 = vld [vmem:[#allocation5 + $0x70] sm:$0xff]
  %v4815 = vld [vmem:[#allocation5 + $0x78] sm:$0xff]
  %v4816 = vld [vmem:[#allocation5 + $0x80] sm:$0xff]
  %v4817 = vld [vmem:[#allocation5 + $0x88] sm:$0xff]
  %v4818 = vld [vmem:[#allocation5 + $0x90] sm:$0xff]
  %v4819 = vld [vmem:[#allocation5 + $0x98] sm:$0xff]
  %4840 = vrot.lane.b32.xlu0 %v4800, 127
  %v4841 = vpop.permute.xlu0 %4840
  %4842 = vrot.lane.b32.xlu0 %v4801, 127
  %v4843 = vpop.permute.xlu0 %4842
  %4844 = vrot.lane.b32.xlu0 %v4802, 127
  %v4845 = vpop.permute.xlu0 %4844
  %4846 = vrot.lane.b32.xlu0 %v4803, 127
  %v4847 = vpop.permute.xlu0 %4846
  %4848 = vrot.lane.b32.xlu0 %v4804, 127
  %v4849 = vpop.permute.xlu0 %4848
  %4850 = vrot.lane.b32.xlu0 %v4805, 127
  %v4851 = vpop.permute.xlu0 %4850
  %4852 = vrot.lane.b32.xlu0 %v4806, 127
  %v4853 = vpop.permute.xlu0 %4852
  %4854 = vrot.lane.b32.xlu0 %v4807, 127
  %v4855 = vpop.permute.xlu0 %4854
  %4856 = vrot.lane.b32.xlu0 %v4808, 127
  %v4857 = vpop.permute.xlu0 %4856
  %4858 = vrot.lane.b32.xlu0 %v4809, 127
  %v4859 = vpop.permute.xlu0 %4858
  %4860 = vrot.lane.b32.xlu0 %v4810, 127
  %v4861 = vpop.permute.xlu0 %4860
  %4862 = vrot.lane.b32.xlu0 %v4811, 127
  %v4863 = vpop.permute.xlu0 %4862
  %4864 = vrot.lane.b32.xlu0 %v4812, 127
  %v4865 = vpop.permute.xlu0 %4864
  %4866 = vrot.lane.b32.xlu0 %v4813, 127
  %v4867 = vpop.permute.xlu0 %4866
  %4868 = vrot.lane.b32.xlu0 %v4814, 127
  %v4869 = vpop.permute.xlu0 %4868
  %4870 = vrot.lane.b32.xlu0 %v4815, 127
  %v4871 = vpop.permute.xlu0 %4870
  %4872 = vrot.lane.b32.xlu0 %v4816, 127
  %v4873 = vpop.permute.xlu0 %4872
  %4874 = vrot.lane.b32.xlu0 %v4817, 127
  %v4875 = vpop.permute.xlu0 %4874
  %4876 = vrot.lane.b32.xlu0 %v4818, 127
  %v4877 = vpop.permute.xlu0 %4876
  %4878 = vrot.lane.b32.xlu0 %v4819, 127
  %v4879 = vpop.permute.xlu0 %4878
  %v4880 = vsel %vm2168, %v4841, %v4843
  %v4881 = vsel %vm2168, %v4843, %v4845
  %v4882 = vsel %vm2168, %v4845, %v4847
  %v4883 = vsel %vm2168, %v4847, %v4849
  %v4884 = vsel %vm2168, %v4849, %v4851
  %v4885 = vsel %vm2168, %v4851, %v4853
  %v4886 = vsel %vm2168, %v4853, %v4855
  %v4887 = vsel %vm2168, %v4855, %v4857
  %v4888 = vsel %vm2168, %v4857, %v4859
  %v4889 = vsel %vm2168, %v4861, %v4863
  %v4890 = vsel %vm2168, %v4863, %v4865
  %v4891 = vsel %vm2168, %v4865, %v4867
  %v4892 = vsel %vm2168, %v4867, %v4869
  %v4893 = vsel %vm2168, %v4869, %v4871
  %v4894 = vsel %vm2168, %v4871, %v4873
  %v4895 = vsel %vm2168, %v4873, %v4875
  %v4896 = vsel %vm2168, %v4875, %v4877
  %v4897 = vsel %vm2168, %v4877, %v4879
  %4918 = vst [vmem:[#allocation9 + $0xa0] sm:$0xff] %v4880
  %4919 = vst [vmem:[#allocation9 + $0xa8] sm:$0xff] %v4881
  %4920 = vst [vmem:[#allocation9 + $0xb0] sm:$0xff] %v4882
  %4921 = vst [vmem:[#allocation9 + $0xb8] sm:$0xff] %v4883
  %4922 = vst [vmem:[#allocation9 + $0xc0] sm:$0xff] %v4884
  %4923 = vst [vmem:[#allocation9 + $0xc8] sm:$0xff] %v4885
  %4924 = vst [vmem:[#allocation9 + $0xd0] sm:$0xff] %v4886
  %4925 = vst [vmem:[#allocation9 + $0xd8] sm:$0xff] %v4887
  %4926 = vst [vmem:[#allocation9 + $0xe0] sm:$0xff] %v4888
  %4927 = vst.msk [vmem:[#allocation9 + $0xe8] sm:$0xff] %vm4407, %v4859
  %4928 = vst [vmem:[#allocation9 + $0xf0] sm:$0xff] %v4889
  %4929 = vst [vmem:[#allocation9 + $0xf8] sm:$0xff] %v4890
  %4930 = vst [vmem:[#allocation9 + $0x100] sm:$0xff] %v4891
  %4931 = vst [vmem:[#allocation9 + $0x108] sm:$0xff] %v4892
  %4932 = vst [vmem:[#allocation9 + $0x110] sm:$0xff] %v4893
  %4933 = vst [vmem:[#allocation9 + $0x118] sm:$0xff] %v4894
  %4934 = vst [vmem:[#allocation9 + $0x120] sm:$0xff] %v4895
  %4935 = vst [vmem:[#allocation9 + $0x128] sm:$0xff] %v4896
  %4936 = vst [vmem:[#allocation9 + $0x130] sm:$0xff] %v4897
  %4937 = vst.msk [vmem:[#allocation9 + $0x138] sm:$0xff] %vm4407, %v4879
  %v4938 = vld [vmem:[#allocation5] sm:$0xff]
  %v4939 = vld [vmem:[#allocation5 + $0x8] sm:$0xff]
  %v4940 = vld [vmem:[#allocation5 + $0x10] sm:$0xff]
  %v4941 = vld [vmem:[#allocation5 + $0x18] sm:$0xff]
  %v4942 = vld [vmem:[#allocation5 + $0x20] sm:$0xff]
  %v4943 = vld [vmem:[#allocation5 + $0x28] sm:$0xff]
  %v4944 = vld [vmem:[#allocation5 + $0x30] sm:$0xff]
  %v4945 = vld [vmem:[#allocation5 + $0x38] sm:$0xff]
  %v4946 = vld [vmem:[#allocation5 + $0x40] sm:$0xff]
  %v4947 = vld [vmem:[#allocation5 + $0x48] sm:$0xff]
  %v4948 = vld [vmem:[#allocation5 + $0x50] sm:$0xff]
  %v4949 = vld [vmem:[#allocation5 + $0x58] sm:$0xff]
  %v4950 = vld [vmem:[#allocation5 + $0x60] sm:$0xff]
  %v4951 = vld [vmem:[#allocation5 + $0x68] sm:$0xff]
  %v4952 = vld [vmem:[#allocation5 + $0x70] sm:$0xff]
  %v4953 = vld [vmem:[#allocation5 + $0x78] sm:$0xff]
  %v4954 = vld [vmem:[#allocation5 + $0x80] sm:$0xff]
  %v4955 = vld [vmem:[#allocation5 + $0x88] sm:$0xff]
  %v4956 = vld [vmem:[#allocation5 + $0x90] sm:$0xff]
  %v4957 = vld [vmem:[#allocation5 + $0x98] sm:$0xff]
  %4978 = vrot.lane.b32.xlu0 %v4938, 126
  %v4979 = vpop.permute.xlu0 %4978
  %4980 = vrot.lane.b32.xlu0 %v4939, 126
  %v4981 = vpop.permute.xlu0 %4980
  %4982 = vrot.lane.b32.xlu0 %v4940, 126
  %v4983 = vpop.permute.xlu0 %4982
  %4984 = vrot.lane.b32.xlu0 %v4941, 126
  %v4985 = vpop.permute.xlu0 %4984
  %4986 = vrot.lane.b32.xlu0 %v4942, 126
  %v4987 = vpop.permute.xlu0 %4986
  %4988 = vrot.lane.b32.xlu0 %v4943, 126
  %v4989 = vpop.permute.xlu0 %4988
  %4990 = vrot.lane.b32.xlu0 %v4944, 126
  %v4991 = vpop.permute.xlu0 %4990
  %4992 = vrot.lane.b32.xlu0 %v4945, 126
  %v4993 = vpop.permute.xlu0 %4992
  %4994 = vrot.lane.b32.xlu0 %v4946, 126
  %v4995 = vpop.permute.xlu0 %4994
  %4996 = vrot.lane.b32.xlu0 %v4947, 126
  %v4997 = vpop.permute.xlu0 %4996
  %4998 = vrot.lane.b32.xlu0 %v4948, 126
  %v4999 = vpop.permute.xlu0 %4998
  %5000 = vrot.lane.b32.xlu0 %v4949, 126
  %v5001 = vpop.permute.xlu0 %5000
  %5002 = vrot.lane.b32.xlu0 %v4950, 126
  %v5003 = vpop.permute.xlu0 %5002
  %5004 = vrot.lane.b32.xlu0 %v4951, 126
  %v5005 = vpop.permute.xlu0 %5004
  %5006 = vrot.lane.b32.xlu0 %v4952, 126
  %v5007 = vpop.permute.xlu0 %5006
  %5008 = vrot.lane.b32.xlu0 %v4953, 126
  %v5009 = vpop.permute.xlu0 %5008
  %5010 = vrot.lane.b32.xlu0 %v4954, 126
  %v5011 = vpop.permute.xlu0 %5010
  %5012 = vrot.lane.b32.xlu0 %v4955, 126
  %v5013 = vpop.permute.xlu0 %5012
  %5014 = vrot.lane.b32.xlu0 %v4956, 126
  %v5015 = vpop.permute.xlu0 %5014
  %5016 = vrot.lane.b32.xlu0 %v4957, 126
  %v5017 = vpop.permute.xlu0 %5016
  %v5018 = vsel %vm2209, %v4979, %v4981
  %v5019 = vsel %vm2209, %v4981, %v4983
  %v5020 = vsel %vm2209, %v4983, %v4985
  %v5021 = vsel %vm2209, %v4985, %v4987
  %v5022 = vsel %vm2209, %v4987, %v4989
  %v5023 = vsel %vm2209, %v4989, %v4991
  %v5024 = vsel %vm2209, %v4991, %v4993
  %v5025 = vsel %vm2209, %v4993, %v4995
  %v5026 = vsel %vm2209, %v4995, %v4997
  %v5027 = vsel %vm2209, %v4999, %v5001
  %v5028 = vsel %vm2209, %v5001, %v5003
  %v5029 = vsel %vm2209, %v5003, %v5005
  %v5030 = vsel %vm2209, %v5005, %v5007
  %v5031 = vsel %vm2209, %v5007, %v5009
  %v5032 = vsel %vm2209, %v5009, %v5011
  %v5033 = vsel %vm2209, %v5011, %v5013
  %v5034 = vsel %vm2209, %v5013, %v5015
  %v5035 = vsel %vm2209, %v5015, %v5017
  %5056 = vst [vmem:[#allocation9 + $0x140] sm:$0xff] %v5018
  %5057 = vst [vmem:[#allocation9 + $0x148] sm:$0xff] %v5019
  %5058 = vst [vmem:[#allocation9 + $0x150] sm:$0xff] %v5020
  %5059 = vst [vmem:[#allocation9 + $0x158] sm:$0xff] %v5021
  %5060 = vst [vmem:[#allocation9 + $0x160] sm:$0xff] %v5022
  %5061 = vst [vmem:[#allocation9 + $0x168] sm:$0xff] %v5023
  %5062 = vst [vmem:[#allocation9 + $0x170] sm:$0xff] %v5024
  %5063 = vst [vmem:[#allocation9 + $0x178] sm:$0xff] %v5025
  %5064 = vst [vmem:[#allocation9 + $0x180] sm:$0xff] %v5026
  %5065 = vst.msk [vmem:[#allocation9 + $0x188] sm:$0xff] %vm4407, %v4997
  %5066 = vst [vmem:[#allocation9 + $0x190] sm:$0xff] %v5027
  %5067 = vst [vmem:[#allocation9 + $0x198] sm:$0xff] %v5028
  %5068 = vst [vmem:[#allocation9 + $0x1a0] sm:$0xff] %v5029
  %5069 = vst [vmem:[#allocation9 + $0x1a8] sm:$0xff] %v5030
  %5070 = vst [vmem:[#allocation9 + $0x1b0] sm:$0xff] %v5031
  %5071 = vst [vmem:[#allocation9 + $0x1b8] sm:$0xff] %v5032
  %5072 = vst [vmem:[#allocation9 + $0x1c0] sm:$0xff] %v5033
  %5073 = vst [vmem:[#allocation9 + $0x1c8] sm:$0xff] %v5034
  %5074 = vst [vmem:[#allocation9 + $0x1d0] sm:$0xff] %v5035
  %5075 = vst.msk [vmem:[#allocation9 + $0x1d8] sm:$0xff] %vm4407, %v5017
  %v5076 = vld [vmem:[#allocation5] sm:$0xff]
  %v5077 = vld [vmem:[#allocation5 + $0x8] sm:$0xff]
  %v5078 = vld [vmem:[#allocation5 + $0x10] sm:$0xff]
  %v5079 = vld [vmem:[#allocation5 + $0x18] sm:$0xff]
  %v5080 = vld [vmem:[#allocation5 + $0x20] sm:$0xff]
  %v5081 = vld [vmem:[#allocation5 + $0x28] sm:$0xff]
  %v5082 = vld [vmem:[#allocation5 + $0x30] sm:$0xff]
  %v5083 = vld [vmem:[#allocation5 + $0x38] sm:$0xff]
  %v5084 = vld [vmem:[#allocation5 + $0x40] sm:$0xff]
  %v5085 = vld [vmem:[#allocation5 + $0x48] sm:$0xff]
  %v5086 = vld [vmem:[#allocation5 + $0x50] sm:$0xff]
  %v5087 = vld [vmem:[#allocation5 + $0x58] sm:$0xff]
  %v5088 = vld [vmem:[#allocation5 + $0x60] sm:$0xff]
  %v5089 = vld [vmem:[#allocation5 + $0x68] sm:$0xff]
  %v5090 = vld [vmem:[#allocation5 + $0x70] sm:$0xff]
  %v5091 = vld [vmem:[#allocation5 + $0x78] sm:$0xff]
  %v5092 = vld [vmem:[#allocation5 + $0x80] sm:$0xff]
  %v5093 = vld [vmem:[#allocation5 + $0x88] sm:$0xff]
  %v5094 = vld [vmem:[#allocation5 + $0x90] sm:$0xff]
  %v5095 = vld [vmem:[#allocation5 + $0x98] sm:$0xff]
  %5116 = vrot.lane.b32.xlu0 %v5076, 94
  %v5117 = vpop.permute.xlu0 %5116
  %5118 = vrot.lane.b32.xlu0 %v5077, 94
  %v5119 = vpop.permute.xlu0 %5118
  %5120 = vrot.lane.b32.xlu0 %v5078, 94
  %v5121 = vpop.permute.xlu0 %5120
  %5122 = vrot.lane.b32.xlu0 %v5079, 94
  %v5123 = vpop.permute.xlu0 %5122
  %5124 = vrot.lane.b32.xlu0 %v5080, 94
  %v5125 = vpop.permute.xlu0 %5124
  %5126 = vrot.lane.b32.xlu0 %v5081, 94
  %v5127 = vpop.permute.xlu0 %5126
  %5128 = vrot.lane.b32.xlu0 %v5082, 94
  %v5129 = vpop.permute.xlu0 %5128
  %5130 = vrot.lane.b32.xlu0 %v5083, 94
  %v5131 = vpop.permute.xlu0 %5130
  %5132 = vrot.lane.b32.xlu0 %v5084, 94
  %v5133 = vpop.permute.xlu0 %5132
  %5134 = vrot.lane.b32.xlu0 %v5085, 94
  %v5135 = vpop.permute.xlu0 %5134
  %5136 = vrot.lane.b32.xlu0 %v5086, 94
  %v5137 = vpop.permute.xlu0 %5136
  %5138 = vrot.lane.b32.xlu0 %v5087, 94
  %v5139 = vpop.permute.xlu0 %5138
  %5140 = vrot.lane.b32.xlu0 %v5088, 94
  %v5141 = vpop.permute.xlu0 %5140
  %5142 = vrot.lane.b32.xlu0 %v5089, 94
  %v5143 = vpop.permute.xlu0 %5142
  %5144 = vrot.lane.b32.xlu0 %v5090, 94
  %v5145 = vpop.permute.xlu0 %5144
  %5146 = vrot.lane.b32.xlu0 %v5091, 94
  %v5147 = vpop.permute.xlu0 %5146
  %5148 = vrot.lane.b32.xlu0 %v5092, 94
  %v5149 = vpop.permute.xlu0 %5148
  %5150 = vrot.lane.b32.xlu0 %v5093, 94
  %v5151 = vpop.permute.xlu0 %5150
  %5152 = vrot.lane.b32.xlu0 %v5094, 94
  %v5153 = vpop.permute.xlu0 %5152
  %5154 = vrot.lane.b32.xlu0 %v5095, 94
  %v5155 = vpop.permute.xlu0 %5154
  %vm5156 = vcmask 769024
  %v5157 = vsel %vm5156, %v5117, %v5119
  %v5158 = vsel %vm5156, %v5119, %v5121
  %v5159 = vsel %vm5156, %v5121, %v5123
  %v5160 = vsel %vm5156, %v5123, %v5125
  %v5161 = vsel %vm5156, %v5125, %v5127
  %v5162 = vsel %vm5156, %v5127, %v5129
  %v5163 = vsel %vm5156, %v5129, %v5131
  %v5164 = vsel %vm5156, %v5131, %v5133
  %v5165 = vsel %vm5156, %v5133, %v5135
  %v5166 = vsel %vm5156, %v5137, %v5139
  %v5167 = vsel %vm5156, %v5139, %v5141
  %v5168 = vsel %vm5156, %v5141, %v5143
  %v5169 = vsel %vm5156, %v5143, %v5145
  %v5170 = vsel %vm5156, %v5145, %v5147
  %v5171 = vsel %vm5156, %v5147, %v5149
  %v5172 = vsel %vm5156, %v5149, %v5151
  %v5173 = vsel %vm5156, %v5151, %v5153
  %v5174 = vsel %vm5156, %v5153, %v5155
  %5195 = vst [vmem:[#allocation9 + $0x1e0] sm:$0xff] %v5157
  %5196 = vst [vmem:[#allocation9 + $0x1e8] sm:$0xff] %v5158
  %5197 = vst [vmem:[#allocation9 + $0x1f0] sm:$0xff] %v5159
  %5198 = vst [vmem:[#allocation9 + $0x1f8] sm:$0xff] %v5160
  %5199 = vst [vmem:[#allocation9 + $0x200] sm:$0xff] %v5161
  %5200 = vst [vmem:[#allocation9 + $0x208] sm:$0xff] %v5162
  %5201 = vst [vmem:[#allocation9 + $0x210] sm:$0xff] %v5163
  %5202 = vst [vmem:[#allocation9 + $0x218] sm:$0xff] %v5164
  %5203 = vst [vmem:[#allocation9 + $0x220] sm:$0xff] %v5165
  %5204 = vst.msk [vmem:[#allocation9 + $0x228] sm:$0xff] %vm4407, %v5135
  %5205 = vst [vmem:[#allocation9 + $0x230] sm:$0xff] %v5166
  %5206 = vst [vmem:[#allocation9 + $0x238] sm:$0xff] %v5167
  %5207 = vst [vmem:[#allocation9 + $0x240] sm:$0xff] %v5168
  %5208 = vst [vmem:[#allocation9 + $0x248] sm:$0xff] %v5169
  %5209 = vst [vmem:[#allocation9 + $0x250] sm:$0xff] %v5170
  %5210 = vst [vmem:[#allocation9 + $0x258] sm:$0xff] %v5171
  %5211 = vst [vmem:[#allocation9 + $0x260] sm:$0xff] %v5172
  %5212 = vst [vmem:[#allocation9 + $0x268] sm:$0xff] %v5173
  %5213 = vst [vmem:[#allocation9 + $0x270] sm:$0xff] %v5174
  %5214 = vst.msk [vmem:[#allocation9 + $0x278] sm:$0xff] %vm4407, %v5155
  %v5215 = vld [vmem:[#allocation5] sm:$0xff]
  %v5216 = vld [vmem:[#allocation5 + $0x8] sm:$0xff]
  %v5217 = vld [vmem:[#allocation5 + $0x10] sm:$0xff]
  %v5218 = vld [vmem:[#allocation5 + $0x18] sm:$0xff]
  %v5219 = vld [vmem:[#allocation5 + $0x20] sm:$0xff]
  %v5220 = vld [vmem:[#allocation5 + $0x28] sm:$0xff]
  %v5221 = vld [vmem:[#allocation5 + $0x30] sm:$0xff]
  %v5222 = vld [vmem:[#allocation5 + $0x38] sm:$0xff]
  %v5223 = vld [vmem:[#allocation5 + $0x40] sm:$0xff]
  %v5224 = vld [vmem:[#allocation5 + $0x48] sm:$0xff]
  %v5225 = vld [vmem:[#allocation5 + $0x50] sm:$0xff]
  %v5226 = vld [vmem:[#allocation5 + $0x58] sm:$0xff]
  %v5227 = vld [vmem:[#allocation5 + $0x60] sm:$0xff]
  %v5228 = vld [vmem:[#allocation5 + $0x68] sm:$0xff]
  %v5229 = vld [vmem:[#allocation5 + $0x70] sm:$0xff]
  %v5230 = vld [vmem:[#allocation5 + $0x78] sm:$0xff]
  %v5231 = vld [vmem:[#allocation5 + $0x80] sm:$0xff]
  %v5232 = vld [vmem:[#allocation5 + $0x88] sm:$0xff]
  %v5233 = vld [vmem:[#allocation5 + $0x90] sm:$0xff]
  %v5234 = vld [vmem:[#allocation5 + $0x98] sm:$0xff]
  %5255 = vrot.lane.b32.xlu0 %v5215, 93
  %v5256 = vpop.permute.xlu0 %5255
  %5257 = vrot.lane.b32.xlu0 %v5216, 93
  %v5258 = vpop.permute.xlu0 %5257
  %5259 = vrot.lane.b32.xlu0 %v5217, 93
  %v5260 = vpop.permute.xlu0 %5259
  %5261 = vrot.lane.b32.xlu0 %v5218, 93
  %v5262 = vpop.permute.xlu0 %5261
  %5263 = vrot.lane.b32.xlu0 %v5219, 93
  %v5264 = vpop.permute.xlu0 %5263
  %5265 = vrot.lane.b32.xlu0 %v5220, 93
  %v5266 = vpop.permute.xlu0 %5265
  %5267 = vrot.lane.b32.xlu0 %v5221, 93
  %v5268 = vpop.permute.xlu0 %5267
  %5269 = vrot.lane.b32.xlu0 %v5222, 93
  %v5270 = vpop.permute.xlu0 %5269
  %5271 = vrot.lane.b32.xlu0 %v5223, 93
  %v5272 = vpop.permute.xlu0 %5271
  %5273 = vrot.lane.b32.xlu0 %v5224, 93
  %v5274 = vpop.permute.xlu0 %5273
  %5275 = vrot.lane.b32.xlu0 %v5225, 93
  %v5276 = vpop.permute.xlu0 %5275
  %5277 = vrot.lane.b32.xlu0 %v5226, 93
  %v5278 = vpop.permute.xlu0 %5277
  %5279 = vrot.lane.b32.xlu0 %v5227, 93
  %v5280 = vpop.permute.xlu0 %5279
  %5281 = vrot.lane.b32.xlu0 %v5228, 93
  %v5282 = vpop.permute.xlu0 %5281
  %5283 = vrot.lane.b32.xlu0 %v5229, 93
  %v5284 = vpop.permute.xlu0 %5283
  %5285 = vrot.lane.b32.xlu0 %v5230, 93
  %v5286 = vpop.permute.xlu0 %5285
  %5287 = vrot.lane.b32.xlu0 %v5231, 93
  %v5288 = vpop.permute.xlu0 %5287
  %5289 = vrot.lane.b32.xlu0 %v5232, 93
  %v5290 = vpop.permute.xlu0 %5289
  %5291 = vrot.lane.b32.xlu0 %v5233, 93
  %v5292 = vpop.permute.xlu0 %5291
  %5293 = vrot.lane.b32.xlu0 %v5234, 93
  %v5294 = vpop.permute.xlu0 %5293
  %vm5295 = vcmask 760832
  %v5296 = vsel %vm5295, %v5256, %v5258
  %v5297 = vsel %vm5295, %v5258, %v5260
  %v5298 = vsel %vm5295, %v5260, %v5262
  %v5299 = vsel %vm5295, %v5262, %v5264
  %v5300 = vsel %vm5295, %v5264, %v5266
  %v5301 = vsel %vm5295, %v5266, %v5268
  %v5302 = vsel %vm5295, %v5268, %v5270
  %v5303 = vsel %vm5295, %v5270, %v5272
  %v5304 = vsel %vm5295, %v5272, %v5274
  %v5305 = vsel %vm5295, %v5276, %v5278
  %v5306 = vsel %vm5295, %v5278, %v5280
  %v5307 = vsel %vm5295, %v5280, %v5282
  %v5308 = vsel %vm5295, %v5282, %v5284
  %v5309 = vsel %vm5295, %v5284, %v5286
  %v5310 = vsel %vm5295, %v5286, %v5288
  %v5311 = vsel %vm5295, %v5288, %v5290
  %v5312 = vsel %vm5295, %v5290, %v5292
  %v5313 = vsel %vm5295, %v5292, %v5294
  %5334 = vst [vmem:[#allocation9 + $0x280] sm:$0xff] %v5296
  %5335 = vst [vmem:[#allocation9 + $0x288] sm:$0xff] %v5297
  %5336 = vst [vmem:[#allocation9 + $0x290] sm:$0xff] %v5298
  %5337 = vst [vmem:[#allocation9 + $0x298] sm:$0xff] %v5299
  %5338 = vst [vmem:[#allocation9 + $0x2a0] sm:$0xff] %v5300
  %5339 = vst [vmem:[#allocation9 + $0x2a8] sm:$0xff] %v5301
  %5340 = vst [vmem:[#allocation9 + $0x2b0] sm:$0xff] %v5302
  %5341 = vst [vmem:[#allocation9 + $0x2b8] sm:$0xff] %v5303
  %5342 = vst [vmem:[#allocation9 + $0x2c0] sm:$0xff] %v5304
  %5343 = vst.msk [vmem:[#allocation9 + $0x2c8] sm:$0xff] %vm4407, %v5274
  %5344 = vst [vmem:[#allocation9 + $0x2d0] sm:$0xff] %v5305
  %5345 = vst [vmem:[#allocation9 + $0x2d8] sm:$0xff] %v5306
  %5346 = vst [vmem:[#allocation9 + $0x2e0] sm:$0xff] %v5307
  %5347 = vst [vmem:[#allocation9 + $0x2e8] sm:$0xff] %v5308
  %5348 = vst [vmem:[#allocation9 + $0x2f0] sm:$0xff] %v5309
  %5349 = vst [vmem:[#allocation9 + $0x2f8] sm:$0xff] %v5310
  %5350 = vst [vmem:[#allocation9 + $0x300] sm:$0xff] %v5311
  %5351 = vst [vmem:[#allocation9 + $0x308] sm:$0xff] %v5312
  %5352 = vst [vmem:[#allocation9 + $0x310] sm:$0xff] %v5313
  %5353 = vst.msk [vmem:[#allocation9 + $0x318] sm:$0xff] %vm4407, %v5294
  %v5354 = vld [vmem:[#allocation5] sm:$0xff]
  %v5355 = vld [vmem:[#allocation5 + $0x8] sm:$0xff]
  %v5356 = vld [vmem:[#allocation5 + $0x10] sm:$0xff]
  %v5357 = vld [vmem:[#allocation5 + $0x18] sm:$0xff]
  %v5358 = vld [vmem:[#allocation5 + $0x20] sm:$0xff]
  %v5359 = vld [vmem:[#allocation5 + $0x28] sm:$0xff]
  %v5360 = vld [vmem:[#allocation5 + $0x30] sm:$0xff]
  %v5361 = vld [vmem:[#allocation5 + $0x38] sm:$0xff]
  %v5362 = vld [vmem:[#allocation5 + $0x40] sm:$0xff]
  %v5363 = vld [vmem:[#allocation5 + $0x48] sm:$0xff]
  %v5364 = vld [vmem:[#allocation5 + $0x50] sm:$0xff]
  %v5365 = vld [vmem:[#allocation5 + $0x58] sm:$0xff]
  %v5366 = vld [vmem:[#allocation5 + $0x60] sm:$0xff]
  %v5367 = vld [vmem:[#allocation5 + $0x68] sm:$0xff]
  %v5368 = vld [vmem:[#allocation5 + $0x70] sm:$0xff]
  %v5369 = vld [vmem:[#allocation5 + $0x78] sm:$0xff]
  %v5370 = vld [vmem:[#allocation5 + $0x80] sm:$0xff]
  %v5371 = vld [vmem:[#allocation5 + $0x88] sm:$0xff]
  %v5372 = vld [vmem:[#allocation5 + $0x90] sm:$0xff]
  %v5373 = vld [vmem:[#allocation5 + $0x98] sm:$0xff]
  %5394 = vrot.lane.b32.xlu0 %v5354, 92
  %v5395 = vpop.permute.xlu0 %5394
  %5396 = vrot.lane.b32.xlu0 %v5355, 92
  %v5397 = vpop.permute.xlu0 %5396
  %5398 = vrot.lane.b32.xlu0 %v5356, 92
  %v5399 = vpop.permute.xlu0 %5398
  %5400 = vrot.lane.b32.xlu0 %v5357, 92
  %v5401 = vpop.permute.xlu0 %5400
  %5402 = vrot.lane.b32.xlu0 %v5358, 92
  %v5403 = vpop.permute.xlu0 %5402
  %5404 = vrot.lane.b32.xlu0 %v5359, 92
  %v5405 = vpop.permute.xlu0 %5404
  %5406 = vrot.lane.b32.xlu0 %v5360, 92
  %v5407 = vpop.permute.xlu0 %5406
  %5408 = vrot.lane.b32.xlu0 %v5361, 92
  %v5409 = vpop.permute.xlu0 %5408
  %5410 = vrot.lane.b32.xlu0 %v5362, 92
  %v5411 = vpop.permute.xlu0 %5410
  %5412 = vrot.lane.b32.xlu0 %v5363, 92
  %v5413 = vpop.permute.xlu0 %5412
  %5414 = vrot.lane.b32.xlu0 %v5364, 92
  %v5415 = vpop.permute.xlu0 %5414
  %5416 = vrot.lane.b32.xlu0 %v5365, 92
  %v5417 = vpop.permute.xlu0 %5416
  %5418 = vrot.lane.b32.xlu0 %v5366, 92
  %v5419 = vpop.permute.xlu0 %5418
  %5420 = vrot.lane.b32.xlu0 %v5367, 92
  %v5421 = vpop.permute.xlu0 %5420
  %5422 = vrot.lane.b32.xlu0 %v5368, 92
  %v5423 = vpop.permute.xlu0 %5422
  %5424 = vrot.lane.b32.xlu0 %v5369, 92
  %v5425 = vpop.permute.xlu0 %5424
  %5426 = vrot.lane.b32.xlu0 %v5370, 92
  %v5427 = vpop.permute.xlu0 %5426
  %5428 = vrot.lane.b32.xlu0 %v5371, 92
  %v5429 = vpop.permute.xlu0 %5428
  %5430 = vrot.lane.b32.xlu0 %v5372, 92
  %v5431 = vpop.permute.xlu0 %5430
  %5432 = vrot.lane.b32.xlu0 %v5373, 92
  %v5433 = vpop.permute.xlu0 %5432
  %v5434 = vsel %vm2373, %v5395, %v5397
  %v5435 = vsel %vm2373, %v5397, %v5399
  %v5436 = vsel %vm2373, %v5399, %v5401
  %v5437 = vsel %vm2373, %v5401, %v5403
  %v5438 = vsel %vm2373, %v5403, %v5405
  %v5439 = vsel %vm2373, %v5405, %v5407
  %v5440 = vsel %vm2373, %v5407, %v5409
  %v5441 = vsel %vm2373, %v5409, %v5411
  %v5442 = vsel %vm2373, %v5411, %v5413
  %v5443 = vsel %vm2373, %v5415, %v5417
  %v5444 = vsel %vm2373, %v5417, %v5419
  %v5445 = vsel %vm2373, %v5419, %v5421
  %v5446 = vsel %vm2373, %v5421, %v5423
  %v5447 = vsel %vm2373, %v5423, %v5425
  %v5448 = vsel %vm2373, %v5425, %v5427
  %v5449 = vsel %vm2373, %v5427, %v5429
  %v5450 = vsel %vm2373, %v5429, %v5431
  %v5451 = vsel %vm2373, %v5431, %v5433
  %5472 = vst [vmem:[#allocation9 + $0x320] sm:$0xff] %v5434
  %5473 = vst [vmem:[#allocation9 + $0x328] sm:$0xff] %v5435
  %5474 = vst [vmem:[#allocation9 + $0x330] sm:$0xff] %v5436
  %5475 = vst [vmem:[#allocation9 + $0x338] sm:$0xff] %v5437
  %5476 = vst [vmem:[#allocation9 + $0x340] sm:$0xff] %v5438
  %5477 = vst [vmem:[#allocation9 + $0x348] sm:$0xff] %v5439
  %5478 = vst [vmem:[#allocation9 + $0x350] sm:$0xff] %v5440
  %5479 = vst [vmem:[#allocation9 + $0x358] sm:$0xff] %v5441
  %5480 = vst [vmem:[#allocation9 + $0x360] sm:$0xff] %v5442
  %5481 = vst.msk [vmem:[#allocation9 + $0x368] sm:$0xff] %vm4407, %v5413
  %5482 = vst [vmem:[#allocation9 + $0x370] sm:$0xff] %v5443
  %5483 = vst [vmem:[#allocation9 + $0x378] sm:$0xff] %v5444
  %5484 = vst [vmem:[#allocation9 + $0x380] sm:$0xff] %v5445
  %5485 = vst [vmem:[#allocation9 + $0x388] sm:$0xff] %v5446
  %5486 = vst [vmem:[#allocation9 + $0x390] sm:$0xff] %v5447
  %5487 = vst [vmem:[#allocation9 + $0x398] sm:$0xff] %v5448
  %5488 = vst [vmem:[#allocation9 + $0x3a0] sm:$0xff] %v5449
  %5489 = vst [vmem:[#allocation9 + $0x3a8] sm:$0xff] %v5450
  %5490 = vst [vmem:[#allocation9 + $0x3b0] sm:$0xff] %v5451
  %5491 = vst.msk [vmem:[#allocation9 + $0x3b8] sm:$0xff] %vm4407, %v5433
  %v5492 = vld [vmem:[#allocation5] sm:$0xff]
  %v5493 = vld [vmem:[#allocation5 + $0x8] sm:$0xff]
  %v5494 = vld [vmem:[#allocation5 + $0x10] sm:$0xff]
  %v5495 = vld [vmem:[#allocation5 + $0x18] sm:$0xff]
  %v5496 = vld [vmem:[#allocation5 + $0x20] sm:$0xff]
  %v5497 = vld [vmem:[#allocation5 + $0x28] sm:$0xff]
  %v5498 = vld [vmem:[#allocation5 + $0x30] sm:$0xff]
  %v5499 = vld [vmem:[#allocation5 + $0x38] sm:$0xff]
  %v5500 = vld [vmem:[#allocation5 + $0x40] sm:$0xff]
  %v5501 = vld [vmem:[#allocation5 + $0x48] sm:$0xff]
  %v5502 = vld [vmem:[#allocation5 + $0x50] sm:$0xff]
  %v5503 = vld [vmem:[#allocation5 + $0x58] sm:$0xff]
  %v5504 = vld [vmem:[#allocation5 + $0x60] sm:$0xff]
  %v5505 = vld [vmem:[#allocation5 + $0x68] sm:$0xff]
  %v5506 = vld [vmem:[#allocation5 + $0x70] sm:$0xff]
  %v5507 = vld [vmem:[#allocation5 + $0x78] sm:$0xff]
  %v5508 = vld [vmem:[#allocation5 + $0x80] sm:$0xff]
  %v5509 = vld [vmem:[#allocation5 + $0x88] sm:$0xff]
  %v5510 = vld [vmem:[#allocation5 + $0x90] sm:$0xff]
  %v5511 = vld [vmem:[#allocation5 + $0x98] sm:$0xff]
  %5532 = vrot.lane.b32.xlu0 %v5492, 60
  %v5533 = vpop.permute.xlu0 %5532
  %5534 = vrot.lane.b32.xlu0 %v5493, 60
  %v5535 = vpop.permute.xlu0 %5534
  %5536 = vrot.lane.b32.xlu0 %v5494, 60
  %v5537 = vpop.permute.xlu0 %5536
  %5538 = vrot.lane.b32.xlu0 %v5495, 60
  %v5539 = vpop.permute.xlu0 %5538
  %5540 = vrot.lane.b32.xlu0 %v5496, 60
  %v5541 = vpop.permute.xlu0 %5540
  %5542 = vrot.lane.b32.xlu0 %v5497, 60
  %v5543 = vpop.permute.xlu0 %5542
  %5544 = vrot.lane.b32.xlu0 %v5498, 60
  %v5545 = vpop.permute.xlu0 %5544
  %5546 = vrot.lane.b32.xlu0 %v5499, 60
  %v5547 = vpop.permute.xlu0 %5546
  %5548 = vrot.lane.b32.xlu0 %v5500, 60
  %v5549 = vpop.permute.xlu0 %5548
  %5550 = vrot.lane.b32.xlu0 %v5501, 60
  %v5551 = vpop.permute.xlu0 %5550
  %5552 = vrot.lane.b32.xlu0 %v5502, 60
  %v5553 = vpop.permute.xlu0 %5552
  %5554 = vrot.lane.b32.xlu0 %v5503, 60
  %v5555 = vpop.permute.xlu0 %5554
  %5556 = vrot.lane.b32.xlu0 %v5504, 60
  %v5557 = vpop.permute.xlu0 %5556
  %5558 = vrot.lane.b32.xlu0 %v5505, 60
  %v5559 = vpop.permute.xlu0 %5558
  %5560 = vrot.lane.b32.xlu0 %v5506, 60
  %v5561 = vpop.permute.xlu0 %5560
  %5562 = vrot.lane.b32.xlu0 %v5507, 60
  %v5563 = vpop.permute.xlu0 %5562
  %5564 = vrot.lane.b32.xlu0 %v5508, 60
  %v5565 = vpop.permute.xlu0 %5564
  %5566 = vrot.lane.b32.xlu0 %v5509, 60
  %v5567 = vpop.permute.xlu0 %5566
  %5568 = vrot.lane.b32.xlu0 %v5510, 60
  %v5569 = vpop.permute.xlu0 %5568
  %5570 = vrot.lane.b32.xlu0 %v5511, 60
  %v5571 = vpop.permute.xlu0 %5570
  %vm5572 = vcmask 490496
  %v5573 = vsel %vm5572, %v5533, %v5535
  %v5574 = vsel %vm5572, %v5535, %v5537
  %v5575 = vsel %vm5572, %v5537, %v5539
  %v5576 = vsel %vm5572, %v5539, %v5541
  %v5577 = vsel %vm5572, %v5541, %v5543
  %v5578 = vsel %vm5572, %v5543, %v5545
  %v5579 = vsel %vm5572, %v5545, %v5547
  %v5580 = vsel %vm5572, %v5547, %v5549
  %v5581 = vsel %vm5572, %v5549, %v5551
  %v5582 = vsel %vm5572, %v5553, %v5555
  %v5583 = vsel %vm5572, %v5555, %v5557
  %v5584 = vsel %vm5572, %v5557, %v5559
  %v5585 = vsel %vm5572, %v5559, %v5561
  %v5586 = vsel %vm5572, %v5561, %v5563
  %v5587 = vsel %vm5572, %v5563, %v5565
  %v5588 = vsel %vm5572, %v5565, %v5567
  %v5589 = vsel %vm5572, %v5567, %v5569
  %v5590 = vsel %vm5572, %v5569, %v5571
  %5611 = vst [vmem:[#allocation9 + $0x3c0] sm:$0xff] %v5573
  %5612 = vst [vmem:[#allocation9 + $0x3c8] sm:$0xff] %v5574
  %5613 = vst [vmem:[#allocation9 + $0x3d0] sm:$0xff] %v5575
  %5614 = vst [vmem:[#allocation9 + $0x3d8] sm:$0xff] %v5576
  %5615 = vst [vmem:[#allocation9 + $0x3e0] sm:$0xff] %v5577
  %5616 = vst [vmem:[#allocation9 + $0x3e8] sm:$0xff] %v5578
  %5617 = vst [vmem:[#allocation9 + $0x3f0] sm:$0xff] %v5579
  %5618 = vst [vmem:[#allocation9 + $0x3f8] sm:$0xff] %v5580
  %5619 = vst [vmem:[#allocation9 + $0x400] sm:$0xff] %v5581
  %5620 = vst.msk [vmem:[#allocation9 + $0x408] sm:$0xff] %vm4407, %v5551
  %5621 = vst [vmem:[#allocation9 + $0x410] sm:$0xff] %v5582
  %5622 = vst [vmem:[#allocation9 + $0x418] sm:$0xff] %v5583
  %5623 = vst [vmem:[#allocation9 + $0x420] sm:$0xff] %v5584
  %5624 = vst [vmem:[#allocation9 + $0x428] sm:$0xff] %v5585
  %5625 = vst [vmem:[#allocation9 + $0x430] sm:$0xff] %v5586
  %5626 = vst [vmem:[#allocation9 + $0x438] sm:$0xff] %v5587
  %5627 = vst [vmem:[#allocation9 + $0x440] sm:$0xff] %v5588
  %5628 = vst [vmem:[#allocation9 + $0x448] sm:$0xff] %v5589
  %5629 = vst [vmem:[#allocation9 + $0x450] sm:$0xff] %v5590
  %5630 = vst.msk [vmem:[#allocation9 + $0x458] sm:$0xff] %vm4407, %v5571
  %v5631 = vld [vmem:[#allocation5] sm:$0xff]
  %v5632 = vld [vmem:[#allocation5 + $0x8] sm:$0xff]
  %v5633 = vld [vmem:[#allocation5 + $0x10] sm:$0xff]
  %v5634 = vld [vmem:[#allocation5 + $0x18] sm:$0xff]
  %v5635 = vld [vmem:[#allocation5 + $0x20] sm:$0xff]
  %v5636 = vld [vmem:[#allocation5 + $0x28] sm:$0xff]
  %v5637 = vld [vmem:[#allocation5 + $0x30] sm:$0xff]
  %v5638 = vld [vmem:[#allocation5 + $0x38] sm:$0xff]
  %v5639 = vld [vmem:[#allocation5 + $0x40] sm:$0xff]
  %v5640 = vld [vmem:[#allocation5 + $0x48] sm:$0xff]
  %v5641 = vld [vmem:[#allocation5 + $0x50] sm:$0xff]
  %v5642 = vld [vmem:[#allocation5 + $0x58] sm:$0xff]
  %v5643 = vld [vmem:[#allocation5 + $0x60] sm:$0xff]
  %v5644 = vld [vmem:[#allocation5 + $0x68] sm:$0xff]
  %v5645 = vld [vmem:[#allocation5 + $0x70] sm:$0xff]
  %v5646 = vld [vmem:[#allocation5 + $0x78] sm:$0xff]
  %v5647 = vld [vmem:[#allocation5 + $0x80] sm:$0xff]
  %v5648 = vld [vmem:[#allocation5 + $0x88] sm:$0xff]
  %v5649 = vld [vmem:[#allocation5 + $0x90] sm:$0xff]
  %v5650 = vld [vmem:[#allocation5 + $0x98] sm:$0xff]
  %5671 = vrot.lane.b32.xlu0 %v5631, 59
  %v5672 = vpop.permute.xlu0 %5671
  %5673 = vrot.lane.b32.xlu0 %v5632, 59
  %v5674 = vpop.permute.xlu0 %5673
  %5675 = vrot.lane.b32.xlu0 %v5633, 59
  %v5676 = vpop.permute.xlu0 %5675
  %5677 = vrot.lane.b32.xlu0 %v5634, 59
  %v5678 = vpop.permute.xlu0 %5677
  %5679 = vrot.lane.b32.xlu0 %v5635, 59
  %v5680 = vpop.permute.xlu0 %5679
  %5681 = vrot.lane.b32.xlu0 %v5636, 59
  %v5682 = vpop.permute.xlu0 %5681
  %5683 = vrot.lane.b32.xlu0 %v5637, 59
  %v5684 = vpop.permute.xlu0 %5683
  %5685 = vrot.lane.b32.xlu0 %v5638, 59
  %v5686 = vpop.permute.xlu0 %5685
  %5687 = vrot.lane.b32.xlu0 %v5639, 59
  %v5688 = vpop.permute.xlu0 %5687
  %5689 = vrot.lane.b32.xlu0 %v5640, 59
  %v5690 = vpop.permute.xlu0 %5689
  %5691 = vrot.lane.b32.xlu0 %v5641, 59
  %v5692 = vpop.permute.xlu0 %5691
  %5693 = vrot.lane.b32.xlu0 %v5642, 59
  %v5694 = vpop.permute.xlu0 %5693
  %5695 = vrot.lane.b32.xlu0 %v5643, 59
  %v5696 = vpop.permute.xlu0 %5695
  %5697 = vrot.lane.b32.xlu0 %v5644, 59
  %v5698 = vpop.permute.xlu0 %5697
  %5699 = vrot.lane.b32.xlu0 %v5645, 59
  %v5700 = vpop.permute.xlu0 %5699
  %5701 = vrot.lane.b32.xlu0 %v5646, 59
  %v5702 = vpop.permute.xlu0 %5701
  %5703 = vrot.lane.b32.xlu0 %v5647, 59
  %v5704 = vpop.permute.xlu0 %5703
  %5705 = vrot.lane.b32.xlu0 %v5648, 59
  %v5706 = vpop.permute.xlu0 %5705
  %5707 = vrot.lane.b32.xlu0 %v5649, 59
  %v5708 = vpop.permute.xlu0 %5707
  %5709 = vrot.lane.b32.xlu0 %v5650, 59
  %v5710 = vpop.permute.xlu0 %5709
  %vm5711 = vcmask 482304
  %v5712 = vsel %vm5711, %v5672, %v5674
  %v5713 = vsel %vm5711, %v5674, %v5676
  %v5714 = vsel %vm5711, %v5676, %v5678
  %v5715 = vsel %vm5711, %v5678, %v5680
  %v5716 = vsel %vm5711, %v5680, %v5682
  %v5717 = vsel %vm5711, %v5682, %v5684
  %v5718 = vsel %vm5711, %v5684, %v5686
  %v5719 = vsel %vm5711, %v5686, %v5688
  %v5720 = vsel %vm5711, %v5688, %v5690
  %v5721 = vsel %vm5711, %v5692, %v5694
  %v5722 = vsel %vm5711, %v5694, %v5696
  %v5723 = vsel %vm5711, %v5696, %v5698
  %v5724 = vsel %vm5711, %v5698, %v5700
  %v5725 = vsel %vm5711, %v5700, %v5702
  %v5726 = vsel %vm5711, %v5702, %v5704
  %v5727 = vsel %vm5711, %v5704, %v5706
  %v5728 = vsel %vm5711, %v5706, %v5708
  %v5729 = vsel %vm5711, %v5708, %v5710
  %5750 = vst [vmem:[#allocation9 + $0x460] sm:$0xff] %v5712
  %5751 = vst [vmem:[#allocation9 + $0x468] sm:$0xff] %v5713
  %5752 = vst [vmem:[#allocation9 + $0x470] sm:$0xff] %v5714
  %5753 = vst [vmem:[#allocation9 + $0x478] sm:$0xff] %v5715
  %5754 = vst [vmem:[#allocation9 + $0x480] sm:$0xff] %v5716
  %5755 = vst [vmem:[#allocation9 + $0x488] sm:$0xff] %v5717
  %5756 = vst [vmem:[#allocation9 + $0x490] sm:$0xff] %v5718
  %5757 = vst [vmem:[#allocation9 + $0x498] sm:$0xff] %v5719
  %5758 = vst [vmem:[#allocation9 + $0x4a0] sm:$0xff] %v5720
  %5759 = vst.msk [vmem:[#allocation9 + $0x4a8] sm:$0xff] %vm4407, %v5690
  %5760 = vst [vmem:[#allocation9 + $0x4b0] sm:$0xff] %v5721
  %5761 = vst [vmem:[#allocation9 + $0x4b8] sm:$0xff] %v5722
  %5762 = vst [vmem:[#allocation9 + $0x4c0] sm:$0xff] %v5723
  %5763 = vst [vmem:[#allocation9 + $0x4c8] sm:$0xff] %v5724
  %5764 = vst [vmem:[#allocation9 + $0x4d0] sm:$0xff] %v5725
  %5765 = vst [vmem:[#allocation9 + $0x4d8] sm:$0xff] %v5726
  %5766 = vst [vmem:[#allocation9 + $0x4e0] sm:$0xff] %v5727
  %5767 = vst [vmem:[#allocation9 + $0x4e8] sm:$0xff] %v5728
  %5768 = vst [vmem:[#allocation9 + $0x4f0] sm:$0xff] %v5729
  %5769 = vst.msk [vmem:[#allocation9 + $0x4f8] sm:$0xff] %vm4407, %v5710
  %v5770 = vld [vmem:[#allocation5] sm:$0xff]
  %v5771 = vld [vmem:[#allocation5 + $0x8] sm:$0xff]
  %v5772 = vld [vmem:[#allocation5 + $0x10] sm:$0xff]
  %v5773 = vld [vmem:[#allocation5 + $0x18] sm:$0xff]
  %v5774 = vld [vmem:[#allocation5 + $0x20] sm:$0xff]
  %v5775 = vld [vmem:[#allocation5 + $0x28] sm:$0xff]
  %v5776 = vld [vmem:[#allocation5 + $0x30] sm:$0xff]
  %v5777 = vld [vmem:[#allocation5 + $0x38] sm:$0xff]
  %v5778 = vld [vmem:[#allocation5 + $0x40] sm:$0xff]
  %v5779 = vld [vmem:[#allocation5 + $0x48] sm:$0xff]
  %v5780 = vld [vmem:[#allocation5 + $0x50] sm:$0xff]
  %v5781 = vld [vmem:[#allocation5 + $0x58] sm:$0xff]
  %v5782 = vld [vmem:[#allocation5 + $0x60] sm:$0xff]
  %v5783 = vld [vmem:[#allocation5 + $0x68] sm:$0xff]
  %v5784 = vld [vmem:[#allocation5 + $0x70] sm:$0xff]
  %v5785 = vld [vmem:[#allocation5 + $0x78] sm:$0xff]
  %v5786 = vld [vmem:[#allocation5 + $0x80] sm:$0xff]
  %v5787 = vld [vmem:[#allocation5 + $0x88] sm:$0xff]
  %v5788 = vld [vmem:[#allocation5 + $0x90] sm:$0xff]
  %v5789 = vld [vmem:[#allocation5 + $0x98] sm:$0xff]
  %5810 = vrot.lane.b32.xlu0 %v5770, 58
  %v5811 = vpop.permute.xlu0 %5810
  %5812 = vrot.lane.b32.xlu0 %v5771, 58
  %v5813 = vpop.permute.xlu0 %5812
  %5814 = vrot.lane.b32.xlu0 %v5772, 58
  %v5815 = vpop.permute.xlu0 %5814
  %5816 = vrot.lane.b32.xlu0 %v5773, 58
  %v5817 = vpop.permute.xlu0 %5816
  %5818 = vrot.lane.b32.xlu0 %v5774, 58
  %v5819 = vpop.permute.xlu0 %5818
  %5820 = vrot.lane.b32.xlu0 %v5775, 58
  %v5821 = vpop.permute.xlu0 %5820
  %5822 = vrot.lane.b32.xlu0 %v5776, 58
  %v5823 = vpop.permute.xlu0 %5822
  %5824 = vrot.lane.b32.xlu0 %v5777, 58
  %v5825 = vpop.permute.xlu0 %5824
  %5826 = vrot.lane.b32.xlu0 %v5778, 58
  %v5827 = vpop.permute.xlu0 %5826
  %5828 = vrot.lane.b32.xlu0 %v5779, 58
  %v5829 = vpop.permute.xlu0 %5828
  %5830 = vrot.lane.b32.xlu0 %v5780, 58
  %v5831 = vpop.permute.xlu0 %5830
  %5832 = vrot.lane.b32.xlu0 %v5781, 58
  %v5833 = vpop.permute.xlu0 %5832
  %5834 = vrot.lane.b32.xlu0 %v5782, 58
  %v5835 = vpop.permute.xlu0 %5834
  %5836 = vrot.lane.b32.xlu0 %v5783, 58
  %v5837 = vpop.permute.xlu0 %5836
  %5838 = vrot.lane.b32.xlu0 %v5784, 58
  %v5839 = vpop.permute.xlu0 %5838
  %5840 = vrot.lane.b32.xlu0 %v5785, 58
  %v5841 = vpop.permute.xlu0 %5840
  %5842 = vrot.lane.b32.xlu0 %v5786, 58
  %v5843 = vpop.permute.xlu0 %5842
  %5844 = vrot.lane.b32.xlu0 %v5787, 58
  %v5845 = vpop.permute.xlu0 %5844
  %5846 = vrot.lane.b32.xlu0 %v5788, 58
  %v5847 = vpop.permute.xlu0 %5846
  %5848 = vrot.lane.b32.xlu0 %v5789, 58
  %v5849 = vpop.permute.xlu0 %5848
  %vm5850 = vcmask 474112
  %v5851 = vsel %vm5850, %v5811, %v5813
  %v5852 = vsel %vm5850, %v5813, %v5815
  %v5853 = vsel %vm5850, %v5815, %v5817
  %v5854 = vsel %vm5850, %v5817, %v5819
  %v5855 = vsel %vm5850, %v5819, %v5821
  %v5856 = vsel %vm5850, %v5821, %v5823
  %v5857 = vsel %vm5850, %v5823, %v5825
  %v5858 = vsel %vm5850, %v5825, %v5827
  %v5859 = vsel %vm5850, %v5827, %v5829
  %v5860 = vsel %vm5850, %v5831, %v5833
  %v5861 = vsel %vm5850, %v5833, %v5835
  %v5862 = vsel %vm5850, %v5835, %v5837
  %v5863 = vsel %vm5850, %v5837, %v5839
  %v5864 = vsel %vm5850, %v5839, %v5841
  %v5865 = vsel %vm5850, %v5841, %v5843
  %v5866 = vsel %vm5850, %v5843, %v5845
  %v5867 = vsel %vm5850, %v5845, %v5847
  %v5868 = vsel %vm5850, %v5847, %v5849
  %5889 = vst [vmem:[#allocation9 + $0x500] sm:$0xff] %v5851
  %5890 = vst [vmem:[#allocation9 + $0x508] sm:$0xff] %v5852
  %5891 = vst [vmem:[#allocation9 + $0x510] sm:$0xff] %v5853
  %5892 = vst [vmem:[#allocation9 + $0x518] sm:$0xff] %v5854
  %5893 = vst [vmem:[#allocation9 + $0x520] sm:$0xff] %v5855
  %5894 = vst [vmem:[#allocation9 + $0x528] sm:$0xff] %v5856
  %5895 = vst [vmem:[#allocation9 + $0x530] sm:$0xff] %v5857
  %5896 = vst [vmem:[#allocation9 + $0x538] sm:$0xff] %v5858
  %5897 = vst [vmem:[#allocation9 + $0x540] sm:$0xff] %v5859
  %5898 = vst.msk [vmem:[#allocation9 + $0x548] sm:$0xff] %vm4407, %v5829
  %5899 = vst [vmem:[#allocation9 + $0x550] sm:$0xff] %v5860
  %5900 = vst [vmem:[#allocation9 + $0x558] sm:$0xff] %v5861
  %5901 = vst [vmem:[#allocation9 + $0x560] sm:$0xff] %v5862
  %5902 = vst [vmem:[#allocation9 + $0x568] sm:$0xff] %v5863
  %5903 = vst [vmem:[#allocation9 + $0x570] sm:$0xff] %v5864
  %5904 = vst [vmem:[#allocation9 + $0x578] sm:$0xff] %v5865
  %5905 = vst [vmem:[#allocation9 + $0x580] sm:$0xff] %v5866
  %5906 = vst [vmem:[#allocation9 + $0x588] sm:$0xff] %v5867
  %5907 = vst [vmem:[#allocation9 + $0x590] sm:$0xff] %v5868
  %5908 = vst.msk [vmem:[#allocation9 + $0x598] sm:$0xff] %vm4407, %v5849
  %v5909 = vld [vmem:[#allocation9] sm:$0xff]
  %v5910 = vld [vmem:[#allocation9 + $0x8] sm:$0xff]
  %v5911 = vld [vmem:[#allocation9 + $0x10] sm:$0xff]
  %v5912 = vld [vmem:[#allocation9 + $0x18] sm:$0xff]
  %v5913 = vld [vmem:[#allocation9 + $0x20] sm:$0xff]
  %v5914 = vld [vmem:[#allocation9 + $0x28] sm:$0xff]
  %v5915 = vld [vmem:[#allocation9 + $0x30] sm:$0xff]
  %v5916 = vld [vmem:[#allocation9 + $0x38] sm:$0xff]
  %v5917 = vld [vmem:[#allocation9 + $0x40] sm:$0xff]
  %v5918 = vld [vmem:[#allocation9 + $0x48] sm:$0xff]
  %v5919 = vld [vmem:[#allocation9 + $0x50] sm:$0xff]
  %v5920 = vld [vmem:[#allocation9 + $0x58] sm:$0xff]
  %v5921 = vld [vmem:[#allocation9 + $0x60] sm:$0xff]
  %v5922 = vld [vmem:[#allocation9 + $0x68] sm:$0xff]
  %v5923 = vld [vmem:[#allocation9 + $0x70] sm:$0xff]
  %v5924 = vld [vmem:[#allocation9 + $0x78] sm:$0xff]
  %v5925 = vld [vmem:[#allocation9 + $0x80] sm:$0xff]
  %v5926 = vld [vmem:[#allocation9 + $0x88] sm:$0xff]
  %v5927 = vld [vmem:[#allocation9 + $0x90] sm:$0xff]
  %v5928 = vld [vmem:[#allocation9 + $0x98] sm:$0xff]
  %v5929 = vld [vmem:[#allocation9 + $0xa0] sm:$0xff]
  %v5930 = vld [vmem:[#allocation9 + $0xa8] sm:$0xff]
  %v5931 = vld [vmem:[#allocation9 + $0xb0] sm:$0xff]
  %v5932 = vld [vmem:[#allocation9 + $0xb8] sm:$0xff]
  %v5933 = vld [vmem:[#allocation9 + $0xc0] sm:$0xff]
  %v5934 = vld [vmem:[#allocation9 + $0xc8] sm:$0xff]
  %v5935 = vld [vmem:[#allocation9 + $0xd0] sm:$0xff]
  %v5936 = vld [vmem:[#allocation9 + $0xd8] sm:$0xff]
  %v5937 = vld [vmem:[#allocation9 + $0xe0] sm:$0xff]
  %v5938 = vld [vmem:[#allocation9 + $0xe8] sm:$0xff]
  %v5939 = vld [vmem:[#allocation9 + $0xf0] sm:$0xff]
  %v5940 = vld [vmem:[#allocation9 + $0xf8] sm:$0xff]
  %v5941 = vld [vmem:[#allocation9 + $0x100] sm:$0xff]
  %v5942 = vld [vmem:[#allocation9 + $0x108] sm:$0xff]
  %v5943 = vld [vmem:[#allocation9 + $0x110] sm:$0xff]
  %v5944 = vld [vmem:[#allocation9 + $0x118] sm:$0xff]
  %v5945 = vld [vmem:[#allocation9 + $0x120] sm:$0xff]
  %v5946 = vld [vmem:[#allocation9 + $0x128] sm:$0xff]
  %v5947 = vld [vmem:[#allocation9 + $0x130] sm:$0xff]
  %v5948 = vld [vmem:[#allocation9 + $0x138] sm:$0xff]
  %v5949 = vld [vmem:[#allocation9 + $0x140] sm:$0xff]
  %v5950 = vld [vmem:[#allocation9 + $0x148] sm:$0xff]
  %v5951 = vld [vmem:[#allocation9 + $0x150] sm:$0xff]
  %v5952 = vld [vmem:[#allocation9 + $0x158] sm:$0xff]
  %v5953 = vld [vmem:[#allocation9 + $0x160] sm:$0xff]
  %v5954 = vld [vmem:[#allocation9 + $0x168] sm:$0xff]
  %v5955 = vld [vmem:[#allocation9 + $0x170] sm:$0xff]
  %v5956 = vld [vmem:[#allocation9 + $0x178] sm:$0xff]
  %v5957 = vld [vmem:[#allocation9 + $0x180] sm:$0xff]
  %v5958 = vld [vmem:[#allocation9 + $0x188] sm:$0xff]
  %v5959 = vld [vmem:[#allocation9 + $0x190] sm:$0xff]
  %v5960 = vld [vmem:[#allocation9 + $0x198] sm:$0xff]
  %v5961 = vld [vmem:[#allocation9 + $0x1a0] sm:$0xff]
  %v5962 = vld [vmem:[#allocation9 + $0x1a8] sm:$0xff]
  %v5963 = vld [vmem:[#allocation9 + $0x1b0] sm:$0xff]
  %v5964 = vld [vmem:[#allocation9 + $0x1b8] sm:$0xff]
  %v5965 = vld [vmem:[#allocation9 + $0x1c0] sm:$0xff]
  %v5966 = vld [vmem:[#allocation9 + $0x1c8] sm:$0xff]
  %v5967 = vld [vmem:[#allocation9 + $0x1d0] sm:$0xff]
  %v5968 = vld [vmem:[#allocation9 + $0x1d8] sm:$0xff]
  %v5969 = vld [vmem:[#allocation9 + $0x1e0] sm:$0xff]
  %v5970 = vld [vmem:[#allocation9 + $0x1e8] sm:$0xff]
  %v5971 = vld [vmem:[#allocation9 + $0x1f0] sm:$0xff]
  %v5972 = vld [vmem:[#allocation9 + $0x1f8] sm:$0xff]
  %v5973 = vld [vmem:[#allocation9 + $0x200] sm:$0xff]
  %v5974 = vld [vmem:[#allocation9 + $0x208] sm:$0xff]
  %v5975 = vld [vmem:[#allocation9 + $0x210] sm:$0xff]
  %v5976 = vld [vmem:[#allocation9 + $0x218] sm:$0xff]
  %v5977 = vld [vmem:[#allocation9 + $0x220] sm:$0xff]
  %v5978 = vld [vmem:[#allocation9 + $0x228] sm:$0xff]
  %v5979 = vld [vmem:[#allocation9 + $0x230] sm:$0xff]
  %v5980 = vld [vmem:[#allocation9 + $0x238] sm:$0xff]
  %v5981 = vld [vmem:[#allocation9 + $0x240] sm:$0xff]
  %v5982 = vld [vmem:[#allocation9 + $0x248] sm:$0xff]
  %v5983 = vld [vmem:[#allocation9 + $0x250] sm:$0xff]
  %v5984 = vld [vmem:[#allocation9 + $0x258] sm:$0xff]
  %v5985 = vld [vmem:[#allocation9 + $0x260] sm:$0xff]
  %v5986 = vld [vmem:[#allocation9 + $0x268] sm:$0xff]
  %v5987 = vld [vmem:[#allocation9 + $0x270] sm:$0xff]
  %v5988 = vld [vmem:[#allocation9 + $0x278] sm:$0xff]
  %v5989 = vld [vmem:[#allocation9 + $0x280] sm:$0xff]
  %v5990 = vld [vmem:[#allocation9 + $0x288] sm:$0xff]
  %v5991 = vld [vmem:[#allocation9 + $0x290] sm:$0xff]
  %v5992 = vld [vmem:[#allocation9 + $0x298] sm:$0xff]
  %v5993 = vld [vmem:[#allocation9 + $0x2a0] sm:$0xff]
  %v5994 = vld [vmem:[#allocation9 + $0x2a8] sm:$0xff]
  %v5995 = vld [vmem:[#allocation9 + $0x2b0] sm:$0xff]
  %v5996 = vld [vmem:[#allocation9 + $0x2b8] sm:$0xff]
  %v5997 = vld [vmem:[#allocation9 + $0x2c0] sm:$0xff]
  %v5998 = vld [vmem:[#allocation9 + $0x2c8] sm:$0xff]
  %v5999 = vld [vmem:[#allocation9 + $0x2d0] sm:$0xff]
  %v6000 = vld [vmem:[#allocation9 + $0x2d8] sm:$0xff]
  %v6001 = vld [vmem:[#allocation9 + $0x2e0] sm:$0xff]
  %v6002 = vld [vmem:[#allocation9 + $0x2e8] sm:$0xff]
  %v6003 = vld [vmem:[#allocation9 + $0x2f0] sm:$0xff]
  %v6004 = vld [vmem:[#allocation9 + $0x2f8] sm:$0xff]
  %v6005 = vld [vmem:[#allocation9 + $0x300] sm:$0xff]
  %v6006 = vld [vmem:[#allocation9 + $0x308] sm:$0xff]
  %v6007 = vld [vmem:[#allocation9 + $0x310] sm:$0xff]
  %v6008 = vld [vmem:[#allocation9 + $0x318] sm:$0xff]
  %v6009 = vld [vmem:[#allocation9 + $0x320] sm:$0xff]
  %v6010 = vld [vmem:[#allocation9 + $0x328] sm:$0xff]
  %v6011 = vld [vmem:[#allocation9 + $0x330] sm:$0xff]
  %v6012 = vld [vmem:[#allocation9 + $0x338] sm:$0xff]
  %v6013 = vld [vmem:[#allocation9 + $0x340] sm:$0xff]
  %v6014 = vld [vmem:[#allocation9 + $0x348] sm:$0xff]
  %v6015 = vld [vmem:[#allocation9 + $0x350] sm:$0xff]
  %v6016 = vld [vmem:[#allocation9 + $0x358] sm:$0xff]
  %v6017 = vld [vmem:[#allocation9 + $0x360] sm:$0xff]
  %v6018 = vld [vmem:[#allocation9 + $0x368] sm:$0xff]
  %v6019 = vld [vmem:[#allocation9 + $0x370] sm:$0xff]
  %v6020 = vld [vmem:[#allocation9 + $0x378] sm:$0xff]
  %v6021 = vld [vmem:[#allocation9 + $0x380] sm:$0xff]
  %v6022 = vld [vmem:[#allocation9 + $0x388] sm:$0xff]
  %v6023 = vld [vmem:[#allocation9 + $0x390] sm:$0xff]
  %v6024 = vld [vmem:[#allocation9 + $0x398] sm:$0xff]
  %v6025 = vld [vmem:[#allocation9 + $0x3a0] sm:$0xff]
  %v6026 = vld [vmem:[#allocation9 + $0x3a8] sm:$0xff]
  %v6027 = vld [vmem:[#allocation9 + $0x3b0] sm:$0xff]
  %v6028 = vld [vmem:[#allocation9 + $0x3b8] sm:$0xff]
  %v6029 = vld [vmem:[#allocation9 + $0x3c0] sm:$0xff]
  %v6030 = vld [vmem:[#allocation9 + $0x3c8] sm:$0xff]
  %v6031 = vld [vmem:[#allocation9 + $0x3d0] sm:$0xff]
  %v6032 = vld [vmem:[#allocation9 + $0x3d8] sm:$0xff]
  %v6033 = vld [vmem:[#allocation9 + $0x3e0] sm:$0xff]
  %v6034 = vld [vmem:[#allocation9 + $0x3e8] sm:$0xff]
  %v6035 = vld [vmem:[#allocation9 + $0x3f0] sm:$0xff]
  %v6036 = vld [vmem:[#allocation9 + $0x3f8] sm:$0xff]
  %v6037 = vld [vmem:[#allocation9 + $0x400] sm:$0xff]
  %v6038 = vld [vmem:[#allocation9 + $0x408] sm:$0xff]
  %v6039 = vld [vmem:[#allocation9 + $0x410] sm:$0xff]
  %v6040 = vld [vmem:[#allocation9 + $0x418] sm:$0xff]
  %v6041 = vld [vmem:[#allocation9 + $0x420] sm:$0xff]
  %v6042 = vld [vmem:[#allocation9 + $0x428] sm:$0xff]
  %v6043 = vld [vmem:[#allocation9 + $0x430] sm:$0xff]
  %v6044 = vld [vmem:[#allocation9 + $0x438] sm:$0xff]
  %v6045 = vld [vmem:[#allocation9 + $0x440] sm:$0xff]
  %v6046 = vld [vmem:[#allocation9 + $0x448] sm:$0xff]
  %v6047 = vld [vmem:[#allocation9 + $0x450] sm:$0xff]
  %v6048 = vld [vmem:[#allocation9 + $0x458] sm:$0xff]
  %v6049 = vld [vmem:[#allocation9 + $0x460] sm:$0xff]
  %v6050 = vld [vmem:[#allocation9 + $0x468] sm:$0xff]
  %v6051 = vld [vmem:[#allocation9 + $0x470] sm:$0xff]
  %v6052 = vld [vmem:[#allocation9 + $0x478] sm:$0xff]
  %v6053 = vld [vmem:[#allocation9 + $0x480] sm:$0xff]
  %v6054 = vld [vmem:[#allocation9 + $0x488] sm:$0xff]
  %v6055 = vld [vmem:[#allocation9 + $0x490] sm:$0xff]
  %v6056 = vld [vmem:[#allocation9 + $0x498] sm:$0xff]
  %v6057 = vld [vmem:[#allocation9 + $0x4a0] sm:$0xff]
  %v6058 = vld [vmem:[#allocation9 + $0x4a8] sm:$0xff]
  %v6059 = vld [vmem:[#allocation9 + $0x4b0] sm:$0xff]
  %v6060 = vld [vmem:[#allocation9 + $0x4b8] sm:$0xff]
  %v6061 = vld [vmem:[#allocation9 + $0x4c0] sm:$0xff]
  %v6062 = vld [vmem:[#allocation9 + $0x4c8] sm:$0xff]
  %v6063 = vld [vmem:[#allocation9 + $0x4d0] sm:$0xff]
  %v6064 = vld [vmem:[#allocation9 + $0x4d8] sm:$0xff]
  %v6065 = vld [vmem:[#allocation9 + $0x4e0] sm:$0xff]
  %v6066 = vld [vmem:[#allocation9 + $0x4e8] sm:$0xff]
  %v6067 = vld [vmem:[#allocation9 + $0x4f0] sm:$0xff]
  %v6068 = vld [vmem:[#allocation9 + $0x4f8] sm:$0xff]
  %v6069 = vld [vmem:[#allocation9 + $0x500] sm:$0xff]
  %v6070 = vld [vmem:[#allocation9 + $0x508] sm:$0xff]
  %v6071 = vld [vmem:[#allocation9 + $0x510] sm:$0xff]
  %v6072 = vld [vmem:[#allocation9 + $0x518] sm:$0xff]
  %v6073 = vld [vmem:[#allocation9 + $0x520] sm:$0xff]
  %v6074 = vld [vmem:[#allocation9 + $0x528] sm:$0xff]
  %v6075 = vld [vmem:[#allocation9 + $0x530] sm:$0xff]
  %v6076 = vld [vmem:[#allocation9 + $0x538] sm:$0xff]
  %v6077 = vld [vmem:[#allocation9 + $0x540] sm:$0xff]
  %v6078 = vld [vmem:[#allocation9 + $0x548] sm:$0xff]
  %v6079 = vld [vmem:[#allocation9 + $0x550] sm:$0xff]
  %v6080 = vld [vmem:[#allocation9 + $0x558] sm:$0xff]
  %v6081 = vld [vmem:[#allocation9 + $0x560] sm:$0xff]
  %v6082 = vld [vmem:[#allocation9 + $0x568] sm:$0xff]
  %v6083 = vld [vmem:[#allocation9 + $0x570] sm:$0xff]
  %v6084 = vld [vmem:[#allocation9 + $0x578] sm:$0xff]
  %v6085 = vld [vmem:[#allocation9 + $0x580] sm:$0xff]
  %v6086 = vld [vmem:[#allocation9 + $0x588] sm:$0xff]
  %v6087 = vld [vmem:[#allocation9 + $0x590] sm:$0xff]
  %v6088 = vld [vmem:[#allocation9 + $0x598] sm:$0xff]
  %v6097 = vunpack.c.l.b16 %v4748
  %v6098 = vunpack.c.h.b16 %v4748
  %v6099 = vunpack.c.l.b16 %v4749
  %v6100 = vunpack.c.l.b16 %v4750
  %v6101 = vunpack.c.h.b16 %v4750
  %v6102 = vunpack.c.l.b16 %v4751
  %v6103 = vunpack.c.l.b16 %v4752
  %v6104 = vunpack.c.h.b16 %v4752
  %v6105 = vunpack.c.l.b16 %v4753
  %v6106 = vunpack.c.l.b16 %v4754
  %v6107 = vunpack.c.h.b16 %v4754
  %v6108 = vunpack.c.l.b16 %v4755
  %v6109 = vpack.c.b16 %v6100, %v6097
  %v6110 = vpack.c.b16 %v6101, %v6098
  %v6111 = vpack.c.b16 %v6102, %v6099
  %v6112 = vpack.c.b16 %v6106, %v6103
  %v6113 = vpack.c.b16 %v6107, %v6104
  %v6114 = vpack.c.b16 %v6108, %v6105
  %v6120 = vsel %vm1074, %v6111, 0
  %v6123 = vsel %vm1074, %v6114, 0
  %6125 = vmatprep.subr.bf16.mxu0 %v5910
  %6126 = vmatpush1.bf16.msra.mxu0 %v5909
  %6127 = vmatprep.subr.bf16.mxu0 %v5920
  %6128 = vmatpush1.bf16.msra.mxu0 %v5919
  %6129 = vmatprep.subr.bf16.mxu0 %v5930
  %6130 = vmatpush1.bf16.msra.mxu0 %v5929
  %6131 = vmatprep.subr.bf16.mxu0 %v5940
  %6132 = vmatpush1.bf16.msra.mxu0 %v5939
  %6133 = vmatprep.subr.bf16.mxu0 %v5950
  %6134 = vmatpush1.bf16.msra.mxu0 %v5949
  %6135 = vmatprep.subr.bf16.mxu0 %v5960
  %6136 = vmatpush1.bf16.msra.mxu0 %v5959
  %6137 = vmatprep.subr.bf16.mxu0 %v5970
  %6138 = vmatpush1.bf16.msra.mxu0 %v5969
  %6139 = vmatprep.subr.bf16.mxu0 %v5980
  %6140 = vmatpush1.bf16.msra.mxu0 %v5979
  %6141 = vmatprep.subr.bf16.mxu0 %v5990
  %6142 = vmatpush1.bf16.msra.mxu0 %v5989
  %6143 = vmatprep.subr.bf16.mxu0 %v6000
  %6144 = vmatpush1.bf16.msra.mxu0 %v5999
  %6145 = vmatprep.subr.bf16.mxu0 %v6010
  %6146 = vmatpush1.bf16.msra.mxu0 %v6009
  %6147 = vmatprep.subr.bf16.mxu0 %v6020
  %6148 = vmatpush1.bf16.msra.mxu0 %v6019
  %6149 = vmatprep.subr.bf16.mxu0 %v6030
  %6150 = vmatpush1.bf16.msra.mxu0 %v6029
  %6151 = vmatprep.subr.bf16.mxu0 %v6040
  %6152 = vmatpush1.bf16.msra.mxu0 %v6039
  %6153 = vmatprep.subr.bf16.mxu0 %v6050
  %6154 = vmatpush1.bf16.msra.mxu0 %v6049
  %6155 = vmatprep.subr.bf16.mxu0 %v6060
  %6156 = vmatpush1.bf16.msra.mxu0 %v6059
  %6157 = vmatprep.mubr.bf16.mxu0 %v6110
  %6158 = vmatmul.mubr.bf16.gmra.mrb[0].mxu0 %v6109
  %v6159 = vpop.f32.mrb[0].mxu0
  %v6160 = vadd.f32 0.0, %v6159
  %v6161 = vpop.f32.mrb[0].mxu0
  %v6162 = vadd.f32 0.0, %v6161
  %v6163 = vpop.f32.mrb[0].mxu0
  %v6164 = vadd.f32 0.0, %v6163
  %v6165 = vpop.f32.mrb[0].mxu0
  %v6166 = vadd.f32 0.0, %v6165
  %6167 = vmatprep.mubr.bf16.mxu0 %v6113
  %6168 = vmatmul.mubr.bf16.gmra.mrb[0].mxu0 %v6112
  %v6169 = vpop.f32.mrb[0].mxu0
  %v6170 = vadd.f32 0.0, %v6169
  %v6171 = vpop.f32.mrb[0].mxu0
  %v6172 = vadd.f32 0.0, %v6171
  %v6173 = vpop.f32.mrb[0].mxu0
  %v6174 = vadd.f32 0.0, %v6173
  %v6175 = vpop.f32.mrb[0].mxu0
  %v6176 = vadd.f32 0.0, %v6175
  %6177 = vdwg.mxu0
  %6178 = vmatprep.subr.bf16.mxu0 %v6070
  %6179 = vmatpush1.bf16.msra.mxu0 %v6069
  %6180 = vmatprep.subr.bf16.mxu0 %v6080
  %6181 = vmatpush1.bf16.msra.mxu0 %v6079
  %6182 = vmatprep.subr.bf16.mxu0 0
  %6183 = vmatpush1.bf16.msra.mxu0 0
  %6184 = vmatprep.subr.bf16.mxu0 0
  %6185 = vmatpush1.bf16.msra.mxu0 0
  %6186 = vmatprep.subr.bf16.mxu0 0
  %6187 = vmatpush1.bf16.msra.mxu0 0
  %6188 = vmatprep.subr.bf16.mxu0 0
  %6189 = vmatpush1.bf16.msra.mxu0 0
  %6190 = vmatprep.subr.bf16.mxu0 0
  %6191 = vmatpush1.bf16.msra.mxu0 0
  %6192 = vmatprep.subr.bf16.mxu0 0
  %6193 = vmatpush1.bf16.msra.mxu0 0
  %6194 = vmatprep.subr.bf16.mxu0 0
  %6195 = vmatpush1.bf16.msra.mxu0 0
  %6196 = vmatprep.subr.bf16.mxu0 0
  %6197 = vmatpush1.bf16.msra.mxu0 0
  %6198 = vmatprep.subr.bf16.mxu0 0
  %6199 = vmatpush1.bf16.msra.mxu0 0
  %6200 = vmatprep.subr.bf16.mxu0 0
  %6201 = vmatpush1.bf16.msra.mxu0 0
  %6202 = vmatprep.subr.bf16.mxu0 0
  %6203 = vmatpush1.bf16.msra.mxu0 0
  %6204 = vmatprep.subr.bf16.mxu0 0
  %6205 = vmatpush1.bf16.msra.mxu0 0
  %6206 = vmatprep.subr.bf16.mxu0 0
  %6207 = vmatpush1.bf16.msra.mxu0 0
  %6208 = vmatprep.subr.bf16.mxu0 0
  %6209 = vmatpush1.bf16.msra.mxu0 0
  %6210 = vmatprep.mubr.bf16.mxu0 0
  %6211 = vmatmul.mubr.bf16.gmra.mrb[0].mxu0 %v6120
  %v6212 = vpop.f32.mrb[0].mxu0
  %v6213 = vadd.f32 %v6160, %v6212
  %v6214 = vpop.f32.mrb[0].mxu0
  %v6215 = vadd.f32 %v6162, %v6214
  %v6216 = vpop.f32.mrb[0].mxu0
  %v6217 = vadd.f32 %v6164, %v6216
  %v6218 = vpop.f32.mrb[0].mxu0
  %v6219 = vadd.f32 %v6166, %v6218
  %6220 = vmatprep.mubr.bf16.mxu0 0
  %6221 = vmatmul.mubr.bf16.gmra.mrb[0].mxu0 %v6123
  %v6222 = vpop.f32.mrb[0].mxu0
  %v6223 = vadd.f32 %v6170, %v6222
  %v6224 = vpop.f32.mrb[0].mxu0
  %v6225 = vadd.f32 %v6172, %v6224
  %v6226 = vpop.f32.mrb[0].mxu0
  %v6227 = vadd.f32 %v6174, %v6226
  %v6228 = vpop.f32.mrb[0].mxu0
  %v6229 = vadd.f32 %v6176, %v6228
  %6230 = vdwg.mxu0
  %6231 = vmatprep.subr.bf16.mxu0 %v5912
  %6232 = vmatpush1.bf16.msra.mxu0 %v5911
  %6233 = vmatprep.subr.bf16.mxu0 %v5922
  %6234 = vmatpush1.bf16.msra.mxu0 %v5921
  %6235 = vmatprep.subr.bf16.mxu0 %v5932
  %6236 = vmatpush1.bf16.msra.mxu0 %v5931
  %6237 = vmatprep.subr.bf16.mxu0 %v5942
  %6238 = vmatpush1.bf16.msra.mxu0 %v5941
  %6239 = vmatprep.subr.bf16.mxu0 %v5952
  %6240 = vmatpush1.bf16.msra.mxu0 %v5951
  %6241 = vmatprep.subr.bf16.mxu0 %v5962
  %6242 = vmatpush1.bf16.msra.mxu0 %v5961
  %6243 = vmatprep.subr.bf16.mxu0 %v5972
  %6244 = vmatpush1.bf16.msra.mxu0 %v5971
  %6245 = vmatprep.subr.bf16.mxu0 %v5982
  %6246 = vmatpush1.bf16.msra.mxu0 %v5981
  %6247 = vmatprep.subr.bf16.mxu0 %v5992
  %6248 = vmatpush1.bf16.msra.mxu0 %v5991
  %6249 = vmatprep.subr.bf16.mxu0 %v6002
  %6250 = vmatpush1.bf16.msra.mxu0 %v6001
  %6251 = vmatprep.subr.bf16.mxu0 %v6012
  %6252 = vmatpush1.bf16.msra.mxu0 %v6011
  %6253 = vmatprep.subr.bf16.mxu0 %v6022
  %6254 = vmatpush1.bf16.msra.mxu0 %v6021
  %6255 = vmatprep.subr.bf16.mxu0 %v6032
  %6256 = vmatpush1.bf16.msra.mxu0 %v6031
  %6257 = vmatprep.subr.bf16.mxu0 %v6042
  %6258 = vmatpush1.bf16.msra.mxu0 %v6041
  %6259 = vmatprep.subr.bf16.mxu0 %v6052
  %6260 = vmatpush1.bf16.msra.mxu0 %v6051
  %6261 = vmatprep.subr.bf16.mxu0 %v6062
  %6262 = vmatpush1.bf16.msra.mxu0 %v6061
  %6263 = vmatprep.mubr.bf16.mxu0 %v6110
  %6264 = vmatmul.mubr.bf16.gmra.mrb[0].mxu0 %v6109
  %v6265 = vpop.f32.mrb[0].mxu0
  %v6266 = vadd.f32 0.0, %v6265
  %v6267 = vpop.f32.mrb[0].mxu0
  %v6268 = vadd.f32 0.0, %v6267
  %v6269 = vpop.f32.mrb[0].mxu0
  %v6270 = vadd.f32 0.0, %v6269
  %v6271 = vpop.f32.mrb[0].mxu0
  %v6272 = vadd.f32 0.0, %v6271
  %6273 = vmatprep.mubr.bf16.mxu0 %v6113
  %6274 = vmatmul.mubr.bf16.gmra.mrb[0].mxu0 %v6112
  %v6275 = vpop.f32.mrb[0].mxu0
  %v6276 = vadd.f32 0.0, %v6275
  %v6277 = vpop.f32.mrb[0].mxu0
  %v6278 = vadd.f32 0.0, %v6277
  %v6279 = vpop.f32.mrb[0].mxu0
  %v6280 = vadd.f32 0.0, %v6279
  %v6281 = vpop.f32.mrb[0].mxu0
  %v6282 = vadd.f32 0.0, %v6281
  %6283 = vdwg.mxu0
  %6284 = vmatprep.subr.bf16.mxu0 %v6072
  %6285 = vmatpush1.bf16.msra.mxu0 %v6071
  %6286 = vmatprep.subr.bf16.mxu0 %v6082
  %6287 = vmatpush1.bf16.msra.mxu0 %v6081
  %6288 = vmatprep.subr.bf16.mxu0 0
  %6289 = vmatpush1.bf16.msra.mxu0 0
  %6290 = vmatprep.subr.bf16.mxu0 0
  %6291 = vmatpush1.bf16.msra.mxu0 0
  %6292 = vmatprep.subr.bf16.mxu0 0
  %6293 = vmatpush1.bf16.msra.mxu0 0
  %6294 = vmatprep.subr.bf16.mxu0 0
  %6295 = vmatpush1.bf16.msra.mxu0 0
  %6296 = vmatprep.subr.bf16.mxu0 0
  %6297 = vmatpush1.bf16.msra.mxu0 0
  %6298 = vmatprep.subr.bf16.mxu0 0
  %6299 = vmatpush1.bf16.msra.mxu0 0
  %6300 = vmatprep.subr.bf16.mxu0 0
  %6301 = vmatpush1.bf16.msra.mxu0 0
  %6302 = vmatprep.subr.bf16.mxu0 0
  %6303 = vmatpush1.bf16.msra.mxu0 0
  %6304 = vmatprep.subr.bf16.mxu0 0
  %6305 = vmatpush1.bf16.msra.mxu0 0
  %6306 = vmatprep.subr.bf16.mxu0 0
  %6307 = vmatpush1.bf16.msra.mxu0 0
  %6308 = vmatprep.subr.bf16.mxu0 0
  %6309 = vmatpush1.bf16.msra.mxu0 0
  %6310 = vmatprep.subr.bf16.mxu0 0
  %6311 = vmatpush1.bf16.msra.mxu0 0
  %6312 = vmatprep.subr.bf16.mxu0 0
  %6313 = vmatpush1.bf16.msra.mxu0 0
  %6314 = vmatprep.subr.bf16.mxu0 0
  %6315 = vmatpush1.bf16.msra.mxu0 0
  %6316 = vmatprep.mubr.bf16.mxu0 0
  %6317 = vmatmul.mubr.bf16.gmra.mrb[0].mxu0 %v6120
  %v6318 = vpop.f32.mrb[0].mxu0
  %v6319 = vadd.f32 %v6266, %v6318
  %v6320 = vpop.f32.mrb[0].mxu0
  %v6321 = vadd.f32 %v6268, %v6320
  %v6322 = vpop.f32.mrb[0].mxu0
  %v6323 = vadd.f32 %v6270, %v6322
  %v6324 = vpop.f32.mrb[0].mxu0
  %v6325 = vadd.f32 %v6272, %v6324
  %6326 = vmatprep.mubr.bf16.mxu0 0
  %6327 = vmatmul.mubr.bf16.gmra.mrb[0].mxu0 %v6123
  %v6328 = vpop.f32.mrb[0].mxu0
  %v6329 = vadd.f32 %v6276, %v6328
  %v6330 = vpop.f32.mrb[0].mxu0
  %v6331 = vadd.f32 %v6278, %v6330
  %v6332 = vpop.f32.mrb[0].mxu0
  %v6333 = vadd.f32 %v6280, %v6332
  %v6334 = vpop.f32.mrb[0].mxu0
  %v6335 = vadd.f32 %v6282, %v6334
  %6336 = vdwg.mxu0
  %6337 = vmatprep.subr.bf16.mxu0 %v5914
  %6338 = vmatpush1.bf16.msra.mxu0 %v5913
  %6339 = vmatprep.subr.bf16.mxu0 %v5924
  %6340 = vmatpush1.bf16.msra.mxu0 %v5923
  %6341 = vmatprep.subr.bf16.mxu0 %v5934
  %6342 = vmatpush1.bf16.msra.mxu0 %v5933
  %6343 = vmatprep.subr.bf16.mxu0 %v5944
  %6344 = vmatpush1.bf16.msra.mxu0 %v5943
  %6345 = vmatprep.subr.bf16.mxu0 %v5954
  %6346 = vmatpush1.bf16.msra.mxu0 %v5953
  %6347 = vmatprep.subr.bf16.mxu0 %v5964
  %6348 = vmatpush1.bf16.msra.mxu0 %v5963
  %6349 = vmatprep.subr.bf16.mxu0 %v5974
  %6350 = vmatpush1.bf16.msra.mxu0 %v5973
  %6351 = vmatprep.subr.bf16.mxu0 %v5984
  %6352 = vmatpush1.bf16.msra.mxu0 %v5983
  %6353 = vmatprep.subr.bf16.mxu0 %v5994
  %6354 = vmatpush1.bf16.msra.mxu0 %v5993
  %6355 = vmatprep.subr.bf16.mxu0 %v6004
  %6356 = vmatpush1.bf16.msra.mxu0 %v6003
  %6357 = vmatprep.subr.bf16.mxu0 %v6014
  %6358 = vmatpush1.bf16.msra.mxu0 %v6013
  %6359 = vmatprep.subr.bf16.mxu0 %v6024
  %6360 = vmatpush1.bf16.msra.mxu0 %v6023
  %6361 = vmatprep.subr.bf16.mxu0 %v6034
  %6362 = vmatpush1.bf16.msra.mxu0 %v6033
  %6363 = vmatprep.subr.bf16.mxu0 %v6044
  %6364 = vmatpush1.bf16.msra.mxu0 %v6043
  %6365 = vmatprep.subr.bf16.mxu0 %v6054
  %6366 = vmatpush1.bf16.msra.mxu0 %v6053
  %6367 = vmatprep.subr.bf16.mxu0 %v6064
  %6368 = vmatpush1.bf16.msra.mxu0 %v6063
  %6369 = vmatprep.mubr.bf16.mxu0 %v6110
  %6370 = vmatmul.mubr.bf16.gmra.mrb[0].mxu0 %v6109
  %v6371 = vpop.f32.mrb[0].mxu0
  %v6372 = vadd.f32 0.0, %v6371
  %v6373 = vpop.f32.mrb[0].mxu0
  %v6374 = vadd.f32 0.0, %v6373
  %v6375 = vpop.f32.mrb[0].mxu0
  %v6376 = vadd.f32 0.0, %v6375
  %v6377 = vpop.f32.mrb[0].mxu0
  %v6378 = vadd.f32 0.0, %v6377
  %6379 = vmatprep.mubr.bf16.mxu0 %v6113
  %6380 = vmatmul.mubr.bf16.gmra.mrb[0].mxu0 %v6112
  %v6381 = vpop.f32.mrb[0].mxu0
  %v6382 = vadd.f32 0.0, %v6381
  %v6383 = vpop.f32.mrb[0].mxu0
  %v6384 = vadd.f32 0.0, %v6383
  %v6385 = vpop.f32.mrb[0].mxu0
  %v6386 = vadd.f32 0.0, %v6385
  %v6387 = vpop.f32.mrb[0].mxu0
  %v6388 = vadd.f32 0.0, %v6387
  %6389 = vdwg.mxu0
  %6390 = vmatprep.subr.bf16.mxu0 %v6074
  %6391 = vmatpush1.bf16.msra.mxu0 %v6073
  %6392 = vmatprep.subr.bf16.mxu0 %v6084
  %6393 = vmatpush1.bf16.msra.mxu0 %v6083
  %6394 = vmatprep.subr.bf16.mxu0 0
  %6395 = vmatpush1.bf16.msra.mxu0 0
  %6396 = vmatprep.subr.bf16.mxu0 0
  %6397 = vmatpush1.bf16.msra.mxu0 0
  %6398 = vmatprep.subr.bf16.mxu0 0
  %6399 = vmatpush1.bf16.msra.mxu0 0
  %6400 = vmatprep.subr.bf16.mxu0 0
  %6401 = vmatpush1.bf16.msra.mxu0 0
  %6402 = vmatprep.subr.bf16.mxu0 0
  %6403 = vmatpush1.bf16.msra.mxu0 0
  %6404 = vmatprep.subr.bf16.mxu0 0
  %6405 = vmatpush1.bf16.msra.mxu0 0
  %6406 = vmatprep.subr.bf16.mxu0 0
  %6407 = vmatpush1.bf16.msra.mxu0 0
  %6408 = vmatprep.subr.bf16.mxu0 0
  %6409 = vmatpush1.bf16.msra.mxu0 0
  %6410 = vmatprep.subr.bf16.mxu0 0
  %6411 = vmatpush1.bf16.msra.mxu0 0
  %6412 = vmatprep.subr.bf16.mxu0 0
  %6413 = vmatpush1.bf16.msra.mxu0 0
  %6414 = vmatprep.subr.bf16.mxu0 0
  %6415 = vmatpush1.bf16.msra.mxu0 0
  %6416 = vmatprep.subr.bf16.mxu0 0
  %6417 = vmatpush1.bf16.msra.mxu0 0
  %6418 = vmatprep.subr.bf16.mxu0 0
  %6419 = vmatpush1.bf16.msra.mxu0 0
  %6420 = vmatprep.subr.bf16.mxu0 0
  %6421 = vmatpush1.bf16.msra.mxu0 0
  %6422 = vmatprep.mubr.bf16.mxu0 0
  %6423 = vmatmul.mubr.bf16.gmra.mrb[0].mxu0 %v6120
  %v6424 = vpop.f32.mrb[0].mxu0
  %v6425 = vadd.f32 %v6372, %v6424
  %v6426 = vpop.f32.mrb[0].mxu0
  %v6427 = vadd.f32 %v6374, %v6426
  %v6428 = vpop.f32.mrb[0].mxu0
  %v6429 = vadd.f32 %v6376, %v6428
  %v6430 = vpop.f32.mrb[0].mxu0
  %v6431 = vadd.f32 %v6378, %v6430
  %6432 = vmatprep.mubr.bf16.mxu0 0
  %6433 = vmatmul.mubr.bf16.gmra.mrb[0].mxu0 %v6123
  %v6434 = vpop.f32.mrb[0].mxu0
  %v6435 = vadd.f32 %v6382, %v6434
  %v6436 = vpop.f32.mrb[0].mxu0
  %v6437 = vadd.f32 %v6384, %v6436
  %v6438 = vpop.f32.mrb[0].mxu0
  %v6439 = vadd.f32 %v6386, %v6438
  %v6440 = vpop.f32.mrb[0].mxu0
  %v6441 = vadd.f32 %v6388, %v6440
  %6442 = vdwg.mxu0
  %6443 = vmatprep.subr.bf16.mxu0 %v5916
  %6444 = vmatpush1.bf16.msra.mxu0 %v5915
  %6445 = vmatprep.subr.bf16.mxu0 %v5926
  %6446 = vmatpush1.bf16.msra.mxu0 %v5925
  %6447 = vmatprep.subr.bf16.mxu0 %v5936
  %6448 = vmatpush1.bf16.msra.mxu0 %v5935
  %6449 = vmatprep.subr.bf16.mxu0 %v5946
  %6450 = vmatpush1.bf16.msra.mxu0 %v5945
  %6451 = vmatprep.subr.bf16.mxu0 %v5956
  %6452 = vmatpush1.bf16.msra.mxu0 %v5955
  %6453 = vmatprep.subr.bf16.mxu0 %v5966
  %6454 = vmatpush1.bf16.msra.mxu0 %v5965
  %6455 = vmatprep.subr.bf16.mxu0 %v5976
  %6456 = vmatpush1.bf16.msra.mxu0 %v5975
  %6457 = vmatprep.subr.bf16.mxu0 %v5986
  %6458 = vmatpush1.bf16.msra.mxu0 %v5985
  %6459 = vmatprep.subr.bf16.mxu0 %v5996
  %6460 = vmatpush1.bf16.msra.mxu0 %v5995
  %6461 = vmatprep.subr.bf16.mxu0 %v6006
  %6462 = vmatpush1.bf16.msra.mxu0 %v6005
  %6463 = vmatprep.subr.bf16.mxu0 %v6016
  %6464 = vmatpush1.bf16.msra.mxu0 %v6015
  %6465 = vmatprep.subr.bf16.mxu0 %v6026
  %6466 = vmatpush1.bf16.msra.mxu0 %v6025
  %6467 = vmatprep.subr.bf16.mxu0 %v6036
  %6468 = vmatpush1.bf16.msra.mxu0 %v6035
  %6469 = vmatprep.subr.bf16.mxu0 %v6046
  %6470 = vmatpush1.bf16.msra.mxu0 %v6045
  %6471 = vmatprep.subr.bf16.mxu0 %v6056
  %6472 = vmatpush1.bf16.msra.mxu0 %v6055
  %6473 = vmatprep.subr.bf16.mxu0 %v6066
  %6474 = vmatpush1.bf16.msra.mxu0 %v6065
  %6475 = vmatprep.mubr.bf16.mxu0 %v6110
  %6476 = vmatmul.mubr.bf16.gmra.mrb[0].mxu0 %v6109
  %v6477 = vpop.f32.mrb[0].mxu0
  %v6478 = vadd.f32 0.0, %v6477
  %v6479 = vpop.f32.mrb[0].mxu0
  %v6480 = vadd.f32 0.0, %v6479
  %v6481 = vpop.f32.mrb[0].mxu0
  %v6482 = vadd.f32 0.0, %v6481
  %v6483 = vpop.f32.mrb[0].mxu0
  %v6484 = vadd.f32 0.0, %v6483
  %6485 = vmatprep.mubr.bf16.mxu0 %v6113
  %6486 = vmatmul.mubr.bf16.gmra.mrb[0].mxu0 %v6112
  %v6487 = vpop.f32.mrb[0].mxu0
  %v6488 = vadd.f32 0.0, %v6487
  %v6489 = vpop.f32.mrb[0].mxu0
  %v6490 = vadd.f32 0.0, %v6489
  %v6491 = vpop.f32.mrb[0].mxu0
  %v6492 = vadd.f32 0.0, %v6491
  %v6493 = vpop.f32.mrb[0].mxu0
  %v6494 = vadd.f32 0.0, %v6493
  %6495 = vdwg.mxu0
  %6496 = vmatprep.subr.bf16.mxu0 %v6076
  %6497 = vmatpush1.bf16.msra.mxu0 %v6075
  %6498 = vmatprep.subr.bf16.mxu0 %v6086
  %6499 = vmatpush1.bf16.msra.mxu0 %v6085
  %6500 = vmatprep.subr.bf16.mxu0 0
  %6501 = vmatpush1.bf16.msra.mxu0 0
  %6502 = vmatprep.subr.bf16.mxu0 0
  %6503 = vmatpush1.bf16.msra.mxu0 0
  %6504 = vmatprep.subr.bf16.mxu0 0
  %6505 = vmatpush1.bf16.msra.mxu0 0
  %6506 = vmatprep.subr.bf16.mxu0 0
  %6507 = vmatpush1.bf16.msra.mxu0 0
  %6508 = vmatprep.subr.bf16.mxu0 0
  %6509 = vmatpush1.bf16.msra.mxu0 0
  %6510 = vmatprep.subr.bf16.mxu0 0
  %6511 = vmatpush1.bf16.msra.mxu0 0
  %6512 = vmatprep.subr.bf16.mxu0 0
  %6513 = vmatpush1.bf16.msra.mxu0 0
  %6514 = vmatprep.subr.bf16.mxu0 0
  %6515 = vmatpush1.bf16.msra.mxu0 0
  %6516 = vmatprep.subr.bf16.mxu0 0
  %6517 = vmatpush1.bf16.msra.mxu0 0
  %6518 = vmatprep.subr.bf16.mxu0 0
  %6519 = vmatpush1.bf16.msra.mxu0 0
  %6520 = vmatprep.subr.bf16.mxu0 0
  %6521 = vmatpush1.bf16.msra.mxu0 0
  %6522 = vmatprep.subr.bf16.mxu0 0
  %6523 = vmatpush1.bf16.msra.mxu0 0
  %6524 = vmatprep.subr.bf16.mxu0 0
  %6525 = vmatpush1.bf16.msra.mxu0 0
  %6526 = vmatprep.subr.bf16.mxu0 0
  %6527 = vmatpush1.bf16.msra.mxu0 0
  %6528 = vmatprep.mubr.bf16.mxu0 0
  %6529 = vmatmul.mubr.bf16.gmra.mrb[0].mxu0 %v6120
  %v6530 = vpop.f32.mrb[0].mxu0
  %v6531 = vadd.f32 %v6478, %v6530
  %v6532 = vpop.f32.mrb[0].mxu0
  %v6533 = vadd.f32 %v6480, %v6532
  %v6534 = vpop.f32.mrb[0].mxu0
  %v6535 = vadd.f32 %v6482, %v6534
  %v6536 = vpop.f32.mrb[0].mxu0
  %v6537 = vadd.f32 %v6484, %v6536
  %6538 = vmatprep.mubr.bf16.mxu0 0
  %6539 = vmatmul.mubr.bf16.gmra.mrb[0].mxu0 %v6123
  %v6540 = vpop.f32.mrb[0].mxu0
  %v6541 = vadd.f32 %v6488, %v6540
  %v6542 = vpop.f32.mrb[0].mxu0
  %v6543 = vadd.f32 %v6490, %v6542
  %v6544 = vpop.f32.mrb[0].mxu0
  %v6545 = vadd.f32 %v6492, %v6544
  %v6546 = vpop.f32.mrb[0].mxu0
  %v6547 = vadd.f32 %v6494, %v6546
  %6548 = vdwg.mxu0
  %6549 = vmatprep.subr.bf16.mxu0 %v5918
  %6550 = vmatpush1.bf16.msra.mxu0 %v5917
  %6551 = vmatprep.subr.bf16.mxu0 %v5928
  %6552 = vmatpush1.bf16.msra.mxu0 %v5927
  %6553 = vmatprep.subr.bf16.mxu0 %v5938
  %6554 = vmatpush1.bf16.msra.mxu0 %v5937
  %6555 = vmatprep.subr.bf16.mxu0 %v5948
  %6556 = vmatpush1.bf16.msra.mxu0 %v5947
  %6557 = vmatprep.subr.bf16.mxu0 %v5958
  %6558 = vmatpush1.bf16.msra.mxu0 %v5957
  %6559 = vmatprep.subr.bf16.mxu0 %v5968
  %6560 = vmatpush1.bf16.msra.mxu0 %v5967
  %6561 = vmatprep.subr.bf16.mxu0 %v5978
  %6562 = vmatpush1.bf16.msra.mxu0 %v5977
  %6563 = vmatprep.subr.bf16.mxu0 %v5988
  %6564 = vmatpush1.bf16.msra.mxu0 %v5987
  %6565 = vmatprep.subr.bf16.mxu0 %v5998
  %6566 = vmatpush1.bf16.msra.mxu0 %v5997
  %6567 = vmatprep.subr.bf16.mxu0 %v6008
  %6568 = vmatpush1.bf16.msra.mxu0 %v6007
  %6569 = vmatprep.subr.bf16.mxu0 %v6018
  %6570 = vmatpush1.bf16.msra.mxu0 %v6017
  %6571 = vmatprep.subr.bf16.mxu0 %v6028
  %6572 = vmatpush1.bf16.msra.mxu0 %v6027
  %6573 = vmatprep.subr.bf16.mxu0 %v6038
  %6574 = vmatpush1.bf16.msra.mxu0 %v6037
  %6575 = vmatprep.subr.bf16.mxu0 %v6048
  %6576 = vmatpush1.bf16.msra.mxu0 %v6047
  %6577 = vmatprep.subr.bf16.mxu0 %v6058
  %6578 = vmatpush1.bf16.msra.mxu0 %v6057
  %6579 = vmatprep.subr.bf16.mxu0 %v6068
  %6580 = vmatpush1.bf16.msra.mxu0 %v6067
  %6581 = vmatprep.mubr.bf16.mxu0 %v6110
  %6582 = vmatmul.mubr.bf16.gmra.mrb[0].mxu0 %v6109
  %v6583 = vpop.f32.mrb[0].mxu0
  %v6584 = vadd.f32 0.0, %v6583
  %v6585 = vpop.f32.mrb[0].mxu0
  %v6586 = vadd.f32 0.0, %v6585
  %v6587 = vpop.f32.mrb[0].mxu0
  %v6588 = vadd.f32 0.0, %v6587
  %v6589 = vpop.f32.mrb[0].mxu0
  %v6590 = vadd.f32 0.0, %v6589
  %6591 = vmatprep.mubr.bf16.mxu0 %v6113
  %6592 = vmatmul.mubr.bf16.gmra.mrb[0].mxu0 %v6112
  %v6593 = vpop.f32.mrb[0].mxu0
  %v6594 = vadd.f32 0.0, %v6593
  %v6595 = vpop.f32.mrb[0].mxu0
  %v6596 = vadd.f32 0.0, %v6595
  %v6597 = vpop.f32.mrb[0].mxu0
  %v6598 = vadd.f32 0.0, %v6597
  %v6599 = vpop.f32.mrb[0].mxu0
  %v6600 = vadd.f32 0.0, %v6599
  %6601 = vdwg.mxu0
  %6602 = vmatprep.subr.bf16.mxu0 %v6078
  %6603 = vmatpush1.bf16.msra.mxu0 %v6077
  %6604 = vmatprep.subr.bf16.mxu0 %v6088
  %6605 = vmatpush1.bf16.msra.mxu0 %v6087
  %6606 = vmatprep.subr.bf16.mxu0 0
  %6607 = vmatpush1.bf16.msra.mxu0 0
  %6608 = vmatprep.subr.bf16.mxu0 0
  %6609 = vmatpush1.bf16.msra.mxu0 0
  %6610 = vmatprep.subr.bf16.mxu0 0
  %6611 = vmatpush1.bf16.msra.mxu0 0
  %6612 = vmatprep.subr.bf16.mxu0 0
  %6613 = vmatpush1.bf16.msra.mxu0 0
  %6614 = vmatprep.subr.bf16.mxu0 0
  %6615 = vmatpush1.bf16.msra.mxu0 0
  %6616 = vmatprep.subr.bf16.mxu0 0
  %6617 = vmatpush1.bf16.msra.mxu0 0
  %6618 = vmatprep.subr.bf16.mxu0 0
  %6619 = vmatpush1.bf16.msra.mxu0 0
  %6620 = vmatprep.subr.bf16.mxu0 0
  %6621 = vmatpush1.bf16.msra.mxu0 0
  %6622 = vmatprep.subr.bf16.mxu0 0
  %6623 = vmatpush1.bf16.msra.mxu0 0
  %6624 = vmatprep.subr.bf16.mxu0 0
  %6625 = vmatpush1.bf16.msra.mxu0 0
  %6626 = vmatprep.subr.bf16.mxu0 0
  %6627 = vmatpush1.bf16.msra.mxu0 0
  %6628 = vmatprep.subr.bf16.mxu0 0
  %6629 = vmatpush1.bf16.msra.mxu0 0
  %6630 = vmatprep.subr.bf16.mxu0 0
  %6631 = vmatpush1.bf16.msra.mxu0 0
  %6632 = vmatprep.subr.bf16.mxu0 0
  %6633 = vmatpush1.bf16.msra.mxu0 0
  %6634 = vmatprep.mubr.bf16.mxu0 0
  %6635 = vmatmul.mubr.bf16.gmra.mrb[0].mxu0 %v6120
  %v6636 = vpop.f32.mrb[0].mxu0
  %v6637 = vadd.f32 %v6584, %v6636
  %v6638 = vpop.f32.mrb[0].mxu0
  %v6639 = vadd.f32 %v6586, %v6638
  %v6640 = vpop.f32.mrb[0].mxu0
  %v6641 = vadd.f32 %v6588, %v6640
  %v6642 = vpop.f32.mrb[0].mxu0
  %v6643 = vadd.f32 %v6590, %v6642
  %6644 = vmatprep.mubr.bf16.mxu0 0
  %6645 = vmatmul.mubr.bf16.gmra.mrb[0].mxu0 %v6123
  %v6646 = vpop.f32.mrb[0].mxu0
  %v6647 = vadd.f32 %v6594, %v6646
  %v6648 = vpop.f32.mrb[0].mxu0
  %v6649 = vadd.f32 %v6596, %v6648
  %v6650 = vpop.f32.mrb[0].mxu0
  %v6651 = vadd.f32 %v6598, %v6650
  %v6652 = vpop.f32.mrb[0].mxu0
  %v6653 = vadd.f32 %v6600, %v6652
  %6654 = vdwg.mxu0
  %6656 = vset.pattern.permute.xlu0 9
  %6657 = vperm.xlu0 %6656, %v4756
  %v6658 = vpop.permute.xlu0 %6657
  %6661 = vset.pattern.permute.xlu0 9
  %6662 = vperm.xlu0 %6661, %v4757
  %v6663 = vpop.permute.xlu0 %6662
  %6666 = vset.pattern.permute.xlu0 9
  %6667 = vperm.xlu0 %6666, %v4758
  %v6668 = vpop.permute.xlu0 %6667
  %6671 = vset.pattern.permute.xlu0 9
  %6672 = vperm.xlu0 %6671, %v4759
  %v6673 = vpop.permute.xlu0 %6672
  %v6675 = vmul.f32 %v6213, %v6658
  %v6676 = vmul.f32 %v6215, %v6658
  %v6677 = vmul.f32 %v6319, %v6658
  %v6678 = vmul.f32 %v6321, %v6658
  %v6679 = vmul.f32 %v6425, %v6658
  %v6680 = vmul.f32 %v6427, %v6658
  %v6681 = vmul.f32 %v6531, %v6658
  %v6682 = vmul.f32 %v6533, %v6658
  %v6683 = vmul.f32 %v6637, %v6658
  %v6684 = vmul.f32 %v6639, %v6658
  %v6685 = vmul.f32 %v6217, %v6663
  %v6686 = vmul.f32 %v6219, %v6663
  %v6687 = vmul.f32 %v6323, %v6663
  %v6688 = vmul.f32 %v6325, %v6663
  %v6689 = vmul.f32 %v6429, %v6663
  %v6690 = vmul.f32 %v6431, %v6663
  %v6691 = vmul.f32 %v6535, %v6663
  %v6692 = vmul.f32 %v6537, %v6663
  %v6693 = vmul.f32 %v6641, %v6663
  %v6694 = vmul.f32 %v6643, %v6663
  %v6695 = vmul.f32 %v6223, %v6668
  %v6696 = vmul.f32 %v6225, %v6668
  %v6697 = vmul.f32 %v6329, %v6668
  %v6698 = vmul.f32 %v6331, %v6668
  %v6699 = vmul.f32 %v6435, %v6668
  %v6700 = vmul.f32 %v6437, %v6668
  %v6701 = vmul.f32 %v6541, %v6668
  %v6702 = vmul.f32 %v6543, %v6668
  %v6703 = vmul.f32 %v6647, %v6668
  %v6704 = vmul.f32 %v6649, %v6668
  %v6705 = vmul.f32 %v6227, %v6673
  %v6706 = vmul.f32 %v6229, %v6673
  %v6707 = vmul.f32 %v6333, %v6673
  %v6708 = vmul.f32 %v6335, %v6673
  %v6709 = vmul.f32 %v6439, %v6673
  %v6710 = vmul.f32 %v6441, %v6673
  %v6711 = vmul.f32 %v6545, %v6673
  %v6712 = vmul.f32 %v6547, %v6673
  %v6713 = vmul.f32 %v6651, %v6673
  %v6714 = vmul.f32 %v6653, %v6673
  %6715 = vset.pattern.permute.xlu0 10
  %6716 = vperm.xlu0 %6715, %v4756
  %v6717 = vpop.permute.xlu0 %6716
  %6719 = vset.pattern.permute.xlu0 10
  %6720 = vperm.xlu0 %6719, %v4757
  %v6721 = vpop.permute.xlu0 %6720
  %6723 = vset.pattern.permute.xlu0 10
  %6724 = vperm.xlu0 %6723, %v4758
  %v6725 = vpop.permute.xlu0 %6724
  %6727 = vset.pattern.permute.xlu0 10
  %6728 = vperm.xlu0 %6727, %v4759
  %v6729 = vpop.permute.xlu0 %6728
  %v6731 = vadd.f32 %v6675, %v6717
  %v6732 = vadd.f32 %v6676, %v6717
  %v6733 = vadd.f32 %v6677, %v6717
  %v6734 = vadd.f32 %v6678, %v6717
  %v6735 = vadd.f32 %v6679, %v6717
  %v6736 = vadd.f32 %v6680, %v6717
  %v6737 = vadd.f32 %v6681, %v6717
  %v6738 = vadd.f32 %v6682, %v6717
  %v6739 = vadd.f32 %v6683, %v6717
  %v6740 = vadd.f32 %v6684, %v6717
  %v6741 = vadd.f32 %v6685, %v6721
  %v6742 = vadd.f32 %v6686, %v6721
  %v6743 = vadd.f32 %v6687, %v6721
  %v6744 = vadd.f32 %v6688, %v6721
  %v6745 = vadd.f32 %v6689, %v6721
  %v6746 = vadd.f32 %v6690, %v6721
  %v6747 = vadd.f32 %v6691, %v6721
  %v6748 = vadd.f32 %v6692, %v6721
  %v6749 = vadd.f32 %v6693, %v6721
  %v6750 = vadd.f32 %v6694, %v6721
  %v6751 = vadd.f32 %v6695, %v6725
  %v6752 = vadd.f32 %v6696, %v6725
  %v6753 = vadd.f32 %v6697, %v6725
  %v6754 = vadd.f32 %v6698, %v6725
  %v6755 = vadd.f32 %v6699, %v6725
  %v6756 = vadd.f32 %v6700, %v6725
  %v6757 = vadd.f32 %v6701, %v6725
  %v6758 = vadd.f32 %v6702, %v6725
  %v6759 = vadd.f32 %v6703, %v6725
  %v6760 = vadd.f32 %v6704, %v6725
  %v6761 = vadd.f32 %v6705, %v6729
  %v6762 = vadd.f32 %v6706, %v6729
  %v6763 = vadd.f32 %v6707, %v6729
  %v6764 = vadd.f32 %v6708, %v6729
  %v6765 = vadd.f32 %v6709, %v6729
  %v6766 = vadd.f32 %v6710, %v6729
  %v6767 = vadd.f32 %v6711, %v6729
  %v6768 = vadd.f32 %v6712, %v6729
  %v6769 = vadd.f32 %v6713, %v6729
  %v6770 = vadd.f32 %v6714, %v6729
  %v6771 = vmax.f32 %v6731, 0.0
  %v6772 = vmax.f32 %v6732, 0.0
  %v6773 = vmax.f32 %v6733, 0.0
  %v6774 = vmax.f32 %v6734, 0.0
  %v6775 = vmax.f32 %v6735, 0.0
  %v6776 = vmax.f32 %v6736, 0.0
  %v6777 = vmax.f32 %v6737, 0.0
  %v6778 = vmax.f32 %v6738, 0.0
  %v6779 = vmax.f32 %v6739, 0.0
  %v6780 = vmax.f32 %v6740, 0.0
  %v6781 = vmax.f32 %v6741, 0.0
  %v6782 = vmax.f32 %v6742, 0.0
  %v6783 = vmax.f32 %v6743, 0.0
  %v6784 = vmax.f32 %v6744, 0.0
  %v6785 = vmax.f32 %v6745, 0.0
  %v6786 = vmax.f32 %v6746, 0.0
  %v6787 = vmax.f32 %v6747, 0.0
  %v6788 = vmax.f32 %v6748, 0.0
  %v6789 = vmax.f32 %v6749, 0.0
  %v6790 = vmax.f32 %v6750, 0.0
  %v6791 = vmax.f32 %v6751, 0.0
  %v6792 = vmax.f32 %v6752, 0.0
  %v6793 = vmax.f32 %v6753, 0.0
  %v6794 = vmax.f32 %v6754, 0.0
  %v6795 = vmax.f32 %v6755, 0.0
  %v6796 = vmax.f32 %v6756, 0.0
  %v6797 = vmax.f32 %v6757, 0.0
  %v6798 = vmax.f32 %v6758, 0.0
  %v6799 = vmax.f32 %v6759, 0.0
  %v6800 = vmax.f32 %v6760, 0.0
  %v6801 = vmax.f32 %v6761, 0.0
  %v6802 = vmax.f32 %v6762, 0.0
  %v6803 = vmax.f32 %v6763, 0.0
  %v6804 = vmax.f32 %v6764, 0.0
  %v6805 = vmax.f32 %v6765, 0.0
  %v6806 = vmax.f32 %v6766, 0.0
  %v6807 = vmax.f32 %v6767, 0.0
  %v6808 = vmax.f32 %v6768, 0.0
  %v6809 = vmax.f32 %v6769, 0.0
  %v6810 = vmax.f32 %v6770, 0.0
  %v6813 = vlaneseq
  %v6814 = vshrl.u32 %v6813, 7
  %v6815 = vsub.s32 0, %v6814
  %v6816 = vrot.slane %v72, %v6815
  %v6817 = vlaneseq
  %v6818 = vshrl.u32 %v6817, 7
  %v6819 = vsub.s32 1, %v6818
  %v6820 = vrot.slane %v72, %v6819
  %v6821 = vlaneseq
  %v6822 = vshrl.u32 %v6821, 7
  %v6823 = vsub.s32 2, %v6822
  %v6824 = vrot.slane %v72, %v6823
  %v6825 = vlaneseq
  %v6826 = vshrl.u32 %v6825, 7
  %v6827 = vsub.s32 3, %v6826
  %v6828 = vrot.slane %v72, %v6827
  %v6829 = vlaneseq
  %v6830 = vshrl.u32 %v6829, 7
  %v6831 = vsub.s32 4, %v6830
  %v6832 = vrot.slane %v72, %v6831
  %v6833 = vlaneseq
  %v6834 = vshrl.u32 %v6833, 7
  %v6835 = vsub.s32 5, %v6834
  %v6836 = vrot.slane %v72, %v6835
  %v6837 = vlaneseq
  %v6838 = vshrl.u32 %v6837, 7
  %v6839 = vsub.s32 6, %v6838
  %v6840 = vrot.slane %v72, %v6839
  %v6841 = vlaneseq
  %v6842 = vshrl.u32 %v6841, 7
  %v6843 = vsub.s32 7, %v6842
  %v6844 = vrot.slane %v72, %v6843
  %v6845 = vlaneseq
  %v6846 = vshrl.u32 %v6845, 7
  %v6847 = vsub.s32 0, %v6846
  %v6848 = vrot.slane %v74, %v6847
  %v6849 = vlaneseq
  %v6850 = vshrl.u32 %v6849, 7
  %v6851 = vsub.s32 1, %v6850
  %v6852 = vrot.slane %v74, %v6851
  %v6863 = vmul.f32 %v6771, %v6816
  %v6864 = vmul.f32 %v6772, %v6820
  %v6865 = vmul.f32 %v6773, %v6824
  %v6866 = vmul.f32 %v6774, %v6828
  %v6867 = vmul.f32 %v6775, %v6832
  %v6868 = vmul.f32 %v6776, %v6836
  %v6869 = vmul.f32 %v6777, %v6840
  %v6870 = vmul.f32 %v6778, %v6844
  %v6871 = vmul.f32 %v6779, %v6848
  %v6872 = vmul.f32 %v6780, %v6852
  %v6873 = vmul.f32 %v6781, %v6816
  %v6874 = vmul.f32 %v6782, %v6820
  %v6875 = vmul.f32 %v6783, %v6824
  %v6876 = vmul.f32 %v6784, %v6828
  %v6877 = vmul.f32 %v6785, %v6832
  %v6878 = vmul.f32 %v6786, %v6836
  %v6879 = vmul.f32 %v6787, %v6840
  %v6880 = vmul.f32 %v6788, %v6844
  %v6881 = vmul.f32 %v6789, %v6848
  %v6882 = vmul.f32 %v6790, %v6852
  %v6883 = vmul.f32 %v6791, %v6816
  %v6884 = vmul.f32 %v6792, %v6820
  %v6885 = vmul.f32 %v6793, %v6824
  %v6886 = vmul.f32 %v6794, %v6828
  %v6887 = vmul.f32 %v6795, %v6832
  %v6888 = vmul.f32 %v6796, %v6836
  %v6889 = vmul.f32 %v6797, %v6840
  %v6890 = vmul.f32 %v6798, %v6844
  %v6891 = vmul.f32 %v6799, %v6848
  %v6892 = vmul.f32 %v6800, %v6852
  %v6893 = vmul.f32 %v6801, %v6816
  %v6894 = vmul.f32 %v6802, %v6820
  %v6895 = vmul.f32 %v6803, %v6824
  %v6896 = vmul.f32 %v6804, %v6828
  %v6897 = vmul.f32 %v6805, %v6832
  %v6898 = vmul.f32 %v6806, %v6836
  %v6899 = vmul.f32 %v6807, %v6840
  %v6900 = vmul.f32 %v6808, %v6844
  %v6901 = vmul.f32 %v6809, %v6848
  %v6902 = vmul.f32 %v6810, %v6852
  %v6903 = vld [vmem:[%s1 + $0x48] sm:$0xf]
  %v6904 = vld [vmem:[%s1 + $0xa4] sm:$0xf]
  %v6905 = vunpack.c.l.bf16 %v6903
  %v6906 = vunpack.c.l.bf16 %v6904
  %v6908 = vsel %vm1074, %v6905, 0
  %v6911 = vsel %vm1074, %v6906, 0
  %6913 = vmatprep.subr.mxu0 %v6864
  %6914 = vmatpush1.msra.mxu0 %v6863
  %6915 = vmatprep.subr.mxu0 %v6874
  %6916 = vmatpush1.msra.mxu0 %v6873
  %6917 = vmatprep.subr.mxu0 %v6884
  %6918 = vmatpush1.msra.mxu0 %v6883
  %6919 = vmatprep.subr.mxu0 %v6894
  %6920 = vmatpush1.msra.mxu0 %v6893
  %6921 = vmatprep.subr.mxu0 0.0
  %6922 = vmatpush1.msra.mxu0 0.0
  %6923 = vmatprep.subr.mxu0 0.0
  %6924 = vmatpush1.msra.mxu0 0.0
  %6925 = vmatprep.subr.mxu0 0.0
  %6926 = vmatpush1.msra.mxu0 0.0
  %6927 = vmatprep.subr.mxu0 0.0
  %6928 = vmatpush1.msra.mxu0 0.0
  %6929 = vmatprep.subr.mxu0 0.0
  %6930 = vmatpush1.msra.mxu0 0.0
  %6931 = vmatprep.subr.mxu0 0.0
  %6932 = vmatpush1.msra.mxu0 0.0
  %6933 = vmatprep.subr.mxu0 0.0
  %6934 = vmatpush1.msra.mxu0 0.0
  %6935 = vmatprep.subr.mxu0 0.0
  %6936 = vmatpush1.msra.mxu0 0.0
  %6937 = vmatprep.subr.mxu0 0.0
  %6938 = vmatpush1.msra.mxu0 0.0
  %6939 = vmatprep.subr.mxu0 0.0
  %6940 = vmatpush1.msra.mxu0 0.0
  %6941 = vmatprep.subr.mxu0 0.0
  %6942 = vmatpush1.msra.mxu0 0.0
  %6943 = vmatprep.subr.mxu0 0.0
  %6944 = vmatpush1.msra.mxu0 0.0
  %6945 = vmatprep.subr.mxu0 0.0
  %6946 = vmatpush1.msra.mxu0 0.0
  %6947 = vmatprep.subr.mxu0 0.0
  %6948 = vmatpush1.msra.mxu0 0.0
  %6949 = vmatprep.subr.mxu0 0.0
  %6950 = vmatpush1.msra.mxu0 0.0
  %6951 = vmatprep.subr.mxu0 0.0
  %6952 = vmatpush1.msra.mxu0 0.0
  %6953 = vmatprep.subr.mxu0 0.0
  %6954 = vmatpush1.msra.mxu0 0.0
  %6955 = vmatprep.subr.mxu0 0.0
  %6956 = vmatpush1.msra.mxu0 0.0
  %6957 = vmatprep.subr.mxu0 0.0
  %6958 = vmatpush1.msra.mxu0 0.0
  %6959 = vmatprep.subr.mxu0 0.0
  %6960 = vmatpush1.msra.mxu0 0.0
  %6961 = vmatprep.subr.mxu0 0.0
  %6962 = vmatpush1.msra.mxu0 0.0
  %6963 = vmatprep.subr.mxu0 0.0
  %6964 = vmatpush1.msra.mxu0 0.0
  %6965 = vmatprep.subr.mxu0 0.0
  %6966 = vmatpush1.msra.mxu0 0.0
  %6967 = vmatprep.subr.mxu0 0.0
  %6968 = vmatpush1.msra.mxu0 0.0
  %6969 = vmatprep.subr.mxu0 0.0
  %6970 = vmatpush1.msra.mxu0 0.0
  %6971 = vmatprep.subr.mxu0 0.0
  %6972 = vmatpush1.msra.mxu0 0.0
  %6973 = vmatprep.subr.mxu0 0.0
  %6974 = vmatpush1.msra.mxu0 0.0
  %6975 = vmatprep.subr.mxu0 0.0
  %6976 = vmatpush1.msra.mxu0 0.0
  %6977 = vmatprep.mubr.f32.mxu0 0.0
  %6978 = vmatmul.mubr.f32.gmra.mrb[0].mxu0 %v6908
  %v6979 = vpop.f32.mrb[0].mxu0
  %v6980 = vadd.f32 0.0, %v6979
  %v6981 = vpop.f32.mrb[0].mxu0
  %v6982 = vadd.f32 0.0, %v6981
  %6983 = vmatprep.mubr.f32.mxu0 0.0
  %6984 = vmatmul.mubr.f32.gmra.mrb[0].mxu0 %v6911
  %v6985 = vpop.f32.mrb[0].mxu0
  %v6986 = vadd.f32 0.0, %v6985
  %v6987 = vpop.f32.mrb[0].mxu0
  %v6988 = vadd.f32 0.0, %v6987
  %6989 = vdwg.mxu0
  %6990 = vmatprep.subr.mxu0 %v6866
  %6991 = vmatpush1.msra.mxu0 %v6865
  %6992 = vmatprep.subr.mxu0 %v6876
  %6993 = vmatpush1.msra.mxu0 %v6875
  %6994 = vmatprep.subr.mxu0 %v6886
  %6995 = vmatpush1.msra.mxu0 %v6885
  %6996 = vmatprep.subr.mxu0 %v6896
  %6997 = vmatpush1.msra.mxu0 %v6895
  %6998 = vmatprep.subr.mxu0 0.0
  %6999 = vmatpush1.msra.mxu0 0.0
  %7000 = vmatprep.subr.mxu0 0.0
  %7001 = vmatpush1.msra.mxu0 0.0
  %7002 = vmatprep.subr.mxu0 0.0
  %7003 = vmatpush1.msra.mxu0 0.0
  %7004 = vmatprep.subr.mxu0 0.0
  %7005 = vmatpush1.msra.mxu0 0.0
  %7006 = vmatprep.subr.mxu0 0.0
  %7007 = vmatpush1.msra.mxu0 0.0
  %7008 = vmatprep.subr.mxu0 0.0
  %7009 = vmatpush1.msra.mxu0 0.0
  %7010 = vmatprep.subr.mxu0 0.0
  %7011 = vmatpush1.msra.mxu0 0.0
  %7012 = vmatprep.subr.mxu0 0.0
  %7013 = vmatpush1.msra.mxu0 0.0
  %7014 = vmatprep.subr.mxu0 0.0
  %7015 = vmatpush1.msra.mxu0 0.0
  %7016 = vmatprep.subr.mxu0 0.0
  %7017 = vmatpush1.msra.mxu0 0.0
  %7018 = vmatprep.subr.mxu0 0.0
  %7019 = vmatpush1.msra.mxu0 0.0
  %7020 = vmatprep.subr.mxu0 0.0
  %7021 = vmatpush1.msra.mxu0 0.0
  %7022 = vmatprep.subr.mxu0 0.0
  %7023 = vmatpush1.msra.mxu0 0.0
  %7024 = vmatprep.subr.mxu0 0.0
  %7025 = vmatpush1.msra.mxu0 0.0
  %7026 = vmatprep.subr.mxu0 0.0
  %7027 = vmatpush1.msra.mxu0 0.0
  %7028 = vmatprep.subr.mxu0 0.0
  %7029 = vmatpush1.msra.mxu0 0.0
  %7030 = vmatprep.subr.mxu0 0.0
  %7031 = vmatpush1.msra.mxu0 0.0
  %7032 = vmatprep.subr.mxu0 0.0
  %7033 = vmatpush1.msra.mxu0 0.0
  %7034 = vmatprep.subr.mxu0 0.0
  %7035 = vmatpush1.msra.mxu0 0.0
  %7036 = vmatprep.subr.mxu0 0.0
  %7037 = vmatpush1.msra.mxu0 0.0
  %7038 = vmatprep.subr.mxu0 0.0
  %7039 = vmatpush1.msra.mxu0 0.0
  %7040 = vmatprep.subr.mxu0 0.0
  %7041 = vmatpush1.msra.mxu0 0.0
  %7042 = vmatprep.subr.mxu0 0.0
  %7043 = vmatpush1.msra.mxu0 0.0
  %7044 = vmatprep.subr.mxu0 0.0
  %7045 = vmatpush1.msra.mxu0 0.0
  %7046 = vmatprep.subr.mxu0 0.0
  %7047 = vmatpush1.msra.mxu0 0.0
  %7048 = vmatprep.subr.mxu0 0.0
  %7049 = vmatpush1.msra.mxu0 0.0
  %7050 = vmatprep.subr.mxu0 0.0
  %7051 = vmatpush1.msra.mxu0 0.0
  %7052 = vmatprep.subr.mxu0 0.0
  %7053 = vmatpush1.msra.mxu0 0.0
  %7054 = vmatprep.mubr.f32.mxu0 0.0
  %7055 = vmatmul.mubr.f32.gmra.mrb[0].mxu0 %v6908
  %v7056 = vpop.f32.mrb[0].mxu0
  %v7057 = vadd.f32 0.0, %v7056
  %v7058 = vpop.f32.mrb[0].mxu0
  %v7059 = vadd.f32 0.0, %v7058
  %7060 = vmatprep.mubr.f32.mxu0 0.0
  %7061 = vmatmul.mubr.f32.gmra.mrb[0].mxu0 %v6911
  %v7062 = vpop.f32.mrb[0].mxu0
  %v7063 = vadd.f32 0.0, %v7062
  %v7064 = vpop.f32.mrb[0].mxu0
  %v7065 = vadd.f32 0.0, %v7064
  %7066 = vdwg.mxu0
  %7067 = vmatprep.subr.mxu0 %v6868
  %7068 = vmatpush1.msra.mxu0 %v6867
  %7069 = vmatprep.subr.mxu0 %v6878
  %7070 = vmatpush1.msra.mxu0 %v6877
  %7071 = vmatprep.subr.mxu0 %v6888
  %7072 = vmatpush1.msra.mxu0 %v6887
  %7073 = vmatprep.subr.mxu0 %v6898
  %7074 = vmatpush1.msra.mxu0 %v6897
  %7075 = vmatprep.subr.mxu0 0.0
  %7076 = vmatpush1.msra.mxu0 0.0
  %7077 = vmatprep.subr.mxu0 0.0
  %7078 = vmatpush1.msra.mxu0 0.0
  %7079 = vmatprep.subr.mxu0 0.0
  %7080 = vmatpush1.msra.mxu0 0.0
  %7081 = vmatprep.subr.mxu0 0.0
  %7082 = vmatpush1.msra.mxu0 0.0
  %7083 = vmatprep.subr.mxu0 0.0
  %7084 = vmatpush1.msra.mxu0 0.0
  %7085 = vmatprep.subr.mxu0 0.0
  %7086 = vmatpush1.msra.mxu0 0.0
  %7087 = vmatprep.subr.mxu0 0.0
  %7088 = vmatpush1.msra.mxu0 0.0
  %7089 = vmatprep.subr.mxu0 0.0
  %7090 = vmatpush1.msra.mxu0 0.0
  %7091 = vmatprep.subr.mxu0 0.0
  %7092 = vmatpush1.msra.mxu0 0.0
  %7093 = vmatprep.subr.mxu0 0.0
  %7094 = vmatpush1.msra.mxu0 0.0
  %7095 = vmatprep.subr.mxu0 0.0
  %7096 = vmatpush1.msra.mxu0 0.0
  %7097 = vmatprep.subr.mxu0 0.0
  %7098 = vmatpush1.msra.mxu0 0.0
  %7099 = vmatprep.subr.mxu0 0.0
  %7100 = vmatpush1.msra.mxu0 0.0
  %7101 = vmatprep.subr.mxu0 0.0
  %7102 = vmatpush1.msra.mxu0 0.0
  %7103 = vmatprep.subr.mxu0 0.0
  %7104 = vmatpush1.msra.mxu0 0.0
  %7105 = vmatprep.subr.mxu0 0.0
  %7106 = vmatpush1.msra.mxu0 0.0
  %7107 = vmatprep.subr.mxu0 0.0
  %7108 = vmatpush1.msra.mxu0 0.0
  %7109 = vmatprep.subr.mxu0 0.0
  %7110 = vmatpush1.msra.mxu0 0.0
  %7111 = vmatprep.subr.mxu0 0.0
  %7112 = vmatpush1.msra.mxu0 0.0
  %7113 = vmatprep.subr.mxu0 0.0
  %7114 = vmatpush1.msra.mxu0 0.0
  %7115 = vmatprep.subr.mxu0 0.0
  %7116 = vmatpush1.msra.mxu0 0.0
  %7117 = vmatprep.subr.mxu0 0.0
  %7118 = vmatpush1.msra.mxu0 0.0
  %7119 = vmatprep.subr.mxu0 0.0
  %7120 = vmatpush1.msra.mxu0 0.0
  %7121 = vmatprep.subr.mxu0 0.0
  %7122 = vmatpush1.msra.mxu0 0.0
  %7123 = vmatprep.subr.mxu0 0.0
  %7124 = vmatpush1.msra.mxu0 0.0
  %7125 = vmatprep.subr.mxu0 0.0
  %7126 = vmatpush1.msra.mxu0 0.0
  %7127 = vmatprep.subr.mxu0 0.0
  %7128 = vmatpush1.msra.mxu0 0.0
  %7129 = vmatprep.subr.mxu0 0.0
  %7130 = vmatpush1.msra.mxu0 0.0
  %7131 = vmatprep.mubr.f32.mxu0 0.0
  %7132 = vmatmul.mubr.f32.gmra.mrb[0].mxu0 %v6908
  %v7133 = vpop.f32.mrb[0].mxu0
  %v7134 = vadd.f32 0.0, %v7133
  %v7135 = vpop.f32.mrb[0].mxu0
  %v7136 = vadd.f32 0.0, %v7135
  %7137 = vmatprep.mubr.f32.mxu0 0.0
  %7138 = vmatmul.mubr.f32.gmra.mrb[0].mxu0 %v6911
  %v7139 = vpop.f32.mrb[0].mxu0
  %v7140 = vadd.f32 0.0, %v7139
  %v7141 = vpop.f32.mrb[0].mxu0
  %v7142 = vadd.f32 0.0, %v7141
  %7143 = vdwg.mxu0
  %7144 = vmatprep.subr.mxu0 %v6870
  %7145 = vmatpush1.msra.mxu0 %v6869
  %7146 = vmatprep.subr.mxu0 %v6880
  %7147 = vmatpush1.msra.mxu0 %v6879
  %7148 = vmatprep.subr.mxu0 %v6890
  %7149 = vmatpush1.msra.mxu0 %v6889
  %7150 = vmatprep.subr.mxu0 %v6900
  %7151 = vmatpush1.msra.mxu0 %v6899
  %7152 = vmatprep.subr.mxu0 0.0
  %7153 = vmatpush1.msra.mxu0 0.0
  %7154 = vmatprep.subr.mxu0 0.0
  %7155 = vmatpush1.msra.mxu0 0.0
  %7156 = vmatprep.subr.mxu0 0.0
  %7157 = vmatpush1.msra.mxu0 0.0
  %7158 = vmatprep.subr.mxu0 0.0
  %7159 = vmatpush1.msra.mxu0 0.0
  %7160 = vmatprep.subr.mxu0 0.0
  %7161 = vmatpush1.msra.mxu0 0.0
  %7162 = vmatprep.subr.mxu0 0.0
  %7163 = vmatpush1.msra.mxu0 0.0
  %7164 = vmatprep.subr.mxu0 0.0
  %7165 = vmatpush1.msra.mxu0 0.0
  %7166 = vmatprep.subr.mxu0 0.0
  %7167 = vmatpush1.msra.mxu0 0.0
  %7168 = vmatprep.subr.mxu0 0.0
  %7169 = vmatpush1.msra.mxu0 0.0
  %7170 = vmatprep.subr.mxu0 0.0
  %7171 = vmatpush1.msra.mxu0 0.0
  %7172 = vmatprep.subr.mxu0 0.0
  %7173 = vmatpush1.msra.mxu0 0.0
  %7174 = vmatprep.subr.mxu0 0.0
  %7175 = vmatpush1.msra.mxu0 0.0
  %7176 = vmatprep.subr.mxu0 0.0
  %7177 = vmatpush1.msra.mxu0 0.0
  %7178 = vmatprep.subr.mxu0 0.0
  %7179 = vmatpush1.msra.mxu0 0.0
  %7180 = vmatprep.subr.mxu0 0.0
  %7181 = vmatpush1.msra.mxu0 0.0
  %7182 = vmatprep.subr.mxu0 0.0
  %7183 = vmatpush1.msra.mxu0 0.0
  %7184 = vmatprep.subr.mxu0 0.0
  %7185 = vmatpush1.msra.mxu0 0.0
  %7186 = vmatprep.subr.mxu0 0.0
  %7187 = vmatpush1.msra.mxu0 0.0
  %7188 = vmatprep.subr.mxu0 0.0
  %7189 = vmatpush1.msra.mxu0 0.0
  %7190 = vmatprep.subr.mxu0 0.0
  %7191 = vmatpush1.msra.mxu0 0.0
  %7192 = vmatprep.subr.mxu0 0.0
  %7193 = vmatpush1.msra.mxu0 0.0
  %7194 = vmatprep.subr.mxu0 0.0
  %7195 = vmatpush1.msra.mxu0 0.0
  %7196 = vmatprep.subr.mxu0 0.0
  %7197 = vmatpush1.msra.mxu0 0.0
  %7198 = vmatprep.subr.mxu0 0.0
  %7199 = vmatpush1.msra.mxu0 0.0
  %7200 = vmatprep.subr.mxu0 0.0
  %7201 = vmatpush1.msra.mxu0 0.0
  %7202 = vmatprep.subr.mxu0 0.0
  %7203 = vmatpush1.msra.mxu0 0.0
  %7204 = vmatprep.subr.mxu0 0.0
  %7205 = vmatpush1.msra.mxu0 0.0
  %7206 = vmatprep.subr.mxu0 0.0
  %7207 = vmatpush1.msra.mxu0 0.0
  %7208 = vmatprep.mubr.f32.mxu0 0.0
  %7209 = vmatmul.mubr.f32.gmra.mrb[0].mxu0 %v6908
  %v7210 = vpop.f32.mrb[0].mxu0
  %v7211 = vadd.f32 0.0, %v7210
  %v7212 = vpop.f32.mrb[0].mxu0
  %v7213 = vadd.f32 0.0, %v7212
  %7214 = vmatprep.mubr.f32.mxu0 0.0
  %7215 = vmatmul.mubr.f32.gmra.mrb[0].mxu0 %v6911
  %v7216 = vpop.f32.mrb[0].mxu0
  %v7217 = vadd.f32 0.0, %v7216
  %v7218 = vpop.f32.mrb[0].mxu0
  %v7219 = vadd.f32 0.0, %v7218
  %7220 = vdwg.mxu0
  %7221 = vmatprep.subr.mxu0 %v6872
  %7222 = vmatpush1.msra.mxu0 %v6871
  %7223 = vmatprep.subr.mxu0 %v6882
  %7224 = vmatpush1.msra.mxu0 %v6881
  %7225 = vmatprep.subr.mxu0 %v6892
  %7226 = vmatpush1.msra.mxu0 %v6891
  %7227 = vmatprep.subr.mxu0 %v6902
  %7228 = vmatpush1.msra.mxu0 %v6901
  %7229 = vmatprep.subr.mxu0 0.0
  %7230 = vmatpush1.msra.mxu0 0.0
  %7231 = vmatprep.subr.mxu0 0.0
  %7232 = vmatpush1.msra.mxu0 0.0
  %7233 = vmatprep.subr.mxu0 0.0
  %7234 = vmatpush1.msra.mxu0 0.0
  %7235 = vmatprep.subr.mxu0 0.0
  %7236 = vmatpush1.msra.mxu0 0.0
  %7237 = vmatprep.subr.mxu0 0.0
  %7238 = vmatpush1.msra.mxu0 0.0
  %7239 = vmatprep.subr.mxu0 0.0
  %7240 = vmatpush1.msra.mxu0 0.0
  %7241 = vmatprep.subr.mxu0 0.0
  %7242 = vmatpush1.msra.mxu0 0.0
  %7243 = vmatprep.subr.mxu0 0.0
  %7244 = vmatpush1.msra.mxu0 0.0
  %7245 = vmatprep.subr.mxu0 0.0
  %7246 = vmatpush1.msra.mxu0 0.0
  %7247 = vmatprep.subr.mxu0 0.0
  %7248 = vmatpush1.msra.mxu0 0.0
  %7249 = vmatprep.subr.mxu0 0.0
  %7250 = vmatpush1.msra.mxu0 0.0
  %7251 = vmatprep.subr.mxu0 0.0
  %7252 = vmatpush1.msra.mxu0 0.0
  %7253 = vmatprep.subr.mxu0 0.0
  %7254 = vmatpush1.msra.mxu0 0.0
  %7255 = vmatprep.subr.mxu0 0.0
  %7256 = vmatpush1.msra.mxu0 0.0
  %7257 = vmatprep.subr.mxu0 0.0
  %7258 = vmatpush1.msra.mxu0 0.0
  %7259 = vmatprep.subr.mxu0 0.0
  %7260 = vmatpush1.msra.mxu0 0.0
  %7261 = vmatprep.subr.mxu0 0.0
  %7262 = vmatpush1.msra.mxu0 0.0
  %7263 = vmatprep.subr.mxu0 0.0
  %7264 = vmatpush1.msra.mxu0 0.0
  %7265 = vmatprep.subr.mxu0 0.0
  %7266 = vmatpush1.msra.mxu0 0.0
  %7267 = vmatprep.subr.mxu0 0.0
  %7268 = vmatpush1.msra.mxu0 0.0
  %7269 = vmatprep.subr.mxu0 0.0
  %7270 = vmatpush1.msra.mxu0 0.0
  %7271 = vmatprep.subr.mxu0 0.0
  %7272 = vmatpush1.msra.mxu0 0.0
  %7273 = vmatprep.subr.mxu0 0.0
  %7274 = vmatpush1.msra.mxu0 0.0
  %7275 = vmatprep.subr.mxu0 0.0
  %7276 = vmatpush1.msra.mxu0 0.0
  %7277 = vmatprep.subr.mxu0 0.0
  %7278 = vmatpush1.msra.mxu0 0.0
  %7279 = vmatprep.subr.mxu0 0.0
  %7280 = vmatpush1.msra.mxu0 0.0
  %7281 = vmatprep.subr.mxu0 0.0
  %7282 = vmatpush1.msra.mxu0 0.0
  %7283 = vmatprep.subr.mxu0 0.0
  %7284 = vmatpush1.msra.mxu0 0.0
  %7285 = vmatprep.mubr.f32.mxu0 0.0
  %7286 = vmatmul.mubr.f32.gmra.mrb[0].mxu0 %v6908
  %v7287 = vpop.f32.mrb[0].mxu0
  %v7288 = vadd.f32 0.0, %v7287
  %v7289 = vpop.f32.mrb[0].mxu0
  %v7290 = vadd.f32 0.0, %v7289
  %7291 = vmatprep.mubr.f32.mxu0 0.0
  %7292 = vmatmul.mubr.f32.gmra.mrb[0].mxu0 %v6911
  %v7293 = vpop.f32.mrb[0].mxu0
  %v7294 = vadd.f32 0.0, %v7293
  %v7295 = vpop.f32.mrb[0].mxu0
  %v7296 = vadd.f32 0.0, %v7295
  %7297 = vdwg.mxu0
  %v7298 = vld [vmem:[%s2] sm:$0xff]
  %v7299 = vld [vmem:[%s2 + $0x8] sm:$0xff]
  %7301 = vset.pattern.permute.xlu0 15
  %7302 = vperm.xlu0 %7301, %v7298
  %v7303 = vpop.permute.xlu0 %7302
  %7306 = vset.pattern.permute.xlu0 15
  %7307 = vperm.xlu0 %7306, %v7299
  %v7308 = vpop.permute.xlu0 %7307
  %v7310 = vmul.f32 %v6980, %v7303
  %v7311 = vmul.f32 %v6982, %v7303
  %v7312 = vmul.f32 %v7057, %v7303
  %v7313 = vmul.f32 %v7059, %v7303
  %v7314 = vmul.f32 %v7134, %v7303
  %v7315 = vmul.f32 %v7136, %v7303
  %v7316 = vmul.f32 %v7211, %v7303
  %v7317 = vmul.f32 %v7213, %v7303
  %v7318 = vmul.f32 %v7288, %v7303
  %v7319 = vmul.f32 %v7290, %v7303
  %v7320 = vmul.f32 %v6986, %v7308
  %v7321 = vmul.f32 %v6988, %v7308
  %v7322 = vmul.f32 %v7063, %v7308
  %v7323 = vmul.f32 %v7065, %v7308
  %v7324 = vmul.f32 %v7140, %v7308
  %v7325 = vmul.f32 %v7142, %v7308
  %v7326 = vmul.f32 %v7217, %v7308
  %v7327 = vmul.f32 %v7219, %v7308
  %v7328 = vmul.f32 %v7294, %v7308
  %v7329 = vmul.f32 %v7296, %v7308
  %7330 = vset.pattern.permute.xlu0 16
  %7331 = vperm.xlu0 %7330, %v7298
  %v7332 = vpop.permute.xlu0 %7331
  %7334 = vset.pattern.permute.xlu0 16
  %7335 = vperm.xlu0 %7334, %v7299
  %v7336 = vpop.permute.xlu0 %7335
  %v7338 = vadd.f32 %v7310, %v7332
  %v7339 = vadd.f32 %v7311, %v7332
  %v7340 = vadd.f32 %v7312, %v7332
  %v7341 = vadd.f32 %v7313, %v7332
  %v7342 = vadd.f32 %v7314, %v7332
  %v7343 = vadd.f32 %v7315, %v7332
  %v7344 = vadd.f32 %v7316, %v7332
  %v7345 = vadd.f32 %v7317, %v7332
  %v7346 = vadd.f32 %v7318, %v7332
  %v7347 = vadd.f32 %v7319, %v7332
  %v7348 = vadd.f32 %v7320, %v7336
  %v7349 = vadd.f32 %v7321, %v7336
  %v7350 = vadd.f32 %v7322, %v7336
  %v7351 = vadd.f32 %v7323, %v7336
  %v7352 = vadd.f32 %v7324, %v7336
  %v7353 = vadd.f32 %v7325, %v7336
  %v7354 = vadd.f32 %v7326, %v7336
  %v7355 = vadd.f32 %v7327, %v7336
  %v7356 = vadd.f32 %v7328, %v7336
  %v7357 = vadd.f32 %v7329, %v7336
  %v7358 = vmul.f32 %v7338, %v6816
  %v7359 = vmul.f32 %v7339, %v6820
  %v7360 = vmul.f32 %v7340, %v6824
  %v7361 = vmul.f32 %v7341, %v6828
  %v7362 = vmul.f32 %v7342, %v6832
  %v7363 = vmul.f32 %v7343, %v6836
  %v7364 = vmul.f32 %v7344, %v6840
  %v7365 = vmul.f32 %v7345, %v6844
  %v7366 = vmul.f32 %v7346, %v6848
  %v7367 = vmul.f32 %v7347, %v6852
  %v7368 = vmul.f32 %v7348, %v6816
  %v7369 = vmul.f32 %v7349, %v6820
  %v7370 = vmul.f32 %v7350, %v6824
  %v7371 = vmul.f32 %v7351, %v6828
  %v7372 = vmul.f32 %v7352, %v6832
  %v7373 = vmul.f32 %v7353, %v6836
  %v7374 = vmul.f32 %v7354, %v6840
  %v7375 = vmul.f32 %v7355, %v6844
  %v7376 = vmul.f32 %v7356, %v6848
  %v7377 = vmul.f32 %v7357, %v6852
  %7378 = vst [vmem:[#allocation8] sm:$0xff] %v7358
  %7379 = vst [vmem:[#allocation8 + $0x8] sm:$0xff] %v7359
  %7380 = vst [vmem:[#allocation8 + $0x10] sm:$0xff] %v7360
  %7381 = vst [vmem:[#allocation8 + $0x18] sm:$0xff] %v7361
  %7382 = vst [vmem:[#allocation8 + $0x20] sm:$0xff] %v7362
  %7383 = vst [vmem:[#allocation8 + $0x28] sm:$0xff] %v7363
  %7384 = vst [vmem:[#allocation8 + $0x30] sm:$0xff] %v7364
  %7385 = vst [vmem:[#allocation8 + $0x38] sm:$0xff] %v7365
  %7386 = vst [vmem:[#allocation8 + $0x40] sm:$0xff] %v7366
  %7387 = vst.msk [vmem:[#allocation8 + $0x48] sm:$0xff] %vm4407, %v7367
  %7388 = vst [vmem:[#allocation8 + $0x50] sm:$0xff] %v7368
  %7389 = vst [vmem:[#allocation8 + $0x58] sm:$0xff] %v7369
  %7390 = vst [vmem:[#allocation8 + $0x60] sm:$0xff] %v7370
  %7391 = vst [vmem:[#allocation8 + $0x68] sm:$0xff] %v7371
  %7392 = vst [vmem:[#allocation8 + $0x70] sm:$0xff] %v7372
  %7393 = vst [vmem:[#allocation8 + $0x78] sm:$0xff] %v7373
  %7394 = vst [vmem:[#allocation8 + $0x80] sm:$0xff] %v7374
  %7395 = vst [vmem:[#allocation8 + $0x88] sm:$0xff] %v7375
  %7396 = vst [vmem:[#allocation8 + $0x90] sm:$0xff] %v7376
  %7397 = vst.msk [vmem:[#allocation8 + $0x98] sm:$0xff] %vm4407, %v7377
  %v7398 = vld [vmem:[%s2] sm:$0xff]
  %v7399 = vld [vmem:[%s2 + $0x8] sm:$0xff]
  %v7400 = vld [vmem:[%s2 + $0x10] sm:$0xff]
  %v7401 = vld [vmem:[%s2 + $0x18] sm:$0xff]
  %7403 = vset.pattern.permute.xlu0 11
  %7404 = vperm.xlu0 %7403, %v7398
  %v7405 = vpop.permute.xlu0 %7404
  %7408 = vset.pattern.permute.xlu0 11
  %7409 = vperm.xlu0 %7408, %v7399
  %v7410 = vpop.permute.xlu0 %7409
  %7413 = vset.pattern.permute.xlu0 11
  %7414 = vperm.xlu0 %7413, %v7400
  %v7415 = vpop.permute.xlu0 %7414
  %7418 = vset.pattern.permute.xlu0 11
  %7419 = vperm.xlu0 %7418, %v7401
  %v7420 = vpop.permute.xlu0 %7419
  %v7422 = vmul.f32 %v6863, %v7405
  %v7423 = vmul.f32 %v6864, %v7405
  %v7424 = vmul.f32 %v6865, %v7405
  %v7425 = vmul.f32 %v6866, %v7405
  %v7426 = vmul.f32 %v6867, %v7405
  %v7427 = vmul.f32 %v6868, %v7405
  %v7428 = vmul.f32 %v6869, %v7405
  %v7429 = vmul.f32 %v6870, %v7405
  %v7430 = vmul.f32 %v6871, %v7405
  %v7431 = vmul.f32 %v6872, %v7405
  %v7432 = vmul.f32 %v6873, %v7410
  %v7433 = vmul.f32 %v6874, %v7410
  %v7434 = vmul.f32 %v6875, %v7410
  %v7435 = vmul.f32 %v6876, %v7410
  %v7436 = vmul.f32 %v6877, %v7410
  %v7437 = vmul.f32 %v6878, %v7410
  %v7438 = vmul.f32 %v6879, %v7410
  %v7439 = vmul.f32 %v6880, %v7410
  %v7440 = vmul.f32 %v6881, %v7410
  %v7441 = vmul.f32 %v6882, %v7410
  %v7442 = vmul.f32 %v6883, %v7415
  %v7443 = vmul.f32 %v6884, %v7415
  %v7444 = vmul.f32 %v6885, %v7415
  %v7445 = vmul.f32 %v6886, %v7415
  %v7446 = vmul.f32 %v6887, %v7415
  %v7447 = vmul.f32 %v6888, %v7415
  %v7448 = vmul.f32 %v6889, %v7415
  %v7449 = vmul.f32 %v6890, %v7415
  %v7450 = vmul.f32 %v6891, %v7415
  %v7451 = vmul.f32 %v6892, %v7415
  %v7452 = vmul.f32 %v6893, %v7420
  %v7453 = vmul.f32 %v6894, %v7420
  %v7454 = vmul.f32 %v6895, %v7420
  %v7455 = vmul.f32 %v6896, %v7420
  %v7456 = vmul.f32 %v6897, %v7420
  %v7457 = vmul.f32 %v6898, %v7420
  %v7458 = vmul.f32 %v6899, %v7420
  %v7459 = vmul.f32 %v6900, %v7420
  %v7460 = vmul.f32 %v6901, %v7420
  %v7461 = vmul.f32 %v6902, %v7420
  %7462 = vset.pattern.permute.xlu0 12
  %7463 = vperm.xlu0 %7462, %v7398
  %v7464 = vpop.permute.xlu0 %7463
  %7466 = vset.pattern.permute.xlu0 12
  %7467 = vperm.xlu0 %7466, %v7399
  %v7468 = vpop.permute.xlu0 %7467
  %7470 = vset.pattern.permute.xlu0 12
  %7471 = vperm.xlu0 %7470, %v7400
  %v7472 = vpop.permute.xlu0 %7471
  %7474 = vset.pattern.permute.xlu0 12
  %7475 = vperm.xlu0 %7474, %v7401
  %v7476 = vpop.permute.xlu0 %7475
  %v7478 = vadd.f32 %v7422, %v7464
  %v7479 = vadd.f32 %v7423, %v7464
  %v7480 = vadd.f32 %v7424, %v7464
  %v7481 = vadd.f32 %v7425, %v7464
  %v7482 = vadd.f32 %v7426, %v7464
  %v7483 = vadd.f32 %v7427, %v7464
  %v7484 = vadd.f32 %v7428, %v7464
  %v7485 = vadd.f32 %v7429, %v7464
  %v7486 = vadd.f32 %v7430, %v7464
  %v7487 = vadd.f32 %v7431, %v7464
  %v7488 = vadd.f32 %v7432, %v7468
  %v7489 = vadd.f32 %v7433, %v7468
  %v7490 = vadd.f32 %v7434, %v7468
  %v7491 = vadd.f32 %v7435, %v7468
  %v7492 = vadd.f32 %v7436, %v7468
  %v7493 = vadd.f32 %v7437, %v7468
  %v7494 = vadd.f32 %v7438, %v7468
  %v7495 = vadd.f32 %v7439, %v7468
  %v7496 = vadd.f32 %v7440, %v7468
  %v7497 = vadd.f32 %v7441, %v7468
  %v7498 = vadd.f32 %v7442, %v7472
  %v7499 = vadd.f32 %v7443, %v7472
  %v7500 = vadd.f32 %v7444, %v7472
  %v7501 = vadd.f32 %v7445, %v7472
  %v7502 = vadd.f32 %v7446, %v7472
  %v7503 = vadd.f32 %v7447, %v7472
  %v7504 = vadd.f32 %v7448, %v7472
  %v7505 = vadd.f32 %v7449, %v7472
  %v7506 = vadd.f32 %v7450, %v7472
  %v7507 = vadd.f32 %v7451, %v7472
  %v7508 = vadd.f32 %v7452, %v7476
  %v7509 = vadd.f32 %v7453, %v7476
  %v7510 = vadd.f32 %v7454, %v7476
  %v7511 = vadd.f32 %v7455, %v7476
  %v7512 = vadd.f32 %v7456, %v7476
  %v7513 = vadd.f32 %v7457, %v7476
  %v7514 = vadd.f32 %v7458, %v7476
  %v7515 = vadd.f32 %v7459, %v7476
  %v7516 = vadd.f32 %v7460, %v7476
  %v7517 = vadd.f32 %v7461, %v7476
  %v7518 = vmax.f32 %v7478, 0.0
  %v7519 = vmax.f32 %v7479, 0.0
  %v7520 = vmax.f32 %v7480, 0.0
  %v7521 = vmax.f32 %v7481, 0.0
  %v7522 = vmax.f32 %v7482, 0.0
  %v7523 = vmax.f32 %v7483, 0.0
  %v7524 = vmax.f32 %v7484, 0.0
  %v7525 = vmax.f32 %v7485, 0.0
  %v7526 = vmax.f32 %v7486, 0.0
  %v7527 = vmax.f32 %v7487, 0.0
  %v7528 = vmax.f32 %v7488, 0.0
  %v7529 = vmax.f32 %v7489, 0.0
  %v7530 = vmax.f32 %v7490, 0.0
  %v7531 = vmax.f32 %v7491, 0.0
  %v7532 = vmax.f32 %v7492, 0.0
  %v7533 = vmax.f32 %v7493, 0.0
  %v7534 = vmax.f32 %v7494, 0.0
  %v7535 = vmax.f32 %v7495, 0.0
  %v7536 = vmax.f32 %v7496, 0.0
  %v7537 = vmax.f32 %v7497, 0.0
  %v7538 = vmax.f32 %v7498, 0.0
  %v7539 = vmax.f32 %v7499, 0.0
  %v7540 = vmax.f32 %v7500, 0.0
  %v7541 = vmax.f32 %v7501, 0.0
  %v7542 = vmax.f32 %v7502, 0.0
  %v7543 = vmax.f32 %v7503, 0.0
  %v7544 = vmax.f32 %v7504, 0.0
  %v7545 = vmax.f32 %v7505, 0.0
  %v7546 = vmax.f32 %v7506, 0.0
  %v7547 = vmax.f32 %v7507, 0.0
  %v7548 = vmax.f32 %v7508, 0.0
  %v7549 = vmax.f32 %v7509, 0.0
  %v7550 = vmax.f32 %v7510, 0.0
  %v7551 = vmax.f32 %v7511, 0.0
  %v7552 = vmax.f32 %v7512, 0.0
  %v7553 = vmax.f32 %v7513, 0.0
  %v7554 = vmax.f32 %v7514, 0.0
  %v7555 = vmax.f32 %v7515, 0.0
  %v7556 = vmax.f32 %v7516, 0.0
  %v7557 = vmax.f32 %v7517, 0.0
  %v7558 = vmul.f32 %v7518, %v6816
  %v7559 = vmul.f32 %v7519, %v6820
  %v7560 = vmul.f32 %v7520, %v6824
  %v7561 = vmul.f32 %v7521, %v6828
  %v7562 = vmul.f32 %v7522, %v6832
  %v7563 = vmul.f32 %v7523, %v6836
  %v7564 = vmul.f32 %v7524, %v6840
  %v7565 = vmul.f32 %v7525, %v6844
  %v7566 = vmul.f32 %v7526, %v6848
  %v7567 = vmul.f32 %v7527, %v6852
  %v7568 = vmul.f32 %v7528, %v6816
  %v7569 = vmul.f32 %v7529, %v6820
  %v7570 = vmul.f32 %v7530, %v6824
  %v7571 = vmul.f32 %v7531, %v6828
  %v7572 = vmul.f32 %v7532, %v6832
  %v7573 = vmul.f32 %v7533, %v6836
  %v7574 = vmul.f32 %v7534, %v6840
  %v7575 = vmul.f32 %v7535, %v6844
  %v7576 = vmul.f32 %v7536, %v6848
  %v7577 = vmul.f32 %v7537, %v6852
  %v7578 = vmul.f32 %v7538, %v6816
  %v7579 = vmul.f32 %v7539, %v6820
  %v7580 = vmul.f32 %v7540, %v6824
  %v7581 = vmul.f32 %v7541, %v6828
  %v7582 = vmul.f32 %v7542, %v6832
  %v7583 = vmul.f32 %v7543, %v6836
  %v7584 = vmul.f32 %v7544, %v6840
  %v7585 = vmul.f32 %v7545, %v6844
  %v7586 = vmul.f32 %v7546, %v6848
  %v7587 = vmul.f32 %v7547, %v6852
  %v7588 = vmul.f32 %v7548, %v6816
  %v7589 = vmul.f32 %v7549, %v6820
  %v7590 = vmul.f32 %v7550, %v6824
  %v7591 = vmul.f32 %v7551, %v6828
  %v7592 = vmul.f32 %v7552, %v6832
  %v7593 = vmul.f32 %v7553, %v6836
  %v7594 = vmul.f32 %v7554, %v6840
  %v7595 = vmul.f32 %v7555, %v6844
  %v7596 = vmul.f32 %v7556, %v6848
  %v7597 = vmul.f32 %v7557, %v6852
  %v7598 = vpack.c.bf16 %v7568, %v7558
  %v7599 = vpack.c.bf16 %v7569, %v7559
  %v7600 = vpack.c.bf16 %v7570, %v7560
  %v7601 = vpack.c.bf16 %v7571, %v7561
  %v7602 = vpack.c.bf16 %v7572, %v7562
  %v7603 = vpack.c.bf16 %v7573, %v7563
  %v7604 = vpack.c.bf16 %v7574, %v7564
  %v7605 = vpack.c.bf16 %v7575, %v7565
  %v7606 = vpack.c.bf16 %v7576, %v7566
  %v7607 = vpack.c.bf16 %v7577, %v7567
  %v7608 = vpack.c.bf16 %v7588, %v7578
  %v7609 = vpack.c.bf16 %v7589, %v7579
  %v7610 = vpack.c.bf16 %v7590, %v7580
  %v7611 = vpack.c.bf16 %v7591, %v7581
  %v7612 = vpack.c.bf16 %v7592, %v7582
  %v7613 = vpack.c.bf16 %v7593, %v7583
  %v7614 = vpack.c.bf16 %v7594, %v7584
  %v7615 = vpack.c.bf16 %v7595, %v7585
  %v7616 = vpack.c.bf16 %v7596, %v7586
  %v7617 = vpack.c.bf16 %v7597, %v7587
  %7638 = vrot.lane.b32.xlu0 %v7598, 35
  %v7639 = vpop.permute.xlu0 %7638
  %7640 = vrot.lane.b32.xlu0 %v7599, 35
  %v7641 = vpop.permute.xlu0 %7640
  %7642 = vrot.lane.b32.xlu0 %v7600, 35
  %v7643 = vpop.permute.xlu0 %7642
  %7644 = vrot.lane.b32.xlu0 %v7601, 35
  %v7645 = vpop.permute.xlu0 %7644
  %7646 = vrot.lane.b32.xlu0 %v7602, 35
  %v7647 = vpop.permute.xlu0 %7646
  %7648 = vrot.lane.b32.xlu0 %v7603, 35
  %v7649 = vpop.permute.xlu0 %7648
  %7650 = vrot.lane.b32.xlu0 %v7604, 35
  %v7651 = vpop.permute.xlu0 %7650
  %7652 = vrot.lane.b32.xlu0 %v7605, 35
  %v7653 = vpop.permute.xlu0 %7652
  %7654 = vrot.lane.b32.xlu0 %v7606, 35
  %v7655 = vpop.permute.xlu0 %7654
  %7656 = vrot.lane.b32.xlu0 %v7607, 35
  %v7657 = vpop.permute.xlu0 %7656
  %7658 = vrot.lane.b32.xlu0 %v7608, 35
  %v7659 = vpop.permute.xlu0 %7658
  %7660 = vrot.lane.b32.xlu0 %v7609, 35
  %v7661 = vpop.permute.xlu0 %7660
  %7662 = vrot.lane.b32.xlu0 %v7610, 35
  %v7663 = vpop.permute.xlu0 %7662
  %7664 = vrot.lane.b32.xlu0 %v7611, 35
  %v7665 = vpop.permute.xlu0 %7664
  %7666 = vrot.lane.b32.xlu0 %v7612, 35
  %v7667 = vpop.permute.xlu0 %7666
  %7668 = vrot.lane.b32.xlu0 %v7613, 35
  %v7669 = vpop.permute.xlu0 %7668
  %7670 = vrot.lane.b32.xlu0 %v7614, 35
  %v7671 = vpop.permute.xlu0 %7670
  %7672 = vrot.lane.b32.xlu0 %v7615, 35
  %v7673 = vpop.permute.xlu0 %7672
  %7674 = vrot.lane.b32.xlu0 %v7616, 35
  %v7675 = vpop.permute.xlu0 %7674
  %7676 = vrot.lane.b32.xlu0 %v7617, 35
  %v7677 = vpop.permute.xlu0 %7676
  %vm7678 = vcmask 285696
  %v7679 = vsel %vm7678, %v7639, %v7641
  %v7680 = vsel %vm7678, %v7641, %v7643
  %v7681 = vsel %vm7678, %v7643, %v7645
  %v7682 = vsel %vm7678, %v7645, %v7647
  %v7683 = vsel %vm7678, %v7647, %v7649
  %v7684 = vsel %vm7678, %v7649, %v7651
  %v7685 = vsel %vm7678, %v7651, %v7653
  %v7686 = vsel %vm7678, %v7653, %v7655
  %v7687 = vsel %vm7678, %v7655, %v7657
  %v7688 = vsel %vm7678, %v7659, %v7661
  %v7689 = vsel %vm7678, %v7661, %v7663
  %v7690 = vsel %vm7678, %v7663, %v7665
  %v7691 = vsel %vm7678, %v7665, %v7667
  %v7692 = vsel %vm7678, %v7667, %v7669
  %v7693 = vsel %vm7678, %v7669, %v7671
  %v7694 = vsel %vm7678, %v7671, %v7673
  %v7695 = vsel %vm7678, %v7673, %v7675
  %v7696 = vsel %vm7678, %v7675, %v7677
  %vm7717 = vcmask 1047832
  %7718 = vst.msk [vmem:[#allocation6] sm:$0xff] %vm7717, %v7639
  %7719 = vst [vmem:[#allocation6 + $0x8] sm:$0xff] %v7679
  %7720 = vst [vmem:[#allocation6 + $0x10] sm:$0xff] %v7680
  %7721 = vst [vmem:[#allocation6 + $0x18] sm:$0xff] %v7681
  %7722 = vst [vmem:[#allocation6 + $0x20] sm:$0xff] %v7682
  %7723 = vst [vmem:[#allocation6 + $0x28] sm:$0xff] %v7683
  %7724 = vst [vmem:[#allocation6 + $0x30] sm:$0xff] %v7684
  %7725 = vst [vmem:[#allocation6 + $0x38] sm:$0xff] %v7685
  %7726 = vst [vmem:[#allocation6 + $0x40] sm:$0xff] %v7686
  %vm7727 = vcmask 318464
  %7728 = vst.msk [vmem:[#allocation6 + $0x48] sm:$0xff] %vm7727, %v7687
  %7729 = vst.msk [vmem:[#allocation6 + $0x50] sm:$0xff] %vm7717, %v7659
  %7730 = vst [vmem:[#allocation6 + $0x58] sm:$0xff] %v7688
  %7731 = vst [vmem:[#allocation6 + $0x60] sm:$0xff] %v7689
  %7732 = vst [vmem:[#allocation6 + $0x68] sm:$0xff] %v7690
  %7733 = vst [vmem:[#allocation6 + $0x70] sm:$0xff] %v7691
  %7734 = vst [vmem:[#allocation6 + $0x78] sm:$0xff] %v7692
  %7735 = vst [vmem:[#allocation6 + $0x80] sm:$0xff] %v7693
  %7736 = vst [vmem:[#allocation6 + $0x88] sm:$0xff] %v7694
  %7737 = vst [vmem:[#allocation6 + $0x90] sm:$0xff] %v7695
  %7738 = vst.msk [vmem:[#allocation6 + $0x98] sm:$0xff] %vm7727, %v7696
  %v7739 = vld [vmem:[%s1 + $0x3c] sm:$0xff]
  %v7740 = vld [vmem:[%s1 + $0x44] sm:$0xf]
  %v7741 = vld [vmem:[%s1 + $0x98] sm:$0xff]
  %v7742 = vld [vmem:[%s1 + $0xa0] sm:$0xf]
  %v7743 = vld [vmem:[%s2] sm:$0xff]
  %v7744 = vld [vmem:[%s2 + $0x8] sm:$0xff]
  %v7745 = vld [vmem:[#allocation6] sm:$0xff]
  %v7746 = vld [vmem:[#allocation6 + $0x8] sm:$0xff]
  %v7747 = vld [vmem:[#allocation6 + $0x10] sm:$0xff]
  %v7748 = vld [vmem:[#allocation6 + $0x18] sm:$0xff]
  %v7749 = vld [vmem:[#allocation6 + $0x20] sm:$0xff]
  %v7750 = vld [vmem:[#allocation6 + $0x28] sm:$0xff]
  %v7751 = vld [vmem:[#allocation6 + $0x30] sm:$0xff]
  %v7752 = vld [vmem:[#allocation6 + $0x38] sm:$0xff]
  %v7753 = vld [vmem:[#allocation6 + $0x40] sm:$0xff]
  %v7754 = vld [vmem:[#allocation6 + $0x48] sm:$0xff]
  %v7755 = vld [vmem:[#allocation6 + $0x50] sm:$0xff]
  %v7756 = vld [vmem:[#allocation6 + $0x58] sm:$0xff]
  %v7757 = vld [vmem:[#allocation6 + $0x60] sm:$0xff]
  %v7758 = vld [vmem:[#allocation6 + $0x68] sm:$0xff]
  %v7759 = vld [vmem:[#allocation6 + $0x70] sm:$0xff]
  %v7760 = vld [vmem:[#allocation6 + $0x78] sm:$0xff]
  %v7761 = vld [vmem:[#allocation6 + $0x80] sm:$0xff]
  %v7762 = vld [vmem:[#allocation6 + $0x88] sm:$0xff]
  %v7763 = vld [vmem:[#allocation6 + $0x90] sm:$0xff]
  %v7764 = vld [vmem:[#allocation6 + $0x98] sm:$0xff]
  %7765 = vst [vmem:[#allocation9] sm:$0xff] %v7745
  %7766 = vst [vmem:[#allocation9 + $0x8] sm:$0xff] %v7746
  %7767 = vst [vmem:[#allocation9 + $0x10] sm:$0xff] %v7747
  %7768 = vst [vmem:[#allocation9 + $0x18] sm:$0xff] %v7748
  %7769 = vst [vmem:[#allocation9 + $0x20] sm:$0xff] %v7749
  %7770 = vst [vmem:[#allocation9 + $0x28] sm:$0xff] %v7750
  %7771 = vst [vmem:[#allocation9 + $0x30] sm:$0xff] %v7751
  %7772 = vst [vmem:[#allocation9 + $0x38] sm:$0xff] %v7752
  %7773 = vst [vmem:[#allocation9 + $0x40] sm:$0xff] %v7753
  %7774 = vst.msk [vmem:[#allocation9 + $0x48] sm:$0xff] %vm4407, %v7754
  %7775 = vst [vmem:[#allocation9 + $0x50] sm:$0xff] %v7755
  %7776 = vst [vmem:[#allocation9 + $0x58] sm:$0xff] %v7756
  %7777 = vst [vmem:[#allocation9 + $0x60] sm:$0xff] %v7757
  %7778 = vst [vmem:[#allocation9 + $0x68] sm:$0xff] %v7758
  %7779 = vst [vmem:[#allocation9 + $0x70] sm:$0xff] %v7759
  %7780 = vst [vmem:[#allocation9 + $0x78] sm:$0xff] %v7760
  %7781 = vst [vmem:[#allocation9 + $0x80] sm:$0xff] %v7761
  %7782 = vst [vmem:[#allocation9 + $0x88] sm:$0xff] %v7762
  %7783 = vst [vmem:[#allocation9 + $0x90] sm:$0xff] %v7763
  %7784 = vst.msk [vmem:[#allocation9 + $0x98] sm:$0xff] %vm4407, %v7764
  %v7785 = vld [vmem:[#allocation6] sm:$0xff]
  %v7786 = vld [vmem:[#allocation6 + $0x8] sm:$0xff]
  %v7787 = vld [vmem:[#allocation6 + $0x10] sm:$0xff]
  %v7788 = vld [vmem:[#allocation6 + $0x18] sm:$0xff]
  %v7789 = vld [vmem:[#allocation6 + $0x20] sm:$0xff]
  %v7790 = vld [vmem:[#allocation6 + $0x28] sm:$0xff]
  %v7791 = vld [vmem:[#allocation6 + $0x30] sm:$0xff]
  %v7792 = vld [vmem:[#allocation6 + $0x38] sm:$0xff]
  %v7793 = vld [vmem:[#allocation6 + $0x40] sm:$0xff]
  %v7794 = vld [vmem:[#allocation6 + $0x48] sm:$0xff]
  %v7795 = vld [vmem:[#allocation6 + $0x50] sm:$0xff]
  %v7796 = vld [vmem:[#allocation6 + $0x58] sm:$0xff]
  %v7797 = vld [vmem:[#allocation6 + $0x60] sm:$0xff]
  %v7798 = vld [vmem:[#allocation6 + $0x68] sm:$0xff]
  %v7799 = vld [vmem:[#allocation6 + $0x70] sm:$0xff]
  %v7800 = vld [vmem:[#allocation6 + $0x78] sm:$0xff]
  %v7801 = vld [vmem:[#allocation6 + $0x80] sm:$0xff]
  %v7802 = vld [vmem:[#allocation6 + $0x88] sm:$0xff]
  %v7803 = vld [vmem:[#allocation6 + $0x90] sm:$0xff]
  %v7804 = vld [vmem:[#allocation6 + $0x98] sm:$0xff]
  %7825 = vrot.lane.b32.xlu0 %v7785, 127
  %v7826 = vpop.permute.xlu0 %7825
  %7827 = vrot.lane.b32.xlu0 %v7786, 127
  %v7828 = vpop.permute.xlu0 %7827
  %7829 = vrot.lane.b32.xlu0 %v7787, 127
  %v7830 = vpop.permute.xlu0 %7829
  %7831 = vrot.lane.b32.xlu0 %v7788, 127
  %v7832 = vpop.permute.xlu0 %7831
  %7833 = vrot.lane.b32.xlu0 %v7789, 127
  %v7834 = vpop.permute.xlu0 %7833
  %7835 = vrot.lane.b32.xlu0 %v7790, 127
  %v7836 = vpop.permute.xlu0 %7835
  %7837 = vrot.lane.b32.xlu0 %v7791, 127
  %v7838 = vpop.permute.xlu0 %7837
  %7839 = vrot.lane.b32.xlu0 %v7792, 127
  %v7840 = vpop.permute.xlu0 %7839
  %7841 = vrot.lane.b32.xlu0 %v7793, 127
  %v7842 = vpop.permute.xlu0 %7841
  %7843 = vrot.lane.b32.xlu0 %v7794, 127
  %v7844 = vpop.permute.xlu0 %7843
  %7845 = vrot.lane.b32.xlu0 %v7795, 127
  %v7846 = vpop.permute.xlu0 %7845
  %7847 = vrot.lane.b32.xlu0 %v7796, 127
  %v7848 = vpop.permute.xlu0 %7847
  %7849 = vrot.lane.b32.xlu0 %v7797, 127
  %v7850 = vpop.permute.xlu0 %7849
  %7851 = vrot.lane.b32.xlu0 %v7798, 127
  %v7852 = vpop.permute.xlu0 %7851
  %7853 = vrot.lane.b32.xlu0 %v7799, 127
  %v7854 = vpop.permute.xlu0 %7853
  %7855 = vrot.lane.b32.xlu0 %v7800, 127
  %v7856 = vpop.permute.xlu0 %7855
  %7857 = vrot.lane.b32.xlu0 %v7801, 127
  %v7858 = vpop.permute.xlu0 %7857
  %7859 = vrot.lane.b32.xlu0 %v7802, 127
  %v7860 = vpop.permute.xlu0 %7859
  %7861 = vrot.lane.b32.xlu0 %v7803, 127
  %v7862 = vpop.permute.xlu0 %7861
  %7863 = vrot.lane.b32.xlu0 %v7804, 127
  %v7864 = vpop.permute.xlu0 %7863
  %v7865 = vsel %vm2168, %v7826, %v7828
  %v7866 = vsel %vm2168, %v7828, %v7830
  %v7867 = vsel %vm2168, %v7830, %v7832
  %v7868 = vsel %vm2168, %v7832, %v7834
  %v7869 = vsel %vm2168, %v7834, %v7836
  %v7870 = vsel %vm2168, %v7836, %v7838
  %v7871 = vsel %vm2168, %v7838, %v7840
  %v7872 = vsel %vm2168, %v7840, %v7842
  %v7873 = vsel %vm2168, %v7842, %v7844
  %v7874 = vsel %vm2168, %v7846, %v7848
  %v7875 = vsel %vm2168, %v7848, %v7850
  %v7876 = vsel %vm2168, %v7850, %v7852
  %v7877 = vsel %vm2168, %v7852, %v7854
  %v7878 = vsel %vm2168, %v7854, %v7856
  %v7879 = vsel %vm2168, %v7856, %v7858
  %v7880 = vsel %vm2168, %v7858, %v7860
  %v7881 = vsel %vm2168, %v7860, %v7862
  %v7882 = vsel %vm2168, %v7862, %v7864
  %7903 = vst [vmem:[#allocation9 + $0xa0] sm:$0xff] %v7865
  %7904 = vst [vmem:[#allocation9 + $0xa8] sm:$0xff] %v7866
  %7905 = vst [vmem:[#allocation9 + $0xb0] sm:$0xff] %v7867
  %7906 = vst [vmem:[#allocation9 + $0xb8] sm:$0xff] %v7868
  %7907 = vst [vmem:[#allocation9 + $0xc0] sm:$0xff] %v7869
  %7908 = vst [vmem:[#allocation9 + $0xc8] sm:$0xff] %v7870
  %7909 = vst [vmem:[#allocation9 + $0xd0] sm:$0xff] %v7871
  %7910 = vst [vmem:[#allocation9 + $0xd8] sm:$0xff] %v7872
  %7911 = vst [vmem:[#allocation9 + $0xe0] sm:$0xff] %v7873
  %7912 = vst.msk [vmem:[#allocation9 + $0xe8] sm:$0xff] %vm4407, %v7844
  %7913 = vst [vmem:[#allocation9 + $0xf0] sm:$0xff] %v7874
  %7914 = vst [vmem:[#allocation9 + $0xf8] sm:$0xff] %v7875
  %7915 = vst [vmem:[#allocation9 + $0x100] sm:$0xff] %v7876
  %7916 = vst [vmem:[#allocation9 + $0x108] sm:$0xff] %v7877
  %7917 = vst [vmem:[#allocation9 + $0x110] sm:$0xff] %v7878
  %7918 = vst [vmem:[#allocation9 + $0x118] sm:$0xff] %v7879
  %7919 = vst [vmem:[#allocation9 + $0x120] sm:$0xff] %v7880
  %7920 = vst [vmem:[#allocation9 + $0x128] sm:$0xff] %v7881
  %7921 = vst [vmem:[#allocation9 + $0x130] sm:$0xff] %v7882
  %7922 = vst.msk [vmem:[#allocation9 + $0x138] sm:$0xff] %vm4407, %v7864
  %v7923 = vld [vmem:[#allocation6] sm:$0xff]
  %v7924 = vld [vmem:[#allocation6 + $0x8] sm:$0xff]
  %v7925 = vld [vmem:[#allocation6 + $0x10] sm:$0xff]
  %v7926 = vld [vmem:[#allocation6 + $0x18] sm:$0xff]
  %v7927 = vld [vmem:[#allocation6 + $0x20] sm:$0xff]
  %v7928 = vld [vmem:[#allocation6 + $0x28] sm:$0xff]
  %v7929 = vld [vmem:[#allocation6 + $0x30] sm:$0xff]
  %v7930 = vld [vmem:[#allocation6 + $0x38] sm:$0xff]
  %v7931 = vld [vmem:[#allocation6 + $0x40] sm:$0xff]
  %v7932 = vld [vmem:[#allocation6 + $0x48] sm:$0xff]
  %v7933 = vld [vmem:[#allocation6 + $0x50] sm:$0xff]
  %v7934 = vld [vmem:[#allocation6 + $0x58] sm:$0xff]
  %v7935 = vld [vmem:[#allocation6 + $0x60] sm:$0xff]
  %v7936 = vld [vmem:[#allocation6 + $0x68] sm:$0xff]
  %v7937 = vld [vmem:[#allocation6 + $0x70] sm:$0xff]
  %v7938 = vld [vmem:[#allocation6 + $0x78] sm:$0xff]
  %v7939 = vld [vmem:[#allocation6 + $0x80] sm:$0xff]
  %v7940 = vld [vmem:[#allocation6 + $0x88] sm:$0xff]
  %v7941 = vld [vmem:[#allocation6 + $0x90] sm:$0xff]
  %v7942 = vld [vmem:[#allocation6 + $0x98] sm:$0xff]
  %7963 = vrot.lane.b32.xlu0 %v7923, 126
  %v7964 = vpop.permute.xlu0 %7963
  %7965 = vrot.lane.b32.xlu0 %v7924, 126
  %v7966 = vpop.permute.xlu0 %7965
  %7967 = vrot.lane.b32.xlu0 %v7925, 126
  %v7968 = vpop.permute.xlu0 %7967
  %7969 = vrot.lane.b32.xlu0 %v7926, 126
  %v7970 = vpop.permute.xlu0 %7969
  %7971 = vrot.lane.b32.xlu0 %v7927, 126
  %v7972 = vpop.permute.xlu0 %7971
  %7973 = vrot.lane.b32.xlu0 %v7928, 126
  %v7974 = vpop.permute.xlu0 %7973
  %7975 = vrot.lane.b32.xlu0 %v7929, 126
  %v7976 = vpop.permute.xlu0 %7975
  %7977 = vrot.lane.b32.xlu0 %v7930, 126
  %v7978 = vpop.permute.xlu0 %7977
  %7979 = vrot.lane.b32.xlu0 %v7931, 126
  %v7980 = vpop.permute.xlu0 %7979
  %7981 = vrot.lane.b32.xlu0 %v7932, 126
  %v7982 = vpop.permute.xlu0 %7981
  %7983 = vrot.lane.b32.xlu0 %v7933, 126
  %v7984 = vpop.permute.xlu0 %7983
  %7985 = vrot.lane.b32.xlu0 %v7934, 126
  %v7986 = vpop.permute.xlu0 %7985
  %7987 = vrot.lane.b32.xlu0 %v7935, 126
  %v7988 = vpop.permute.xlu0 %7987
  %7989 = vrot.lane.b32.xlu0 %v7936, 126
  %v7990 = vpop.permute.xlu0 %7989
  %7991 = vrot.lane.b32.xlu0 %v7937, 126
  %v7992 = vpop.permute.xlu0 %7991
  %7993 = vrot.lane.b32.xlu0 %v7938, 126
  %v7994 = vpop.permute.xlu0 %7993
  %7995 = vrot.lane.b32.xlu0 %v7939, 126
  %v7996 = vpop.permute.xlu0 %7995
  %7997 = vrot.lane.b32.xlu0 %v7940, 126
  %v7998 = vpop.permute.xlu0 %7997
  %7999 = vrot.lane.b32.xlu0 %v7941, 126
  %v8000 = vpop.permute.xlu0 %7999
  %8001 = vrot.lane.b32.xlu0 %v7942, 126
  %v8002 = vpop.permute.xlu0 %8001
  %v8003 = vsel %vm2209, %v7964, %v7966
  %v8004 = vsel %vm2209, %v7966, %v7968
  %v8005 = vsel %vm2209, %v7968, %v7970
  %v8006 = vsel %vm2209, %v7970, %v7972
  %v8007 = vsel %vm2209, %v7972, %v7974
  %v8008 = vsel %vm2209, %v7974, %v7976
  %v8009 = vsel %vm2209, %v7976, %v7978
  %v8010 = vsel %vm2209, %v7978, %v7980
  %v8011 = vsel %vm2209, %v7980, %v7982
  %v8012 = vsel %vm2209, %v7984, %v7986
  %v8013 = vsel %vm2209, %v7986, %v7988
  %v8014 = vsel %vm2209, %v7988, %v7990
  %v8015 = vsel %vm2209, %v7990, %v7992
  %v8016 = vsel %vm2209, %v7992, %v7994
  %v8017 = vsel %vm2209, %v7994, %v7996
  %v8018 = vsel %vm2209, %v7996, %v7998
  %v8019 = vsel %vm2209, %v7998, %v8000
  %v8020 = vsel %vm2209, %v8000, %v8002
  %8041 = vst [vmem:[#allocation9 + $0x140] sm:$0xff] %v8003
  %8042 = vst [vmem:[#allocation9 + $0x148] sm:$0xff] %v8004
  %8043 = vst [vmem:[#allocation9 + $0x150] sm:$0xff] %v8005
  %8044 = vst [vmem:[#allocation9 + $0x158] sm:$0xff] %v8006
  %8045 = vst [vmem:[#allocation9 + $0x160] sm:$0xff] %v8007
  %8046 = vst [vmem:[#allocation9 + $0x168] sm:$0xff] %v8008
  %8047 = vst [vmem:[#allocation9 + $0x170] sm:$0xff] %v8009
  %8048 = vst [vmem:[#allocation9 + $0x178] sm:$0xff] %v8010
  %8049 = vst [vmem:[#allocation9 + $0x180] sm:$0xff] %v8011
  %8050 = vst.msk [vmem:[#allocation9 + $0x188] sm:$0xff] %vm4407, %v7982
  %8051 = vst [vmem:[#allocation9 + $0x190] sm:$0xff] %v8012
  %8052 = vst [vmem:[#allocation9 + $0x198] sm:$0xff] %v8013
  %8053 = vst [vmem:[#allocation9 + $0x1a0] sm:$0xff] %v8014
  %8054 = vst [vmem:[#allocation9 + $0x1a8] sm:$0xff] %v8015
  %8055 = vst [vmem:[#allocation9 + $0x1b0] sm:$0xff] %v8016
  %8056 = vst [vmem:[#allocation9 + $0x1b8] sm:$0xff] %v8017
  %8057 = vst [vmem:[#allocation9 + $0x1c0] sm:$0xff] %v8018
  %8058 = vst [vmem:[#allocation9 + $0x1c8] sm:$0xff] %v8019
  %8059 = vst [vmem:[#allocation9 + $0x1d0] sm:$0xff] %v8020
  %8060 = vst.msk [vmem:[#allocation9 + $0x1d8] sm:$0xff] %vm4407, %v8002
  %v8061 = vld [vmem:[#allocation6] sm:$0xff]
  %v8062 = vld [vmem:[#allocation6 + $0x8] sm:$0xff]
  %v8063 = vld [vmem:[#allocation6 + $0x10] sm:$0xff]
  %v8064 = vld [vmem:[#allocation6 + $0x18] sm:$0xff]
  %v8065 = vld [vmem:[#allocation6 + $0x20] sm:$0xff]
  %v8066 = vld [vmem:[#allocation6 + $0x28] sm:$0xff]
  %v8067 = vld [vmem:[#allocation6 + $0x30] sm:$0xff]
  %v8068 = vld [vmem:[#allocation6 + $0x38] sm:$0xff]
  %v8069 = vld [vmem:[#allocation6 + $0x40] sm:$0xff]
  %v8070 = vld [vmem:[#allocation6 + $0x48] sm:$0xff]
  %v8071 = vld [vmem:[#allocation6 + $0x50] sm:$0xff]
  %v8072 = vld [vmem:[#allocation6 + $0x58] sm:$0xff]
  %v8073 = vld [vmem:[#allocation6 + $0x60] sm:$0xff]
  %v8074 = vld [vmem:[#allocation6 + $0x68] sm:$0xff]
  %v8075 = vld [vmem:[#allocation6 + $0x70] sm:$0xff]
  %v8076 = vld [vmem:[#allocation6 + $0x78] sm:$0xff]
  %v8077 = vld [vmem:[#allocation6 + $0x80] sm:$0xff]
  %v8078 = vld [vmem:[#allocation6 + $0x88] sm:$0xff]
  %v8079 = vld [vmem:[#allocation6 + $0x90] sm:$0xff]
  %v8080 = vld [vmem:[#allocation6 + $0x98] sm:$0xff]
  %8101 = vrot.lane.b32.xlu0 %v8061, 94
  %v8102 = vpop.permute.xlu0 %8101
  %8103 = vrot.lane.b32.xlu0 %v8062, 94
  %v8104 = vpop.permute.xlu0 %8103
  %8105 = vrot.lane.b32.xlu0 %v8063, 94
  %v8106 = vpop.permute.xlu0 %8105
  %8107 = vrot.lane.b32.xlu0 %v8064, 94
  %v8108 = vpop.permute.xlu0 %8107
  %8109 = vrot.lane.b32.xlu0 %v8065, 94
  %v8110 = vpop.permute.xlu0 %8109
  %8111 = vrot.lane.b32.xlu0 %v8066, 94
  %v8112 = vpop.permute.xlu0 %8111
  %8113 = vrot.lane.b32.xlu0 %v8067, 94
  %v8114 = vpop.permute.xlu0 %8113
  %8115 = vrot.lane.b32.xlu0 %v8068, 94
  %v8116 = vpop.permute.xlu0 %8115
  %8117 = vrot.lane.b32.xlu0 %v8069, 94
  %v8118 = vpop.permute.xlu0 %8117
  %8119 = vrot.lane.b32.xlu0 %v8070, 94
  %v8120 = vpop.permute.xlu0 %8119
  %8121 = vrot.lane.b32.xlu0 %v8071, 94
  %v8122 = vpop.permute.xlu0 %8121
  %8123 = vrot.lane.b32.xlu0 %v8072, 94
  %v8124 = vpop.permute.xlu0 %8123
  %8125 = vrot.lane.b32.xlu0 %v8073, 94
  %v8126 = vpop.permute.xlu0 %8125
  %8127 = vrot.lane.b32.xlu0 %v8074, 94
  %v8128 = vpop.permute.xlu0 %8127
  %8129 = vrot.lane.b32.xlu0 %v8075, 94
  %v8130 = vpop.permute.xlu0 %8129
  %8131 = vrot.lane.b32.xlu0 %v8076, 94
  %v8132 = vpop.permute.xlu0 %8131
  %8133 = vrot.lane.b32.xlu0 %v8077, 94
  %v8134 = vpop.permute.xlu0 %8133
  %8135 = vrot.lane.b32.xlu0 %v8078, 94
  %v8136 = vpop.permute.xlu0 %8135
  %8137 = vrot.lane.b32.xlu0 %v8079, 94
  %v8138 = vpop.permute.xlu0 %8137
  %8139 = vrot.lane.b32.xlu0 %v8080, 94
  %v8140 = vpop.permute.xlu0 %8139
  %v8141 = vsel %vm5156, %v8102, %v8104
  %v8142 = vsel %vm5156, %v8104, %v8106
  %v8143 = vsel %vm5156, %v8106, %v8108
  %v8144 = vsel %vm5156, %v8108, %v8110
  %v8145 = vsel %vm5156, %v8110, %v8112
  %v8146 = vsel %vm5156, %v8112, %v8114
  %v8147 = vsel %vm5156, %v8114, %v8116
  %v8148 = vsel %vm5156, %v8116, %v8118
  %v8149 = vsel %vm5156, %v8118, %v8120
  %v8150 = vsel %vm5156, %v8122, %v8124
  %v8151 = vsel %vm5156, %v8124, %v8126
  %v8152 = vsel %vm5156, %v8126, %v8128
  %v8153 = vsel %vm5156, %v8128, %v8130
  %v8154 = vsel %vm5156, %v8130, %v8132
  %v8155 = vsel %vm5156, %v8132, %v8134
  %v8156 = vsel %vm5156, %v8134, %v8136
  %v8157 = vsel %vm5156, %v8136, %v8138
  %v8158 = vsel %vm5156, %v8138, %v8140
  %8179 = vst [vmem:[#allocation9 + $0x1e0] sm:$0xff] %v8141
  %8180 = vst [vmem:[#allocation9 + $0x1e8] sm:$0xff] %v8142
  %8181 = vst [vmem:[#allocation9 + $0x1f0] sm:$0xff] %v8143
  %8182 = vst [vmem:[#allocation9 + $0x1f8] sm:$0xff] %v8144
  %8183 = vst [vmem:[#allocation9 + $0x200] sm:$0xff] %v8145
  %8184 = vst [vmem:[#allocation9 + $0x208] sm:$0xff] %v8146
  %8185 = vst [vmem:[#allocation9 + $0x210] sm:$0xff] %v8147
  %8186 = vst [vmem:[#allocation9 + $0x218] sm:$0xff] %v8148
  %8187 = vst [vmem:[#allocation9 + $0x220] sm:$0xff] %v8149
  %8188 = vst.msk [vmem:[#allocation9 + $0x228] sm:$0xff] %vm4407, %v8120
  %8189 = vst [vmem:[#allocation9 + $0x230] sm:$0xff] %v8150
  %8190 = vst [vmem:[#allocation9 + $0x238] sm:$0xff] %v8151
  %8191 = vst [vmem:[#allocation9 + $0x240] sm:$0xff] %v8152
  %8192 = vst [vmem:[#allocation9 + $0x248] sm:$0xff] %v8153
  %8193 = vst [vmem:[#allocation9 + $0x250] sm:$0xff] %v8154
  %8194 = vst [vmem:[#allocation9 + $0x258] sm:$0xff] %v8155
  %8195 = vst [vmem:[#allocation9 + $0x260] sm:$0xff] %v8156
  %8196 = vst [vmem:[#allocation9 + $0x268] sm:$0xff] %v8157
  %8197 = vst [vmem:[#allocation9 + $0x270] sm:$0xff] %v8158
  %8198 = vst.msk [vmem:[#allocation9 + $0x278] sm:$0xff] %vm4407, %v8140
  %v8199 = vld [vmem:[#allocation6] sm:$0xff]
  %v8200 = vld [vmem:[#allocation6 + $0x8] sm:$0xff]
  %v8201 = vld [vmem:[#allocation6 + $0x10] sm:$0xff]
  %v8202 = vld [vmem:[#allocation6 + $0x18] sm:$0xff]
  %v8203 = vld [vmem:[#allocation6 + $0x20] sm:$0xff]
  %v8204 = vld [vmem:[#allocation6 + $0x28] sm:$0xff]
  %v8205 = vld [vmem:[#allocation6 + $0x30] sm:$0xff]
  %v8206 = vld [vmem:[#allocation6 + $0x38] sm:$0xff]
  %v8207 = vld [vmem:[#allocation6 + $0x40] sm:$0xff]
  %v8208 = vld [vmem:[#allocation6 + $0x48] sm:$0xff]
  %v8209 = vld [vmem:[#allocation6 + $0x50] sm:$0xff]
  %v8210 = vld [vmem:[#allocation6 + $0x58] sm:$0xff]
  %v8211 = vld [vmem:[#allocation6 + $0x60] sm:$0xff]
  %v8212 = vld [vmem:[#allocation6 + $0x68] sm:$0xff]
  %v8213 = vld [vmem:[#allocation6 + $0x70] sm:$0xff]
  %v8214 = vld [vmem:[#allocation6 + $0x78] sm:$0xff]
  %v8215 = vld [vmem:[#allocation6 + $0x80] sm:$0xff]
  %v8216 = vld [vmem:[#allocation6 + $0x88] sm:$0xff]
  %v8217 = vld [vmem:[#allocation6 + $0x90] sm:$0xff]
  %v8218 = vld [vmem:[#allocation6 + $0x98] sm:$0xff]
  %8239 = vrot.lane.b32.xlu0 %v8199, 93
  %v8240 = vpop.permute.xlu0 %8239
  %8241 = vrot.lane.b32.xlu0 %v8200, 93
  %v8242 = vpop.permute.xlu0 %8241
  %8243 = vrot.lane.b32.xlu0 %v8201, 93
  %v8244 = vpop.permute.xlu0 %8243
  %8245 = vrot.lane.b32.xlu0 %v8202, 93
  %v8246 = vpop.permute.xlu0 %8245
  %8247 = vrot.lane.b32.xlu0 %v8203, 93
  %v8248 = vpop.permute.xlu0 %8247
  %8249 = vrot.lane.b32.xlu0 %v8204, 93
  %v8250 = vpop.permute.xlu0 %8249
  %8251 = vrot.lane.b32.xlu0 %v8205, 93
  %v8252 = vpop.permute.xlu0 %8251
  %8253 = vrot.lane.b32.xlu0 %v8206, 93
  %v8254 = vpop.permute.xlu0 %8253
  %8255 = vrot.lane.b32.xlu0 %v8207, 93
  %v8256 = vpop.permute.xlu0 %8255
  %8257 = vrot.lane.b32.xlu0 %v8208, 93
  %v8258 = vpop.permute.xlu0 %8257
  %8259 = vrot.lane.b32.xlu0 %v8209, 93
  %v8260 = vpop.permute.xlu0 %8259
  %8261 = vrot.lane.b32.xlu0 %v8210, 93
  %v8262 = vpop.permute.xlu0 %8261
  %8263 = vrot.lane.b32.xlu0 %v8211, 93
  %v8264 = vpop.permute.xlu0 %8263
  %8265 = vrot.lane.b32.xlu0 %v8212, 93
  %v8266 = vpop.permute.xlu0 %8265
  %8267 = vrot.lane.b32.xlu0 %v8213, 93
  %v8268 = vpop.permute.xlu0 %8267
  %8269 = vrot.lane.b32.xlu0 %v8214, 93
  %v8270 = vpop.permute.xlu0 %8269
  %8271 = vrot.lane.b32.xlu0 %v8215, 93
  %v8272 = vpop.permute.xlu0 %8271
  %8273 = vrot.lane.b32.xlu0 %v8216, 93
  %v8274 = vpop.permute.xlu0 %8273
  %8275 = vrot.lane.b32.xlu0 %v8217, 93
  %v8276 = vpop.permute.xlu0 %8275
  %8277 = vrot.lane.b32.xlu0 %v8218, 93
  %v8278 = vpop.permute.xlu0 %8277
  %v8279 = vsel %vm5295, %v8240, %v8242
  %v8280 = vsel %vm5295, %v8242, %v8244
  %v8281 = vsel %vm5295, %v8244, %v8246
  %v8282 = vsel %vm5295, %v8246, %v8248
  %v8283 = vsel %vm5295, %v8248, %v8250
  %v8284 = vsel %vm5295, %v8250, %v8252
  %v8285 = vsel %vm5295, %v8252, %v8254
  %v8286 = vsel %vm5295, %v8254, %v8256
  %v8287 = vsel %vm5295, %v8256, %v8258
  %v8288 = vsel %vm5295, %v8260, %v8262
  %v8289 = vsel %vm5295, %v8262, %v8264
  %v8290 = vsel %vm5295, %v8264, %v8266
  %v8291 = vsel %vm5295, %v8266, %v8268
  %v8292 = vsel %vm5295, %v8268, %v8270
  %v8293 = vsel %vm5295, %v8270, %v8272
  %v8294 = vsel %vm5295, %v8272, %v8274
  %v8295 = vsel %vm5295, %v8274, %v8276
  %v8296 = vsel %vm5295, %v8276, %v8278
  %8317 = vst [vmem:[#allocation9 + $0x280] sm:$0xff] %v8279
  %8318 = vst [vmem:[#allocation9 + $0x288] sm:$0xff] %v8280
  %8319 = vst [vmem:[#allocation9 + $0x290] sm:$0xff] %v8281
  %8320 = vst [vmem:[#allocation9 + $0x298] sm:$0xff] %v8282
  %8321 = vst [vmem:[#allocation9 + $0x2a0] sm:$0xff] %v8283
  %8322 = vst [vmem:[#allocation9 + $0x2a8] sm:$0xff] %v8284
  %8323 = vst [vmem:[#allocation9 + $0x2b0] sm:$0xff] %v8285
  %8324 = vst [vmem:[#allocation9 + $0x2b8] sm:$0xff] %v8286
  %8325 = vst [vmem:[#allocation9 + $0x2c0] sm:$0xff] %v8287
  %8326 = vst.msk [vmem:[#allocation9 + $0x2c8] sm:$0xff] %vm4407, %v8258
  %8327 = vst [vmem:[#allocation9 + $0x2d0] sm:$0xff] %v8288
  %8328 = vst [vmem:[#allocation9 + $0x2d8] sm:$0xff] %v8289
  %8329 = vst [vmem:[#allocation9 + $0x2e0] sm:$0xff] %v8290
  %8330 = vst [vmem:[#allocation9 + $0x2e8] sm:$0xff] %v8291
  %8331 = vst [vmem:[#allocation9 + $0x2f0] sm:$0xff] %v8292
  %8332 = vst [vmem:[#allocation9 + $0x2f8] sm:$0xff] %v8293
  %8333 = vst [vmem:[#allocation9 + $0x300] sm:$0xff] %v8294
  %8334 = vst [vmem:[#allocation9 + $0x308] sm:$0xff] %v8295
  %8335 = vst [vmem:[#allocation9 + $0x310] sm:$0xff] %v8296
  %8336 = vst.msk [vmem:[#allocation9 + $0x318] sm:$0xff] %vm4407, %v8278
  %v8337 = vld [vmem:[#allocation6] sm:$0xff]
  %v8338 = vld [vmem:[#allocation6 + $0x8] sm:$0xff]
  %v8339 = vld [vmem:[#allocation6 + $0x10] sm:$0xff]
  %v8340 = vld [vmem:[#allocation6 + $0x18] sm:$0xff]
  %v8341 = vld [vmem:[#allocation6 + $0x20] sm:$0xff]
  %v8342 = vld [vmem:[#allocation6 + $0x28] sm:$0xff]
  %v8343 = vld [vmem:[#allocation6 + $0x30] sm:$0xff]
  %v8344 = vld [vmem:[#allocation6 + $0x38] sm:$0xff]
  %v8345 = vld [vmem:[#allocation6 + $0x40] sm:$0xff]
  %v8346 = vld [vmem:[#allocation6 + $0x48] sm:$0xff]
  %v8347 = vld [vmem:[#allocation6 + $0x50] sm:$0xff]
  %v8348 = vld [vmem:[#allocation6 + $0x58] sm:$0xff]
  %v8349 = vld [vmem:[#allocation6 + $0x60] sm:$0xff]
  %v8350 = vld [vmem:[#allocation6 + $0x68] sm:$0xff]
  %v8351 = vld [vmem:[#allocation6 + $0x70] sm:$0xff]
  %v8352 = vld [vmem:[#allocation6 + $0x78] sm:$0xff]
  %v8353 = vld [vmem:[#allocation6 + $0x80] sm:$0xff]
  %v8354 = vld [vmem:[#allocation6 + $0x88] sm:$0xff]
  %v8355 = vld [vmem:[#allocation6 + $0x90] sm:$0xff]
  %v8356 = vld [vmem:[#allocation6 + $0x98] sm:$0xff]
  %8377 = vrot.lane.b32.xlu0 %v8337, 92
  %v8378 = vpop.permute.xlu0 %8377
  %8379 = vrot.lane.b32.xlu0 %v8338, 92
  %v8380 = vpop.permute.xlu0 %8379
  %8381 = vrot.lane.b32.xlu0 %v8339, 92
  %v8382 = vpop.permute.xlu0 %8381
  %8383 = vrot.lane.b32.xlu0 %v8340, 92
  %v8384 = vpop.permute.xlu0 %8383
  %8385 = vrot.lane.b32.xlu0 %v8341, 92
  %v8386 = vpop.permute.xlu0 %8385
  %8387 = vrot.lane.b32.xlu0 %v8342, 92
  %v8388 = vpop.permute.xlu0 %8387
  %8389 = vrot.lane.b32.xlu0 %v8343, 92
  %v8390 = vpop.permute.xlu0 %8389
  %8391 = vrot.lane.b32.xlu0 %v8344, 92
  %v8392 = vpop.permute.xlu0 %8391
  %8393 = vrot.lane.b32.xlu0 %v8345, 92
  %v8394 = vpop.permute.xlu0 %8393
  %8395 = vrot.lane.b32.xlu0 %v8346, 92
  %v8396 = vpop.permute.xlu0 %8395
  %8397 = vrot.lane.b32.xlu0 %v8347, 92
  %v8398 = vpop.permute.xlu0 %8397
  %8399 = vrot.lane.b32.xlu0 %v8348, 92
  %v8400 = vpop.permute.xlu0 %8399
  %8401 = vrot.lane.b32.xlu0 %v8349, 92
  %v8402 = vpop.permute.xlu0 %8401
  %8403 = vrot.lane.b32.xlu0 %v8350, 92
  %v8404 = vpop.permute.xlu0 %8403
  %8405 = vrot.lane.b32.xlu0 %v8351, 92
  %v8406 = vpop.permute.xlu0 %8405
  %8407 = vrot.lane.b32.xlu0 %v8352, 92
  %v8408 = vpop.permute.xlu0 %8407
  %8409 = vrot.lane.b32.xlu0 %v8353, 92
  %v8410 = vpop.permute.xlu0 %8409
  %8411 = vrot.lane.b32.xlu0 %v8354, 92
  %v8412 = vpop.permute.xlu0 %8411
  %8413 = vrot.lane.b32.xlu0 %v8355, 92
  %v8414 = vpop.permute.xlu0 %8413
  %8415 = vrot.lane.b32.xlu0 %v8356, 92
  %v8416 = vpop.permute.xlu0 %8415
  %v8417 = vsel %vm2373, %v8378, %v8380
  %v8418 = vsel %vm2373, %v8380, %v8382
  %v8419 = vsel %vm2373, %v8382, %v8384
  %v8420 = vsel %vm2373, %v8384, %v8386
  %v8421 = vsel %vm2373, %v8386, %v8388
  %v8422 = vsel %vm2373, %v8388, %v8390
  %v8423 = vsel %vm2373, %v8390, %v8392
  %v8424 = vsel %vm2373, %v8392, %v8394
  %v8425 = vsel %vm2373, %v8394, %v8396
  %v8426 = vsel %vm2373, %v8398, %v8400
  %v8427 = vsel %vm2373, %v8400, %v8402
  %v8428 = vsel %vm2373, %v8402, %v8404
  %v8429 = vsel %vm2373, %v8404, %v8406
  %v8430 = vsel %vm2373, %v8406, %v8408
  %v8431 = vsel %vm2373, %v8408, %v8410
  %v8432 = vsel %vm2373, %v8410, %v8412
  %v8433 = vsel %vm2373, %v8412, %v8414
  %v8434 = vsel %vm2373, %v8414, %v8416
  %8455 = vst [vmem:[#allocation9 + $0x320] sm:$0xff] %v8417
  %8456 = vst [vmem:[#allocation9 + $0x328] sm:$0xff] %v8418
  %8457 = vst [vmem:[#allocation9 + $0x330] sm:$0xff] %v8419
  %8458 = vst [vmem:[#allocation9 + $0x338] sm:$0xff] %v8420
  %8459 = vst [vmem:[#allocation9 + $0x340] sm:$0xff] %v8421
  %8460 = vst [vmem:[#allocation9 + $0x348] sm:$0xff] %v8422
  %8461 = vst [vmem:[#allocation9 + $0x350] sm:$0xff] %v8423
  %8462 = vst [vmem:[#allocation9 + $0x358] sm:$0xff] %v8424
  %8463 = vst [vmem:[#allocation9 + $0x360] sm:$0xff] %v8425
  %8464 = vst.msk [vmem:[#allocation9 + $0x368] sm:$0xff] %vm4407, %v8396
  %8465 = vst [vmem:[#allocation9 + $0x370] sm:$0xff] %v8426
  %8466 = vst [vmem:[#allocation9 + $0x378] sm:$0xff] %v8427
  %8467 = vst [vmem:[#allocation9 + $0x380] sm:$0xff] %v8428
  %8468 = vst [vmem:[#allocation9 + $0x388] sm:$0xff] %v8429
  %8469 = vst [vmem:[#allocation9 + $0x390] sm:$0xff] %v8430
  %8470 = vst [vmem:[#allocation9 + $0x398] sm:$0xff] %v8431
  %8471 = vst [vmem:[#allocation9 + $0x3a0] sm:$0xff] %v8432
  %8472 = vst [vmem:[#allocation9 + $0x3a8] sm:$0xff] %v8433
  %8473 = vst [vmem:[#allocation9 + $0x3b0] sm:$0xff] %v8434
  %8474 = vst.msk [vmem:[#allocation9 + $0x3b8] sm:$0xff] %vm4407, %v8416
  %v8475 = vld [vmem:[#allocation6] sm:$0xff]
  %v8476 = vld [vmem:[#allocation6 + $0x8] sm:$0xff]
  %v8477 = vld [vmem:[#allocation6 + $0x10] sm:$0xff]
  %v8478 = vld [vmem:[#allocation6 + $0x18] sm:$0xff]
  %v8479 = vld [vmem:[#allocation6 + $0x20] sm:$0xff]
  %v8480 = vld [vmem:[#allocation6 + $0x28] sm:$0xff]
  %v8481 = vld [vmem:[#allocation6 + $0x30] sm:$0xff]
  %v8482 = vld [vmem:[#allocation6 + $0x38] sm:$0xff]
  %v8483 = vld [vmem:[#allocation6 + $0x40] sm:$0xff]
  %v8484 = vld [vmem:[#allocation6 + $0x48] sm:$0xff]
  %v8485 = vld [vmem:[#allocation6 + $0x50] sm:$0xff]
  %v8486 = vld [vmem:[#allocation6 + $0x58] sm:$0xff]
  %v8487 = vld [vmem:[#allocation6 + $0x60] sm:$0xff]
  %v8488 = vld [vmem:[#allocation6 + $0x68] sm:$0xff]
  %v8489 = vld [vmem:[#allocation6 + $0x70] sm:$0xff]
  %v8490 = vld [vmem:[#allocation6 + $0x78] sm:$0xff]
  %v8491 = vld [vmem:[#allocation6 + $0x80] sm:$0xff]
  %v8492 = vld [vmem:[#allocation6 + $0x88] sm:$0xff]
  %v8493 = vld [vmem:[#allocation6 + $0x90] sm:$0xff]
  %v8494 = vld [vmem:[#allocation6 + $0x98] sm:$0xff]
  %8515 = vrot.lane.b32.xlu0 %v8475, 60
  %v8516 = vpop.permute.xlu0 %8515
  %8517 = vrot.lane.b32.xlu0 %v8476, 60
  %v8518 = vpop.permute.xlu0 %8517
  %8519 = vrot.lane.b32.xlu0 %v8477, 60
  %v8520 = vpop.permute.xlu0 %8519
  %8521 = vrot.lane.b32.xlu0 %v8478, 60
  %v8522 = vpop.permute.xlu0 %8521
  %8523 = vrot.lane.b32.xlu0 %v8479, 60
  %v8524 = vpop.permute.xlu0 %8523
  %8525 = vrot.lane.b32.xlu0 %v8480, 60
  %v8526 = vpop.permute.xlu0 %8525
  %8527 = vrot.lane.b32.xlu0 %v8481, 60
  %v8528 = vpop.permute.xlu0 %8527
  %8529 = vrot.lane.b32.xlu0 %v8482, 60
  %v8530 = vpop.permute.xlu0 %8529
  %8531 = vrot.lane.b32.xlu0 %v8483, 60
  %v8532 = vpop.permute.xlu0 %8531
  %8533 = vrot.lane.b32.xlu0 %v8484, 60
  %v8534 = vpop.permute.xlu0 %8533
  %8535 = vrot.lane.b32.xlu0 %v8485, 60
  %v8536 = vpop.permute.xlu0 %8535
  %8537 = vrot.lane.b32.xlu0 %v8486, 60
  %v8538 = vpop.permute.xlu0 %8537
  %8539 = vrot.lane.b32.xlu0 %v8487, 60
  %v8540 = vpop.permute.xlu0 %8539
  %8541 = vrot.lane.b32.xlu0 %v8488, 60
  %v8542 = vpop.permute.xlu0 %8541
  %8543 = vrot.lane.b32.xlu0 %v8489, 60
  %v8544 = vpop.permute.xlu0 %8543
  %8545 = vrot.lane.b32.xlu0 %v8490, 60
  %v8546 = vpop.permute.xlu0 %8545
  %8547 = vrot.lane.b32.xlu0 %v8491, 60
  %v8548 = vpop.permute.xlu0 %8547
  %8549 = vrot.lane.b32.xlu0 %v8492, 60
  %v8550 = vpop.permute.xlu0 %8549
  %8551 = vrot.lane.b32.xlu0 %v8493, 60
  %v8552 = vpop.permute.xlu0 %8551
  %8553 = vrot.lane.b32.xlu0 %v8494, 60
  %v8554 = vpop.permute.xlu0 %8553
  %v8555 = vsel %vm5572, %v8516, %v8518
  %v8556 = vsel %vm5572, %v8518, %v8520
  %v8557 = vsel %vm5572, %v8520, %v8522
  %v8558 = vsel %vm5572, %v8522, %v8524
  %v8559 = vsel %vm5572, %v8524, %v8526
  %v8560 = vsel %vm5572, %v8526, %v8528
  %v8561 = vsel %vm5572, %v8528, %v8530
  %v8562 = vsel %vm5572, %v8530, %v8532
  %v8563 = vsel %vm5572, %v8532, %v8534
  %v8564 = vsel %vm5572, %v8536, %v8538
  %v8565 = vsel %vm5572, %v8538, %v8540
  %v8566 = vsel %vm5572, %v8540, %v8542
  %v8567 = vsel %vm5572, %v8542, %v8544
  %v8568 = vsel %vm5572, %v8544, %v8546
  %v8569 = vsel %vm5572, %v8546, %v8548
  %v8570 = vsel %vm5572, %v8548, %v8550
  %v8571 = vsel %vm5572, %v8550, %v8552
  %v8572 = vsel %vm5572, %v8552, %v8554
  %8593 = vst [vmem:[#allocation9 + $0x3c0] sm:$0xff] %v8555
  %8594 = vst [vmem:[#allocation9 + $0x3c8] sm:$0xff] %v8556
  %8595 = vst [vmem:[#allocation9 + $0x3d0] sm:$0xff] %v8557
  %8596 = vst [vmem:[#allocation9 + $0x3d8] sm:$0xff] %v8558
  %8597 = vst [vmem:[#allocation9 + $0x3e0] sm:$0xff] %v8559
  %8598 = vst [vmem:[#allocation9 + $0x3e8] sm:$0xff] %v8560
  %8599 = vst [vmem:[#allocation9 + $0x3f0] sm:$0xff] %v8561
  %8600 = vst [vmem:[#allocation9 + $0x3f8] sm:$0xff] %v8562
  %8601 = vst [vmem:[#allocation9 + $0x400] sm:$0xff] %v8563
  %8602 = vst.msk [vmem:[#allocation9 + $0x408] sm:$0xff] %vm4407, %v8534
  %8603 = vst [vmem:[#allocation9 + $0x410] sm:$0xff] %v8564
  %8604 = vst [vmem:[#allocation9 + $0x418] sm:$0xff] %v8565
  %8605 = vst [vmem:[#allocation9 + $0x420] sm:$0xff] %v8566
  %8606 = vst [vmem:[#allocation9 + $0x428] sm:$0xff] %v8567
  %8607 = vst [vmem:[#allocation9 + $0x430] sm:$0xff] %v8568
  %8608 = vst [vmem:[#allocation9 + $0x438] sm:$0xff] %v8569
  %8609 = vst [vmem:[#allocation9 + $0x440] sm:$0xff] %v8570
  %8610 = vst [vmem:[#allocation9 + $0x448] sm:$0xff] %v8571
  %8611 = vst [vmem:[#allocation9 + $0x450] sm:$0xff] %v8572
  %8612 = vst.msk [vmem:[#allocation9 + $0x458] sm:$0xff] %vm4407, %v8554
  %v8613 = vld [vmem:[#allocation6] sm:$0xff]
  %v8614 = vld [vmem:[#allocation6 + $0x8] sm:$0xff]
  %v8615 = vld [vmem:[#allocation6 + $0x10] sm:$0xff]
  %v8616 = vld [vmem:[#allocation6 + $0x18] sm:$0xff]
  %v8617 = vld [vmem:[#allocation6 + $0x20] sm:$0xff]
  %v8618 = vld [vmem:[#allocation6 + $0x28] sm:$0xff]
  %v8619 = vld [vmem:[#allocation6 + $0x30] sm:$0xff]
  %v8620 = vld [vmem:[#allocation6 + $0x38] sm:$0xff]
  %v8621 = vld [vmem:[#allocation6 + $0x40] sm:$0xff]
  %v8622 = vld [vmem:[#allocation6 + $0x48] sm:$0xff]
  %v8623 = vld [vmem:[#allocation6 + $0x50] sm:$0xff]
  %v8624 = vld [vmem:[#allocation6 + $0x58] sm:$0xff]
  %v8625 = vld [vmem:[#allocation6 + $0x60] sm:$0xff]
  %v8626 = vld [vmem:[#allocation6 + $0x68] sm:$0xff]
  %v8627 = vld [vmem:[#allocation6 + $0x70] sm:$0xff]
  %v8628 = vld [vmem:[#allocation6 + $0x78] sm:$0xff]
  %v8629 = vld [vmem:[#allocation6 + $0x80] sm:$0xff]
  %v8630 = vld [vmem:[#allocation6 + $0x88] sm:$0xff]
  %v8631 = vld [vmem:[#allocation6 + $0x90] sm:$0xff]
  %v8632 = vld [vmem:[#allocation6 + $0x98] sm:$0xff]
  %8653 = vrot.lane.b32.xlu0 %v8613, 59
  %v8654 = vpop.permute.xlu0 %8653
  %8655 = vrot.lane.b32.xlu0 %v8614, 59
  %v8656 = vpop.permute.xlu0 %8655
  %8657 = vrot.lane.b32.xlu0 %v8615, 59
  %v8658 = vpop.permute.xlu0 %8657
  %8659 = vrot.lane.b32.xlu0 %v8616, 59
  %v8660 = vpop.permute.xlu0 %8659
  %8661 = vrot.lane.b32.xlu0 %v8617, 59
  %v8662 = vpop.permute.xlu0 %8661
  %8663 = vrot.lane.b32.xlu0 %v8618, 59
  %v8664 = vpop.permute.xlu0 %8663
  %8665 = vrot.lane.b32.xlu0 %v8619, 59
  %v8666 = vpop.permute.xlu0 %8665
  %8667 = vrot.lane.b32.xlu0 %v8620, 59
  %v8668 = vpop.permute.xlu0 %8667
  %8669 = vrot.lane.b32.xlu0 %v8621, 59
  %v8670 = vpop.permute.xlu0 %8669
  %8671 = vrot.lane.b32.xlu0 %v8622, 59
  %v8672 = vpop.permute.xlu0 %8671
  %8673 = vrot.lane.b32.xlu0 %v8623, 59
  %v8674 = vpop.permute.xlu0 %8673
  %8675 = vrot.lane.b32.xlu0 %v8624, 59
  %v8676 = vpop.permute.xlu0 %8675
  %8677 = vrot.lane.b32.xlu0 %v8625, 59
  %v8678 = vpop.permute.xlu0 %8677
  %8679 = vrot.lane.b32.xlu0 %v8626, 59
  %v8680 = vpop.permute.xlu0 %8679
  %8681 = vrot.lane.b32.xlu0 %v8627, 59
  %v8682 = vpop.permute.xlu0 %8681
  %8683 = vrot.lane.b32.xlu0 %v8628, 59
  %v8684 = vpop.permute.xlu0 %8683
  %8685 = vrot.lane.b32.xlu0 %v8629, 59
  %v8686 = vpop.permute.xlu0 %8685
  %8687 = vrot.lane.b32.xlu0 %v8630, 59
  %v8688 = vpop.permute.xlu0 %8687
  %8689 = vrot.lane.b32.xlu0 %v8631, 59
  %v8690 = vpop.permute.xlu0 %8689
  %8691 = vrot.lane.b32.xlu0 %v8632, 59
  %v8692 = vpop.permute.xlu0 %8691
  %v8693 = vsel %vm5711, %v8654, %v8656
  %v8694 = vsel %vm5711, %v8656, %v8658
  %v8695 = vsel %vm5711, %v8658, %v8660
  %v8696 = vsel %vm5711, %v8660, %v8662
  %v8697 = vsel %vm5711, %v8662, %v8664
  %v8698 = vsel %vm5711, %v8664, %v8666
  %v8699 = vsel %vm5711, %v8666, %v8668
  %v8700 = vsel %vm5711, %v8668, %v8670
  %v8701 = vsel %vm5711, %v8670, %v8672
  %v8702 = vsel %vm5711, %v8674, %v8676
  %v8703 = vsel %vm5711, %v8676, %v8678
  %v8704 = vsel %vm5711, %v8678, %v8680
  %v8705 = vsel %vm5711, %v8680, %v8682
  %v8706 = vsel %vm5711, %v8682, %v8684
  %v8707 = vsel %vm5711, %v8684, %v8686
  %v8708 = vsel %vm5711, %v8686, %v8688
  %v8709 = vsel %vm5711, %v8688, %v8690
  %v8710 = vsel %vm5711, %v8690, %v8692
  %8731 = vst [vmem:[#allocation9 + $0x460] sm:$0xff] %v8693
  %8732 = vst [vmem:[#allocation9 + $0x468] sm:$0xff] %v8694
  %8733 = vst [vmem:[#allocation9 + $0x470] sm:$0xff] %v8695
  %8734 = vst [vmem:[#allocation9 + $0x478] sm:$0xff] %v8696
  %8735 = vst [vmem:[#allocation9 + $0x480] sm:$0xff] %v8697
  %8736 = vst [vmem:[#allocation9 + $0x488] sm:$0xff] %v8698
  %8737 = vst [vmem:[#allocation9 + $0x490] sm:$0xff] %v8699
  %8738 = vst [vmem:[#allocation9 + $0x498] sm:$0xff] %v8700
  %8739 = vst [vmem:[#allocation9 + $0x4a0] sm:$0xff] %v8701
  %8740 = vst.msk [vmem:[#allocation9 + $0x4a8] sm:$0xff] %vm4407, %v8672
  %8741 = vst [vmem:[#allocation9 + $0x4b0] sm:$0xff] %v8702
  %8742 = vst [vmem:[#allocation9 + $0x4b8] sm:$0xff] %v8703
  %8743 = vst [vmem:[#allocation9 + $0x4c0] sm:$0xff] %v8704
  %8744 = vst [vmem:[#allocation9 + $0x4c8] sm:$0xff] %v8705
  %8745 = vst [vmem:[#allocation9 + $0x4d0] sm:$0xff] %v8706
  %8746 = vst [vmem:[#allocation9 + $0x4d8] sm:$0xff] %v8707
  %8747 = vst [vmem:[#allocation9 + $0x4e0] sm:$0xff] %v8708
  %8748 = vst [vmem:[#allocation9 + $0x4e8] sm:$0xff] %v8709
  %8749 = vst [vmem:[#allocation9 + $0x4f0] sm:$0xff] %v8710
  %8750 = vst.msk [vmem:[#allocation9 + $0x4f8] sm:$0xff] %vm4407, %v8692
  %v8751 = vld [vmem:[#allocation6] sm:$0xff]
  %v8752 = vld [vmem:[#allocation6 + $0x8] sm:$0xff]
  %v8753 = vld [vmem:[#allocation6 + $0x10] sm:$0xff]
  %v8754 = vld [vmem:[#allocation6 + $0x18] sm:$0xff]
  %v8755 = vld [vmem:[#allocation6 + $0x20] sm:$0xff]
  %v8756 = vld [vmem:[#allocation6 + $0x28] sm:$0xff]
  %v8757 = vld [vmem:[#allocation6 + $0x30] sm:$0xff]
  %v8758 = vld [vmem:[#allocation6 + $0x38] sm:$0xff]
  %v8759 = vld [vmem:[#allocation6 + $0x40] sm:$0xff]
  %v8760 = vld [vmem:[#allocation6 + $0x48] sm:$0xff]
  %v8761 = vld [vmem:[#allocation6 + $0x50] sm:$0xff]
  %v8762 = vld [vmem:[#allocation6 + $0x58] sm:$0xff]
  %v8763 = vld [vmem:[#allocation6 + $0x60] sm:$0xff]
  %v8764 = vld [vmem:[#allocation6 + $0x68] sm:$0xff]
  %v8765 = vld [vmem:[#allocation6 + $0x70] sm:$0xff]
  %v8766 = vld [vmem:[#allocation6 + $0x78] sm:$0xff]
  %v8767 = vld [vmem:[#allocation6 + $0x80] sm:$0xff]
  %v8768 = vld [vmem:[#allocation6 + $0x88] sm:$0xff]
  %v8769 = vld [vmem:[#allocation6 + $0x90] sm:$0xff]
  %v8770 = vld [vmem:[#allocation6 + $0x98] sm:$0xff]
  %8791 = vrot.lane.b32.xlu0 %v8751, 58
  %v8792 = vpop.permute.xlu0 %8791
  %8793 = vrot.lane.b32.xlu0 %v8752, 58
  %v8794 = vpop.permute.xlu0 %8793
  %8795 = vrot.lane.b32.xlu0 %v8753, 58
  %v8796 = vpop.permute.xlu0 %8795
  %8797 = vrot.lane.b32.xlu0 %v8754, 58
  %v8798 = vpop.permute.xlu0 %8797
  %8799 = vrot.lane.b32.xlu0 %v8755, 58
  %v8800 = vpop.permute.xlu0 %8799
  %8801 = vrot.lane.b32.xlu0 %v8756, 58
  %v8802 = vpop.permute.xlu0 %8801
  %8803 = vrot.lane.b32.xlu0 %v8757, 58
  %v8804 = vpop.permute.xlu0 %8803
  %8805 = vrot.lane.b32.xlu0 %v8758, 58
  %v8806 = vpop.permute.xlu0 %8805
  %8807 = vrot.lane.b32.xlu0 %v8759, 58
  %v8808 = vpop.permute.xlu0 %8807
  %8809 = vrot.lane.b32.xlu0 %v8760, 58
  %v8810 = vpop.permute.xlu0 %8809
  %8811 = vrot.lane.b32.xlu0 %v8761, 58
  %v8812 = vpop.permute.xlu0 %8811
  %8813 = vrot.lane.b32.xlu0 %v8762, 58
  %v8814 = vpop.permute.xlu0 %8813
  %8815 = vrot.lane.b32.xlu0 %v8763, 58
  %v8816 = vpop.permute.xlu0 %8815
  %8817 = vrot.lane.b32.xlu0 %v8764, 58
  %v8818 = vpop.permute.xlu0 %8817
  %8819 = vrot.lane.b32.xlu0 %v8765, 58
  %v8820 = vpop.permute.xlu0 %8819
  %8821 = vrot.lane.b32.xlu0 %v8766, 58
  %v8822 = vpop.permute.xlu0 %8821
  %8823 = vrot.lane.b32.xlu0 %v8767, 58
  %v8824 = vpop.permute.xlu0 %8823
  %8825 = vrot.lane.b32.xlu0 %v8768, 58
  %v8826 = vpop.permute.xlu0 %8825
  %8827 = vrot.lane.b32.xlu0 %v8769, 58
  %v8828 = vpop.permute.xlu0 %8827
  %8829 = vrot.lane.b32.xlu0 %v8770, 58
  %v8830 = vpop.permute.xlu0 %8829
  %v8831 = vsel %vm5850, %v8792, %v8794
  %v8832 = vsel %vm5850, %v8794, %v8796
  %v8833 = vsel %vm5850, %v8796, %v8798
  %v8834 = vsel %vm5850, %v8798, %v8800
  %v8835 = vsel %vm5850, %v8800, %v8802
  %v8836 = vsel %vm5850, %v8802, %v8804
  %v8837 = vsel %vm5850, %v8804, %v8806
  %v8838 = vsel %vm5850, %v8806, %v8808
  %v8839 = vsel %vm5850, %v8808, %v8810
  %v8840 = vsel %vm5850, %v8812, %v8814
  %v8841 = vsel %vm5850, %v8814, %v8816
  %v8842 = vsel %vm5850, %v8816, %v8818
  %v8843 = vsel %vm5850, %v8818, %v8820
  %v8844 = vsel %vm5850, %v8820, %v8822
  %v8845 = vsel %vm5850, %v8822, %v8824
  %v8846 = vsel %vm5850, %v8824, %v8826
  %v8847 = vsel %vm5850, %v8826, %v8828
  %v8848 = vsel %vm5850, %v8828, %v8830
  %8869 = vst [vmem:[#allocation9 + $0x500] sm:$0xff] %v8831
  %8870 = vst [vmem:[#allocation9 + $0x508] sm:$0xff] %v8832
  %8871 = vst [vmem:[#allocation9 + $0x510] sm:$0xff] %v8833
  %8872 = vst [vmem:[#allocation9 + $0x518] sm:$0xff] %v8834
  %8873 = vst [vmem:[#allocation9 + $0x520] sm:$0xff] %v8835
  %8874 = vst [vmem:[#allocation9 + $0x528] sm:$0xff] %v8836
  %8875 = vst [vmem:[#allocation9 + $0x530] sm:$0xff] %v8837
  %8876 = vst [vmem:[#allocation9 + $0x538] sm:$0xff] %v8838
  %8877 = vst [vmem:[#allocation9 + $0x540] sm:$0xff] %v8839
  %8878 = vst.msk [vmem:[#allocation9 + $0x548] sm:$0xff] %vm4407, %v8810
  %8879 = vst [vmem:[#allocation9 + $0x550] sm:$0xff] %v8840
  %8880 = vst [vmem:[#allocation9 + $0x558] sm:$0xff] %v8841
  %8881 = vst [vmem:[#allocation9 + $0x560] sm:$0xff] %v8842
  %8882 = vst [vmem:[#allocation9 + $0x568] sm:$0xff] %v8843
  %8883 = vst [vmem:[#allocation9 + $0x570] sm:$0xff] %v8844
  %8884 = vst [vmem:[#allocation9 + $0x578] sm:$0xff] %v8845
  %8885 = vst [vmem:[#allocation9 + $0x580] sm:$0xff] %v8846
  %8886 = vst [vmem:[#allocation9 + $0x588] sm:$0xff] %v8847
  %8887 = vst [vmem:[#allocation9 + $0x590] sm:$0xff] %v8848
  %8888 = vst.msk [vmem:[#allocation9 + $0x598] sm:$0xff] %vm4407, %v8830
  %v8889 = vld [vmem:[#allocation9] sm:$0xff]
  %v8890 = vld [vmem:[#allocation9 + $0x8] sm:$0xff]
  %v8891 = vld [vmem:[#allocation9 + $0x10] sm:$0xff]
  %v8892 = vld [vmem:[#allocation9 + $0x18] sm:$0xff]
  %v8893 = vld [vmem:[#allocation9 + $0x20] sm:$0xff]
  %v8894 = vld [vmem:[#allocation9 + $0x28] sm:$0xff]
  %v8895 = vld [vmem:[#allocation9 + $0x30] sm:$0xff]
  %v8896 = vld [vmem:[#allocation9 + $0x38] sm:$0xff]
  %v8897 = vld [vmem:[#allocation9 + $0x40] sm:$0xff]
  %v8898 = vld [vmem:[#allocation9 + $0x48] sm:$0xff]
  %v8899 = vld [vmem:[#allocation9 + $0x50] sm:$0xff]
  %v8900 = vld [vmem:[#allocation9 + $0x58] sm:$0xff]
  %v8901 = vld [vmem:[#allocation9 + $0x60] sm:$0xff]
  %v8902 = vld [vmem:[#allocation9 + $0x68] sm:$0xff]
  %v8903 = vld [vmem:[#allocation9 + $0x70] sm:$0xff]
  %v8904 = vld [vmem:[#allocation9 + $0x78] sm:$0xff]
  %v8905 = vld [vmem:[#allocation9 + $0x80] sm:$0xff]
  %v8906 = vld [vmem:[#allocation9 + $0x88] sm:$0xff]
  %v8907 = vld [vmem:[#allocation9 + $0x90] sm:$0xff]
  %v8908 = vld [vmem:[#allocation9 + $0x98] sm:$0xff]
  %v8909 = vld [vmem:[#allocation9 + $0xa0] sm:$0xff]
  %v8910 = vld [vmem:[#allocation9 + $0xa8] sm:$0xff]
  %v8911 = vld [vmem:[#allocation9 + $0xb0] sm:$0xff]
  %v8912 = vld [vmem:[#allocation9 + $0xb8] sm:$0xff]
  %v8913 = vld [vmem:[#allocation9 + $0xc0] sm:$0xff]
  %v8914 = vld [vmem:[#allocation9 + $0xc8] sm:$0xff]
  %v8915 = vld [vmem:[#allocation9 + $0xd0] sm:$0xff]
  %v8916 = vld [vmem:[#allocation9 + $0xd8] sm:$0xff]
  %v8917 = vld [vmem:[#allocation9 + $0xe0] sm:$0xff]
  %v8918 = vld [vmem:[#allocation9 + $0xe8] sm:$0xff]
  %v8919 = vld [vmem:[#allocation9 + $0xf0] sm:$0xff]
  %v8920 = vld [vmem:[#allocation9 + $0xf8] sm:$0xff]
  %v8921 = vld [vmem:[#allocation9 + $0x100] sm:$0xff]
  %v8922 = vld [vmem:[#allocation9 + $0x108] sm:$0xff]
  %v8923 = vld [vmem:[#allocation9 + $0x110] sm:$0xff]
  %v8924 = vld [vmem:[#allocation9 + $0x118] sm:$0xff]
  %v8925 = vld [vmem:[#allocation9 + $0x120] sm:$0xff]
  %v8926 = vld [vmem:[#allocation9 + $0x128] sm:$0xff]
  %v8927 = vld [vmem:[#allocation9 + $0x130] sm:$0xff]
  %v8928 = vld [vmem:[#allocation9 + $0x138] sm:$0xff]
  %v8929 = vld [vmem:[#allocation9 + $0x140] sm:$0xff]
  %v8930 = vld [vmem:[#allocation9 + $0x148] sm:$0xff]
  %v8931 = vld [vmem:[#allocation9 + $0x150] sm:$0xff]
  %v8932 = vld [vmem:[#allocation9 + $0x158] sm:$0xff]
  %v8933 = vld [vmem:[#allocation9 + $0x160] sm:$0xff]
  %v8934 = vld [vmem:[#allocation9 + $0x168] sm:$0xff]
  %v8935 = vld [vmem:[#allocation9 + $0x170] sm:$0xff]
  %v8936 = vld [vmem:[#allocation9 + $0x178] sm:$0xff]
  %v8937 = vld [vmem:[#allocation9 + $0x180] sm:$0xff]
  %v8938 = vld [vmem:[#allocation9 + $0x188] sm:$0xff]
  %v8939 = vld [vmem:[#allocation9 + $0x190] sm:$0xff]
  %v8940 = vld [vmem:[#allocation9 + $0x198] sm:$0xff]
  %v8941 = vld [vmem:[#allocation9 + $0x1a0] sm:$0xff]
  %v8942 = vld [vmem:[#allocation9 + $0x1a8] sm:$0xff]
  %v8943 = vld [vmem:[#allocation9 + $0x1b0] sm:$0xff]
  %v8944 = vld [vmem:[#allocation9 + $0x1b8] sm:$0xff]
  %v8945 = vld [vmem:[#allocation9 + $0x1c0] sm:$0xff]
  %v8946 = vld [vmem:[#allocation9 + $0x1c8] sm:$0xff]
  %v8947 = vld [vmem:[#allocation9 + $0x1d0] sm:$0xff]
  %v8948 = vld [vmem:[#allocation9 + $0x1d8] sm:$0xff]
  %v8949 = vld [vmem:[#allocation9 + $0x1e0] sm:$0xff]
  %v8950 = vld [vmem:[#allocation9 + $0x1e8] sm:$0xff]
  %v8951 = vld [vmem:[#allocation9 + $0x1f0] sm:$0xff]
  %v8952 = vld [vmem:[#allocation9 + $0x1f8] sm:$0xff]
  %v8953 = vld [vmem:[#allocation9 + $0x200] sm:$0xff]
  %v8954 = vld [vmem:[#allocation9 + $0x208] sm:$0xff]
  %v8955 = vld [vmem:[#allocation9 + $0x210] sm:$0xff]
  %v8956 = vld [vmem:[#allocation9 + $0x218] sm:$0xff]
  %v8957 = vld [vmem:[#allocation9 + $0x220] sm:$0xff]
  %v8958 = vld [vmem:[#allocation9 + $0x228] sm:$0xff]
  %v8959 = vld [vmem:[#allocation9 + $0x230] sm:$0xff]
  %v8960 = vld [vmem:[#allocation9 + $0x238] sm:$0xff]
  %v8961 = vld [vmem:[#allocation9 + $0x240] sm:$0xff]
  %v8962 = vld [vmem:[#allocation9 + $0x248] sm:$0xff]
  %v8963 = vld [vmem:[#allocation9 + $0x250] sm:$0xff]
  %v8964 = vld [vmem:[#allocation9 + $0x258] sm:$0xff]
  %v8965 = vld [vmem:[#allocation9 + $0x260] sm:$0xff]
  %v8966 = vld [vmem:[#allocation9 + $0x268] sm:$0xff]
  %v8967 = vld [vmem:[#allocation9 + $0x270] sm:$0xff]
  %v8968 = vld [vmem:[#allocation9 + $0x278] sm:$0xff]
  %v8969 = vld [vmem:[#allocation9 + $0x280] sm:$0xff]
  %v8970 = vld [vmem:[#allocation9 + $0x288] sm:$0xff]
  %v8971 = vld [vmem:[#allocation9 + $0x290] sm:$0xff]
  %v8972 = vld [vmem:[#allocation9 + $0x298] sm:$0xff]
  %v8973 = vld [vmem:[#allocation9 + $0x2a0] sm:$0xff]
  %v8974 = vld [vmem:[#allocation9 + $0x2a8] sm:$0xff]
  %v8975 = vld [vmem:[#allocation9 + $0x2b0] sm:$0xff]
  %v8976 = vld [vmem:[#allocation9 + $0x2b8] sm:$0xff]
  %v8977 = vld [vmem:[#allocation9 + $0x2c0] sm:$0xff]
  %v8978 = vld [vmem:[#allocation9 + $0x2c8] sm:$0xff]
  %v8979 = vld [vmem:[#allocation9 + $0x2d0] sm:$0xff]
  %v8980 = vld [vmem:[#allocation9 + $0x2d8] sm:$0xff]
  %v8981 = vld [vmem:[#allocation9 + $0x2e0] sm:$0xff]
  %v8982 = vld [vmem:[#allocation9 + $0x2e8] sm:$0xff]
  %v8983 = vld [vmem:[#allocation9 + $0x2f0] sm:$0xff]
  %v8984 = vld [vmem:[#allocation9 + $0x2f8] sm:$0xff]
  %v8985 = vld [vmem:[#allocation9 + $0x300] sm:$0xff]
  %v8986 = vld [vmem:[#allocation9 + $0x308] sm:$0xff]
  %v8987 = vld [vmem:[#allocation9 + $0x310] sm:$0xff]
  %v8988 = vld [vmem:[#allocation9 + $0x318] sm:$0xff]
  %v8989 = vld [vmem:[#allocation9 + $0x320] sm:$0xff]
  %v8990 = vld [vmem:[#allocation9 + $0x328] sm:$0xff]
  %v8991 = vld [vmem:[#allocation9 + $0x330] sm:$0xff]
  %v8992 = vld [vmem:[#allocation9 + $0x338] sm:$0xff]
  %v8993 = vld [vmem:[#allocation9 + $0x340] sm:$0xff]
  %v8994 = vld [vmem:[#allocation9 + $0x348] sm:$0xff]
  %v8995 = vld [vmem:[#allocation9 + $0x350] sm:$0xff]
  %v8996 = vld [vmem:[#allocation9 + $0x358] sm:$0xff]
  %v8997 = vld [vmem:[#allocation9 + $0x360] sm:$0xff]
  %v8998 = vld [vmem:[#allocation9 + $0x368] sm:$0xff]
  %v8999 = vld [vmem:[#allocation9 + $0x370] sm:$0xff]
  %v9000 = vld [vmem:[#allocation9 + $0x378] sm:$0xff]
  %v9001 = vld [vmem:[#allocation9 + $0x380] sm:$0xff]
  %v9002 = vld [vmem:[#allocation9 + $0x388] sm:$0xff]
  %v9003 = vld [vmem:[#allocation9 + $0x390] sm:$0xff]
  %v9004 = vld [vmem:[#allocation9 + $0x398] sm:$0xff]
  %v9005 = vld [vmem:[#allocation9 + $0x3a0] sm:$0xff]
  %v9006 = vld [vmem:[#allocation9 + $0x3a8] sm:$0xff]
  %v9007 = vld [vmem:[#allocation9 + $0x3b0] sm:$0xff]
  %v9008 = vld [vmem:[#allocation9 + $0x3b8] sm:$0xff]
  %v9009 = vld [vmem:[#allocation9 + $0x3c0] sm:$0xff]
  %v9010 = vld [vmem:[#allocation9 + $0x3c8] sm:$0xff]
  %v9011 = vld [vmem:[#allocation9 + $0x3d0] sm:$0xff]
  %v9012 = vld [vmem:[#allocation9 + $0x3d8] sm:$0xff]
  %v9013 = vld [vmem:[#allocation9 + $0x3e0] sm:$0xff]
  %v9014 = vld [vmem:[#allocation9 + $0x3e8] sm:$0xff]
  %v9015 = vld [vmem:[#allocation9 + $0x3f0] sm:$0xff]
  %v9016 = vld [vmem:[#allocation9 + $0x3f8] sm:$0xff]
  %v9017 = vld [vmem:[#allocation9 + $0x400] sm:$0xff]
  %v9018 = vld [vmem:[#allocation9 + $0x408] sm:$0xff]
  %v9019 = vld [vmem:[#allocation9 + $0x410] sm:$0xff]
  %v9020 = vld [vmem:[#allocation9 + $0x418] sm:$0xff]
  %v9021 = vld [vmem:[#allocation9 + $0x420] sm:$0xff]
  %v9022 = vld [vmem:[#allocation9 + $0x428] sm:$0xff]
  %v9023 = vld [vmem:[#allocation9 + $0x430] sm:$0xff]
  %v9024 = vld [vmem:[#allocation9 + $0x438] sm:$0xff]
  %v9025 = vld [vmem:[#allocation9 + $0x440] sm:$0xff]
  %v9026 = vld [vmem:[#allocation9 + $0x448] sm:$0xff]
  %v9027 = vld [vmem:[#allocation9 + $0x450] sm:$0xff]
  %v9028 = vld [vmem:[#allocation9 + $0x458] sm:$0xff]
  %v9029 = vld [vmem:[#allocation9 + $0x460] sm:$0xff]
  %v9030 = vld [vmem:[#allocation9 + $0x468] sm:$0xff]
  %v9031 = vld [vmem:[#allocation9 + $0x470] sm:$0xff]
  %v9032 = vld [vmem:[#allocation9 + $0x478] sm:$0xff]
  %v9033 = vld [vmem:[#allocation9 + $0x480] sm:$0xff]
  %v9034 = vld [vmem:[#allocation9 + $0x488] sm:$0xff]
  %v9035 = vld [vmem:[#allocation9 + $0x490] sm:$0xff]
  %v9036 = vld [vmem:[#allocation9 + $0x498] sm:$0xff]
  %v9037 = vld [vmem:[#allocation9 + $0x4a0] sm:$0xff]
  %v9038 = vld [vmem:[#allocation9 + $0x4a8] sm:$0xff]
  %v9039 = vld [vmem:[#allocation9 + $0x4b0] sm:$0xff]
  %v9040 = vld [vmem:[#allocation9 + $0x4b8] sm:$0xff]
  %v9041 = vld [vmem:[#allocation9 + $0x4c0] sm:$0xff]
  %v9042 = vld [vmem:[#allocation9 + $0x4c8] sm:$0xff]
  %v9043 = vld [vmem:[#allocation9 + $0x4d0] sm:$0xff]
  %v9044 = vld [vmem:[#allocation9 + $0x4d8] sm:$0xff]
  %v9045 = vld [vmem:[#allocation9 + $0x4e0] sm:$0xff]
  %v9046 = vld [vmem:[#allocation9 + $0x4e8] sm:$0xff]
  %v9047 = vld [vmem:[#allocation9 + $0x4f0] sm:$0xff]
  %v9048 = vld [vmem:[#allocation9 + $0x4f8] sm:$0xff]
  %v9049 = vld [vmem:[#allocation9 + $0x500] sm:$0xff]
  %v9050 = vld [vmem:[#allocation9 + $0x508] sm:$0xff]
  %v9051 = vld [vmem:[#allocation9 + $0x510] sm:$0xff]
  %v9052 = vld [vmem:[#allocation9 + $0x518] sm:$0xff]
  %v9053 = vld [vmem:[#allocation9 + $0x520] sm:$0xff]
  %v9054 = vld [vmem:[#allocation9 + $0x528] sm:$0xff]
  %v9055 = vld [vmem:[#allocation9 + $0x530] sm:$0xff]
  %v9056 = vld [vmem:[#allocation9 + $0x538] sm:$0xff]
  %v9057 = vld [vmem:[#allocation9 + $0x540] sm:$0xff]
  %v9058 = vld [vmem:[#allocation9 + $0x548] sm:$0xff]
  %v9059 = vld [vmem:[#allocation9 + $0x550] sm:$0xff]
  %v9060 = vld [vmem:[#allocation9 + $0x558] sm:$0xff]
  %v9061 = vld [vmem:[#allocation9 + $0x560] sm:$0xff]
  %v9062 = vld [vmem:[#allocation9 + $0x568] sm:$0xff]
  %v9063 = vld [vmem:[#allocation9 + $0x570] sm:$0xff]
  %v9064 = vld [vmem:[#allocation9 + $0x578] sm:$0xff]
  %v9065 = vld [vmem:[#allocation9 + $0x580] sm:$0xff]
  %v9066 = vld [vmem:[#allocation9 + $0x588] sm:$0xff]
  %v9067 = vld [vmem:[#allocation9 + $0x590] sm:$0xff]
  %v9068 = vld [vmem:[#allocation9 + $0x598] sm:$0xff]
  %v9073 = vunpack.c.l.b16 %v7739
  %v9074 = vunpack.c.h.b16 %v7739
  %v9075 = vunpack.c.l.b16 %v7740
  %v9076 = vunpack.c.l.b16 %v7741
  %v9077 = vunpack.c.h.b16 %v7741
  %v9078 = vunpack.c.l.b16 %v7742
  %v9079 = vpack.c.b16 %v9076, %v9073
  %v9080 = vpack.c.b16 %v9077, %v9074
  %v9081 = vpack.c.b16 %v9078, %v9075
  %v9085 = vsel %vm1074, %v9081, 0
  %9087 = vmatprep.subr.bf16.mxu0 %v8890
  %9088 = vmatpush1.bf16.msra.mxu0 %v8889
  %9089 = vmatprep.subr.bf16.mxu0 %v8900
  %9090 = vmatpush1.bf16.msra.mxu0 %v8899
  %9091 = vmatprep.subr.bf16.mxu0 %v8910
  %9092 = vmatpush1.bf16.msra.mxu0 %v8909
  %9093 = vmatprep.subr.bf16.mxu0 %v8920
  %9094 = vmatpush1.bf16.msra.mxu0 %v8919
  %9095 = vmatprep.subr.bf16.mxu0 %v8930
  %9096 = vmatpush1.bf16.msra.mxu0 %v8929
  %9097 = vmatprep.subr.bf16.mxu0 %v8940
  %9098 = vmatpush1.bf16.msra.mxu0 %v8939
  %9099 = vmatprep.subr.bf16.mxu0 %v8950
  %9100 = vmatpush1.bf16.msra.mxu0 %v8949
  %9101 = vmatprep.subr.bf16.mxu0 %v8960
  %9102 = vmatpush1.bf16.msra.mxu0 %v8959
  %9103 = vmatprep.subr.bf16.mxu0 %v8970
  %9104 = vmatpush1.bf16.msra.mxu0 %v8969
  %9105 = vmatprep.subr.bf16.mxu0 %v8980
  %9106 = vmatpush1.bf16.msra.mxu0 %v8979
  %9107 = vmatprep.subr.bf16.mxu0 %v8990
  %9108 = vmatpush1.bf16.msra.mxu0 %v8989
  %9109 = vmatprep.subr.bf16.mxu0 %v9000
  %9110 = vmatpush1.bf16.msra.mxu0 %v8999
  %9111 = vmatprep.subr.bf16.mxu0 %v9010
  %9112 = vmatpush1.bf16.msra.mxu0 %v9009
  %9113 = vmatprep.subr.bf16.mxu0 %v9020
  %9114 = vmatpush1.bf16.msra.mxu0 %v9019
  %9115 = vmatprep.subr.bf16.mxu0 %v9030
  %9116 = vmatpush1.bf16.msra.mxu0 %v9029
  %9117 = vmatprep.subr.bf16.mxu0 %v9040
  %9118 = vmatpush1.bf16.msra.mxu0 %v9039
  %9119 = vmatprep.mubr.bf16.mxu0 %v9080
  %9120 = vmatmul.mubr.bf16.gmra.mrb[0].mxu0 %v9079
  %v9121 = vpop.f32.mrb[0].mxu0
  %v9122 = vadd.f32 0.0, %v9121
  %v9123 = vpop.f32.mrb[0].mxu0
  %v9124 = vadd.f32 0.0, %v9123
  %v9125 = vpop.f32.mrb[0].mxu0
  %v9126 = vadd.f32 0.0, %v9125
  %v9127 = vpop.f32.mrb[0].mxu0
  %v9128 = vadd.f32 0.0, %v9127
  %9129 = vdwg.mxu0
  %9130 = vmatprep.subr.bf16.mxu0 %v9050
  %9131 = vmatpush1.bf16.msra.mxu0 %v9049
  %9132 = vmatprep.subr.bf16.mxu0 %v9060
  %9133 = vmatpush1.bf16.msra.mxu0 %v9059
  %9134 = vmatprep.subr.bf16.mxu0 0
  %9135 = vmatpush1.bf16.msra.mxu0 0
  %9136 = vmatprep.subr.bf16.mxu0 0
  %9137 = vmatpush1.bf16.msra.mxu0 0
  %9138 = vmatprep.subr.bf16.mxu0 0
  %9139 = vmatpush1.bf16.msra.mxu0 0
  %9140 = vmatprep.subr.bf16.mxu0 0
  %9141 = vmatpush1.bf16.msra.mxu0 0
  %9142 = vmatprep.subr.bf16.mxu0 0
  %9143 = vmatpush1.bf16.msra.mxu0 0
  %9144 = vmatprep.subr.bf16.mxu0 0
  %9145 = vmatpush1.bf16.msra.mxu0 0
  %9146 = vmatprep.subr.bf16.mxu0 0
  %9147 = vmatpush1.bf16.msra.mxu0 0
  %9148 = vmatprep.subr.bf16.mxu0 0
  %9149 = vmatpush1.bf16.msra.mxu0 0
  %9150 = vmatprep.subr.bf16.mxu0 0
  %9151 = vmatpush1.bf16.msra.mxu0 0
  %9152 = vmatprep.subr.bf16.mxu0 0
  %9153 = vmatpush1.bf16.msra.mxu0 0
  %9154 = vmatprep.subr.bf16.mxu0 0
  %9155 = vmatpush1.bf16.msra.mxu0 0
  %9156 = vmatprep.subr.bf16.mxu0 0
  %9157 = vmatpush1.bf16.msra.mxu0 0
  %9158 = vmatprep.subr.bf16.mxu0 0
  %9159 = vmatpush1.bf16.msra.mxu0 0
  %9160 = vmatprep.subr.bf16.mxu0 0
  %9161 = vmatpush1.bf16.msra.mxu0 0
  %9162 = vmatprep.mubr.bf16.mxu0 0
  %9163 = vmatmul.mubr.bf16.gmra.mrb[0].mxu0 %v9085
  %v9164 = vpop.f32.mrb[0].mxu0
  %v9165 = vadd.f32 %v9122, %v9164
  %v9166 = vpop.f32.mrb[0].mxu0
  %v9167 = vadd.f32 %v9124, %v9166
  %v9168 = vpop.f32.mrb[0].mxu0
  %v9169 = vadd.f32 %v9126, %v9168
  %v9170 = vpop.f32.mrb[0].mxu0
  %v9171 = vadd.f32 %v9128, %v9170
  %9172 = vdwg.mxu0
  %9173 = vmatprep.subr.bf16.mxu0 %v8892
  %9174 = vmatpush1.bf16.msra.mxu0 %v8891
  %9175 = vmatprep.subr.bf16.mxu0 %v8902
  %9176 = vmatpush1.bf16.msra.mxu0 %v8901
  %9177 = vmatprep.subr.bf16.mxu0 %v8912
  %9178 = vmatpush1.bf16.msra.mxu0 %v8911
  %9179 = vmatprep.subr.bf16.mxu0 %v8922
  %9180 = vmatpush1.bf16.msra.mxu0 %v8921
  %9181 = vmatprep.subr.bf16.mxu0 %v8932
  %9182 = vmatpush1.bf16.msra.mxu0 %v8931
  %9183 = vmatprep.subr.bf16.mxu0 %v8942
  %9184 = vmatpush1.bf16.msra.mxu0 %v8941
  %9185 = vmatprep.subr.bf16.mxu0 %v8952
  %9186 = vmatpush1.bf16.msra.mxu0 %v8951
  %9187 = vmatprep.subr.bf16.mxu0 %v8962
  %9188 = vmatpush1.bf16.msra.mxu0 %v8961
  %9189 = vmatprep.subr.bf16.mxu0 %v8972
  %9190 = vmatpush1.bf16.msra.mxu0 %v8971
  %9191 = vmatprep.subr.bf16.mxu0 %v8982
  %9192 = vmatpush1.bf16.msra.mxu0 %v8981
  %9193 = vmatprep.subr.bf16.mxu0 %v8992
  %9194 = vmatpush1.bf16.msra.mxu0 %v8991
  %9195 = vmatprep.subr.bf16.mxu0 %v9002
  %9196 = vmatpush1.bf16.msra.mxu0 %v9001
  %9197 = vmatprep.subr.bf16.mxu0 %v9012
  %9198 = vmatpush1.bf16.msra.mxu0 %v9011
  %9199 = vmatprep.subr.bf16.mxu0 %v9022
  %9200 = vmatpush1.bf16.msra.mxu0 %v9021
  %9201 = vmatprep.subr.bf16.mxu0 %v9032
  %9202 = vmatpush1.bf16.msra.mxu0 %v9031
  %9203 = vmatprep.subr.bf16.mxu0 %v9042
  %9204 = vmatpush1.bf16.msra.mxu0 %v9041
  %9205 = vmatprep.mubr.bf16.mxu0 %v9080
  %9206 = vmatmul.mubr.bf16.gmra.mrb[0].mxu0 %v9079
  %v9207 = vpop.f32.mrb[0].mxu0
  %v9208 = vadd.f32 0.0, %v9207
  %v9209 = vpop.f32.mrb[0].mxu0
  %v9210 = vadd.f32 0.0, %v9209
  %v9211 = vpop.f32.mrb[0].mxu0
  %v9212 = vadd.f32 0.0, %v9211
  %v9213 = vpop.f32.mrb[0].mxu0
  %v9214 = vadd.f32 0.0, %v9213
  %9215 = vdwg.mxu0
  %9216 = vmatprep.subr.bf16.mxu0 %v9052
  %9217 = vmatpush1.bf16.msra.mxu0 %v9051
  %9218 = vmatprep.subr.bf16.mxu0 %v9062
  %9219 = vmatpush1.bf16.msra.mxu0 %v9061
  %9220 = vmatprep.subr.bf16.mxu0 0
  %9221 = vmatpush1.bf16.msra.mxu0 0
  %9222 = vmatprep.subr.bf16.mxu0 0
  %9223 = vmatpush1.bf16.msra.mxu0 0
  %9224 = vmatprep.subr.bf16.mxu0 0
  %9225 = vmatpush1.bf16.msra.mxu0 0
  %9226 = vmatprep.subr.bf16.mxu0 0
  %9227 = vmatpush1.bf16.msra.mxu0 0
  %9228 = vmatprep.subr.bf16.mxu0 0
  %9229 = vmatpush1.bf16.msra.mxu0 0
  %9230 = vmatprep.subr.bf16.mxu0 0
  %9231 = vmatpush1.bf16.msra.mxu0 0
  %9232 = vmatprep.subr.bf16.mxu0 0
  %9233 = vmatpush1.bf16.msra.mxu0 0
  %9234 = vmatprep.subr.bf16.mxu0 0
  %9235 = vmatpush1.bf16.msra.mxu0 0
  %9236 = vmatprep.subr.bf16.mxu0 0
  %9237 = vmatpush1.bf16.msra.mxu0 0
  %9238 = vmatprep.subr.bf16.mxu0 0
  %9239 = vmatpush1.bf16.msra.mxu0 0
  %9240 = vmatprep.subr.bf16.mxu0 0
  %9241 = vmatpush1.bf16.msra.mxu0 0
  %9242 = vmatprep.subr.bf16.mxu0 0
  %9243 = vmatpush1.bf16.msra.mxu0 0
  %9244 = vmatprep.subr.bf16.mxu0 0
  %9245 = vmatpush1.bf16.msra.mxu0 0
  %9246 = vmatprep.subr.bf16.mxu0 0
  %9247 = vmatpush1.bf16.msra.mxu0 0
  %9248 = vmatprep.mubr.bf16.mxu0 0
  %9249 = vmatmul.mubr.bf16.gmra.mrb[0].mxu0 %v9085
  %v9250 = vpop.f32.mrb[0].mxu0
  %v9251 = vadd.f32 %v9208, %v9250
  %v9252 = vpop.f32.mrb[0].mxu0
  %v9253 = vadd.f32 %v9210, %v9252
  %v9254 = vpop.f32.mrb[0].mxu0
  %v9255 = vadd.f32 %v9212, %v9254
  %v9256 = vpop.f32.mrb[0].mxu0
  %v9257 = vadd.f32 %v9214, %v9256
  %9258 = vdwg.mxu0
  %9259 = vmatprep.subr.bf16.mxu0 %v8894
  %9260 = vmatpush1.bf16.msra.mxu0 %v8893
  %9261 = vmatprep.subr.bf16.mxu0 %v8904
  %9262 = vmatpush1.bf16.msra.mxu0 %v8903
  %9263 = vmatprep.subr.bf16.mxu0 %v8914
  %9264 = vmatpush1.bf16.msra.mxu0 %v8913
  %9265 = vmatprep.subr.bf16.mxu0 %v8924
  %9266 = vmatpush1.bf16.msra.mxu0 %v8923
  %9267 = vmatprep.subr.bf16.mxu0 %v8934
  %9268 = vmatpush1.bf16.msra.mxu0 %v8933
  %9269 = vmatprep.subr.bf16.mxu0 %v8944
  %9270 = vmatpush1.bf16.msra.mxu0 %v8943
  %9271 = vmatprep.subr.bf16.mxu0 %v8954
  %9272 = vmatpush1.bf16.msra.mxu0 %v8953
  %9273 = vmatprep.subr.bf16.mxu0 %v8964
  %9274 = vmatpush1.bf16.msra.mxu0 %v8963
  %9275 = vmatprep.subr.bf16.mxu0 %v8974
  %9276 = vmatpush1.bf16.msra.mxu0 %v8973
  %9277 = vmatprep.subr.bf16.mxu0 %v8984
  %9278 = vmatpush1.bf16.msra.mxu0 %v8983
  %9279 = vmatprep.subr.bf16.mxu0 %v8994
  %9280 = vmatpush1.bf16.msra.mxu0 %v8993
  %9281 = vmatprep.subr.bf16.mxu0 %v9004
  %9282 = vmatpush1.bf16.msra.mxu0 %v9003
  %9283 = vmatprep.subr.bf16.mxu0 %v9014
  %9284 = vmatpush1.bf16.msra.mxu0 %v9013
  %9285 = vmatprep.subr.bf16.mxu0 %v9024
  %9286 = vmatpush1.bf16.msra.mxu0 %v9023
  %9287 = vmatprep.subr.bf16.mxu0 %v9034
  %9288 = vmatpush1.bf16.msra.mxu0 %v9033
  %9289 = vmatprep.subr.bf16.mxu0 %v9044
  %9290 = vmatpush1.bf16.msra.mxu0 %v9043
  %9291 = vmatprep.mubr.bf16.mxu0 %v9080
  %9292 = vmatmul.mubr.bf16.gmra.mrb[0].mxu0 %v9079
  %v9293 = vpop.f32.mrb[0].mxu0
  %v9294 = vadd.f32 0.0, %v9293
  %v9295 = vpop.f32.mrb[0].mxu0
  %v9296 = vadd.f32 0.0, %v9295
  %v9297 = vpop.f32.mrb[0].mxu0
  %v9298 = vadd.f32 0.0, %v9297
  %v9299 = vpop.f32.mrb[0].mxu0
  %v9300 = vadd.f32 0.0, %v9299
  %9301 = vdwg.mxu0
  %9302 = vmatprep.subr.bf16.mxu0 %v9054
  %9303 = vmatpush1.bf16.msra.mxu0 %v9053
  %9304 = vmatprep.subr.bf16.mxu0 %v9064
  %9305 = vmatpush1.bf16.msra.mxu0 %v9063
  %9306 = vmatprep.subr.bf16.mxu0 0
  %9307 = vmatpush1.bf16.msra.mxu0 0
  %9308 = vmatprep.subr.bf16.mxu0 0
  %9309 = vmatpush1.bf16.msra.mxu0 0
  %9310 = vmatprep.subr.bf16.mxu0 0
  %9311 = vmatpush1.bf16.msra.mxu0 0
  %9312 = vmatprep.subr.bf16.mxu0 0
  %9313 = vmatpush1.bf16.msra.mxu0 0
  %9314 = vmatprep.subr.bf16.mxu0 0
  %9315 = vmatpush1.bf16.msra.mxu0 0
  %9316 = vmatprep.subr.bf16.mxu0 0
  %9317 = vmatpush1.bf16.msra.mxu0 0
  %9318 = vmatprep.subr.bf16.mxu0 0
  %9319 = vmatpush1.bf16.msra.mxu0 0
  %9320 = vmatprep.subr.bf16.mxu0 0
  %9321 = vmatpush1.bf16.msra.mxu0 0
  %9322 = vmatprep.subr.bf16.mxu0 0
  %9323 = vmatpush1.bf16.msra.mxu0 0
  %9324 = vmatprep.subr.bf16.mxu0 0
  %9325 = vmatpush1.bf16.msra.mxu0 0
  %9326 = vmatprep.subr.bf16.mxu0 0
  %9327 = vmatpush1.bf16.msra.mxu0 0
  %9328 = vmatprep.subr.bf16.mxu0 0
  %9329 = vmatpush1.bf16.msra.mxu0 0
  %9330 = vmatprep.subr.bf16.mxu0 0
  %9331 = vmatpush1.bf16.msra.mxu0 0
  %9332 = vmatprep.subr.bf16.mxu0 0
  %9333 = vmatpush1.bf16.msra.mxu0 0
  %9334 = vmatprep.mubr.bf16.mxu0 0
  %9335 = vmatmul.mubr.bf16.gmra.mrb[0].mxu0 %v9085
  %v9336 = vpop.f32.mrb[0].mxu0
  %v9337 = vadd.f32 %v9294, %v9336
  %v9338 = vpop.f32.mrb[0].mxu0
  %v9339 = vadd.f32 %v9296, %v9338
  %v9340 = vpop.f32.mrb[0].mxu0
  %v9341 = vadd.f32 %v9298, %v9340
  %v9342 = vpop.f32.mrb[0].mxu0
  %v9343 = vadd.f32 %v9300, %v9342
  %9344 = vdwg.mxu0
  %9345 = vmatprep.subr.bf16.mxu0 %v8896
  %9346 = vmatpush1.bf16.msra.mxu0 %v8895
  %9347 = vmatprep.subr.bf16.mxu0 %v8906
  %9348 = vmatpush1.bf16.msra.mxu0 %v8905
  %9349 = vmatprep.subr.bf16.mxu0 %v8916
  %9350 = vmatpush1.bf16.msra.mxu0 %v8915
  %9351 = vmatprep.subr.bf16.mxu0 %v8926
  %9352 = vmatpush1.bf16.msra.mxu0 %v8925
  %9353 = vmatprep.subr.bf16.mxu0 %v8936
  %9354 = vmatpush1.bf16.msra.mxu0 %v8935
  %9355 = vmatprep.subr.bf16.mxu0 %v8946
  %9356 = vmatpush1.bf16.msra.mxu0 %v8945
  %9357 = vmatprep.subr.bf16.mxu0 %v8956
  %9358 = vmatpush1.bf16.msra.mxu0 %v8955
  %9359 = vmatprep.subr.bf16.mxu0 %v8966
  %9360 = vmatpush1.bf16.msra.mxu0 %v8965
  %9361 = vmatprep.subr.bf16.mxu0 %v8976
  %9362 = vmatpush1.bf16.msra.mxu0 %v8975
  %9363 = vmatprep.subr.bf16.mxu0 %v8986
  %9364 = vmatpush1.bf16.msra.mxu0 %v8985
  %9365 = vmatprep.subr.bf16.mxu0 %v8996
  %9366 = vmatpush1.bf16.msra.mxu0 %v8995
  %9367 = vmatprep.subr.bf16.mxu0 %v9006
  %9368 = vmatpush1.bf16.msra.mxu0 %v9005
  %9369 = vmatprep.subr.bf16.mxu0 %v9016
  %9370 = vmatpush1.bf16.msra.mxu0 %v9015
  %9371 = vmatprep.subr.bf16.mxu0 %v9026
  %9372 = vmatpush1.bf16.msra.mxu0 %v9025
  %9373 = vmatprep.subr.bf16.mxu0 %v9036
  %9374 = vmatpush1.bf16.msra.mxu0 %v9035
  %9375 = vmatprep.subr.bf16.mxu0 %v9046
  %9376 = vmatpush1.bf16.msra.mxu0 %v9045
  %9377 = vmatprep.mubr.bf16.mxu0 %v9080
  %9378 = vmatmul.mubr.bf16.gmra.mrb[0].mxu0 %v9079
  %v9379 = vpop.f32.mrb[0].mxu0
  %v9380 = vadd.f32 0.0, %v9379
  %v9381 = vpop.f32.mrb[0].mxu0
  %v9382 = vadd.f32 0.0, %v9381
  %v9383 = vpop.f32.mrb[0].mxu0
  %v9384 = vadd.f32 0.0, %v9383
  %v9385 = vpop.f32.mrb[0].mxu0
  %v9386 = vadd.f32 0.0, %v9385
  %9387 = vdwg.mxu0
  %9388 = vmatprep.subr.bf16.mxu0 %v9056
  %9389 = vmatpush1.bf16.msra.mxu0 %v9055
  %9390 = vmatprep.subr.bf16.mxu0 %v9066
  %9391 = vmatpush1.bf16.msra.mxu0 %v9065
  %9392 = vmatprep.subr.bf16.mxu0 0
  %9393 = vmatpush1.bf16.msra.mxu0 0
  %9394 = vmatprep.subr.bf16.mxu0 0
  %9395 = vmatpush1.bf16.msra.mxu0 0
  %9396 = vmatprep.subr.bf16.mxu0 0
  %9397 = vmatpush1.bf16.msra.mxu0 0
  %9398 = vmatprep.subr.bf16.mxu0 0
  %9399 = vmatpush1.bf16.msra.mxu0 0
  %9400 = vmatprep.subr.bf16.mxu0 0
  %9401 = vmatpush1.bf16.msra.mxu0 0
  %9402 = vmatprep.subr.bf16.mxu0 0
  %9403 = vmatpush1.bf16.msra.mxu0 0
  %9404 = vmatprep.subr.bf16.mxu0 0
  %9405 = vmatpush1.bf16.msra.mxu0 0
  %9406 = vmatprep.subr.bf16.mxu0 0
  %9407 = vmatpush1.bf16.msra.mxu0 0
  %9408 = vmatprep.subr.bf16.mxu0 0
  %9409 = vmatpush1.bf16.msra.mxu0 0
  %9410 = vmatprep.subr.bf16.mxu0 0
  %9411 = vmatpush1.bf16.msra.mxu0 0
  %9412 = vmatprep.subr.bf16.mxu0 0
  %9413 = vmatpush1.bf16.msra.mxu0 0
  %9414 = vmatprep.subr.bf16.mxu0 0
  %9415 = vmatpush1.bf16.msra.mxu0 0
  %9416 = vmatprep.subr.bf16.mxu0 0
  %9417 = vmatpush1.bf16.msra.mxu0 0
  %9418 = vmatprep.subr.bf16.mxu0 0
  %9419 = vmatpush1.bf16.msra.mxu0 0
  %9420 = vmatprep.mubr.bf16.mxu0 0
  %9421 = vmatmul.mubr.bf16.gmra.mrb[0].mxu0 %v9085
  %v9422 = vpop.f32.mrb[0].mxu0
  %v9423 = vadd.f32 %v9380, %v9422
  %v9424 = vpop.f32.mrb[0].mxu0
  %v9425 = vadd.f32 %v9382, %v9424
  %v9426 = vpop.f32.mrb[0].mxu0
  %v9427 = vadd.f32 %v9384, %v9426
  %v9428 = vpop.f32.mrb[0].mxu0
  %v9429 = vadd.f32 %v9386, %v9428
  %9430 = vdwg.mxu0
  %9431 = vmatprep.subr.bf16.mxu0 %v8898
  %9432 = vmatpush1.bf16.msra.mxu0 %v8897
  %9433 = vmatprep.subr.bf16.mxu0 %v8908
  %9434 = vmatpush1.bf16.msra.mxu0 %v8907
  %9435 = vmatprep.subr.bf16.mxu0 %v8918
  %9436 = vmatpush1.bf16.msra.mxu0 %v8917
  %9437 = vmatprep.subr.bf16.mxu0 %v8928
  %9438 = vmatpush1.bf16.msra.mxu0 %v8927
  %9439 = vmatprep.subr.bf16.mxu0 %v8938
  %9440 = vmatpush1.bf16.msra.mxu0 %v8937
  %9441 = vmatprep.subr.bf16.mxu0 %v8948
  %9442 = vmatpush1.bf16.msra.mxu0 %v8947
  %9443 = vmatprep.subr.bf16.mxu0 %v8958
  %9444 = vmatpush1.bf16.msra.mxu0 %v8957
  %9445 = vmatprep.subr.bf16.mxu0 %v8968
  %9446 = vmatpush1.bf16.msra.mxu0 %v8967
  %9447 = vmatprep.subr.bf16.mxu0 %v8978
  %9448 = vmatpush1.bf16.msra.mxu0 %v8977
  %9449 = vmatprep.subr.bf16.mxu0 %v8988
  %9450 = vmatpush1.bf16.msra.mxu0 %v8987
  %9451 = vmatprep.subr.bf16.mxu0 %v8998
  %9452 = vmatpush1.bf16.msra.mxu0 %v8997
  %9453 = vmatprep.subr.bf16.mxu0 %v9008
  %9454 = vmatpush1.bf16.msra.mxu0 %v9007
  %9455 = vmatprep.subr.bf16.mxu0 %v9018
  %9456 = vmatpush1.bf16.msra.mxu0 %v9017
  %9457 = vmatprep.subr.bf16.mxu0 %v9028
  %9458 = vmatpush1.bf16.msra.mxu0 %v9027
  %9459 = vmatprep.subr.bf16.mxu0 %v9038
  %9460 = vmatpush1.bf16.msra.mxu0 %v9037
  %9461 = vmatprep.subr.bf16.mxu0 %v9048
  %9462 = vmatpush1.bf16.msra.mxu0 %v9047
  %9463 = vmatprep.mubr.bf16.mxu0 %v9080
  %9464 = vmatmul.mubr.bf16.gmra.mrb[0].mxu0 %v9079
  %v9465 = vpop.f32.mrb[0].mxu0
  %v9466 = vadd.f32 0.0, %v9465
  %v9467 = vpop.f32.mrb[0].mxu0
  %v9468 = vadd.f32 0.0, %v9467
  %v9469 = vpop.f32.mrb[0].mxu0
  %v9470 = vadd.f32 0.0, %v9469
  %v9471 = vpop.f32.mrb[0].mxu0
  %v9472 = vadd.f32 0.0, %v9471
  %9473 = vdwg.mxu0
  %9474 = vmatprep.subr.bf16.mxu0 %v9058
  %9475 = vmatpush1.bf16.msra.mxu0 %v9057
  %9476 = vmatprep.subr.bf16.mxu0 %v9068
  %9477 = vmatpush1.bf16.msra.mxu0 %v9067
  %9478 = vmatprep.subr.bf16.mxu0 0
  %9479 = vmatpush1.bf16.msra.mxu0 0
  %9480 = vmatprep.subr.bf16.mxu0 0
  %9481 = vmatpush1.bf16.msra.mxu0 0
  %9482 = vmatprep.subr.bf16.mxu0 0
  %9483 = vmatpush1.bf16.msra.mxu0 0
  %9484 = vmatprep.subr.bf16.mxu0 0
  %9485 = vmatpush1.bf16.msra.mxu0 0
  %9486 = vmatprep.subr.bf16.mxu0 0
  %9487 = vmatpush1.bf16.msra.mxu0 0
  %9488 = vmatprep.subr.bf16.mxu0 0
  %9489 = vmatpush1.bf16.msra.mxu0 0
  %9490 = vmatprep.subr.bf16.mxu0 0
  %9491 = vmatpush1.bf16.msra.mxu0 0
  %9492 = vmatprep.subr.bf16.mxu0 0
  %9493 = vmatpush1.bf16.msra.mxu0 0
  %9494 = vmatprep.subr.bf16.mxu0 0
  %9495 = vmatpush1.bf16.msra.mxu0 0
  %9496 = vmatprep.subr.bf16.mxu0 0
  %9497 = vmatpush1.bf16.msra.mxu0 0
  %9498 = vmatprep.subr.bf16.mxu0 0
  %9499 = vmatpush1.bf16.msra.mxu0 0
  %9500 = vmatprep.subr.bf16.mxu0 0
  %9501 = vmatpush1.bf16.msra.mxu0 0
  %9502 = vmatprep.subr.bf16.mxu0 0
  %9503 = vmatpush1.bf16.msra.mxu0 0
  %9504 = vmatprep.subr.bf16.mxu0 0
  %9505 = vmatpush1.bf16.msra.mxu0 0
  %9506 = vmatprep.mubr.bf16.mxu0 0
  %9507 = vmatmul.mubr.bf16.gmra.mrb[0].mxu0 %v9085
  %v9508 = vpop.f32.mrb[0].mxu0
  %v9509 = vadd.f32 %v9466, %v9508
  %v9510 = vpop.f32.mrb[0].mxu0
  %v9511 = vadd.f32 %v9468, %v9510
  %v9512 = vpop.f32.mrb[0].mxu0
  %v9513 = vadd.f32 %v9470, %v9512
  %v9514 = vpop.f32.mrb[0].mxu0
  %v9515 = vadd.f32 %v9472, %v9514
  %9516 = vdwg.mxu0
  %9518 = vset.pattern.permute.xlu0 13
  %9519 = vperm.xlu0 %9518, %v7743
  %v9520 = vpop.permute.xlu0 %9519
  %9523 = vset.pattern.permute.xlu0 13
  %9524 = vperm.xlu0 %9523, %v7744
  %v9525 = vpop.permute.xlu0 %9524
  %v9527 = vmul.f32 %v9165, %v9520
  %v9528 = vmul.f32 %v9167, %v9520
  %v9529 = vmul.f32 %v9251, %v9520
  %v9530 = vmul.f32 %v9253, %v9520
  %v9531 = vmul.f32 %v9337, %v9520
  %v9532 = vmul.f32 %v9339, %v9520
  %v9533 = vmul.f32 %v9423, %v9520
  %v9534 = vmul.f32 %v9425, %v9520
  %v9535 = vmul.f32 %v9509, %v9520
  %v9536 = vmul.f32 %v9511, %v9520
  %v9537 = vmul.f32 %v9169, %v9525
  %v9538 = vmul.f32 %v9171, %v9525
  %v9539 = vmul.f32 %v9255, %v9525
  %v9540 = vmul.f32 %v9257, %v9525
  %v9541 = vmul.f32 %v9341, %v9525
  %v9542 = vmul.f32 %v9343, %v9525
  %v9543 = vmul.f32 %v9427, %v9525
  %v9544 = vmul.f32 %v9429, %v9525
  %v9545 = vmul.f32 %v9513, %v9525
  %v9546 = vmul.f32 %v9515, %v9525
  %9547 = vset.pattern.permute.xlu0 14
  %9548 = vperm.xlu0 %9547, %v7743
  %v9549 = vpop.permute.xlu0 %9548
  %9551 = vset.pattern.permute.xlu0 14
  %9552 = vperm.xlu0 %9551, %v7744
  %v9553 = vpop.permute.xlu0 %9552
  %v9555 = vadd.f32 %v9527, %v9549
  %v9556 = vadd.f32 %v9528, %v9549
  %v9557 = vadd.f32 %v9529, %v9549
  %v9558 = vadd.f32 %v9530, %v9549
  %v9559 = vadd.f32 %v9531, %v9549
  %v9560 = vadd.f32 %v9532, %v9549
  %v9561 = vadd.f32 %v9533, %v9549
  %v9562 = vadd.f32 %v9534, %v9549
  %v9563 = vadd.f32 %v9535, %v9549
  %v9564 = vadd.f32 %v9536, %v9549
  %v9565 = vadd.f32 %v9537, %v9553
  %v9566 = vadd.f32 %v9538, %v9553
  %v9567 = vadd.f32 %v9539, %v9553
  %v9568 = vadd.f32 %v9540, %v9553
  %v9569 = vadd.f32 %v9541, %v9553
  %v9570 = vadd.f32 %v9542, %v9553
  %v9571 = vadd.f32 %v9543, %v9553
  %v9572 = vadd.f32 %v9544, %v9553
  %v9573 = vadd.f32 %v9545, %v9553
  %v9574 = vadd.f32 %v9546, %v9553
  %v9575 = vmax.f32 %v9555, 0.0
  %v9576 = vmax.f32 %v9556, 0.0
  %v9577 = vmax.f32 %v9557, 0.0
  %v9578 = vmax.f32 %v9558, 0.0
  %v9579 = vmax.f32 %v9559, 0.0
  %v9580 = vmax.f32 %v9560, 0.0
  %v9581 = vmax.f32 %v9561, 0.0
  %v9582 = vmax.f32 %v9562, 0.0
  %v9583 = vmax.f32 %v9563, 0.0
  %v9584 = vmax.f32 %v9564, 0.0
  %v9585 = vmax.f32 %v9565, 0.0
  %v9586 = vmax.f32 %v9566, 0.0
  %v9587 = vmax.f32 %v9567, 0.0
  %v9588 = vmax.f32 %v9568, 0.0
  %v9589 = vmax.f32 %v9569, 0.0
  %v9590 = vmax.f32 %v9570, 0.0
  %v9591 = vmax.f32 %v9571, 0.0
  %v9592 = vmax.f32 %v9572, 0.0
  %v9593 = vmax.f32 %v9573, 0.0
  %v9594 = vmax.f32 %v9574, 0.0
  %v9595 = vmul.f32 %v9575, %v6816
  %v9596 = vmul.f32 %v9576, %v6820
  %v9597 = vmul.f32 %v9577, %v6824
  %v9598 = vmul.f32 %v9578, %v6828
  %v9599 = vmul.f32 %v9579, %v6832
  %v9600 = vmul.f32 %v9580, %v6836
  %v9601 = vmul.f32 %v9581, %v6840
  %v9602 = vmul.f32 %v9582, %v6844
  %v9603 = vmul.f32 %v9583, %v6848
  %v9604 = vmul.f32 %v9584, %v6852
  %v9605 = vmul.f32 %v9585, %v6816
  %v9606 = vmul.f32 %v9586, %v6820
  %v9607 = vmul.f32 %v9587, %v6824
  %v9608 = vmul.f32 %v9588, %v6828
  %v9609 = vmul.f32 %v9589, %v6832
  %v9610 = vmul.f32 %v9590, %v6836
  %v9611 = vmul.f32 %v9591, %v6840
  %v9612 = vmul.f32 %v9592, %v6844
  %v9613 = vmul.f32 %v9593, %v6848
  %v9614 = vmul.f32 %v9594, %v6852
  %v9615 = vpack.c.bf16 %v9605, %v9595
  %v9616 = vpack.c.bf16 %v9606, %v9596
  %v9617 = vpack.c.bf16 %v9607, %v9597
  %v9618 = vpack.c.bf16 %v9608, %v9598
  %v9619 = vpack.c.bf16 %v9609, %v9599
  %v9620 = vpack.c.bf16 %v9610, %v9600
  %v9621 = vpack.c.bf16 %v9611, %v9601
  %v9622 = vpack.c.bf16 %v9612, %v9602
  %v9623 = vpack.c.bf16 %v9613, %v9603
  %v9624 = vpack.c.bf16 %v9614, %v9604
  %9635 = vrot.lane.b32.xlu0 %v9615, 35
  %v9636 = vpop.permute.xlu0 %9635
  %9637 = vrot.lane.b32.xlu0 %v9616, 35
  %v9638 = vpop.permute.xlu0 %9637
  %9639 = vrot.lane.b32.xlu0 %v9617, 35
  %v9640 = vpop.permute.xlu0 %9639
  %9641 = vrot.lane.b32.xlu0 %v9618, 35
  %v9642 = vpop.permute.xlu0 %9641
  %9643 = vrot.lane.b32.xlu0 %v9619, 35
  %v9644 = vpop.permute.xlu0 %9643
  %9645 = vrot.lane.b32.xlu0 %v9620, 35
  %v9646 = vpop.permute.xlu0 %9645
  %9647 = vrot.lane.b32.xlu0 %v9621, 35
  %v9648 = vpop.permute.xlu0 %9647
  %9649 = vrot.lane.b32.xlu0 %v9622, 35
  %v9650 = vpop.permute.xlu0 %9649
  %9651 = vrot.lane.b32.xlu0 %v9623, 35
  %v9652 = vpop.permute.xlu0 %9651
  %9653 = vrot.lane.b32.xlu0 %v9624, 35
  %v9654 = vpop.permute.xlu0 %9653
  %v9655 = vsel %vm7678, %v9636, %v9638
  %v9656 = vsel %vm7678, %v9638, %v9640
  %v9657 = vsel %vm7678, %v9640, %v9642
  %v9658 = vsel %vm7678, %v9642, %v9644
  %v9659 = vsel %vm7678, %v9644, %v9646
  %v9660 = vsel %vm7678, %v9646, %v9648
  %v9661 = vsel %vm7678, %v9648, %v9650
  %v9662 = vsel %vm7678, %v9650, %v9652
  %v9663 = vsel %vm7678, %v9652, %v9654
  %9674 = vst.msk [vmem:[#allocation7] sm:$0xff] %vm7717, %v9636
  %9675 = vst [vmem:[#allocation7 + $0x8] sm:$0xff] %v9655
  %9676 = vst [vmem:[#allocation7 + $0x10] sm:$0xff] %v9656
  %9677 = vst [vmem:[#allocation7 + $0x18] sm:$0xff] %v9657
  %9678 = vst [vmem:[#allocation7 + $0x20] sm:$0xff] %v9658
  %9679 = vst [vmem:[#allocation7 + $0x28] sm:$0xff] %v9659
  %9680 = vst [vmem:[#allocation7 + $0x30] sm:$0xff] %v9660
  %9681 = vst [vmem:[#allocation7 + $0x38] sm:$0xff] %v9661
  %9682 = vst [vmem:[#allocation7 + $0x40] sm:$0xff] %v9662
  %9683 = vst.msk [vmem:[#allocation7 + $0x48] sm:$0xff] %vm7727, %v9663
  %v9684 = vld [vmem:[%s1 + $0x4c] sm:$0xff]
  %v9685 = vld [vmem:[%s1 + $0xa8] sm:$0xff]
  %v9686 = vld [vmem:[%s2] sm:$0xff]
  %v9687 = vld [vmem:[%s2 + $0x8] sm:$0xff]
  %v9688 = vld [vmem:[#allocation8] sm:$0xff]
  %v9689 = vld [vmem:[#allocation8 + $0x8] sm:$0xff]
  %v9690 = vld [vmem:[#allocation8 + $0x10] sm:$0xff]
  %v9691 = vld [vmem:[#allocation8 + $0x18] sm:$0xff]
  %v9692 = vld [vmem:[#allocation8 + $0x20] sm:$0xff]
  %v9693 = vld [vmem:[#allocation8 + $0x28] sm:$0xff]
  %v9694 = vld [vmem:[#allocation8 + $0x30] sm:$0xff]
  %v9695 = vld [vmem:[#allocation8 + $0x38] sm:$0xff]
  %v9696 = vld [vmem:[#allocation8 + $0x40] sm:$0xff]
  %v9697 = vld [vmem:[#allocation8 + $0x48] sm:$0xff]
  %v9698 = vld [vmem:[#allocation8 + $0x50] sm:$0xff]
  %v9699 = vld [vmem:[#allocation8 + $0x58] sm:$0xff]
  %v9700 = vld [vmem:[#allocation8 + $0x60] sm:$0xff]
  %v9701 = vld [vmem:[#allocation8 + $0x68] sm:$0xff]
  %v9702 = vld [vmem:[#allocation8 + $0x70] sm:$0xff]
  %v9703 = vld [vmem:[#allocation8 + $0x78] sm:$0xff]
  %v9704 = vld [vmem:[#allocation8 + $0x80] sm:$0xff]
  %v9705 = vld [vmem:[#allocation8 + $0x88] sm:$0xff]
  %v9706 = vld [vmem:[#allocation8 + $0x90] sm:$0xff]
  %v9707 = vld [vmem:[#allocation8 + $0x98] sm:$0xff]
  %v9708 = vld [vmem:[#allocation7] sm:$0xff]
  %v9709 = vld [vmem:[#allocation7 + $0x8] sm:$0xff]
  %v9710 = vld [vmem:[#allocation7 + $0x10] sm:$0xff]
  %v9711 = vld [vmem:[#allocation7 + $0x18] sm:$0xff]
  %v9712 = vld [vmem:[#allocation7 + $0x20] sm:$0xff]
  %v9713 = vld [vmem:[#allocation7 + $0x28] sm:$0xff]
  %v9714 = vld [vmem:[#allocation7 + $0x30] sm:$0xff]
  %v9715 = vld [vmem:[#allocation7 + $0x38] sm:$0xff]
  %v9716 = vld [vmem:[#allocation7 + $0x40] sm:$0xff]
  %v9717 = vld [vmem:[#allocation7 + $0x48] sm:$0xff]
  %9718 = vst [vmem:[#allocation9] sm:$0xff] %v9708
  %9719 = vst [vmem:[#allocation9 + $0x8] sm:$0xff] %v9709
  %9720 = vst [vmem:[#allocation9 + $0x10] sm:$0xff] %v9710
  %9721 = vst [vmem:[#allocation9 + $0x18] sm:$0xff] %v9711
  %9722 = vst [vmem:[#allocation9 + $0x20] sm:$0xff] %v9712
  %9723 = vst [vmem:[#allocation9 + $0x28] sm:$0xff] %v9713
  %9724 = vst [vmem:[#allocation9 + $0x30] sm:$0xff] %v9714
  %9725 = vst [vmem:[#allocation9 + $0x38] sm:$0xff] %v9715
  %9726 = vst [vmem:[#allocation9 + $0x40] sm:$0xff] %v9716
  %9727 = vst.msk [vmem:[#allocation9 + $0x48] sm:$0xff] %vm4407, %v9717
  %v9728 = vld [vmem:[#allocation7] sm:$0xff]
  %v9729 = vld [vmem:[#allocation7 + $0x8] sm:$0xff]
  %v9730 = vld [vmem:[#allocation7 + $0x10] sm:$0xff]
  %v9731 = vld [vmem:[#allocation7 + $0x18] sm:$0xff]
  %v9732 = vld [vmem:[#allocation7 + $0x20] sm:$0xff]
  %v9733 = vld [vmem:[#allocation7 + $0x28] sm:$0xff]
  %v9734 = vld [vmem:[#allocation7 + $0x30] sm:$0xff]
  %v9735 = vld [vmem:[#allocation7 + $0x38] sm:$0xff]
  %v9736 = vld [vmem:[#allocation7 + $0x40] sm:$0xff]
  %v9737 = vld [vmem:[#allocation7 + $0x48] sm:$0xff]
  %9748 = vrot.lane.b32.xlu0 %v9728, 127
  %v9749 = vpop.permute.xlu0 %9748
  %9750 = vrot.lane.b32.xlu0 %v9729, 127
  %v9751 = vpop.permute.xlu0 %9750
  %9752 = vrot.lane.b32.xlu0 %v9730, 127
  %v9753 = vpop.permute.xlu0 %9752
  %9754 = vrot.lane.b32.xlu0 %v9731, 127
  %v9755 = vpop.permute.xlu0 %9754
  %9756 = vrot.lane.b32.xlu0 %v9732, 127
  %v9757 = vpop.permute.xlu0 %9756
  %9758 = vrot.lane.b32.xlu0 %v9733, 127
  %v9759 = vpop.permute.xlu0 %9758
  %9760 = vrot.lane.b32.xlu0 %v9734, 127
  %v9761 = vpop.permute.xlu0 %9760
  %9762 = vrot.lane.b32.xlu0 %v9735, 127
  %v9763 = vpop.permute.xlu0 %9762
  %9764 = vrot.lane.b32.xlu0 %v9736, 127
  %v9765 = vpop.permute.xlu0 %9764
  %9766 = vrot.lane.b32.xlu0 %v9737, 127
  %v9767 = vpop.permute.xlu0 %9766
  %v9768 = vsel %vm2168, %v9749, %v9751
  %v9769 = vsel %vm2168, %v9751, %v9753
  %v9770 = vsel %vm2168, %v9753, %v9755
  %v9771 = vsel %vm2168, %v9755, %v9757
  %v9772 = vsel %vm2168, %v9757, %v9759
  %v9773 = vsel %vm2168, %v9759, %v9761
  %v9774 = vsel %vm2168, %v9761, %v9763
  %v9775 = vsel %vm2168, %v9763, %v9765
  %v9776 = vsel %vm2168, %v9765, %v9767
  %9787 = vst [vmem:[#allocation9 + $0x50] sm:$0xff] %v9768
  %9788 = vst [vmem:[#allocation9 + $0x58] sm:$0xff] %v9769
  %9789 = vst [vmem:[#allocation9 + $0x60] sm:$0xff] %v9770
  %9790 = vst [vmem:[#allocation9 + $0x68] sm:$0xff] %v9771
  %9791 = vst [vmem:[#allocation9 + $0x70] sm:$0xff] %v9772
  %9792 = vst [vmem:[#allocation9 + $0x78] sm:$0xff] %v9773
  %9793 = vst [vmem:[#allocation9 + $0x80] sm:$0xff] %v9774
  %9794 = vst [vmem:[#allocation9 + $0x88] sm:$0xff] %v9775
  %9795 = vst [vmem:[#allocation9 + $0x90] sm:$0xff] %v9776
  %9796 = vst.msk [vmem:[#allocation9 + $0x98] sm:$0xff] %vm4407, %v9767
  %v9797 = vld [vmem:[#allocation7] sm:$0xff]
  %v9798 = vld [vmem:[#allocation7 + $0x8] sm:$0xff]
  %v9799 = vld [vmem:[#allocation7 + $0x10] sm:$0xff]
  %v9800 = vld [vmem:[#allocation7 + $0x18] sm:$0xff]
  %v9801 = vld [vmem:[#allocation7 + $0x20] sm:$0xff]
  %v9802 = vld [vmem:[#allocation7 + $0x28] sm:$0xff]
  %v9803 = vld [vmem:[#allocation7 + $0x30] sm:$0xff]
  %v9804 = vld [vmem:[#allocation7 + $0x38] sm:$0xff]
  %v9805 = vld [vmem:[#allocation7 + $0x40] sm:$0xff]
  %v9806 = vld [vmem:[#allocation7 + $0x48] sm:$0xff]
  %9817 = vrot.lane.b32.xlu0 %v9797, 126
  %v9818 = vpop.permute.xlu0 %9817
  %9819 = vrot.lane.b32.xlu0 %v9798, 126
  %v9820 = vpop.permute.xlu0 %9819
  %9821 = vrot.lane.b32.xlu0 %v9799, 126
  %v9822 = vpop.permute.xlu0 %9821
  %9823 = vrot.lane.b32.xlu0 %v9800, 126
  %v9824 = vpop.permute.xlu0 %9823
  %9825 = vrot.lane.b32.xlu0 %v9801, 126
  %v9826 = vpop.permute.xlu0 %9825
  %9827 = vrot.lane.b32.xlu0 %v9802, 126
  %v9828 = vpop.permute.xlu0 %9827
  %9829 = vrot.lane.b32.xlu0 %v9803, 126
  %v9830 = vpop.permute.xlu0 %9829
  %9831 = vrot.lane.b32.xlu0 %v9804, 126
  %v9832 = vpop.permute.xlu0 %9831
  %9833 = vrot.lane.b32.xlu0 %v9805, 126
  %v9834 = vpop.permute.xlu0 %9833
  %9835 = vrot.lane.b32.xlu0 %v9806, 126
  %v9836 = vpop.permute.xlu0 %9835
  %v9837 = vsel %vm2209, %v9818, %v9820
  %v9838 = vsel %vm2209, %v9820, %v9822
  %v9839 = vsel %vm2209, %v9822, %v9824
  %v9840 = vsel %vm2209, %v9824, %v9826
  %v9841 = vsel %vm2209, %v9826, %v9828
  %v9842 = vsel %vm2209, %v9828, %v9830
  %v9843 = vsel %vm2209, %v9830, %v9832
  %v9844 = vsel %vm2209, %v9832, %v9834
  %v9845 = vsel %vm2209, %v9834, %v9836
  %9856 = vst [vmem:[#allocation9 + $0xa0] sm:$0xff] %v9837
  %9857 = vst [vmem:[#allocation9 + $0xa8] sm:$0xff] %v9838
  %9858 = vst [vmem:[#allocation9 + $0xb0] sm:$0xff] %v9839
  %9859 = vst [vmem:[#allocation9 + $0xb8] sm:$0xff] %v9840
  %9860 = vst [vmem:[#allocation9 + $0xc0] sm:$0xff] %v9841
  %9861 = vst [vmem:[#allocation9 + $0xc8] sm:$0xff] %v9842
  %9862 = vst [vmem:[#allocation9 + $0xd0] sm:$0xff] %v9843
  %9863 = vst [vmem:[#allocation9 + $0xd8] sm:$0xff] %v9844
  %9864 = vst [vmem:[#allocation9 + $0xe0] sm:$0xff] %v9845
  %9865 = vst.msk [vmem:[#allocation9 + $0xe8] sm:$0xff] %vm4407, %v9836
  %v9866 = vld [vmem:[#allocation7] sm:$0xff]
  %v9867 = vld [vmem:[#allocation7 + $0x8] sm:$0xff]
  %v9868 = vld [vmem:[#allocation7 + $0x10] sm:$0xff]
  %v9869 = vld [vmem:[#allocation7 + $0x18] sm:$0xff]
  %v9870 = vld [vmem:[#allocation7 + $0x20] sm:$0xff]
  %v9871 = vld [vmem:[#allocation7 + $0x28] sm:$0xff]
  %v9872 = vld [vmem:[#allocation7 + $0x30] sm:$0xff]
  %v9873 = vld [vmem:[#allocation7 + $0x38] sm:$0xff]
  %v9874 = vld [vmem:[#allocation7 + $0x40] sm:$0xff]
  %v9875 = vld [vmem:[#allocation7 + $0x48] sm:$0xff]
  %9886 = vrot.lane.b32.xlu0 %v9866, 94
  %v9887 = vpop.permute.xlu0 %9886
  %9888 = vrot.lane.b32.xlu0 %v9867, 94
  %v9889 = vpop.permute.xlu0 %9888
  %9890 = vrot.lane.b32.xlu0 %v9868, 94
  %v9891 = vpop.permute.xlu0 %9890
  %9892 = vrot.lane.b32.xlu0 %v9869, 94
  %v9893 = vpop.permute.xlu0 %9892
  %9894 = vrot.lane.b32.xlu0 %v9870, 94
  %v9895 = vpop.permute.xlu0 %9894
  %9896 = vrot.lane.b32.xlu0 %v9871, 94
  %v9897 = vpop.permute.xlu0 %9896
  %9898 = vrot.lane.b32.xlu0 %v9872, 94
  %v9899 = vpop.permute.xlu0 %9898
  %9900 = vrot.lane.b32.xlu0 %v9873, 94
  %v9901 = vpop.permute.xlu0 %9900
  %9902 = vrot.lane.b32.xlu0 %v9874, 94
  %v9903 = vpop.permute.xlu0 %9902
  %9904 = vrot.lane.b32.xlu0 %v9875, 94
  %v9905 = vpop.permute.xlu0 %9904
  %v9906 = vsel %vm5156, %v9887, %v9889
  %v9907 = vsel %vm5156, %v9889, %v9891
  %v9908 = vsel %vm5156, %v9891, %v9893
  %v9909 = vsel %vm5156, %v9893, %v9895
  %v9910 = vsel %vm5156, %v9895, %v9897
  %v9911 = vsel %vm5156, %v9897, %v9899
  %v9912 = vsel %vm5156, %v9899, %v9901
  %v9913 = vsel %vm5156, %v9901, %v9903
  %v9914 = vsel %vm5156, %v9903, %v9905
  %9925 = vst [vmem:[#allocation9 + $0xf0] sm:$0xff] %v9906
  %9926 = vst [vmem:[#allocation9 + $0xf8] sm:$0xff] %v9907
  %9927 = vst [vmem:[#allocation9 + $0x100] sm:$0xff] %v9908
  %9928 = vst [vmem:[#allocation9 + $0x108] sm:$0xff] %v9909
  %9929 = vst [vmem:[#allocation9 + $0x110] sm:$0xff] %v9910
  %9930 = vst [vmem:[#allocation9 + $0x118] sm:$0xff] %v9911
  %9931 = vst [vmem:[#allocation9 + $0x120] sm:$0xff] %v9912
  %9932 = vst [vmem:[#allocation9 + $0x128] sm:$0xff] %v9913
  %9933 = vst [vmem:[#allocation9 + $0x130] sm:$0xff] %v9914
  %9934 = vst.msk [vmem:[#allocation9 + $0x138] sm:$0xff] %vm4407, %v9905
  %v9935 = vld [vmem:[#allocation7] sm:$0xff]
  %v9936 = vld [vmem:[#allocation7 + $0x8] sm:$0xff]
  %v9937 = vld [vmem:[#allocation7 + $0x10] sm:$0xff]
  %v9938 = vld [vmem:[#allocation7 + $0x18] sm:$0xff]
  %v9939 = vld [vmem:[#allocation7 + $0x20] sm:$0xff]
  %v9940 = vld [vmem:[#allocation7 + $0x28] sm:$0xff]
  %v9941 = vld [vmem:[#allocation7 + $0x30] sm:$0xff]
  %v9942 = vld [vmem:[#allocation7 + $0x38] sm:$0xff]
  %v9943 = vld [vmem:[#allocation7 + $0x40] sm:$0xff]
  %v9944 = vld [vmem:[#allocation7 + $0x48] sm:$0xff]
  %9955 = vrot.lane.b32.xlu0 %v9935, 93
  %v9956 = vpop.permute.xlu0 %9955
  %9957 = vrot.lane.b32.xlu0 %v9936, 93
  %v9958 = vpop.permute.xlu0 %9957
  %9959 = vrot.lane.b32.xlu0 %v9937, 93
  %v9960 = vpop.permute.xlu0 %9959
  %9961 = vrot.lane.b32.xlu0 %v9938, 93
  %v9962 = vpop.permute.xlu0 %9961
  %9963 = vrot.lane.b32.xlu0 %v9939, 93
  %v9964 = vpop.permute.xlu0 %9963
  %9965 = vrot.lane.b32.xlu0 %v9940, 93
  %v9966 = vpop.permute.xlu0 %9965
  %9967 = vrot.lane.b32.xlu0 %v9941, 93
  %v9968 = vpop.permute.xlu0 %9967
  %9969 = vrot.lane.b32.xlu0 %v9942, 93
  %v9970 = vpop.permute.xlu0 %9969
  %9971 = vrot.lane.b32.xlu0 %v9943, 93
  %v9972 = vpop.permute.xlu0 %9971
  %9973 = vrot.lane.b32.xlu0 %v9944, 93
  %v9974 = vpop.permute.xlu0 %9973
  %v9975 = vsel %vm5295, %v9956, %v9958
  %v9976 = vsel %vm5295, %v9958, %v9960
  %v9977 = vsel %vm5295, %v9960, %v9962
  %v9978 = vsel %vm5295, %v9962, %v9964
  %v9979 = vsel %vm5295, %v9964, %v9966
  %v9980 = vsel %vm5295, %v9966, %v9968
  %v9981 = vsel %vm5295, %v9968, %v9970
  %v9982 = vsel %vm5295, %v9970, %v9972
  %v9983 = vsel %vm5295, %v9972, %v9974
  %9994 = vst [vmem:[#allocation9 + $0x140] sm:$0xff] %v9975
  %9995 = vst [vmem:[#allocation9 + $0x148] sm:$0xff] %v9976
  %9996 = vst [vmem:[#allocation9 + $0x150] sm:$0xff] %v9977
  %9997 = vst [vmem:[#allocation9 + $0x158] sm:$0xff] %v9978
  %9998 = vst [vmem:[#allocation9 + $0x160] sm:$0xff] %v9979
  %9999 = vst [vmem:[#allocation9 + $0x168] sm:$0xff] %v9980
  %10000 = vst [vmem:[#allocation9 + $0x170] sm:$0xff] %v9981
  %10001 = vst [vmem:[#allocation9 + $0x178] sm:$0xff] %v9982
  %10002 = vst [vmem:[#allocation9 + $0x180] sm:$0xff] %v9983
  %10003 = vst.msk [vmem:[#allocation9 + $0x188] sm:$0xff] %vm4407, %v9974
  %v10004 = vld [vmem:[#allocation7] sm:$0xff]
  %v10005 = vld [vmem:[#allocation7 + $0x8] sm:$0xff]
  %v10006 = vld [vmem:[#allocation7 + $0x10] sm:$0xff]
  %v10007 = vld [vmem:[#allocation7 + $0x18] sm:$0xff]
  %v10008 = vld [vmem:[#allocation7 + $0x20] sm:$0xff]
  %v10009 = vld [vmem:[#allocation7 + $0x28] sm:$0xff]
  %v10010 = vld [vmem:[#allocation7 + $0x30] sm:$0xff]
  %v10011 = vld [vmem:[#allocation7 + $0x38] sm:$0xff]
  %v10012 = vld [vmem:[#allocation7 + $0x40] sm:$0xff]
  %v10013 = vld [vmem:[#allocation7 + $0x48] sm:$0xff]
  %10024 = vrot.lane.b32.xlu0 %v10004, 92
  %v10025 = vpop.permute.xlu0 %10024
  %10026 = vrot.lane.b32.xlu0 %v10005, 92
  %v10027 = vpop.permute.xlu0 %10026
  %10028 = vrot.lane.b32.xlu0 %v10006, 92
  %v10029 = vpop.permute.xlu0 %10028
  %10030 = vrot.lane.b32.xlu0 %v10007, 92
  %v10031 = vpop.permute.xlu0 %10030
  %10032 = vrot.lane.b32.xlu0 %v10008, 92
  %v10033 = vpop.permute.xlu0 %10032
  %10034 = vrot.lane.b32.xlu0 %v10009, 92
  %v10035 = vpop.permute.xlu0 %10034
  %10036 = vrot.lane.b32.xlu0 %v10010, 92
  %v10037 = vpop.permute.xlu0 %10036
  %10038 = vrot.lane.b32.xlu0 %v10011, 92
  %v10039 = vpop.permute.xlu0 %10038
  %10040 = vrot.lane.b32.xlu0 %v10012, 92
  %v10041 = vpop.permute.xlu0 %10040
  %10042 = vrot.lane.b32.xlu0 %v10013, 92
  %v10043 = vpop.permute.xlu0 %10042
  %v10044 = vsel %vm2373, %v10025, %v10027
  %v10045 = vsel %vm2373, %v10027, %v10029
  %v10046 = vsel %vm2373, %v10029, %v10031
  %v10047 = vsel %vm2373, %v10031, %v10033
  %v10048 = vsel %vm2373, %v10033, %v10035
  %v10049 = vsel %vm2373, %v10035, %v10037
  %v10050 = vsel %vm2373, %v10037, %v10039
  %v10051 = vsel %vm2373, %v10039, %v10041
  %v10052 = vsel %vm2373, %v10041, %v10043
  %10063 = vst [vmem:[#allocation9 + $0x190] sm:$0xff] %v10044
  %10064 = vst [vmem:[#allocation9 + $0x198] sm:$0xff] %v10045
  %10065 = vst [vmem:[#allocation9 + $0x1a0] sm:$0xff] %v10046
  %10066 = vst [vmem:[#allocation9 + $0x1a8] sm:$0xff] %v10047
  %10067 = vst [vmem:[#allocation9 + $0x1b0] sm:$0xff] %v10048
  %10068 = vst [vmem:[#allocation9 + $0x1b8] sm:$0xff] %v10049
  %10069 = vst [vmem:[#allocation9 + $0x1c0] sm:$0xff] %v10050
  %10070 = vst [vmem:[#allocation9 + $0x1c8] sm:$0xff] %v10051
  %10071 = vst [vmem:[#allocation9 + $0x1d0] sm:$0xff] %v10052
  %10072 = vst.msk [vmem:[#allocation9 + $0x1d8] sm:$0xff] %vm4407, %v10043
  %v10073 = vld [vmem:[#allocation7] sm:$0xff]
  %v10074 = vld [vmem:[#allocation7 + $0x8] sm:$0xff]
  %v10075 = vld [vmem:[#allocation7 + $0x10] sm:$0xff]
  %v10076 = vld [vmem:[#allocation7 + $0x18] sm:$0xff]
  %v10077 = vld [vmem:[#allocation7 + $0x20] sm:$0xff]
  %v10078 = vld [vmem:[#allocation7 + $0x28] sm:$0xff]
  %v10079 = vld [vmem:[#allocation7 + $0x30] sm:$0xff]
  %v10080 = vld [vmem:[#allocation7 + $0x38] sm:$0xff]
  %v10081 = vld [vmem:[#allocation7 + $0x40] sm:$0xff]
  %v10082 = vld [vmem:[#allocation7 + $0x48] sm:$0xff]
  %10093 = vrot.lane.b32.xlu0 %v10073, 60
  %v10094 = vpop.permute.xlu0 %10093
  %10095 = vrot.lane.b32.xlu0 %v10074, 60
  %v10096 = vpop.permute.xlu0 %10095
  %10097 = vrot.lane.b32.xlu0 %v10075, 60
  %v10098 = vpop.permute.xlu0 %10097
  %10099 = vrot.lane.b32.xlu0 %v10076, 60
  %v10100 = vpop.permute.xlu0 %10099
  %10101 = vrot.lane.b32.xlu0 %v10077, 60
  %v10102 = vpop.permute.xlu0 %10101
  %10103 = vrot.lane.b32.xlu0 %v10078, 60
  %v10104 = vpop.permute.xlu0 %10103
  %10105 = vrot.lane.b32.xlu0 %v10079, 60
  %v10106 = vpop.permute.xlu0 %10105
  %10107 = vrot.lane.b32.xlu0 %v10080, 60
  %v10108 = vpop.permute.xlu0 %10107
  %10109 = vrot.lane.b32.xlu0 %v10081, 60
  %v10110 = vpop.permute.xlu0 %10109
  %10111 = vrot.lane.b32.xlu0 %v10082, 60
  %v10112 = vpop.permute.xlu0 %10111
  %v10113 = vsel %vm5572, %v10094, %v10096
  %v10114 = vsel %vm5572, %v10096, %v10098
  %v10115 = vsel %vm5572, %v10098, %v10100
  %v10116 = vsel %vm5572, %v10100, %v10102
  %v10117 = vsel %vm5572, %v10102, %v10104
  %v10118 = vsel %vm5572, %v10104, %v10106
  %v10119 = vsel %vm5572, %v10106, %v10108
  %v10120 = vsel %vm5572, %v10108, %v10110
  %v10121 = vsel %vm5572, %v10110, %v10112
  %10132 = vst [vmem:[#allocation9 + $0x1e0] sm:$0xff] %v10113
  %10133 = vst [vmem:[#allocation9 + $0x1e8] sm:$0xff] %v10114
  %10134 = vst [vmem:[#allocation9 + $0x1f0] sm:$0xff] %v10115
  %10135 = vst [vmem:[#allocation9 + $0x1f8] sm:$0xff] %v10116
  %10136 = vst [vmem:[#allocation9 + $0x200] sm:$0xff] %v10117
  %10137 = vst [vmem:[#allocation9 + $0x208] sm:$0xff] %v10118
  %10138 = vst [vmem:[#allocation9 + $0x210] sm:$0xff] %v10119
  %10139 = vst [vmem:[#allocation9 + $0x218] sm:$0xff] %v10120
  %10140 = vst [vmem:[#allocation9 + $0x220] sm:$0xff] %v10121
  %10141 = vst.msk [vmem:[#allocation9 + $0x228] sm:$0xff] %vm4407, %v10112
  %v10142 = vld [vmem:[#allocation7] sm:$0xff]
  %v10143 = vld [vmem:[#allocation7 + $0x8] sm:$0xff]
  %v10144 = vld [vmem:[#allocation7 + $0x10] sm:$0xff]
  %v10145 = vld [vmem:[#allocation7 + $0x18] sm:$0xff]
  %v10146 = vld [vmem:[#allocation7 + $0x20] sm:$0xff]
  %v10147 = vld [vmem:[#allocation7 + $0x28] sm:$0xff]
  %v10148 = vld [vmem:[#allocation7 + $0x30] sm:$0xff]
  %v10149 = vld [vmem:[#allocation7 + $0x38] sm:$0xff]
  %v10150 = vld [vmem:[#allocation7 + $0x40] sm:$0xff]
  %v10151 = vld [vmem:[#allocation7 + $0x48] sm:$0xff]
  %10162 = vrot.lane.b32.xlu0 %v10142, 59
  %v10163 = vpop.permute.xlu0 %10162
  %10164 = vrot.lane.b32.xlu0 %v10143, 59
  %v10165 = vpop.permute.xlu0 %10164
  %10166 = vrot.lane.b32.xlu0 %v10144, 59
  %v10167 = vpop.permute.xlu0 %10166
  %10168 = vrot.lane.b32.xlu0 %v10145, 59
  %v10169 = vpop.permute.xlu0 %10168
  %10170 = vrot.lane.b32.xlu0 %v10146, 59
  %v10171 = vpop.permute.xlu0 %10170
  %10172 = vrot.lane.b32.xlu0 %v10147, 59
  %v10173 = vpop.permute.xlu0 %10172
  %10174 = vrot.lane.b32.xlu0 %v10148, 59
  %v10175 = vpop.permute.xlu0 %10174
  %10176 = vrot.lane.b32.xlu0 %v10149, 59
  %v10177 = vpop.permute.xlu0 %10176
  %10178 = vrot.lane.b32.xlu0 %v10150, 59
  %v10179 = vpop.permute.xlu0 %10178
  %10180 = vrot.lane.b32.xlu0 %v10151, 59
  %v10181 = vpop.permute.xlu0 %10180
  %v10182 = vsel %vm5711, %v10163, %v10165
  %v10183 = vsel %vm5711, %v10165, %v10167
  %v10184 = vsel %vm5711, %v10167, %v10169
  %v10185 = vsel %vm5711, %v10169, %v10171
  %v10186 = vsel %vm5711, %v10171, %v10173
  %v10187 = vsel %vm5711, %v10173, %v10175
  %v10188 = vsel %vm5711, %v10175, %v10177
  %v10189 = vsel %vm5711, %v10177, %v10179
  %v10190 = vsel %vm5711, %v10179, %v10181
  %10201 = vst [vmem:[#allocation9 + $0x230] sm:$0xff] %v10182
  %10202 = vst [vmem:[#allocation9 + $0x238] sm:$0xff] %v10183
  %10203 = vst [vmem:[#allocation9 + $0x240] sm:$0xff] %v10184
  %10204 = vst [vmem:[#allocation9 + $0x248] sm:$0xff] %v10185
  %10205 = vst [vmem:[#allocation9 + $0x250] sm:$0xff] %v10186
  %10206 = vst [vmem:[#allocation9 + $0x258] sm:$0xff] %v10187
  %10207 = vst [vmem:[#allocation9 + $0x260] sm:$0xff] %v10188
  %10208 = vst [vmem:[#allocation9 + $0x268] sm:$0xff] %v10189
  %10209 = vst [vmem:[#allocation9 + $0x270] sm:$0xff] %v10190
  %10210 = vst.msk [vmem:[#allocation9 + $0x278] sm:$0xff] %vm4407, %v10181
  %v10211 = vld [vmem:[#allocation7] sm:$0xff]
  %v10212 = vld [vmem:[#allocation7 + $0x8] sm:$0xff]
  %v10213 = vld [vmem:[#allocation7 + $0x10] sm:$0xff]
  %v10214 = vld [vmem:[#allocation7 + $0x18] sm:$0xff]
  %v10215 = vld [vmem:[#allocation7 + $0x20] sm:$0xff]
  %v10216 = vld [vmem:[#allocation7 + $0x28] sm:$0xff]
  %v10217 = vld [vmem:[#allocation7 + $0x30] sm:$0xff]
  %v10218 = vld [vmem:[#allocation7 + $0x38] sm:$0xff]
  %v10219 = vld [vmem:[#allocation7 + $0x40] sm:$0xff]
  %v10220 = vld [vmem:[#allocation7 + $0x48] sm:$0xff]
  %10231 = vrot.lane.b32.xlu0 %v10211, 58
  %v10232 = vpop.permute.xlu0 %10231
  %10233 = vrot.lane.b32.xlu0 %v10212, 58
  %v10234 = vpop.permute.xlu0 %10233
  %10235 = vrot.lane.b32.xlu0 %v10213, 58
  %v10236 = vpop.permute.xlu0 %10235
  %10237 = vrot.lane.b32.xlu0 %v10214, 58
  %v10238 = vpop.permute.xlu0 %10237
  %10239 = vrot.lane.b32.xlu0 %v10215, 58
  %v10240 = vpop.permute.xlu0 %10239
  %10241 = vrot.lane.b32.xlu0 %v10216, 58
  %v10242 = vpop.permute.xlu0 %10241
  %10243 = vrot.lane.b32.xlu0 %v10217, 58
  %v10244 = vpop.permute.xlu0 %10243
  %10245 = vrot.lane.b32.xlu0 %v10218, 58
  %v10246 = vpop.permute.xlu0 %10245
  %10247 = vrot.lane.b32.xlu0 %v10219, 58
  %v10248 = vpop.permute.xlu0 %10247
  %10249 = vrot.lane.b32.xlu0 %v10220, 58
  %v10250 = vpop.permute.xlu0 %10249
  %v10251 = vsel %vm5850, %v10232, %v10234
  %v10252 = vsel %vm5850, %v10234, %v10236
  %v10253 = vsel %vm5850, %v10236, %v10238
  %v10254 = vsel %vm5850, %v10238, %v10240
  %v10255 = vsel %vm5850, %v10240, %v10242
  %v10256 = vsel %vm5850, %v10242, %v10244
  %v10257 = vsel %vm5850, %v10244, %v10246
  %v10258 = vsel %vm5850, %v10246, %v10248
  %v10259 = vsel %vm5850, %v10248, %v10250
  %10270 = vst [vmem:[#allocation9 + $0x280] sm:$0xff] %v10251
  %10271 = vst [vmem:[#allocation9 + $0x288] sm:$0xff] %v10252
  %10272 = vst [vmem:[#allocation9 + $0x290] sm:$0xff] %v10253
  %10273 = vst [vmem:[#allocation9 + $0x298] sm:$0xff] %v10254
  %10274 = vst [vmem:[#allocation9 + $0x2a0] sm:$0xff] %v10255
  %10275 = vst [vmem:[#allocation9 + $0x2a8] sm:$0xff] %v10256
  %10276 = vst [vmem:[#allocation9 + $0x2b0] sm:$0xff] %v10257
  %10277 = vst [vmem:[#allocation9 + $0x2b8] sm:$0xff] %v10258
  %10278 = vst [vmem:[#allocation9 + $0x2c0] sm:$0xff] %v10259
  %10279 = vst.msk [vmem:[#allocation9 + $0x2c8] sm:$0xff] %vm4407, %v10250
  %v10280 = vld [vmem:[#allocation9] sm:$0xff]
  %v10281 = vld [vmem:[#allocation9 + $0x8] sm:$0xff]
  %v10282 = vld [vmem:[#allocation9 + $0x10] sm:$0xff]
  %v10283 = vld [vmem:[#allocation9 + $0x18] sm:$0xff]
  %v10284 = vld [vmem:[#allocation9 + $0x20] sm:$0xff]
  %v10285 = vld [vmem:[#allocation9 + $0x28] sm:$0xff]
  %v10286 = vld [vmem:[#allocation9 + $0x30] sm:$0xff]
  %v10287 = vld [vmem:[#allocation9 + $0x38] sm:$0xff]
  %v10288 = vld [vmem:[#allocation9 + $0x40] sm:$0xff]
  %v10289 = vld [vmem:[#allocation9 + $0x48] sm:$0xff]
  %v10290 = vld [vmem:[#allocation9 + $0x50] sm:$0xff]
  %v10291 = vld [vmem:[#allocation9 + $0x58] sm:$0xff]
  %v10292 = vld [vmem:[#allocation9 + $0x60] sm:$0xff]
  %v10293 = vld [vmem:[#allocation9 + $0x68] sm:$0xff]
  %v10294 = vld [vmem:[#allocation9 + $0x70] sm:$0xff]
  %v10295 = vld [vmem:[#allocation9 + $0x78] sm:$0xff]
  %v10296 = vld [vmem:[#allocation9 + $0x80] sm:$0xff]
  %v10297 = vld [vmem:[#allocation9 + $0x88] sm:$0xff]
  %v10298 = vld [vmem:[#allocation9 + $0x90] sm:$0xff]
  %v10299 = vld [vmem:[#allocation9 + $0x98] sm:$0xff]
  %v10300 = vld [vmem:[#allocation9 + $0xa0] sm:$0xff]
  %v10301 = vld [vmem:[#allocation9 + $0xa8] sm:$0xff]
  %v10302 = vld [vmem:[#allocation9 + $0xb0] sm:$0xff]
  %v10303 = vld [vmem:[#allocation9 + $0xb8] sm:$0xff]
  %v10304 = vld [vmem:[#allocation9 + $0xc0] sm:$0xff]
  %v10305 = vld [vmem:[#allocation9 + $0xc8] sm:$0xff]
  %v10306 = vld [vmem:[#allocation9 + $0xd0] sm:$0xff]
  %v10307 = vld [vmem:[#allocation9 + $0xd8] sm:$0xff]
  %v10308 = vld [vmem:[#allocation9 + $0xe0] sm:$0xff]
  %v10309 = vld [vmem:[#allocation9 + $0xe8] sm:$0xff]
  %v10310 = vld [vmem:[#allocation9 + $0xf0] sm:$0xff]
  %v10311 = vld [vmem:[#allocation9 + $0xf8] sm:$0xff]
  %v10312 = vld [vmem:[#allocation9 + $0x100] sm:$0xff]
  %v10313 = vld [vmem:[#allocation9 + $0x108] sm:$0xff]
  %v10314 = vld [vmem:[#allocation9 + $0x110] sm:$0xff]
  %v10315 = vld [vmem:[#allocation9 + $0x118] sm:$0xff]
  %v10316 = vld [vmem:[#allocation9 + $0x120] sm:$0xff]
  %v10317 = vld [vmem:[#allocation9 + $0x128] sm:$0xff]
  %v10318 = vld [vmem:[#allocation9 + $0x130] sm:$0xff]
  %v10319 = vld [vmem:[#allocation9 + $0x138] sm:$0xff]
  %v10320 = vld [vmem:[#allocation9 + $0x140] sm:$0xff]
  %v10321 = vld [vmem:[#allocation9 + $0x148] sm:$0xff]
  %v10322 = vld [vmem:[#allocation9 + $0x150] sm:$0xff]
  %v10323 = vld [vmem:[#allocation9 + $0x158] sm:$0xff]
  %v10324 = vld [vmem:[#allocation9 + $0x160] sm:$0xff]
  %v10325 = vld [vmem:[#allocation9 + $0x168] sm:$0xff]
  %v10326 = vld [vmem:[#allocation9 + $0x170] sm:$0xff]
  %v10327 = vld [vmem:[#allocation9 + $0x178] sm:$0xff]
  %v10328 = vld [vmem:[#allocation9 + $0x180] sm:$0xff]
  %v10329 = vld [vmem:[#allocation9 + $0x188] sm:$0xff]
  %v10330 = vld [vmem:[#allocation9 + $0x190] sm:$0xff]
  %v10331 = vld [vmem:[#allocation9 + $0x198] sm:$0xff]
  %v10332 = vld [vmem:[#allocation9 + $0x1a0] sm:$0xff]
  %v10333 = vld [vmem:[#allocation9 + $0x1a8] sm:$0xff]
  %v10334 = vld [vmem:[#allocation9 + $0x1b0] sm:$0xff]
  %v10335 = vld [vmem:[#allocation9 + $0x1b8] sm:$0xff]
  %v10336 = vld [vmem:[#allocation9 + $0x1c0] sm:$0xff]
  %v10337 = vld [vmem:[#allocation9 + $0x1c8] sm:$0xff]
  %v10338 = vld [vmem:[#allocation9 + $0x1d0] sm:$0xff]
  %v10339 = vld [vmem:[#allocation9 + $0x1d8] sm:$0xff]
  %v10340 = vld [vmem:[#allocation9 + $0x1e0] sm:$0xff]
  %v10341 = vld [vmem:[#allocation9 + $0x1e8] sm:$0xff]
  %v10342 = vld [vmem:[#allocation9 + $0x1f0] sm:$0xff]
  %v10343 = vld [vmem:[#allocation9 + $0x1f8] sm:$0xff]
  %v10344 = vld [vmem:[#allocation9 + $0x200] sm:$0xff]
  %v10345 = vld [vmem:[#allocation9 + $0x208] sm:$0xff]
  %v10346 = vld [vmem:[#allocation9 + $0x210] sm:$0xff]
  %v10347 = vld [vmem:[#allocation9 + $0x218] sm:$0xff]
  %v10348 = vld [vmem:[#allocation9 + $0x220] sm:$0xff]
  %v10349 = vld [vmem:[#allocation9 + $0x228] sm:$0xff]
  %v10350 = vld [vmem:[#allocation9 + $0x230] sm:$0xff]
  %v10351 = vld [vmem:[#allocation9 + $0x238] sm:$0xff]
  %v10352 = vld [vmem:[#allocation9 + $0x240] sm:$0xff]
  %v10353 = vld [vmem:[#allocation9 + $0x248] sm:$0xff]
  %v10354 = vld [vmem:[#allocation9 + $0x250] sm:$0xff]
  %v10355 = vld [vmem:[#allocation9 + $0x258] sm:$0xff]
  %v10356 = vld [vmem:[#allocation9 + $0x260] sm:$0xff]
  %v10357 = vld [vmem:[#allocation9 + $0x268] sm:$0xff]
  %v10358 = vld [vmem:[#allocation9 + $0x270] sm:$0xff]
  %v10359 = vld [vmem:[#allocation9 + $0x278] sm:$0xff]
  %v10360 = vld [vmem:[#allocation9 + $0x280] sm:$0xff]
  %v10361 = vld [vmem:[#allocation9 + $0x288] sm:$0xff]
  %v10362 = vld [vmem:[#allocation9 + $0x290] sm:$0xff]
  %v10363 = vld [vmem:[#allocation9 + $0x298] sm:$0xff]
  %v10364 = vld [vmem:[#allocation9 + $0x2a0] sm:$0xff]
  %v10365 = vld [vmem:[#allocation9 + $0x2a8] sm:$0xff]
  %v10366 = vld [vmem:[#allocation9 + $0x2b0] sm:$0xff]
  %v10367 = vld [vmem:[#allocation9 + $0x2b8] sm:$0xff]
  %v10368 = vld [vmem:[#allocation9 + $0x2c0] sm:$0xff]
  %v10369 = vld [vmem:[#allocation9 + $0x2c8] sm:$0xff]
  %10371 = vset.pattern.permute.xlu0 17
  %10372 = vperm.xlu0 %10371, %v9686
  %v10373 = vpop.permute.xlu0 %10372
  %10376 = vset.pattern.permute.xlu0 17
  %10377 = vperm.xlu0 %10376, %v9687
  %v10378 = vpop.permute.xlu0 %10377
  %v10382 = vunpack.c.l.b16 %v9684
  %v10383 = vunpack.c.h.b16 %v9684
  %v10384 = vunpack.c.l.b16 %v9685
  %v10385 = vunpack.c.h.b16 %v9685
  %v10386 = vpack.c.b16 %v10384, %v10382
  %v10387 = vpack.c.b16 %v10385, %v10383
  %vm10389 = vcmask 130048
  %v10391 = vsel %vm10389, %v10387, 0
  %10393 = vmatprep.subr.bf16.mxu0 %v10281
  %10394 = vmatpush1.bf16.msra.mxu0 %v10280
  %10395 = vmatprep.subr.bf16.mxu0 %v10291
  %10396 = vmatpush1.bf16.msra.mxu0 %v10290
  %10397 = vmatprep.subr.bf16.mxu0 %v10301
  %10398 = vmatpush1.bf16.msra.mxu0 %v10300
  %10399 = vmatprep.subr.bf16.mxu0 %v10311
  %10400 = vmatpush1.bf16.msra.mxu0 %v10310
  %10401 = vmatprep.subr.bf16.mxu0 %v10321
  %10402 = vmatpush1.bf16.msra.mxu0 %v10320
  %10403 = vmatprep.subr.bf16.mxu0 %v10331
  %10404 = vmatpush1.bf16.msra.mxu0 %v10330
  %10405 = vmatprep.subr.bf16.mxu0 %v10341
  %10406 = vmatpush1.bf16.msra.mxu0 %v10340
  %10407 = vmatprep.subr.bf16.mxu0 %v10351
  %10408 = vmatpush1.bf16.msra.mxu0 %v10350
  %10409 = vmatprep.subr.bf16.mxu0 %v10361
  %10410 = vmatpush1.bf16.msra.mxu0 %v10360
  %10411 = vmatprep.subr.bf16.mxu0 0
  %10412 = vmatpush1.bf16.msra.mxu0 0
  %10413 = vmatprep.subr.bf16.mxu0 0
  %10414 = vmatpush1.bf16.msra.mxu0 0
  %10415 = vmatprep.subr.bf16.mxu0 0
  %10416 = vmatpush1.bf16.msra.mxu0 0
  %10417 = vmatprep.subr.bf16.mxu0 0
  %10418 = vmatpush1.bf16.msra.mxu0 0
  %10419 = vmatprep.subr.bf16.mxu0 0
  %10420 = vmatpush1.bf16.msra.mxu0 0
  %10421 = vmatprep.subr.bf16.mxu0 0
  %10422 = vmatpush1.bf16.msra.mxu0 0
  %10423 = vmatprep.subr.bf16.mxu0 0
  %10424 = vmatpush1.bf16.msra.mxu0 0
  %10425 = vmatprep.mubr.bf16.mxu0 %v10391
  %10426 = vmatmul.mubr.bf16.gmra.mrb[0].mxu0 %v10386
  %v10427 = vpop.f32.mrb[0].mxu0
  %v10428 = vadd.f32 %v10373, %v10427
  %v10429 = vpop.f32.mrb[0].mxu0
  %v10430 = vadd.f32 %v10373, %v10429
  %v10431 = vpop.f32.mrb[0].mxu0
  %v10432 = vadd.f32 %v10378, %v10431
  %v10433 = vpop.f32.mrb[0].mxu0
  %v10434 = vadd.f32 %v10378, %v10433
  %10435 = vdwg.mxu0
  %10436 = vmatprep.subr.bf16.mxu0 %v10283
  %10437 = vmatpush1.bf16.msra.mxu0 %v10282
  %10438 = vmatprep.subr.bf16.mxu0 %v10293
  %10439 = vmatpush1.bf16.msra.mxu0 %v10292
  %10440 = vmatprep.subr.bf16.mxu0 %v10303
  %10441 = vmatpush1.bf16.msra.mxu0 %v10302
  %10442 = vmatprep.subr.bf16.mxu0 %v10313
  %10443 = vmatpush1.bf16.msra.mxu0 %v10312
  %10444 = vmatprep.subr.bf16.mxu0 %v10323
  %10445 = vmatpush1.bf16.msra.mxu0 %v10322
  %10446 = vmatprep.subr.bf16.mxu0 %v10333
  %10447 = vmatpush1.bf16.msra.mxu0 %v10332
  %10448 = vmatprep.subr.bf16.mxu0 %v10343
  %10449 = vmatpush1.bf16.msra.mxu0 %v10342
  %10450 = vmatprep.subr.bf16.mxu0 %v10353
  %10451 = vmatpush1.bf16.msra.mxu0 %v10352
  %10452 = vmatprep.subr.bf16.mxu0 %v10363
  %10453 = vmatpush1.bf16.msra.mxu0 %v10362
  %10454 = vmatprep.subr.bf16.mxu0 0
  %10455 = vmatpush1.bf16.msra.mxu0 0
  %10456 = vmatprep.subr.bf16.mxu0 0
  %10457 = vmatpush1.bf16.msra.mxu0 0
  %10458 = vmatprep.subr.bf16.mxu0 0
  %10459 = vmatpush1.bf16.msra.mxu0 0
  %10460 = vmatprep.subr.bf16.mxu0 0
  %10461 = vmatpush1.bf16.msra.mxu0 0
  %10462 = vmatprep.subr.bf16.mxu0 0
  %10463 = vmatpush1.bf16.msra.mxu0 0
  %10464 = vmatprep.subr.bf16.mxu0 0
  %10465 = vmatpush1.bf16.msra.mxu0 0
  %10466 = vmatprep.subr.bf16.mxu0 0
  %10467 = vmatpush1.bf16.msra.mxu0 0
  %10468 = vmatprep.mubr.bf16.mxu0 %v10391
  %10469 = vmatmul.mubr.bf16.gmra.mrb[0].mxu0 %v10386
  %v10470 = vpop.f32.mrb[0].mxu0
  %v10471 = vadd.f32 %v10373, %v10470
  %v10472 = vpop.f32.mrb[0].mxu0
  %v10473 = vadd.f32 %v10373, %v10472
  %v10474 = vpop.f32.mrb[0].mxu0
  %v10475 = vadd.f32 %v10378, %v10474
  %v10476 = vpop.f32.mrb[0].mxu0
  %v10477 = vadd.f32 %v10378, %v10476
  %10478 = vdwg.mxu0
  %10479 = vmatprep.subr.bf16.mxu0 %v10285
  %10480 = vmatpush1.bf16.msra.mxu0 %v10284
  %10481 = vmatprep.subr.bf16.mxu0 %v10295
  %10482 = vmatpush1.bf16.msra.mxu0 %v10294
  %10483 = vmatprep.subr.bf16.mxu0 %v10305
  %10484 = vmatpush1.bf16.msra.mxu0 %v10304
  %10485 = vmatprep.subr.bf16.mxu0 %v10315
  %10486 = vmatpush1.bf16.msra.mxu0 %v10314
  %10487 = vmatprep.subr.bf16.mxu0 %v10325
  %10488 = vmatpush1.bf16.msra.mxu0 %v10324
  %10489 = vmatprep.subr.bf16.mxu0 %v10335
  %10490 = vmatpush1.bf16.msra.mxu0 %v10334
  %10491 = vmatprep.subr.bf16.mxu0 %v10345
  %10492 = vmatpush1.bf16.msra.mxu0 %v10344
  %10493 = vmatprep.subr.bf16.mxu0 %v10355
  %10494 = vmatpush1.bf16.msra.mxu0 %v10354
  %10495 = vmatprep.subr.bf16.mxu0 %v10365
  %10496 = vmatpush1.bf16.msra.mxu0 %v10364
  %10497 = vmatprep.subr.bf16.mxu0 0
  %10498 = vmatpush1.bf16.msra.mxu0 0
  %10499 = vmatprep.subr.bf16.mxu0 0
  %10500 = vmatpush1.bf16.msra.mxu0 0
  %10501 = vmatprep.subr.bf16.mxu0 0
  %10502 = vmatpush1.bf16.msra.mxu0 0
  %10503 = vmatprep.subr.bf16.mxu0 0
  %10504 = vmatpush1.bf16.msra.mxu0 0
  %10505 = vmatprep.subr.bf16.mxu0 0
  %10506 = vmatpush1.bf16.msra.mxu0 0
  %10507 = vmatprep.subr.bf16.mxu0 0
  %10508 = vmatpush1.bf16.msra.mxu0 0
  %10509 = vmatprep.subr.bf16.mxu0 0
  %10510 = vmatpush1.bf16.msra.mxu0 0
  %10511 = vmatprep.mubr.bf16.mxu0 %v10391
  %10512 = vmatmul.mubr.bf16.gmra.mrb[0].mxu0 %v10386
  %v10513 = vpop.f32.mrb[0].mxu0
  %v10514 = vadd.f32 %v10373, %v10513
  %v10515 = vpop.f32.mrb[0].mxu0
  %v10516 = vadd.f32 %v10373, %v10515
  %v10517 = vpop.f32.mrb[0].mxu0
  %v10518 = vadd.f32 %v10378, %v10517
  %v10519 = vpop.f32.mrb[0].mxu0
  %v10520 = vadd.f32 %v10378, %v10519
  %10521 = vdwg.mxu0
  %10522 = vmatprep.subr.bf16.mxu0 %v10287
  %10523 = vmatpush1.bf16.msra.mxu0 %v10286
  %10524 = vmatprep.subr.bf16.mxu0 %v10297
  %10525 = vmatpush1.bf16.msra.mxu0 %v10296
  %10526 = vmatprep.subr.bf16.mxu0 %v10307
  %10527 = vmatpush1.bf16.msra.mxu0 %v10306
  %10528 = vmatprep.subr.bf16.mxu0 %v10317
  %10529 = vmatpush1.bf16.msra.mxu0 %v10316
  %10530 = vmatprep.subr.bf16.mxu0 %v10327
  %10531 = vmatpush1.bf16.msra.mxu0 %v10326
  %10532 = vmatprep.subr.bf16.mxu0 %v10337
  %10533 = vmatpush1.bf16.msra.mxu0 %v10336
  %10534 = vmatprep.subr.bf16.mxu0 %v10347
  %10535 = vmatpush1.bf16.msra.mxu0 %v10346
  %10536 = vmatprep.subr.bf16.mxu0 %v10357
  %10537 = vmatpush1.bf16.msra.mxu0 %v10356
  %10538 = vmatprep.subr.bf16.mxu0 %v10367
  %10539 = vmatpush1.bf16.msra.mxu0 %v10366
  %10540 = vmatprep.subr.bf16.mxu0 0
  %10541 = vmatpush1.bf16.msra.mxu0 0
  %10542 = vmatprep.subr.bf16.mxu0 0
  %10543 = vmatpush1.bf16.msra.mxu0 0
  %10544 = vmatprep.subr.bf16.mxu0 0
  %10545 = vmatpush1.bf16.msra.mxu0 0
  %10546 = vmatprep.subr.bf16.mxu0 0
  %10547 = vmatpush1.bf16.msra.mxu0 0
  %10548 = vmatprep.subr.bf16.mxu0 0
  %10549 = vmatpush1.bf16.msra.mxu0 0
  %10550 = vmatprep.subr.bf16.mxu0 0
  %10551 = vmatpush1.bf16.msra.mxu0 0
  %10552 = vmatprep.subr.bf16.mxu0 0
  %10553 = vmatpush1.bf16.msra.mxu0 0
  %10554 = vmatprep.mubr.bf16.mxu0 %v10391
  %10555 = vmatmul.mubr.bf16.gmra.mrb[0].mxu0 %v10386
  %v10556 = vpop.f32.mrb[0].mxu0
  %v10557 = vadd.f32 %v10373, %v10556
  %v10558 = vpop.f32.mrb[0].mxu0
  %v10559 = vadd.f32 %v10373, %v10558
  %v10560 = vpop.f32.mrb[0].mxu0
  %v10561 = vadd.f32 %v10378, %v10560
  %v10562 = vpop.f32.mrb[0].mxu0
  %v10563 = vadd.f32 %v10378, %v10562
  %10564 = vdwg.mxu0
  %10565 = vmatprep.subr.bf16.mxu0 %v10289
  %10566 = vmatpush1.bf16.msra.mxu0 %v10288
  %10567 = vmatprep.subr.bf16.mxu0 %v10299
  %10568 = vmatpush1.bf16.msra.mxu0 %v10298
  %10569 = vmatprep.subr.bf16.mxu0 %v10309
  %10570 = vmatpush1.bf16.msra.mxu0 %v10308
  %10571 = vmatprep.subr.bf16.mxu0 %v10319
  %10572 = vmatpush1.bf16.msra.mxu0 %v10318
  %10573 = vmatprep.subr.bf16.mxu0 %v10329
  %10574 = vmatpush1.bf16.msra.mxu0 %v10328
  %10575 = vmatprep.subr.bf16.mxu0 %v10339
  %10576 = vmatpush1.bf16.msra.mxu0 %v10338
  %10577 = vmatprep.subr.bf16.mxu0 %v10349
  %10578 = vmatpush1.bf16.msra.mxu0 %v10348
  %10579 = vmatprep.subr.bf16.mxu0 %v10359
  %10580 = vmatpush1.bf16.msra.mxu0 %v10358
  %10581 = vmatprep.subr.bf16.mxu0 %v10369
  %10582 = vmatpush1.bf16.msra.mxu0 %v10368
  %10583 = vmatprep.subr.bf16.mxu0 0
  %10584 = vmatpush1.bf16.msra.mxu0 0
  %10585 = vmatprep.subr.bf16.mxu0 0
  %10586 = vmatpush1.bf16.msra.mxu0 0
  %10587 = vmatprep.subr.bf16.mxu0 0
  %10588 = vmatpush1.bf16.msra.mxu0 0
  %10589 = vmatprep.subr.bf16.mxu0 0
  %10590 = vmatpush1.bf16.msra.mxu0 0
  %10591 = vmatprep.subr.bf16.mxu0 0
  %10592 = vmatpush1.bf16.msra.mxu0 0
  %10593 = vmatprep.subr.bf16.mxu0 0
  %10594 = vmatpush1.bf16.msra.mxu0 0
  %10595 = vmatprep.subr.bf16.mxu0 0
  %10596 = vmatpush1.bf16.msra.mxu0 0
  %10597 = vmatprep.mubr.bf16.mxu0 %v10391
  %10598 = vmatmul.mubr.bf16.gmra.mrb[0].mxu0 %v10386
  %v10599 = vpop.f32.mrb[0].mxu0
  %v10600 = vadd.f32 %v10373, %v10599
  %v10601 = vpop.f32.mrb[0].mxu0
  %v10602 = vadd.f32 %v10373, %v10601
  %v10603 = vpop.f32.mrb[0].mxu0
  %v10604 = vadd.f32 %v10378, %v10603
  %v10605 = vpop.f32.mrb[0].mxu0
  %v10606 = vadd.f32 %v10378, %v10605
  %10607 = vdwg.mxu0
  %v10608 = vadd.f32 %v10428, %v9688
  %v10609 = vadd.f32 %v10430, %v9689
  %v10610 = vadd.f32 %v10471, %v9690
  %v10611 = vadd.f32 %v10473, %v9691
  %v10612 = vadd.f32 %v10514, %v9692
  %v10613 = vadd.f32 %v10516, %v9693
  %v10614 = vadd.f32 %v10557, %v9694
  %v10615 = vadd.f32 %v10559, %v9695
  %v10616 = vadd.f32 %v10600, %v9696
  %v10617 = vadd.f32 %v10602, %v9697
  %v10618 = vadd.f32 %v10432, %v9698
  %v10619 = vadd.f32 %v10434, %v9699
  %v10620 = vadd.f32 %v10475, %v9700
  %v10621 = vadd.f32 %v10477, %v9701
  %v10622 = vadd.f32 %v10518, %v9702
  %v10623 = vadd.f32 %v10520, %v9703
  %v10624 = vadd.f32 %v10561, %v9704
  %v10625 = vadd.f32 %v10563, %v9705
  %v10626 = vadd.f32 %v10604, %v9706
  %v10627 = vadd.f32 %v10606, %v9707
  %v10628 = vxor.u32 %v10608, 2147483648
  %v10629 = vxor.u32 %v10609, 2147483648
  %v10630 = vxor.u32 %v10610, 2147483648
  %v10631 = vxor.u32 %v10611, 2147483648
  %v10632 = vxor.u32 %v10612, 2147483648
  %v10633 = vxor.u32 %v10613, 2147483648
  %v10634 = vxor.u32 %v10614, 2147483648
  %v10635 = vxor.u32 %v10615, 2147483648
  %v10636 = vxor.u32 %v10616, 2147483648
  %v10637 = vxor.u32 %v10617, 2147483648
  %v10638 = vxor.u32 %v10618, 2147483648
  %v10639 = vxor.u32 %v10619, 2147483648
  %v10640 = vxor.u32 %v10620, 2147483648
  %v10641 = vxor.u32 %v10621, 2147483648
  %v10642 = vxor.u32 %v10622, 2147483648
  %v10643 = vxor.u32 %v10623, 2147483648
  %v10644 = vxor.u32 %v10624, 2147483648
  %v10645 = vxor.u32 %v10625, 2147483648
  %v10646 = vxor.u32 %v10626, 2147483648
  %v10647 = vxor.u32 %v10627, 2147483648
  %v10648 = vmul.f32 %v10628, 1.442695
  %v10649 = vpow.pop %v10648
  %v10650 = vmul.f32 %v10629, 1.442695
  %v10651 = vpow.pop %v10650
  %v10652 = vmul.f32 %v10630, 1.442695
  %v10653 = vpow.pop %v10652
  %v10654 = vmul.f32 %v10631, 1.442695
  %v10655 = vpow.pop %v10654
  %v10656 = vmul.f32 %v10632, 1.442695
  %v10657 = vpow.pop %v10656
  %v10658 = vmul.f32 %v10633, 1.442695
  %v10659 = vpow.pop %v10658
  %v10660 = vmul.f32 %v10634, 1.442695
  %v10661 = vpow.pop %v10660
  %v10662 = vmul.f32 %v10635, 1.442695
  %v10663 = vpow.pop %v10662
  %v10664 = vmul.f32 %v10636, 1.442695
  %v10665 = vpow.pop %v10664
  %v10666 = vmul.f32 %v10637, 1.442695
  %v10667 = vpow.pop %v10666
  %v10668 = vmul.f32 %v10638, 1.442695
  %v10669 = vpow.pop %v10668
  %v10670 = vmul.f32 %v10639, 1.442695
  %v10671 = vpow.pop %v10670
  %v10672 = vmul.f32 %v10640, 1.442695
  %v10673 = vpow.pop %v10672
  %v10674 = vmul.f32 %v10641, 1.442695
  %v10675 = vpow.pop %v10674
  %v10676 = vmul.f32 %v10642, 1.442695
  %v10677 = vpow.pop %v10676
  %v10678 = vmul.f32 %v10643, 1.442695
  %v10679 = vpow.pop %v10678
  %v10680 = vmul.f32 %v10644, 1.442695
  %v10681 = vpow.pop %v10680
  %v10682 = vmul.f32 %v10645, 1.442695
  %v10683 = vpow.pop %v10682
  %v10684 = vmul.f32 %v10646, 1.442695
  %v10685 = vpow.pop %v10684
  %v10686 = vmul.f32 %v10647, 1.442695
  %v10687 = vpow.pop %v10686
  %v10688 = vadd.f32 %v10649, 1.0
  %v10689 = vadd.f32 %v10651, 1.0
  %v10690 = vadd.f32 %v10653, 1.0
  %v10691 = vadd.f32 %v10655, 1.0
  %v10692 = vadd.f32 %v10657, 1.0
  %v10693 = vadd.f32 %v10659, 1.0
  %v10694 = vadd.f32 %v10661, 1.0
  %v10695 = vadd.f32 %v10663, 1.0
  %v10696 = vadd.f32 %v10665, 1.0
  %v10697 = vadd.f32 %v10667, 1.0
  %v10698 = vadd.f32 %v10669, 1.0
  %v10699 = vadd.f32 %v10671, 1.0
  %v10700 = vadd.f32 %v10673, 1.0
  %v10701 = vadd.f32 %v10675, 1.0
  %v10702 = vadd.f32 %v10677, 1.0
  %v10703 = vadd.f32 %v10679, 1.0
  %v10704 = vadd.f32 %v10681, 1.0
  %v10705 = vadd.f32 %v10683, 1.0
  %v10706 = vadd.f32 %v10685, 1.0
  %v10707 = vadd.f32 %v10687, 1.0
  %v10708 = vrcp.pop %v10688
  %v10709 = vmul.f32 1.0, %v10708
  %v10710 = vrcp.pop %v10689
  %v10711 = vmul.f32 1.0, %v10710
  %v10712 = vrcp.pop %v10690
  %v10713 = vmul.f32 1.0, %v10712
  %v10714 = vrcp.pop %v10691
  %v10715 = vmul.f32 1.0, %v10714
  %v10716 = vrcp.pop %v10692
  %v10717 = vmul.f32 1.0, %v10716
  %v10718 = vrcp.pop %v10693
  %v10719 = vmul.f32 1.0, %v10718
  %v10720 = vrcp.pop %v10694
  %v10721 = vmul.f32 1.0, %v10720
  %v10722 = vrcp.pop %v10695
  %v10723 = vmul.f32 1.0, %v10722
  %v10724 = vrcp.pop %v10696
  %v10725 = vmul.f32 1.0, %v10724
  %v10726 = vrcp.pop %v10697
  %v10727 = vmul.f32 1.0, %v10726
  %v10728 = vrcp.pop %v10698
  %v10729 = vmul.f32 1.0, %v10728
  %v10730 = vrcp.pop %v10699
  %v10731 = vmul.f32 1.0, %v10730
  %v10732 = vrcp.pop %v10700
  %v10733 = vmul.f32 1.0, %v10732
  %v10734 = vrcp.pop %v10701
  %v10735 = vmul.f32 1.0, %v10734
  %v10736 = vrcp.pop %v10702
  %v10737 = vmul.f32 1.0, %v10736
  %v10738 = vrcp.pop %v10703
  %v10739 = vmul.f32 1.0, %v10738
  %v10740 = vrcp.pop %v10704
  %v10741 = vmul.f32 1.0, %v10740
  %v10742 = vrcp.pop %v10705
  %v10743 = vmul.f32 1.0, %v10742
  %v10744 = vrcp.pop %v10706
  %v10745 = vmul.f32 1.0, %v10744
  %v10746 = vrcp.pop %v10707
  %v10747 = vmul.f32 1.0, %v10746
  %v10748 = vmul.f32 %v10709, %v6816
  %v10749 = vmul.f32 %v10711, %v6820
  %v10750 = vmul.f32 %v10713, %v6824
  %v10751 = vmul.f32 %v10715, %v6828
  %v10752 = vmul.f32 %v10717, %v6832
  %v10753 = vmul.f32 %v10719, %v6836
  %v10754 = vmul.f32 %v10721, %v6840
  %v10755 = vmul.f32 %v10723, %v6844
  %v10756 = vmul.f32 %v10725, %v6848
  %v10757 = vmul.f32 %v10727, %v6852
  %v10758 = vmul.f32 %v10729, %v6816
  %v10759 = vmul.f32 %v10731, %v6820
  %v10760 = vmul.f32 %v10733, %v6824
  %v10761 = vmul.f32 %v10735, %v6828
  %v10762 = vmul.f32 %v10737, %v6832
  %v10763 = vmul.f32 %v10739, %v6836
  %v10764 = vmul.f32 %v10741, %v6840
  %v10765 = vmul.f32 %v10743, %v6844
  %v10766 = vmul.f32 %v10745, %v6848
  %v10767 = vmul.f32 %v10747, %v6852
  %10768 = vst [vmem:[%s4] sm:$0xff] %v10748
  %10769 = vst [vmem:[%s4 + $0x8] sm:$0xff] %v10749
  %10770 = vst [vmem:[%s4 + $0x10] sm:$0xff] %v10750
  %10771 = vst [vmem:[%s4 + $0x18] sm:$0xff] %v10751
  %10772 = vst [vmem:[%s4 + $0x20] sm:$0xff] %v10752
  %10773 = vst [vmem:[%s4 + $0x28] sm:$0xff] %v10753
  %10774 = vst [vmem:[%s4 + $0x30] sm:$0xff] %v10754
  %10775 = vst [vmem:[%s4 + $0x38] sm:$0xff] %v10755
  %10776 = vst [vmem:[%s4 + $0x40] sm:$0xff] %v10756
  %10777 = vst.msk [vmem:[%s4 + $0x48] sm:$0xff] %vm4407, %v10757
  %10778 = vst [vmem:[%s4 + $0x50] sm:$0xff] %v10758
  %10779 = vst [vmem:[%s4 + $0x58] sm:$0xff] %v10759
  %10780 = vst [vmem:[%s4 + $0x60] sm:$0xff] %v10760
  %10781 = vst [vmem:[%s4 + $0x68] sm:$0xff] %v10761
  %10782 = vst [vmem:[%s4 + $0x70] sm:$0xff] %v10762
  %10783 = vst [vmem:[%s4 + $0x78] sm:$0xff] %v10763
  %10784 = vst [vmem:[%s4 + $0x80] sm:$0xff] %v10764
  %10785 = vst [vmem:[%s4 + $0x88] sm:$0xff] %v10765
  %10786 = vst [vmem:[%s4 + $0x90] sm:$0xff] %v10766
  %10787 = vst.msk [vmem:[%s4 + $0x98] sm:$0xff] %vm4407, %v10767
  // Predicated region
  $region18: #{forward.1} parent=0 // pred_check
    _
  $region19: #{forward.1} parent=0 // pred_check_branch
    %10789 = sbr.rel (0) target = $region21
  $region20: #{forward.1} parent=0 // pred_region
    _
  $region21: #{forward.1} parent=0 // pred_fallthru
    _
  // Predicated region
  $region22: #{forward.1} parent=0 // pred_check
    _
  $region23: #{forward.1} parent=0 // pred_check_branch
    %10791 = sbr.rel (0) target = $region25
  $region24: #{forward.1} parent=0 // pred_region
    _
  $region25: #{forward.1} parent=0 // pred_fallthru
    _

</llo_original>
